<compile_context>
chip_gen: v7x
topology: tpu7x:2x2x1
jax: 0.10.0
libtpu: 0.0.40
codegen_flags: <defaults>
</compile_context>

<pallas_src>
import jax
import jax.numpy as jnp
from jax import lax
from jax.experimental import pallas as pl
from jax.experimental.pallas import tpu as pltpu

EPS = 1e-5        # nn.BatchNorm2d default eps
NEG_SLOPE = 0.1   # nn.LeakyReLU(negative_slope=0.1)


def _make_resblock_kernel(N, H, W, C_mid, HP, WP, mm_dtype):
    NV = N * H * W        # number of real output pixels
    inv_nv = 1.0 / NV

    def kernel(xp_ref, x_ref, mask_ref, w1_ref, w2_ref,
               g1_ref, b1_ref, g2_ref, b2_ref, o_ref, y1p_ref):
        # ---------- conv1 (1x1, bias=False): one lane-dense MXU matmul over the padded grid ----
        # Padded rows of xp are all-zero, so their conv1 outputs are exactly 0 and do not
        # perturb the batch statistics (sums are divided by NV, not NP).
        y1 = jnp.dot(xp_ref[...], w1_ref[...],
                     preferred_element_type=jnp.float32)                  # (NP, C_mid) f32

        # ---------- BatchNorm2d(C_mid), training-mode batch stats, one pass --------------------
        s1 = jnp.sum(y1, axis=0, keepdims=True) * inv_nv                  # E[x]
        s2 = jnp.sum(y1 * y1, axis=0, keepdims=True) * inv_nv             # E[x^2]
        var1 = jnp.maximum(s2 - s1 * s1, 0.0)                             # biased variance
        y1 = (y1 - s1) * lax.rsqrt(var1 + EPS) * g1_ref[...] + b1_ref[...]
        y1 = jnp.maximum(y1, NEG_SLOPE * y1)                              # LeakyReLU(0.1)
        # Zero the padding ring (and the alignment columns) so it acts as conv2's zero padding.
        y1 = y1 * mask_ref[...]

        # Stage padded activations in VMEM; (NP, C_mid) -> (N, HP, WP, C_mid) is a pure
        # metadata reshape because WP is a multiple of 8 (sublane tile).
        y1p_ref[...] = y1.reshape(N, HP, WP, C_mid)

        # ---------- conv2 (3x3, pad=1): SINGLE im2col matmul -----------------------------------
        patches = [
            y1p_ref[:, kh:kh + H, kw:kw + W, :].reshape(NV, C_mid)
            for kh in range(3) for kw in range(3)
        ]
        im2col = jnp.concatenate(patches, axis=-1)                        # (NV, 9*C_mid) f32
        y2 = jnp.dot(im2col.astype(mm_dtype), w2_ref[...],
                     preferred_element_type=jnp.float32)                  # (NV, C_out) f32

        # ---------- BatchNorm2d(C_out) one pass + LeakyReLU + residual add ---------------------
        t1 = jnp.sum(y2, axis=0, keepdims=True) * inv_nv
        t2 = jnp.sum(y2 * y2, axis=0, keepdims=True) * inv_nv
        var2 = jnp.maximum(t2 - t1 * t1, 0.0)
        y2 = (y2 - t1) * lax.rsqrt(var2 + EPS) * g2_ref[...] + b2_ref[...]
        y2 = jnp.maximum(y2, NEG_SLOPE * y2)

        o_ref[...] = x_ref[...] + y2                                      # lane-dense (NV, C_out)

    return kernel


def resblock4_child_forward(x, w1, g1, b1, w2, g2, b2, *, mm_dtype=jnp.bfloat16):
    """Pallas TPU forward of resblock4_child (BatchNorm in training mode, biased variance)."""
    N, C_in, H, W = x.shape
    C_mid = w1.shape[0]
    C_out = w2.shape[0]
    KH, KW = w2.shape[2], w2.shape[3]
    assert (KH, KW) == (3, 3) and w1.shape[1:] == (C_in, 1, 1) and C_out == C_in

    HP = H + 2                                   # conv2's 1-pixel zero ring in H
    WP = ((W + 2 + 7) // 8) * 8                  # ring in W, rounded up to a sublane multiple
    NV, NP = N * H * W, N * HP * WP

    # --- NHWC, lane-dense 2-D layouts for the kernel ------------------------------------------
    x_nhwc = jnp.transpose(x, (0, 2, 3, 1)).astype(jnp.float32)           # (N, H, W, C_in)
    x2d = x_nhwc.reshape(NV, C_in)                                        # residual input (f32)
    xp = jnp.pad(x_nhwc, ((0, 0), (1, 1), (1, WP - W - 1), (0, 0)))       # zero-padded grid
    xp2d = xp.reshape(NP, C_in).astype(mm_dtype)                          # conv1 matmul input

    # 1.0 on real output pixels of the padded grid, 0.0 on padding / alignment positions.
    hv = (jnp.arange(HP) >= 1) & (jnp.arange(HP) <= H)
    wv = (jnp.arange(WP) >= 1) & (jnp.arange(WP) <= W)
    mask = (hv[:, None] & wv[None, :]).astype(jnp.float32)                # (HP, WP)
    mask = jnp.broadcast_to(mask[None], (N, HP, WP)).reshape(NP, 1)

    # conv1: (C_mid, C_in, 1, 1) -> (C_in, C_mid)
    w1m = jnp.transpose(w1.reshape(C_mid, C_in), (1, 0)).astype(mm_dtype)
    # conv2: (C_out, C_mid, 3, 3) -> (KH, KW, C_mid, C_out) -> (9*C_mid, C_out)
    w2m = jnp.transpose(w2, (2, 3, 1, 0)).reshape(KH * KW * C_mid, C_out).astype(mm_dtype)

    g1m = g1.reshape(1, C_mid).astype(jnp.float32)
    b1m = b1.reshape(1, C_mid).astype(jnp.float32)
    g2m = g2.reshape(1, C_out).astype(jnp.float32)
    b2m = b2.reshape(1, C_out).astype(jnp.float32)

    kernel = _make_resblock_kernel(N, H, W, C_mid, HP, WP, jnp.dtype(mm_dtype))

    itemsize = jnp.dtype(mm_dtype).itemsize
    flops = 2 * NP * C_in * C_mid + 2 * NV * (9 * C_mid) * C_out
    bytes_accessed = (NP * C_in * itemsize + NV * C_in * 4 + NP * 4
                      + C_in * C_mid * itemsize + 9 * C_mid * C_out * itemsize
                      + 2 * (C_mid + C_out) * 4 + NV * C_out * 4)

    out2d = pl.pallas_call(
        kernel,
        out_shape=jax.ShapeDtypeStruct((NV, C_out), jnp.float32),
        in_specs=[pl.BlockSpec(memory_space=pltpu.MemorySpace.VMEM)] * 9,
        out_specs=pl.BlockSpec(memory_space=pltpu.MemorySpace.VMEM),
        scratch_shapes=[pltpu.VMEM((N, HP, WP, C_mid), jnp.float32)],
        compiler_params=pltpu.CompilerParams(vmem_limit_bytes=32 * 1024 * 1024),
        cost_estimate=pl.CostEstimate(flops=flops,
                                      transcendentals=C_mid + C_out,
                                      bytes_accessed=bytes_accessed),
    )(xp2d, x2d, mask, w1m, w2m, g1m, b1m, g2m, b2m)

    out = out2d.reshape(N, H, W, C_out)
    return jnp.transpose(out, (0, 3, 1, 2))                               # back to NCHW


def reference_forward(x, w1, g1, b1, w2, g2, b2, *, operand_dtype=None):
    """Pure-JAX mirror of resblock4_child.forward (train-mode BatchNorm).

    operand_dtype=None      -> exact f32 module semantics.
    operand_dtype=bfloat16  -> conv operands truncated like the kernel's MXU inputs
                               (accumulation stays f32), for a tight numerical comparison.
    """
    f32 = jnp.float32

    def cast(a):
        return a if operand_dtype is None else a.astype(operand_dtype).astype(f32)

    def conv(a, w, pad):
        return lax.conv_general_dilated(cast(a), cast(w), window_strides=(1, 1), padding=pad,
                                        dimension_numbers=("NCHW", "OIHW", "NCHW"),
                                        precision=lax.Precision.HIGHEST)

    def bn_lrelu(y, g, b):
        mean = y.mean(axis=(0, 2, 3), keepdims=True)
        var = ((y - mean) ** 2).mean(axis=(0, 2, 3), keepdims=True)       # biased
        y = (y - mean) / jnp.sqrt(var + EPS)
        y = y * g.reshape(1, -1, 1, 1) + b.reshape(1, -1, 1, 1)
        return jnp.where(y >= 0, y, NEG_SLOPE * y)

    x = x.astype(f32)
    y = bn_lrelu(conv(x, w1, [(0, 0), (0, 0)]), g1, b1)
    y = bn_lrelu(conv(y, w2, [(1, 1), (1, 1)]), g2, b2)
    return x + y


if __name__ == "__main__":
    key = jax.random.PRNGKey(0)
    kx, k1, k2, k3, k4, k5, k6 = jax.random.split(key, 7)

    # resblock4_child fixes channels 512 -> 256 -> 512; keep spatial size small.
    N, C_IN, H, W = 2, 512, 8, 8
    C_MID, C_OUT = 256, 512

    x = jax.random.normal(kx, (N, C_IN, H, W), dtype=jnp.float32)
    w1 = jax.random.normal(k1, (C_MID, C_IN, 1, 1), jnp.float32) / jnp.sqrt(float(C_IN))
    w2 = jax.random.normal(k2, (C_OUT, C_MID, 3, 3), jnp.float32) / jnp.sqrt(float(C_MID * 9))
    g1 = 1.0 + 0.1 * jax.random.normal(k3, (C_MID,), jnp.float32)
    b1 = 0.1 * jax.random.normal(k4, (C_MID,), jnp.float32)
    g2 = 1.0 + 0.1 * jax.random.normal(k5, (C_OUT,), jnp.float32)
    b2 = 0.1 * jax.random.normal(k6, (C_OUT,), jnp.float32)

    out = resblock4_child_forward(x, w1, g1, b1, w2, g2, b2)
    out = jax.block_until_ready(out)
    assert out.shape == (N, C_OUT, H, W)

    # Tight check: reference with the same bf16 MXU-operand truncation (f32 accumulation).
    ref_matched = reference_forward(x, w1, g1, b1, w2, g2, b2, operand_dtype=jnp.bfloat16)
    err_m = float(jnp.max(jnp.abs(out - ref_matched)))
    assert jnp.allclose(out, ref_matched, atol=3e-3, rtol=3e-3), \
        f"max abs err vs numerics-matched ref: {err_m}"

    # Loose check: exact f32 module semantics (covers bf16 operand truncation in the kernel).
    ref_f32 = reference_forward(x, w1, g1, b1, w2, g2, b2)
    err_f = float(jnp.max(jnp.abs(out - ref_f32)))
    assert jnp.allclose(out, ref_f32, atol=5e-2, rtol=5e-2), \
        f"max abs err vs f32 ref: {err_f}"

    print("KERNEL_OK")
</pallas_src>

<mosaic_0001>
module attributes {stable_mosaic.version = 11 : i64} {
  func.func @kernel(%arg0: memref<320x512xbf16, #tpu.memory_space<vmem>>, %arg1: memref<128x512xf32, #tpu.memory_space<vmem>>, %arg2: memref<320x1xf32, #tpu.memory_space<vmem>>, %arg3: memref<512x256xbf16, #tpu.memory_space<vmem>>, %arg4: memref<2304x512xbf16, #tpu.memory_space<vmem>>, %arg5: memref<1x256xf32, #tpu.memory_space<vmem>>, %arg6: memref<1x256xf32, #tpu.memory_space<vmem>>, %arg7: memref<1x512xf32, #tpu.memory_space<vmem>>, %arg8: memref<1x512xf32, #tpu.memory_space<vmem>>, %arg9: memref<128x512xf32, #tpu.memory_space<vmem>>, %arg10: memref<2x10x16x256xf32, #tpu.memory_space<vmem>>) attributes {dimension_semantics = [], scalar_prefetch = 0 : i64, scratch_operands = 1 : i64, tpu.core_type = #tpu.core_type<tc>} {
    %c0 = arith.constant 0 : index
    %c0_0 = arith.constant 0 : index
    %0 = vector.load %arg0[%c0, %c0_0] : memref<320x512xbf16, #tpu.memory_space<vmem>>, vector<320x512xbf16>
    %c0_1 = arith.constant 0 : index
    %c0_2 = arith.constant 0 : index
    %1 = vector.load %arg3[%c0_1, %c0_2] : memref<512x256xbf16, #tpu.memory_space<vmem>>, vector<512x256xbf16>
    %cst = arith.constant dense<0.000000e+00> : vector<320x256xf32>
    %2 = tpu.matmul %0, %1, %cst {dimension_numbers = #tpu.dot_dimension_numbers<[1], [0], [0], [1], [0, 0, 1, 1], [], []>} : vector<320x512xbf16>, vector<512x256xbf16>, vector<320x256xf32> -> vector<320x256xf32>
    %cst_3 = arith.constant dense<0.000000e+00> : vector<256xf32>
    %3 = vector.multi_reduction <add>, %2, %cst_3 [0] : vector<320x256xf32> to vector<256xf32>
    %4 = vector.shape_cast %3 : vector<256xf32> to vector<1x256xf32>
    %cst_4 = arith.constant 7.812500e-03 : f32
    %5 = vector.broadcast %cst_4 : f32 to vector<1x256xf32>
    %6 = arith.mulf %4, %5 : vector<1x256xf32>
    %7 = arith.mulf %2, %2 : vector<320x256xf32>
    %cst_5 = arith.constant dense<0.000000e+00> : vector<256xf32>
    %8 = vector.multi_reduction <add>, %7, %cst_5 [0] : vector<320x256xf32> to vector<256xf32>
    %9 = vector.shape_cast %8 : vector<256xf32> to vector<1x256xf32>
    %cst_6 = arith.constant 7.812500e-03 : f32
    %10 = vector.broadcast %cst_6 : f32 to vector<1x256xf32>
    %11 = arith.mulf %9, %10 : vector<1x256xf32>
    %12 = arith.mulf %6, %6 : vector<1x256xf32>
    %13 = arith.subf %11, %12 : vector<1x256xf32>
    %cst_7 = arith.constant 0.000000e+00 : f32
    %14 = vector.broadcast %cst_7 : f32 to vector<1x256xf32>
    %15 = arith.maximumf %13, %14 : vector<1x256xf32>
    %16 = vector.broadcast %6 : vector<1x256xf32> to vector<320x256xf32>
    %17 = arith.subf %2, %16 : vector<320x256xf32>
    %cst_8 = arith.constant 9.99999974E-6 : f32
    %18 = vector.broadcast %cst_8 : f32 to vector<1x256xf32>
    %19 = arith.addf %15, %18 : vector<1x256xf32>
    %20 = math.rsqrt %19 : vector<1x256xf32>
    %21 = vector.broadcast %20 : vector<1x256xf32> to vector<320x256xf32>
    %22 = arith.mulf %17, %21 : vector<320x256xf32>
    %c0_9 = arith.constant 0 : index
    %c0_10 = arith.constant 0 : index
    %23 = vector.load %arg5[%c0_9, %c0_10] : memref<1x256xf32, #tpu.memory_space<vmem>>, vector<1x256xf32>
    %24 = vector.broadcast %23 : vector<1x256xf32> to vector<320x256xf32>
    %25 = arith.mulf %22, %24 : vector<320x256xf32>
    %c0_11 = arith.constant 0 : index
    %c0_12 = arith.constant 0 : index
    %26 = vector.load %arg6[%c0_11, %c0_12] : memref<1x256xf32, #tpu.memory_space<vmem>>, vector<1x256xf32>
    %27 = vector.broadcast %26 : vector<1x256xf32> to vector<320x256xf32>
    %28 = arith.addf %25, %27 : vector<320x256xf32>
    %cst_13 = arith.constant 1.000000e-01 : f32
    %29 = vector.broadcast %cst_13 : f32 to vector<320x256xf32>
    %30 = arith.mulf %29, %28 : vector<320x256xf32>
    %31 = arith.maximumf %28, %30 : vector<320x256xf32>
    %c0_14 = arith.constant 0 : index
    %c0_15 = arith.constant 0 : index
    %32 = vector.load %arg2[%c0_14, %c0_15] : memref<320x1xf32, #tpu.memory_space<vmem>>, vector<320x1xf32>
    %33 = vector.broadcast %32 : vector<320x1xf32> to vector<320x256xf32>
    %34 = arith.mulf %31, %33 : vector<320x256xf32>
    %35 = vector.shape_cast %34 : vector<320x256xf32> to vector<2x10x16x256xf32>
    %c0_16 = arith.constant 0 : index
    %c0_17 = arith.constant 0 : index
    %c0_18 = arith.constant 0 : index
    %c0_19 = arith.constant 0 : index
    %36 = vector.load %arg10[%c0_16, %c0_17, %c0_18, %c0_19] : memref<2x10x16x256xf32, #tpu.memory_space<vmem>>, vector<2x10x16x256xf32>
    tpu.vector_store %arg10[%c0_16, %c0_17, %c0_18, %c0_19], %35 {strides = array<i32>} : memref<2x10x16x256xf32, #tpu.memory_space<vmem>>, vector<2x10x16x256xf32>,
    %c0_20 = arith.constant 0 : index
    %c0_21 = arith.constant 0 : index
    %c0_22 = arith.constant 0 : index
    %c0_23 = arith.constant 0 : index
    %37 = vector.load %arg10[%c0_20, %c0_21, %c0_22, %c0_23] : memref<2x10x16x256xf32, #tpu.memory_space<vmem>>, vector<2x8x8x256xf32>
    %38 = vector.shape_cast %37 : vector<2x8x8x256xf32> to vector<128x256xf32>
    %c0_24 = arith.constant 0 : index
    %c0_25 = arith.constant 0 : index
    %c1 = arith.constant 1 : index
    %c0_26 = arith.constant 0 : index
    %39 = vector.load %arg10[%c0_24, %c0_25, %c1, %c0_26] : memref<2x10x16x256xf32, #tpu.memory_space<vmem>>, vector<2x8x8x256xf32>
    %40 = vector.shape_cast %39 : vector<2x8x8x256xf32> to vector<128x256xf32>
    %c0_27 = arith.constant 0 : index
    %c0_28 = arith.constant 0 : index
    %c2 = arith.constant 2 : index
    %c0_29 = arith.constant 0 : index
    %41 = vector.load %arg10[%c0_27, %c0_28, %c2, %c0_29] : memref<2x10x16x256xf32, #tpu.memory_space<vmem>>, vector<2x8x8x256xf32>
    %42 = vector.shape_cast %41 : vector<2x8x8x256xf32> to vector<128x256xf32>
    %c0_30 = arith.constant 0 : index
    %c1_31 = arith.constant 1 : index
    %c0_32 = arith.constant 0 : index
    %c0_33 = arith.constant 0 : index
    %43 = vector.load %arg10[%c0_30, %c1_31, %c0_32, %c0_33] : memref<2x10x16x256xf32, #tpu.memory_space<vmem>>, vector<2x8x8x256xf32>
    %44 = vector.shape_cast %43 : vector<2x8x8x256xf32> to vector<128x256xf32>
    %c0_34 = arith.constant 0 : index
    %c1_35 = arith.constant 1 : index
    %c1_36 = arith.constant 1 : index
    %c0_37 = arith.constant 0 : index
    %45 = vector.load %arg10[%c0_34, %c1_35, %c1_36, %c0_37] : memref<2x10x16x256xf32, #tpu.memory_space<vmem>>, vector<2x8x8x256xf32>
    %46 = vector.shape_cast %45 : vector<2x8x8x256xf32> to vector<128x256xf32>
    %c0_38 = arith.constant 0 : index
    %c1_39 = arith.constant 1 : index
    %c2_40 = arith.constant 2 : index
    %c0_41 = arith.constant 0 : index
    %47 = vector.load %arg10[%c0_38, %c1_39, %c2_40, %c0_41] : memref<2x10x16x256xf32, #tpu.memory_space<vmem>>, vector<2x8x8x256xf32>
    %48 = vector.shape_cast %47 : vector<2x8x8x256xf32> to vector<128x256xf32>
    %c0_42 = arith.constant 0 : index
    %c2_43 = arith.constant 2 : index
    %c0_44 = arith.constant 0 : index
    %c0_45 = arith.constant 0 : index
    %49 = vector.load %arg10[%c0_42, %c2_43, %c0_44, %c0_45] : memref<2x10x16x256xf32, #tpu.memory_space<vmem>>, vector<2x8x8x256xf32>
    %50 = vector.shape_cast %49 : vector<2x8x8x256xf32> to vector<128x256xf32>
    %c0_46 = arith.constant 0 : index
    %c2_47 = arith.constant 2 : index
    %c1_48 = arith.constant 1 : index
    %c0_49 = arith.constant 0 : index
    %51 = vector.load %arg10[%c0_46, %c2_47, %c1_48, %c0_49] : memref<2x10x16x256xf32, #tpu.memory_space<vmem>>, vector<2x8x8x256xf32>
    %52 = vector.shape_cast %51 : vector<2x8x8x256xf32> to vector<128x256xf32>
    %c0_50 = arith.constant 0 : index
    %c2_51 = arith.constant 2 : index
    %c2_52 = arith.constant 2 : index
    %c0_53 = arith.constant 0 : index
    %53 = vector.load %arg10[%c0_50, %c2_51, %c2_52, %c0_53] : memref<2x10x16x256xf32, #tpu.memory_space<vmem>>, vector<2x8x8x256xf32>
    %54 = vector.shape_cast %53 : vector<2x8x8x256xf32> to vector<128x256xf32>
    %55 = tpu.concatenate %38, %40, %42, %44, %46, %48, %50, %52, %54 in 1 : vector<128x256xf32>, vector<128x256xf32>, vector<128x256xf32>, vector<128x256xf32>, vector<128x256xf32>, vector<128x256xf32>, vector<128x256xf32>, vector<128x256xf32>, vector<128x256xf32> -> vector<128x2304xf32>
    %56 = arith.truncf %55 : vector<128x2304xf32> to vector<128x2304xbf16>
    %c0_54 = arith.constant 0 : index
    %c0_55 = arith.constant 0 : index
    %57 = vector.load %arg4[%c0_54, %c0_55] : memref<2304x512xbf16, #tpu.memory_space<vmem>>, vector<2304x512xbf16>
    %cst_56 = arith.constant dense<0.000000e+00> : vector<128x512xf32>
    %58 = tpu.matmul %56, %57, %cst_56 {dimension_numbers = #tpu.dot_dimension_numbers<[1], [0], [0], [1], [0, 0, 1, 1], [], []>} : vector<128x2304xbf16>, vector<2304x512xbf16>, vector<128x512xf32> -> vector<128x512xf32>
    %cst_57 = arith.constant dense<0.000000e+00> : vector<512xf32>
    %59 = vector.multi_reduction <add>, %58, %cst_57 [0] : vector<128x512xf32> to vector<512xf32>
    %60 = vector.shape_cast %59 : vector<512xf32> to vector<1x512xf32>
    %cst_58 = arith.constant 7.812500e-03 : f32
    %61 = vector.broadcast %cst_58 : f32 to vector<1x512xf32>
    %62 = arith.mulf %60, %61 : vector<1x512xf32>
    %63 = arith.mulf %58, %58 : vector<128x512xf32>
    %cst_59 = arith.constant dense<0.000000e+00> : vector<512xf32>
    %64 = vector.multi_reduction <add>, %63, %cst_59 [0] : vector<128x512xf32> to vector<512xf32>
    %65 = vector.shape_cast %64 : vector<512xf32> to vector<1x512xf32>
    %cst_60 = arith.constant 7.812500e-03 : f32
    %66 = vector.broadcast %cst_60 : f32 to vector<1x512xf32>
    %67 = arith.mulf %65, %66 : vector<1x512xf32>
    %68 = arith.mulf %62, %62 : vector<1x512xf32>
    %69 = arith.subf %67, %68 : vector<1x512xf32>
    %cst_61 = arith.constant 0.000000e+00 : f32
    %70 = vector.broadcast %cst_61 : f32 to vector<1x512xf32>
    %71 = arith.maximumf %69, %70 : vector<1x512xf32>
    %72 = vector.broadcast %62 : vector<1x512xf32> to vector<128x512xf32>
    %73 = arith.subf %58, %72 : vector<128x512xf32>
    %cst_62 = arith.constant 9.99999974E-6 : f32
    %74 = vector.broadcast %cst_62 : f32 to vector<1x512xf32>
    %75 = arith.addf %71, %74 : vector<1x512xf32>
    %76 = math.rsqrt %75 : vector<1x512xf32>
    %77 = vector.broadcast %76 : vector<1x512xf32> to vector<128x512xf32>
    %78 = arith.mulf %73, %77 : vector<128x512xf32>
    %c0_63 = arith.constant 0 : index
    %c0_64 = arith.constant 0 : index
    %79 = vector.load %arg7[%c0_63, %c0_64] : memref<1x512xf32, #tpu.memory_space<vmem>>, vector<1x512xf32>
    %80 = vector.broadcast %79 : vector<1x512xf32> to vector<128x512xf32>
    %81 = arith.mulf %78, %80 : vector<128x512xf32>
    %c0_65 = arith.constant 0 : index
    %c0_66 = arith.constant 0 : index
    %82 = vector.load %arg8[%c0_65, %c0_66] : memref<1x512xf32, #tpu.memory_space<vmem>>, vector<1x512xf32>
    %83 = vector.broadcast %82 : vector<1x512xf32> to vector<128x512xf32>
    %84 = arith.addf %81, %83 : vector<128x512xf32>
    %cst_67 = arith.constant 1.000000e-01 : f32
    %85 = vector.broadcast %cst_67 : f32 to vector<128x512xf32>
    %86 = arith.mulf %85, %84 : vector<128x512xf32>
    %87 = arith.maximumf %84, %86 : vector<128x512xf32>
    %c0_68 = arith.constant 0 : index
    %c0_69 = arith.constant 0 : index
    %88 = vector.load %arg1[%c0_68, %c0_69] : memref<128x512xf32, #tpu.memory_space<vmem>>, vector<128x512xf32>
    %89 = arith.addf %88, %87 : vector<128x512xf32>
    %c0_70 = arith.constant 0 : index
    %c0_71 = arith.constant 0 : index
    %90 = vector.load %arg9[%c0_70, %c0_71] : memref<128x512xf32, #tpu.memory_space<vmem>>, vector<128x512xf32>
    tpu.vector_store %arg9[%c0_70, %c0_71], %89 {strides = array<i32>} : memref<128x512xf32, #tpu.memory_space<vmem>>, vector<128x512xf32>,
    return
  }
}

</mosaic_0001>

<llo_original>
// kernel: tpu_custom_call.1
$region0: #{tpu_custom_call.1}
  #allocation0 [shape = 'u32[]', space=smem, size = 0x4, offset = 0x4, fixed_abs, tag = 'smem constant byte address 0x4 - core index']
  #allocation1 [shape = 'u32[144,128]{1,0:T(1,128)}', space=vmem, size = 0x12000, scoped, tag = 'internal scratch']
  #allocation2 [shape = 'f32[2,10,16,256]{3,2,1,0:T(8,128)}', space=vmem, size = 0x50000, scoped, tag = 'scratch operand']
  %s0 = inlined_call_operand.hbm [shape: bf16[320,512], index: 0, kind: input, shape index: {}]
  %s1 = inlined_call_operand.hbm [shape: f32[128,512], index: 1, kind: input, shape index: {}]
  %s2 = inlined_call_operand.vmem [shape: f32[320,1], index: 2, kind: input, shape index: {}]
  %s3 = inlined_call_operand.hbm [shape: bf16[512,256], index: 3, kind: input, shape index: {}]
  %s4 = inlined_call_operand.hbm [shape: bf16[2304,512], index: 4, kind: input, shape index: {}]
  %s5 = inlined_call_operand.hbm [shape: f32[1,256], index: 5, kind: input, shape index: {}]
  %s6 = inlined_call_operand.hbm [shape: f32[1,256], index: 6, kind: input, shape index: {}]
  %s7 = inlined_call_operand.hbm [shape: f32[1,512], index: 7, kind: input, shape index: {}]
  %s8 = inlined_call_operand.hbm [shape: f32[1,512], index: 8, kind: input, shape index: {}]
  %s9 = inlined_call_operand.hbm [shape: f32[128,512], index: 9, kind: output, shape index: {}]
  %s10 = sld [smem:[#allocation0]]
  $region78: #{tpu_custom_call.1} parent=0
    _
  %s12 = ssub.s32 1, %s10
  %s13 = scalar_select 0, %s12, %s10
  $region1: #{tpu_custom_call.1} parent=0
    #allocation3 [shape = 'u8[327680]{0}', space=vmem, size = 0x50000, scoped, tag = 'input window, operand 0, single buffered']
    #allocation4 [shape = 's32[1]{0}', space=sflag, size = 0x4, scoped, tag = 'scoped memory for tpu_custom_call.1']
    #allocation5 [shape = 's32[1]{0}', space=sflag, size = 0x4, scoped, tag = 'scoped memory for tpu_custom_call.1']
    #allocation6 [shape = 'u8[262144]{0}', space=vmem, size = 0x40000, scoped, tag = 'input window, operand 1, single buffered']
    #allocation7 [shape = 's32[1]{0}', space=sflag, size = 0x4, scoped, tag = 'scoped memory for tpu_custom_call.1']
    #allocation8 [shape = 'u8[262144]{0}', space=vmem, size = 0x40000, scoped, tag = 'input window, operand 3, single buffered']
    #allocation9 [shape = 'u8[2359296]{0}', space=vmem, size = 0x240000, scoped, tag = 'input window, operand 4, single buffered']
    #allocation10 [shape = 's32[1]{0}', space=sflag, size = 0x4, scoped, tag = 'scoped memory for tpu_custom_call.1']
    #allocation11 [shape = 'u8[1024]{0}', space=vmem, size = 0x400, scoped, tag = 'input window, operand 5, single buffered']
    #allocation12 [shape = 'u8[1024]{0}', space=vmem, size = 0x400, scoped, tag = 'input window, operand 6, single buffered']
    #allocation13 [shape = 's32[1]{0}', space=sflag, size = 0x4, scoped, tag = 'scoped memory for tpu_custom_call.1']
    #allocation14 [shape = 'u8[2048]{0}', space=vmem, size = 0x800, scoped, tag = 'input window, operand 7, single buffered']
    #allocation15 [shape = 'u8[2048]{0}', space=vmem, size = 0x800, scoped, tag = 'input window, operand 8, single buffered']
    #allocation16 [shape = 's32[1]{0}', space=sflag, size = 0x4, scoped, tag = 'scoped memory for tpu_custom_call.1']
    #allocation17 [shape = 'u8[262144]{0}', space=vmem, size = 0x40000, scoped, tag = 'output window, operand 0, single buffered']
    %14 = vsyncpa [#allocation4], 0
    %15 = vsyncpa [#allocation7], 0
    %16 = vsyncpa [#allocation10], 0
    %17 = vsyncpa [#allocation13], 0
    %18 = vsyncpa [#allocation16], 0
    %19 = vsyncpa [#allocation5], 0
    // Predicated region
    $region2: #{tpu_custom_call.1} parent=1 // pred_check
      _
    $region3: #{tpu_custom_call.1} parent=1 // pred_check_branch
      %21 = sbr.rel (0) target = $region5
    $region4: #{tpu_custom_call.1} parent=1 // pred_region
      %s23 = ssub.s32 10240, 10240
      %24 = vsyncadd [#allocation4], %s23
      %s25 = sshll.u32 [#allocation3], 4
      %s26 = int_to_ptr.vmem [resolvable:$true] %s25
      %31 = dma.hbm_to_vmem [thread:$0]  %s0, 10240, %s26, [#allocation4], 256, 256, 16
    $region5: #{tpu_custom_call.1} parent=1 // pred_fallthru
      _
    // Predicated region
    $region6: #{tpu_custom_call.1} parent=1 // pred_check
      _
    $region7: #{tpu_custom_call.1} parent=1 // pred_check_branch
      %33 = sbr.rel (0) target = $region9
    $region8: #{tpu_custom_call.1} parent=1 // pred_region
      %s35 = ssub.s32 8192, 8192
      %36 = vsyncadd [#allocation7], %s35
      %s37 = sshll.u32 [#allocation6], 4
      %s38 = int_to_ptr.vmem [resolvable:$true] %s37
      %43 = dma.hbm_to_vmem [thread:$0]  %s1, 8192, %s38, [#allocation7], 512, 512, 32
    $region9: #{tpu_custom_call.1} parent=1 // pred_fallthru
      _
    // Predicated region
    $region10: #{tpu_custom_call.1} parent=1 // pred_check
      _
    $region11: #{tpu_custom_call.1} parent=1 // pred_check_branch
      %45 = sbr.rel (0) target = $region13
    $region12: #{tpu_custom_call.1} parent=1 // pred_region
      _
    $region13: #{tpu_custom_call.1} parent=1 // pred_fallthru
      _
    // Predicated region
    $region14: #{tpu_custom_call.1} parent=1 // pred_check
      _
    $region15: #{tpu_custom_call.1} parent=1 // pred_check_branch
      %47 = sbr.rel (0) target = $region17
    $region16: #{tpu_custom_call.1} parent=1 // pred_region
      %s49 = ssub.s32 8192, 8192
      %50 = vsyncadd [#allocation7], %s49
      %s51 = sshll.u32 [#allocation8], 4
      %s52 = int_to_ptr.vmem [resolvable:$true] %s51
      %57 = dma.hbm_to_vmem [thread:$0]  %s3, 8192, %s52, [#allocation7], 128, 128, 8
    $region17: #{tpu_custom_call.1} parent=1 // pred_fallthru
      _
    // Predicated region
    $region18: #{tpu_custom_call.1} parent=1 // pred_check
      _
    $region19: #{tpu_custom_call.1} parent=1 // pred_check_branch
      %59 = sbr.rel (0) target = $region21
    $region20: #{tpu_custom_call.1} parent=1 // pred_region
      %s61 = ssub.s32 73728, 73728
      %62 = vsyncadd [#allocation10], %s61
      %s63 = sshll.u32 [#allocation9], 4
      %s64 = int_to_ptr.vmem [resolvable:$true] %s63
      %69 = dma.hbm_to_vmem [thread:$0]  %s4, 73728, %s64, [#allocation10], 256, 256, 16
    $region21: #{tpu_custom_call.1} parent=1 // pred_fallthru
      _
    // Predicated region
    $region22: #{tpu_custom_call.1} parent=1 // pred_check
      _
    $region23: #{tpu_custom_call.1} parent=1 // pred_check_branch
      %71 = sbr.rel (0) target = $region25
    $region24: #{tpu_custom_call.1} parent=1 // pred_region
      %s73 = ssub.s32 32, 32
      %74 = vsyncadd [#allocation10], %s73
      %s76 = sshll.u32 [#allocation11], 4
      %s77 = int_to_ptr.vmem [resolvable:$true] %s76
      %79 = dma.hbm_to_vmem [thread:$0]  %s5, 32, %s77, [#allocation10]
    $region25: #{tpu_custom_call.1} parent=1 // pred_fallthru
      _
    // Predicated region
    $region26: #{tpu_custom_call.1} parent=1 // pred_check
      _
    $region27: #{tpu_custom_call.1} parent=1 // pred_check_branch
      %81 = sbr.rel (0) target = $region29
    $region28: #{tpu_custom_call.1} parent=1 // pred_region
      %s83 = ssub.s32 32, 32
      %84 = vsyncadd [#allocation13], %s83
      %s86 = sshll.u32 [#allocation12], 4
      %s87 = int_to_ptr.vmem [resolvable:$true] %s86
      %89 = dma.hbm_to_vmem [thread:$0]  %s6, 32, %s87, [#allocation13]
    $region29: #{tpu_custom_call.1} parent=1 // pred_fallthru
      _
    // Predicated region
    $region30: #{tpu_custom_call.1} parent=1 // pred_check
      _
    $region31: #{tpu_custom_call.1} parent=1 // pred_check_branch
      %91 = sbr.rel (0) target = $region33
    $region32: #{tpu_custom_call.1} parent=1 // pred_region
      %s93 = ssub.s32 64, 64
      %94 = vsyncadd [#allocation13], %s93
      %s96 = sshll.u32 [#allocation14], 4
      %s97 = int_to_ptr.vmem [resolvable:$true] %s96
      %99 = dma.hbm_to_vmem [thread:$0]  %s7, 64, %s97, [#allocation13]
    $region33: #{tpu_custom_call.1} parent=1 // pred_fallthru
      _
    // Predicated region
    $region34: #{tpu_custom_call.1} parent=1 // pred_check
      _
    $region35: #{tpu_custom_call.1} parent=1 // pred_check_branch
      %101 = sbr.rel (0) target = $region37
    $region36: #{tpu_custom_call.1} parent=1 // pred_region
      %s103 = ssub.s32 64, 64
      %104 = vsyncadd [#allocation16], %s103
      %s106 = sshll.u32 [#allocation15], 4
      %s107 = int_to_ptr.vmem [resolvable:$true] %s106
      %109 = dma.hbm_to_vmem [thread:$0]  %s8, 64, %s107, [#allocation16]
    $region37: #{tpu_custom_call.1} parent=1 // pred_fallthru
      _
    // Predicated region
    $region38: #{tpu_custom_call.1} parent=1 // pred_check
      _
    $region39: #{tpu_custom_call.1} parent=1 // pred_check_branch
      %111 = sbr.rel (0) target = $region41
    $region40: #{tpu_custom_call.1} parent=1 // pred_region
      %112 = dma.done [#allocation4], 10240
    $region41: #{tpu_custom_call.1} parent=1 // pred_fallthru
      _
    // Predicated region
    $region42: #{tpu_custom_call.1} parent=1 // pred_check
      _
    $region43: #{tpu_custom_call.1} parent=1 // pred_check_branch
      %114 = sbr.rel (0) target = $region45
    $region44: #{tpu_custom_call.1} parent=1 // pred_region
      %115 = dma.done [#allocation7], 8192
    $region45: #{tpu_custom_call.1} parent=1 // pred_fallthru
      _
    // Predicated region
    $region46: #{tpu_custom_call.1} parent=1 // pred_check
      _
    $region47: #{tpu_custom_call.1} parent=1 // pred_check_branch
      %117 = sbr.rel (0) target = $region49
    $region48: #{tpu_custom_call.1} parent=1 // pred_region
      %118 = dma.done [#allocation7], 8192
    $region49: #{tpu_custom_call.1} parent=1 // pred_fallthru
      _
    // Predicated region
    $region50: #{tpu_custom_call.1} parent=1 // pred_check
      _
    $region51: #{tpu_custom_call.1} parent=1 // pred_check_branch
      %120 = sbr.rel (0) target = $region53
    $region52: #{tpu_custom_call.1} parent=1 // pred_region
      %121 = dma.done [#allocation10], 73728
    $region53: #{tpu_custom_call.1} parent=1 // pred_fallthru
      _
    // Predicated region
    $region54: #{tpu_custom_call.1} parent=1 // pred_check
      _
    $region55: #{tpu_custom_call.1} parent=1 // pred_check_branch
      %123 = sbr.rel (0) target = $region57
    $region56: #{tpu_custom_call.1} parent=1 // pred_region
      %124 = dma.done [#allocation10], 32
    $region57: #{tpu_custom_call.1} parent=1 // pred_fallthru
      _
    // Predicated region
    $region58: #{tpu_custom_call.1} parent=1 // pred_check
      _
    $region59: #{tpu_custom_call.1} parent=1 // pred_check_branch
      %126 = sbr.rel (0) target = $region61
    $region60: #{tpu_custom_call.1} parent=1 // pred_region
      %127 = dma.done [#allocation13], 32
    $region61: #{tpu_custom_call.1} parent=1 // pred_fallthru
      _
    // Predicated region
    $region62: #{tpu_custom_call.1} parent=1 // pred_check
      _
    $region63: #{tpu_custom_call.1} parent=1 // pred_check_branch
      %129 = sbr.rel (0) target = $region65
    $region64: #{tpu_custom_call.1} parent=1 // pred_region
      %130 = dma.done [#allocation13], 64
    $region65: #{tpu_custom_call.1} parent=1 // pred_fallthru
      _
    // Predicated region
    $region66: #{tpu_custom_call.1} parent=1 // pred_check
      _
    $region67: #{tpu_custom_call.1} parent=1 // pred_check_branch
      %132 = sbr.rel (0) target = $region69
    $region68: #{tpu_custom_call.1} parent=1 // pred_region
      %133 = dma.done [#allocation16], 64
    $region69: #{tpu_custom_call.1} parent=1 // pred_fallthru
      _
    %v134 = vld [vmem:[#allocation3] sm:$0xff]
    %v135 = vld [vmem:[#allocation3 + $0x8] sm:$0xff]
    %v136 = vld [vmem:[#allocation3 + $0x10] sm:$0xff]
    %v137 = vld [vmem:[#allocation3 + $0x18] sm:$0xff]
    %v138 = vld [vmem:[#allocation3 + $0x20] sm:$0xff]
    %v139 = vld [vmem:[#allocation3 + $0x28] sm:$0xff]
    %v140 = vld [vmem:[#allocation3 + $0x30] sm:$0xff]
    %v141 = vld [vmem:[#allocation3 + $0x38] sm:$0xff]
    %v142 = vld [vmem:[#allocation3 + $0x40] sm:$0xff]
    %v143 = vld [vmem:[#allocation3 + $0x48] sm:$0xff]
    %v144 = vld [vmem:[#allocation3 + $0x50] sm:$0xff]
    %v145 = vld [vmem:[#allocation3 + $0x58] sm:$0xff]
    %v146 = vld [vmem:[#allocation3 + $0x60] sm:$0xff]
    %v147 = vld [vmem:[#allocation3 + $0x68] sm:$0xff]
    %v148 = vld [vmem:[#allocation3 + $0x70] sm:$0xff]
    %v149 = vld [vmem:[#allocation3 + $0x78] sm:$0xff]
    %v150 = vld [vmem:[#allocation3 + $0x80] sm:$0xff]
    %v151 = vld [vmem:[#allocation3 + $0x88] sm:$0xff]
    %v152 = vld [vmem:[#allocation3 + $0x90] sm:$0xff]
    %v153 = vld [vmem:[#allocation3 + $0x98] sm:$0xff]
    %v154 = vld [vmem:[#allocation3 + $0xa0] sm:$0xff]
    %v155 = vld [vmem:[#allocation3 + $0xa8] sm:$0xff]
    %v156 = vld [vmem:[#allocation3 + $0xb0] sm:$0xff]
    %v157 = vld [vmem:[#allocation3 + $0xb8] sm:$0xff]
    %v158 = vld [vmem:[#allocation3 + $0xc0] sm:$0xff]
    %v159 = vld [vmem:[#allocation3 + $0xc8] sm:$0xff]
    %v160 = vld [vmem:[#allocation3 + $0xd0] sm:$0xff]
    %v161 = vld [vmem:[#allocation3 + $0xd8] sm:$0xff]
    %v162 = vld [vmem:[#allocation3 + $0xe0] sm:$0xff]
    %v163 = vld [vmem:[#allocation3 + $0xe8] sm:$0xff]
    %v164 = vld [vmem:[#allocation3 + $0xf0] sm:$0xff]
    %v165 = vld [vmem:[#allocation3 + $0xf8] sm:$0xff]
    %v166 = vld [vmem:[#allocation3 + $0x100] sm:$0xff]
    %v167 = vld [vmem:[#allocation3 + $0x108] sm:$0xff]
    %v168 = vld [vmem:[#allocation3 + $0x110] sm:$0xff]
    %v169 = vld [vmem:[#allocation3 + $0x118] sm:$0xff]
    %v170 = vld [vmem:[#allocation3 + $0x120] sm:$0xff]
    %v171 = vld [vmem:[#allocation3 + $0x128] sm:$0xff]
    %v172 = vld [vmem:[#allocation3 + $0x130] sm:$0xff]
    %v173 = vld [vmem:[#allocation3 + $0x138] sm:$0xff]
    %v174 = vld [vmem:[#allocation3 + $0x140] sm:$0xff]
    %v175 = vld [vmem:[#allocation3 + $0x148] sm:$0xff]
    %v176 = vld [vmem:[#allocation3 + $0x150] sm:$0xff]
    %v177 = vld [vmem:[#allocation3 + $0x158] sm:$0xff]
    %v178 = vld [vmem:[#allocation3 + $0x160] sm:$0xff]
    %v179 = vld [vmem:[#allocation3 + $0x168] sm:$0xff]
    %v180 = vld [vmem:[#allocation3 + $0x170] sm:$0xff]
    %v181 = vld [vmem:[#allocation3 + $0x178] sm:$0xff]
    %v182 = vld [vmem:[#allocation3 + $0x180] sm:$0xff]
    %v183 = vld [vmem:[#allocation3 + $0x188] sm:$0xff]
    %v184 = vld [vmem:[#allocation3 + $0x190] sm:$0xff]
    %v185 = vld [vmem:[#allocation3 + $0x198] sm:$0xff]
    %v186 = vld [vmem:[#allocation3 + $0x1a0] sm:$0xff]
    %v187 = vld [vmem:[#allocation3 + $0x1a8] sm:$0xff]
    %v188 = vld [vmem:[#allocation3 + $0x1b0] sm:$0xff]
    %v189 = vld [vmem:[#allocation3 + $0x1b8] sm:$0xff]
    %v190 = vld [vmem:[#allocation3 + $0x1c0] sm:$0xff]
    %v191 = vld [vmem:[#allocation3 + $0x1c8] sm:$0xff]
    %v192 = vld [vmem:[#allocation3 + $0x1d0] sm:$0xff]
    %v193 = vld [vmem:[#allocation3 + $0x1d8] sm:$0xff]
    %v194 = vld [vmem:[#allocation3 + $0x1e0] sm:$0xff]
    %v195 = vld [vmem:[#allocation3 + $0x1e8] sm:$0xff]
    %v196 = vld [vmem:[#allocation3 + $0x1f0] sm:$0xff]
    %v197 = vld [vmem:[#allocation3 + $0x1f8] sm:$0xff]
    %v198 = vld [vmem:[#allocation3 + $0x200] sm:$0xff]
    %v199 = vld [vmem:[#allocation3 + $0x208] sm:$0xff]
    %v200 = vld [vmem:[#allocation3 + $0x210] sm:$0xff]
    %v201 = vld [vmem:[#allocation3 + $0x218] sm:$0xff]
    %v202 = vld [vmem:[#allocation3 + $0x220] sm:$0xff]
    %v203 = vld [vmem:[#allocation3 + $0x228] sm:$0xff]
    %v204 = vld [vmem:[#allocation3 + $0x230] sm:$0xff]
    %v205 = vld [vmem:[#allocation3 + $0x238] sm:$0xff]
    %v206 = vld [vmem:[#allocation3 + $0x240] sm:$0xff]
    %v207 = vld [vmem:[#allocation3 + $0x248] sm:$0xff]
    %v208 = vld [vmem:[#allocation3 + $0x250] sm:$0xff]
    %v209 = vld [vmem:[#allocation3 + $0x258] sm:$0xff]
    %v210 = vld [vmem:[#allocation3 + $0x260] sm:$0xff]
    %v211 = vld [vmem:[#allocation3 + $0x268] sm:$0xff]
    %v212 = vld [vmem:[#allocation3 + $0x270] sm:$0xff]
    %v213 = vld [vmem:[#allocation3 + $0x278] sm:$0xff]
    %v214 = vld [vmem:[#allocation8] sm:$0xff]
    %v215 = vld [vmem:[#allocation8 + $0x8] sm:$0xff]
    %v216 = vld [vmem:[#allocation8 + $0x10] sm:$0xff]
    %v217 = vld [vmem:[#allocation8 + $0x18] sm:$0xff]
    %v218 = vld [vmem:[#allocation8 + $0x20] sm:$0xff]
    %v219 = vld [vmem:[#allocation8 + $0x28] sm:$0xff]
    %v220 = vld [vmem:[#allocation8 + $0x30] sm:$0xff]
    %v221 = vld [vmem:[#allocation8 + $0x38] sm:$0xff]
    %v222 = vld [vmem:[#allocation8 + $0x40] sm:$0xff]
    %v223 = vld [vmem:[#allocation8 + $0x48] sm:$0xff]
    %v224 = vld [vmem:[#allocation8 + $0x50] sm:$0xff]
    %v225 = vld [vmem:[#allocation8 + $0x58] sm:$0xff]
    %v226 = vld [vmem:[#allocation8 + $0x60] sm:$0xff]
    %v227 = vld [vmem:[#allocation8 + $0x68] sm:$0xff]
    %v228 = vld [vmem:[#allocation8 + $0x70] sm:$0xff]
    %v229 = vld [vmem:[#allocation8 + $0x78] sm:$0xff]
    %v230 = vld [vmem:[#allocation8 + $0x80] sm:$0xff]
    %v231 = vld [vmem:[#allocation8 + $0x88] sm:$0xff]
    %v232 = vld [vmem:[#allocation8 + $0x90] sm:$0xff]
    %v233 = vld [vmem:[#allocation8 + $0x98] sm:$0xff]
    %v234 = vld [vmem:[#allocation8 + $0xa0] sm:$0xff]
    %v235 = vld [vmem:[#allocation8 + $0xa8] sm:$0xff]
    %v236 = vld [vmem:[#allocation8 + $0xb0] sm:$0xff]
    %v237 = vld [vmem:[#allocation8 + $0xb8] sm:$0xff]
    %v238 = vld [vmem:[#allocation8 + $0xc0] sm:$0xff]
    %v239 = vld [vmem:[#allocation8 + $0xc8] sm:$0xff]
    %v240 = vld [vmem:[#allocation8 + $0xd0] sm:$0xff]
    %v241 = vld [vmem:[#allocation8 + $0xd8] sm:$0xff]
    %v242 = vld [vmem:[#allocation8 + $0xe0] sm:$0xff]
    %v243 = vld [vmem:[#allocation8 + $0xe8] sm:$0xff]
    %v244 = vld [vmem:[#allocation8 + $0xf0] sm:$0xff]
    %v245 = vld [vmem:[#allocation8 + $0xf8] sm:$0xff]
    %v246 = vld [vmem:[#allocation8 + $0x100] sm:$0xff]
    %v247 = vld [vmem:[#allocation8 + $0x108] sm:$0xff]
    %v248 = vld [vmem:[#allocation8 + $0x110] sm:$0xff]
    %v249 = vld [vmem:[#allocation8 + $0x118] sm:$0xff]
    %v250 = vld [vmem:[#allocation8 + $0x120] sm:$0xff]
    %v251 = vld [vmem:[#allocation8 + $0x128] sm:$0xff]
    %v252 = vld [vmem:[#allocation8 + $0x130] sm:$0xff]
    %v253 = vld [vmem:[#allocation8 + $0x138] sm:$0xff]
    %v254 = vld [vmem:[#allocation8 + $0x140] sm:$0xff]
    %v255 = vld [vmem:[#allocation8 + $0x148] sm:$0xff]
    %v256 = vld [vmem:[#allocation8 + $0x150] sm:$0xff]
    %v257 = vld [vmem:[#allocation8 + $0x158] sm:$0xff]
    %v258 = vld [vmem:[#allocation8 + $0x160] sm:$0xff]
    %v259 = vld [vmem:[#allocation8 + $0x168] sm:$0xff]
    %v260 = vld [vmem:[#allocation8 + $0x170] sm:$0xff]
    %v261 = vld [vmem:[#allocation8 + $0x178] sm:$0xff]
    %v262 = vld [vmem:[#allocation8 + $0x180] sm:$0xff]
    %v263 = vld [vmem:[#allocation8 + $0x188] sm:$0xff]
    %v264 = vld [vmem:[#allocation8 + $0x190] sm:$0xff]
    %v265 = vld [vmem:[#allocation8 + $0x198] sm:$0xff]
    %v266 = vld [vmem:[#allocation8 + $0x1a0] sm:$0xff]
    %v267 = vld [vmem:[#allocation8 + $0x1a8] sm:$0xff]
    %v268 = vld [vmem:[#allocation8 + $0x1b0] sm:$0xff]
    %v269 = vld [vmem:[#allocation8 + $0x1b8] sm:$0xff]
    %v270 = vld [vmem:[#allocation8 + $0x1c0] sm:$0xff]
    %v271 = vld [vmem:[#allocation8 + $0x1c8] sm:$0xff]
    %v272 = vld [vmem:[#allocation8 + $0x1d0] sm:$0xff]
    %v273 = vld [vmem:[#allocation8 + $0x1d8] sm:$0xff]
    %v274 = vld [vmem:[#allocation8 + $0x1e0] sm:$0xff]
    %v275 = vld [vmem:[#allocation8 + $0x1e8] sm:$0xff]
    %v276 = vld [vmem:[#allocation8 + $0x1f0] sm:$0xff]
    %v277 = vld [vmem:[#allocation8 + $0x1f8] sm:$0xff]
    %v358 = vunpack.c.l.b16 %v134
    %v359 = vunpack.c.h.b16 %v134
    %v360 = vunpack.c.l.b16 %v135
    %v361 = vunpack.c.h.b16 %v135
    %v362 = vunpack.c.l.b16 %v136
    %v363 = vunpack.c.h.b16 %v136
    %v364 = vunpack.c.l.b16 %v137
    %v365 = vunpack.c.h.b16 %v137
    %v366 = vunpack.c.l.b16 %v138
    %v367 = vunpack.c.h.b16 %v138
    %v368 = vunpack.c.l.b16 %v139
    %v369 = vunpack.c.h.b16 %v139
    %v370 = vunpack.c.l.b16 %v140
    %v371 = vunpack.c.h.b16 %v140
    %v372 = vunpack.c.l.b16 %v141
    %v373 = vunpack.c.h.b16 %v141
    %v374 = vunpack.c.l.b16 %v142
    %v375 = vunpack.c.h.b16 %v142
    %v376 = vunpack.c.l.b16 %v143
    %v377 = vunpack.c.h.b16 %v143
    %v378 = vunpack.c.l.b16 %v144
    %v379 = vunpack.c.h.b16 %v144
    %v380 = vunpack.c.l.b16 %v145
    %v381 = vunpack.c.h.b16 %v145
    %v382 = vunpack.c.l.b16 %v146
    %v383 = vunpack.c.h.b16 %v146
    %v384 = vunpack.c.l.b16 %v147
    %v385 = vunpack.c.h.b16 %v147
    %v386 = vunpack.c.l.b16 %v148
    %v387 = vunpack.c.h.b16 %v148
    %v388 = vunpack.c.l.b16 %v149
    %v389 = vunpack.c.h.b16 %v149
    %v390 = vunpack.c.l.b16 %v150
    %v391 = vunpack.c.h.b16 %v150
    %v392 = vunpack.c.l.b16 %v151
    %v393 = vunpack.c.h.b16 %v151
    %v394 = vunpack.c.l.b16 %v152
    %v395 = vunpack.c.h.b16 %v152
    %v396 = vunpack.c.l.b16 %v153
    %v397 = vunpack.c.h.b16 %v153
    %v398 = vunpack.c.l.b16 %v154
    %v399 = vunpack.c.h.b16 %v154
    %v400 = vunpack.c.l.b16 %v155
    %v401 = vunpack.c.h.b16 %v155
    %v402 = vunpack.c.l.b16 %v156
    %v403 = vunpack.c.h.b16 %v156
    %v404 = vunpack.c.l.b16 %v157
    %v405 = vunpack.c.h.b16 %v157
    %v406 = vunpack.c.l.b16 %v158
    %v407 = vunpack.c.h.b16 %v158
    %v408 = vunpack.c.l.b16 %v159
    %v409 = vunpack.c.h.b16 %v159
    %v410 = vunpack.c.l.b16 %v160
    %v411 = vunpack.c.h.b16 %v160
    %v412 = vunpack.c.l.b16 %v161
    %v413 = vunpack.c.h.b16 %v161
    %v414 = vunpack.c.l.b16 %v162
    %v415 = vunpack.c.h.b16 %v162
    %v416 = vunpack.c.l.b16 %v163
    %v417 = vunpack.c.h.b16 %v163
    %v418 = vunpack.c.l.b16 %v164
    %v419 = vunpack.c.h.b16 %v164
    %v420 = vunpack.c.l.b16 %v165
    %v421 = vunpack.c.h.b16 %v165
    %v422 = vunpack.c.l.b16 %v166
    %v423 = vunpack.c.h.b16 %v166
    %v424 = vunpack.c.l.b16 %v167
    %v425 = vunpack.c.h.b16 %v167
    %v426 = vunpack.c.l.b16 %v168
    %v427 = vunpack.c.h.b16 %v168
    %v428 = vunpack.c.l.b16 %v169
    %v429 = vunpack.c.h.b16 %v169
    %v430 = vunpack.c.l.b16 %v170
    %v431 = vunpack.c.h.b16 %v170
    %v432 = vunpack.c.l.b16 %v171
    %v433 = vunpack.c.h.b16 %v171
    %v434 = vunpack.c.l.b16 %v172
    %v435 = vunpack.c.h.b16 %v172
    %v436 = vunpack.c.l.b16 %v173
    %v437 = vunpack.c.h.b16 %v173
    %v438 = vunpack.c.l.b16 %v174
    %v439 = vunpack.c.h.b16 %v174
    %v440 = vunpack.c.l.b16 %v175
    %v441 = vunpack.c.h.b16 %v175
    %v442 = vunpack.c.l.b16 %v176
    %v443 = vunpack.c.h.b16 %v176
    %v444 = vunpack.c.l.b16 %v177
    %v445 = vunpack.c.h.b16 %v177
    %v446 = vunpack.c.l.b16 %v178
    %v447 = vunpack.c.h.b16 %v178
    %v448 = vunpack.c.l.b16 %v179
    %v449 = vunpack.c.h.b16 %v179
    %v450 = vunpack.c.l.b16 %v180
    %v451 = vunpack.c.h.b16 %v180
    %v452 = vunpack.c.l.b16 %v181
    %v453 = vunpack.c.h.b16 %v181
    %v454 = vunpack.c.l.b16 %v182
    %v455 = vunpack.c.h.b16 %v182
    %v456 = vunpack.c.l.b16 %v183
    %v457 = vunpack.c.h.b16 %v183
    %v458 = vunpack.c.l.b16 %v184
    %v459 = vunpack.c.h.b16 %v184
    %v460 = vunpack.c.l.b16 %v185
    %v461 = vunpack.c.h.b16 %v185
    %v462 = vunpack.c.l.b16 %v186
    %v463 = vunpack.c.h.b16 %v186
    %v464 = vunpack.c.l.b16 %v187
    %v465 = vunpack.c.h.b16 %v187
    %v466 = vunpack.c.l.b16 %v188
    %v467 = vunpack.c.h.b16 %v188
    %v468 = vunpack.c.l.b16 %v189
    %v469 = vunpack.c.h.b16 %v189
    %v470 = vunpack.c.l.b16 %v190
    %v471 = vunpack.c.h.b16 %v190
    %v472 = vunpack.c.l.b16 %v191
    %v473 = vunpack.c.h.b16 %v191
    %v474 = vunpack.c.l.b16 %v192
    %v475 = vunpack.c.h.b16 %v192
    %v476 = vunpack.c.l.b16 %v193
    %v477 = vunpack.c.h.b16 %v193
    %v478 = vunpack.c.l.b16 %v194
    %v479 = vunpack.c.h.b16 %v194
    %v480 = vunpack.c.l.b16 %v195
    %v481 = vunpack.c.h.b16 %v195
    %v482 = vunpack.c.l.b16 %v196
    %v483 = vunpack.c.h.b16 %v196
    %v484 = vunpack.c.l.b16 %v197
    %v485 = vunpack.c.h.b16 %v197
    %v486 = vunpack.c.l.b16 %v198
    %v487 = vunpack.c.h.b16 %v198
    %v488 = vunpack.c.l.b16 %v199
    %v489 = vunpack.c.h.b16 %v199
    %v490 = vunpack.c.l.b16 %v200
    %v491 = vunpack.c.h.b16 %v200
    %v492 = vunpack.c.l.b16 %v201
    %v493 = vunpack.c.h.b16 %v201
    %v494 = vunpack.c.l.b16 %v202
    %v495 = vunpack.c.h.b16 %v202
    %v496 = vunpack.c.l.b16 %v203
    %v497 = vunpack.c.h.b16 %v203
    %v498 = vunpack.c.l.b16 %v204
    %v499 = vunpack.c.h.b16 %v204
    %v500 = vunpack.c.l.b16 %v205
    %v501 = vunpack.c.h.b16 %v205
    %v502 = vunpack.c.l.b16 %v206
    %v503 = vunpack.c.h.b16 %v206
    %v504 = vunpack.c.l.b16 %v207
    %v505 = vunpack.c.h.b16 %v207
    %v506 = vunpack.c.l.b16 %v208
    %v507 = vunpack.c.h.b16 %v208
    %v508 = vunpack.c.l.b16 %v209
    %v509 = vunpack.c.h.b16 %v209
    %v510 = vunpack.c.l.b16 %v210
    %v511 = vunpack.c.h.b16 %v210
    %v512 = vunpack.c.l.b16 %v211
    %v513 = vunpack.c.h.b16 %v211
    %v514 = vunpack.c.l.b16 %v212
    %v515 = vunpack.c.h.b16 %v212
    %v516 = vunpack.c.l.b16 %v213
    %v517 = vunpack.c.h.b16 %v213
    %v518 = vpack.c.b16 %v362, %v358
    %v519 = vpack.c.b16 %v363, %v359
    %v520 = vpack.c.b16 %v364, %v360
    %v521 = vpack.c.b16 %v365, %v361
    %v522 = vpack.c.b16 %v370, %v366
    %v523 = vpack.c.b16 %v371, %v367
    %v524 = vpack.c.b16 %v372, %v368
    %v525 = vpack.c.b16 %v373, %v369
    %v526 = vpack.c.b16 %v378, %v374
    %v527 = vpack.c.b16 %v379, %v375
    %v528 = vpack.c.b16 %v380, %v376
    %v529 = vpack.c.b16 %v381, %v377
    %v530 = vpack.c.b16 %v386, %v382
    %v531 = vpack.c.b16 %v387, %v383
    %v532 = vpack.c.b16 %v388, %v384
    %v533 = vpack.c.b16 %v389, %v385
    %v534 = vpack.c.b16 %v394, %v390
    %v535 = vpack.c.b16 %v395, %v391
    %v536 = vpack.c.b16 %v396, %v392
    %v537 = vpack.c.b16 %v397, %v393
    %v538 = vpack.c.b16 %v402, %v398
    %v539 = vpack.c.b16 %v403, %v399
    %v540 = vpack.c.b16 %v404, %v400
    %v541 = vpack.c.b16 %v405, %v401
    %v542 = vpack.c.b16 %v410, %v406
    %v543 = vpack.c.b16 %v411, %v407
    %v544 = vpack.c.b16 %v412, %v408
    %v545 = vpack.c.b16 %v413, %v409
    %v546 = vpack.c.b16 %v418, %v414
    %v547 = vpack.c.b16 %v419, %v415
    %v548 = vpack.c.b16 %v420, %v416
    %v549 = vpack.c.b16 %v421, %v417
    %v550 = vpack.c.b16 %v426, %v422
    %v551 = vpack.c.b16 %v427, %v423
    %v552 = vpack.c.b16 %v428, %v424
    %v553 = vpack.c.b16 %v429, %v425
    %v554 = vpack.c.b16 %v434, %v430
    %v555 = vpack.c.b16 %v435, %v431
    %v556 = vpack.c.b16 %v436, %v432
    %v557 = vpack.c.b16 %v437, %v433
    %v558 = vpack.c.b16 %v442, %v438
    %v559 = vpack.c.b16 %v443, %v439
    %v560 = vpack.c.b16 %v444, %v440
    %v561 = vpack.c.b16 %v445, %v441
    %v562 = vpack.c.b16 %v450, %v446
    %v563 = vpack.c.b16 %v451, %v447
    %v564 = vpack.c.b16 %v452, %v448
    %v565 = vpack.c.b16 %v453, %v449
    %v566 = vpack.c.b16 %v458, %v454
    %v567 = vpack.c.b16 %v459, %v455
    %v568 = vpack.c.b16 %v460, %v456
    %v569 = vpack.c.b16 %v461, %v457
    %v570 = vpack.c.b16 %v466, %v462
    %v571 = vpack.c.b16 %v467, %v463
    %v572 = vpack.c.b16 %v468, %v464
    %v573 = vpack.c.b16 %v469, %v465
    %v574 = vpack.c.b16 %v474, %v470
    %v575 = vpack.c.b16 %v475, %v471
    %v576 = vpack.c.b16 %v476, %v472
    %v577 = vpack.c.b16 %v477, %v473
    %v578 = vpack.c.b16 %v482, %v478
    %v579 = vpack.c.b16 %v483, %v479
    %v580 = vpack.c.b16 %v484, %v480
    %v581 = vpack.c.b16 %v485, %v481
    %v582 = vpack.c.b16 %v490, %v486
    %v583 = vpack.c.b16 %v491, %v487
    %v584 = vpack.c.b16 %v492, %v488
    %v585 = vpack.c.b16 %v493, %v489
    %v586 = vpack.c.b16 %v498, %v494
    %v587 = vpack.c.b16 %v499, %v495
    %v588 = vpack.c.b16 %v500, %v496
    %v589 = vpack.c.b16 %v501, %v497
    %v590 = vpack.c.b16 %v506, %v502
    %v591 = vpack.c.b16 %v507, %v503
    %v592 = vpack.c.b16 %v508, %v504
    %v593 = vpack.c.b16 %v509, %v505
    %v594 = vpack.c.b16 %v514, %v510
    %v595 = vpack.c.b16 %v515, %v511
    %v596 = vpack.c.b16 %v516, %v512
    %v597 = vpack.c.b16 %v517, %v513
    %v742 = vunpack.c.l.b16 %v214
    %v743 = vunpack.c.h.b16 %v214
    %v744 = vunpack.c.l.b16 %v215
    %v745 = vunpack.c.h.b16 %v215
    %v746 = vunpack.c.l.b16 %v216
    %v747 = vunpack.c.h.b16 %v216
    %v748 = vunpack.c.l.b16 %v217
    %v749 = vunpack.c.h.b16 %v217
    %v750 = vunpack.c.l.b16 %v218
    %v751 = vunpack.c.h.b16 %v218
    %v752 = vunpack.c.l.b16 %v219
    %v753 = vunpack.c.h.b16 %v219
    %v754 = vunpack.c.l.b16 %v220
    %v755 = vunpack.c.h.b16 %v220
    %v756 = vunpack.c.l.b16 %v221
    %v757 = vunpack.c.h.b16 %v221
    %v758 = vunpack.c.l.b16 %v222
    %v759 = vunpack.c.h.b16 %v222
    %v760 = vunpack.c.l.b16 %v223
    %v761 = vunpack.c.h.b16 %v223
    %v762 = vunpack.c.l.b16 %v224
    %v763 = vunpack.c.h.b16 %v224
    %v764 = vunpack.c.l.b16 %v225
    %v765 = vunpack.c.h.b16 %v225
    %v766 = vunpack.c.l.b16 %v226
    %v767 = vunpack.c.h.b16 %v226
    %v768 = vunpack.c.l.b16 %v227
    %v769 = vunpack.c.h.b16 %v227
    %v770 = vunpack.c.l.b16 %v228
    %v771 = vunpack.c.h.b16 %v228
    %v772 = vunpack.c.l.b16 %v229
    %v773 = vunpack.c.h.b16 %v229
    %v774 = vunpack.c.l.b16 %v230
    %v775 = vunpack.c.h.b16 %v230
    %v776 = vunpack.c.l.b16 %v231
    %v777 = vunpack.c.h.b16 %v231
    %v778 = vunpack.c.l.b16 %v232
    %v779 = vunpack.c.h.b16 %v232
    %v780 = vunpack.c.l.b16 %v233
    %v781 = vunpack.c.h.b16 %v233
    %v782 = vunpack.c.l.b16 %v234
    %v783 = vunpack.c.h.b16 %v234
    %v784 = vunpack.c.l.b16 %v235
    %v785 = vunpack.c.h.b16 %v235
    %v786 = vunpack.c.l.b16 %v236
    %v787 = vunpack.c.h.b16 %v236
    %v788 = vunpack.c.l.b16 %v237
    %v789 = vunpack.c.h.b16 %v237
    %v790 = vunpack.c.l.b16 %v238
    %v791 = vunpack.c.h.b16 %v238
    %v792 = vunpack.c.l.b16 %v239
    %v793 = vunpack.c.h.b16 %v239
    %v794 = vunpack.c.l.b16 %v240
    %v795 = vunpack.c.h.b16 %v240
    %v796 = vunpack.c.l.b16 %v241
    %v797 = vunpack.c.h.b16 %v241
    %v798 = vunpack.c.l.b16 %v242
    %v799 = vunpack.c.h.b16 %v242
    %v800 = vunpack.c.l.b16 %v243
    %v801 = vunpack.c.h.b16 %v243
    %v802 = vunpack.c.l.b16 %v244
    %v803 = vunpack.c.h.b16 %v244
    %v804 = vunpack.c.l.b16 %v245
    %v805 = vunpack.c.h.b16 %v245
    %v806 = vunpack.c.l.b16 %v246
    %v807 = vunpack.c.h.b16 %v246
    %v808 = vunpack.c.l.b16 %v247
    %v809 = vunpack.c.h.b16 %v247
    %v810 = vunpack.c.l.b16 %v248
    %v811 = vunpack.c.h.b16 %v248
    %v812 = vunpack.c.l.b16 %v249
    %v813 = vunpack.c.h.b16 %v249
    %v814 = vunpack.c.l.b16 %v250
    %v815 = vunpack.c.h.b16 %v250
    %v816 = vunpack.c.l.b16 %v251
    %v817 = vunpack.c.h.b16 %v251
    %v818 = vunpack.c.l.b16 %v252
    %v819 = vunpack.c.h.b16 %v252
    %v820 = vunpack.c.l.b16 %v253
    %v821 = vunpack.c.h.b16 %v253
    %v822 = vunpack.c.l.b16 %v254
    %v823 = vunpack.c.h.b16 %v254
    %v824 = vunpack.c.l.b16 %v255
    %v825 = vunpack.c.h.b16 %v255
    %v826 = vunpack.c.l.b16 %v256
    %v827 = vunpack.c.h.b16 %v256
    %v828 = vunpack.c.l.b16 %v257
    %v829 = vunpack.c.h.b16 %v257
    %v830 = vunpack.c.l.b16 %v258
    %v831 = vunpack.c.h.b16 %v258
    %v832 = vunpack.c.l.b16 %v259
    %v833 = vunpack.c.h.b16 %v259
    %v834 = vunpack.c.l.b16 %v260
    %v835 = vunpack.c.h.b16 %v260
    %v836 = vunpack.c.l.b16 %v261
    %v837 = vunpack.c.h.b16 %v261
    %v838 = vunpack.c.l.b16 %v262
    %v839 = vunpack.c.h.b16 %v262
    %v840 = vunpack.c.l.b16 %v263
    %v841 = vunpack.c.h.b16 %v263
    %v842 = vunpack.c.l.b16 %v264
    %v843 = vunpack.c.h.b16 %v264
    %v844 = vunpack.c.l.b16 %v265
    %v845 = vunpack.c.h.b16 %v265
    %v846 = vunpack.c.l.b16 %v266
    %v847 = vunpack.c.h.b16 %v266
    %v848 = vunpack.c.l.b16 %v267
    %v849 = vunpack.c.h.b16 %v267
    %v850 = vunpack.c.l.b16 %v268
    %v851 = vunpack.c.h.b16 %v268
    %v852 = vunpack.c.l.b16 %v269
    %v853 = vunpack.c.h.b16 %v269
    %v854 = vunpack.c.l.b16 %v270
    %v855 = vunpack.c.h.b16 %v270
    %v856 = vunpack.c.l.b16 %v271
    %v857 = vunpack.c.h.b16 %v271
    %v858 = vunpack.c.l.b16 %v272
    %v859 = vunpack.c.h.b16 %v272
    %v860 = vunpack.c.l.b16 %v273
    %v861 = vunpack.c.h.b16 %v273
    %v862 = vunpack.c.l.b16 %v274
    %v863 = vunpack.c.h.b16 %v274
    %v864 = vunpack.c.l.b16 %v275
    %v865 = vunpack.c.h.b16 %v275
    %v866 = vunpack.c.l.b16 %v276
    %v867 = vunpack.c.h.b16 %v276
    %v868 = vunpack.c.l.b16 %v277
    %v869 = vunpack.c.h.b16 %v277
    %v870 = vpack.c.b16 %v744, %v742
    %v871 = vpack.c.b16 %v745, %v743
    %v872 = vpack.c.b16 %v748, %v746
    %v873 = vpack.c.b16 %v749, %v747
    %v874 = vpack.c.b16 %v752, %v750
    %v875 = vpack.c.b16 %v753, %v751
    %v876 = vpack.c.b16 %v756, %v754
    %v877 = vpack.c.b16 %v757, %v755
    %v878 = vpack.c.b16 %v760, %v758
    %v879 = vpack.c.b16 %v761, %v759
    %v880 = vpack.c.b16 %v764, %v762
    %v881 = vpack.c.b16 %v765, %v763
    %v882 = vpack.c.b16 %v768, %v766
    %v883 = vpack.c.b16 %v769, %v767
    %v884 = vpack.c.b16 %v772, %v770
    %v885 = vpack.c.b16 %v773, %v771
    %v886 = vpack.c.b16 %v776, %v774
    %v887 = vpack.c.b16 %v777, %v775
    %v888 = vpack.c.b16 %v780, %v778
    %v889 = vpack.c.b16 %v781, %v779
    %v890 = vpack.c.b16 %v784, %v782
    %v891 = vpack.c.b16 %v785, %v783
    %v892 = vpack.c.b16 %v788, %v786
    %v893 = vpack.c.b16 %v789, %v787
    %v894 = vpack.c.b16 %v792, %v790
    %v895 = vpack.c.b16 %v793, %v791
    %v896 = vpack.c.b16 %v796, %v794
    %v897 = vpack.c.b16 %v797, %v795
    %v898 = vpack.c.b16 %v800, %v798
    %v899 = vpack.c.b16 %v801, %v799
    %v900 = vpack.c.b16 %v804, %v802
    %v901 = vpack.c.b16 %v805, %v803
    %v902 = vpack.c.b16 %v808, %v806
    %v903 = vpack.c.b16 %v809, %v807
    %v904 = vpack.c.b16 %v812, %v810
    %v905 = vpack.c.b16 %v813, %v811
    %v906 = vpack.c.b16 %v816, %v814
    %v907 = vpack.c.b16 %v817, %v815
    %v908 = vpack.c.b16 %v820, %v818
    %v909 = vpack.c.b16 %v821, %v819
    %v910 = vpack.c.b16 %v824, %v822
    %v911 = vpack.c.b16 %v825, %v823
    %v912 = vpack.c.b16 %v828, %v826
    %v913 = vpack.c.b16 %v829, %v827
    %v914 = vpack.c.b16 %v832, %v830
    %v915 = vpack.c.b16 %v833, %v831
    %v916 = vpack.c.b16 %v836, %v834
    %v917 = vpack.c.b16 %v837, %v835
    %v918 = vpack.c.b16 %v840, %v838
    %v919 = vpack.c.b16 %v841, %v839
    %v920 = vpack.c.b16 %v844, %v842
    %v921 = vpack.c.b16 %v845, %v843
    %v922 = vpack.c.b16 %v848, %v846
    %v923 = vpack.c.b16 %v849, %v847
    %v924 = vpack.c.b16 %v852, %v850
    %v925 = vpack.c.b16 %v853, %v851
    %v926 = vpack.c.b16 %v856, %v854
    %v927 = vpack.c.b16 %v857, %v855
    %v928 = vpack.c.b16 %v860, %v858
    %v929 = vpack.c.b16 %v861, %v859
    %v930 = vpack.c.b16 %v864, %v862
    %v931 = vpack.c.b16 %v865, %v863
    %v932 = vpack.c.b16 %v868, %v866
    %v933 = vpack.c.b16 %v869, %v867
    %998 = vmatprep.subr.bf16.mxu0 %v871
    %999 = vmatpush1.bf16.msra.mxu0 %v870
    %1000 = vmatprep.subr.bf16.mxu0 %v873
    %1001 = vmatpush1.bf16.msra.mxu0 %v872
    %1002 = vmatprep.subr.bf16.mxu0 %v875
    %1003 = vmatpush1.bf16.msra.mxu0 %v874
    %1004 = vmatprep.subr.bf16.mxu0 %v877
    %1005 = vmatpush1.bf16.msra.mxu0 %v876
    %1006 = vmatprep.subr.bf16.mxu0 %v879
    %1007 = vmatpush1.bf16.msra.mxu0 %v878
    %1008 = vmatprep.subr.bf16.mxu0 %v881
    %1009 = vmatpush1.bf16.msra.mxu0 %v880
    %1010 = vmatprep.subr.bf16.mxu0 %v883
    %1011 = vmatpush1.bf16.msra.mxu0 %v882
    %1012 = vmatprep.subr.bf16.mxu0 %v885
    %1013 = vmatpush1.bf16.msra.mxu0 %v884
    %1014 = vmatprep.subr.bf16.mxu0 %v887
    %1015 = vmatpush1.bf16.msra.mxu0 %v886
    %1016 = vmatprep.subr.bf16.mxu0 %v889
    %1017 = vmatpush1.bf16.msra.mxu0 %v888
    %1018 = vmatprep.subr.bf16.mxu0 %v891
    %1019 = vmatpush1.bf16.msra.mxu0 %v890
    %1020 = vmatprep.subr.bf16.mxu0 %v893
    %1021 = vmatpush1.bf16.msra.mxu0 %v892
    %1022 = vmatprep.subr.bf16.mxu0 %v895
    %1023 = vmatpush1.bf16.msra.mxu0 %v894
    %1024 = vmatprep.subr.bf16.mxu0 %v897
    %1025 = vmatpush1.bf16.msra.mxu0 %v896
    %1026 = vmatprep.subr.bf16.mxu0 %v899
    %1027 = vmatpush1.bf16.msra.mxu0 %v898
    %1028 = vmatprep.subr.bf16.mxu0 %v901
    %1029 = vmatpush1.bf16.msra.mxu0 %v900
    %1030 = vmatprep.mubr.bf16.mxu0 %v519
    %1031 = vmatmul.mubr.bf16.gmra.mrb[0].mxu0 %v518
    %v1032 = vpop.f32.mrb[0].mxu0
    %v1033 = vadd.f32 0.0, %v1032
    %v1034 = vpop.f32.mrb[0].mxu0
    %v1035 = vadd.f32 0.0, %v1034
    %v1036 = vpop.f32.mrb[0].mxu0
    %v1037 = vadd.f32 0.0, %v1036
    %v1038 = vpop.f32.mrb[0].mxu0
    %v1039 = vadd.f32 0.0, %v1038
    %1040 = vmatprep.mubr.bf16.mxu0 %v523
    %1041 = vmatmul.mubr.bf16.gmra.mrb[0].mxu0 %v522
    %v1042 = vpop.f32.mrb[0].mxu0
    %v1043 = vadd.f32 0.0, %v1042
    %v1044 = vpop.f32.mrb[0].mxu0
    %v1045 = vadd.f32 0.0, %v1044
    %v1046 = vpop.f32.mrb[0].mxu0
    %v1047 = vadd.f32 0.0, %v1046
    %v1048 = vpop.f32.mrb[0].mxu0
    %v1049 = vadd.f32 0.0, %v1048
    %1050 = vmatprep.mubr.bf16.mxu0 %v527
    %1051 = vmatmul.mubr.bf16.gmra.mrb[0].mxu0 %v526
    %v1052 = vpop.f32.mrb[0].mxu0
    %v1053 = vadd.f32 0.0, %v1052
    %v1054 = vpop.f32.mrb[0].mxu0
    %v1055 = vadd.f32 0.0, %v1054
    %v1056 = vpop.f32.mrb[0].mxu0
    %v1057 = vadd.f32 0.0, %v1056
    %v1058 = vpop.f32.mrb[0].mxu0
    %v1059 = vadd.f32 0.0, %v1058
    %1060 = vmatprep.mubr.bf16.mxu0 %v531
    %1061 = vmatmul.mubr.bf16.gmra.mrb[0].mxu0 %v530
    %v1062 = vpop.f32.mrb[0].mxu0
    %v1063 = vadd.f32 0.0, %v1062
    %v1064 = vpop.f32.mrb[0].mxu0
    %v1065 = vadd.f32 0.0, %v1064
    %v1066 = vpop.f32.mrb[0].mxu0
    %v1067 = vadd.f32 0.0, %v1066
    %v1068 = vpop.f32.mrb[0].mxu0
    %v1069 = vadd.f32 0.0, %v1068
    %1070 = vmatprep.mubr.bf16.mxu0 %v535
    %1071 = vmatmul.mubr.bf16.gmra.mrb[0].mxu0 %v534
    %v1072 = vpop.f32.mrb[0].mxu0
    %v1073 = vadd.f32 0.0, %v1072
    %v1074 = vpop.f32.mrb[0].mxu0
    %v1075 = vadd.f32 0.0, %v1074
    %v1076 = vpop.f32.mrb[0].mxu0
    %v1077 = vadd.f32 0.0, %v1076
    %v1078 = vpop.f32.mrb[0].mxu0
    %v1079 = vadd.f32 0.0, %v1078
    %1080 = vmatprep.mubr.bf16.mxu0 %v539
    %1081 = vmatmul.mubr.bf16.gmra.mrb[0].mxu0 %v538
    %v1082 = vpop.f32.mrb[0].mxu0
    %v1083 = vadd.f32 0.0, %v1082
    %v1084 = vpop.f32.mrb[0].mxu0
    %v1085 = vadd.f32 0.0, %v1084
    %v1086 = vpop.f32.mrb[0].mxu0
    %v1087 = vadd.f32 0.0, %v1086
    %v1088 = vpop.f32.mrb[0].mxu0
    %v1089 = vadd.f32 0.0, %v1088
    %1090 = vmatprep.mubr.bf16.mxu0 %v543
    %1091 = vmatmul.mubr.bf16.gmra.mrb[0].mxu0 %v542
    %v1092 = vpop.f32.mrb[0].mxu0
    %v1093 = vadd.f32 0.0, %v1092
    %v1094 = vpop.f32.mrb[0].mxu0
    %v1095 = vadd.f32 0.0, %v1094
    %v1096 = vpop.f32.mrb[0].mxu0
    %v1097 = vadd.f32 0.0, %v1096
    %v1098 = vpop.f32.mrb[0].mxu0
    %v1099 = vadd.f32 0.0, %v1098
    %1100 = vmatprep.mubr.bf16.mxu0 %v547
    %1101 = vmatmul.mubr.bf16.gmra.mrb[0].mxu0 %v546
    %v1102 = vpop.f32.mrb[0].mxu0
    %v1103 = vadd.f32 0.0, %v1102
    %v1104 = vpop.f32.mrb[0].mxu0
    %v1105 = vadd.f32 0.0, %v1104
    %v1106 = vpop.f32.mrb[0].mxu0
    %v1107 = vadd.f32 0.0, %v1106
    %v1108 = vpop.f32.mrb[0].mxu0
    %v1109 = vadd.f32 0.0, %v1108
    %1110 = vmatprep.mubr.bf16.mxu0 %v551
    %1111 = vmatmul.mubr.bf16.gmra.mrb[0].mxu0 %v550
    %v1112 = vpop.f32.mrb[0].mxu0
    %v1113 = vadd.f32 0.0, %v1112
    %v1114 = vpop.f32.mrb[0].mxu0
    %v1115 = vadd.f32 0.0, %v1114
    %v1116 = vpop.f32.mrb[0].mxu0
    %v1117 = vadd.f32 0.0, %v1116
    %v1118 = vpop.f32.mrb[0].mxu0
    %v1119 = vadd.f32 0.0, %v1118
    %1120 = vmatprep.mubr.bf16.mxu0 %v555
    %1121 = vmatmul.mubr.bf16.gmra.mrb[0].mxu0 %v554
    %v1122 = vpop.f32.mrb[0].mxu0
    %v1123 = vadd.f32 0.0, %v1122
    %v1124 = vpop.f32.mrb[0].mxu0
    %v1125 = vadd.f32 0.0, %v1124
    %v1126 = vpop.f32.mrb[0].mxu0
    %v1127 = vadd.f32 0.0, %v1126
    %v1128 = vpop.f32.mrb[0].mxu0
    %v1129 = vadd.f32 0.0, %v1128
    %1130 = vmatprep.mubr.bf16.mxu0 %v559
    %1131 = vmatmul.mubr.bf16.gmra.mrb[0].mxu0 %v558
    %v1132 = vpop.f32.mrb[0].mxu0
    %v1133 = vadd.f32 0.0, %v1132
    %v1134 = vpop.f32.mrb[0].mxu0
    %v1135 = vadd.f32 0.0, %v1134
    %v1136 = vpop.f32.mrb[0].mxu0
    %v1137 = vadd.f32 0.0, %v1136
    %v1138 = vpop.f32.mrb[0].mxu0
    %v1139 = vadd.f32 0.0, %v1138
    %1140 = vmatprep.mubr.bf16.mxu0 %v563
    %1141 = vmatmul.mubr.bf16.gmra.mrb[0].mxu0 %v562
    %v1142 = vpop.f32.mrb[0].mxu0
    %v1143 = vadd.f32 0.0, %v1142
    %v1144 = vpop.f32.mrb[0].mxu0
    %v1145 = vadd.f32 0.0, %v1144
    %v1146 = vpop.f32.mrb[0].mxu0
    %v1147 = vadd.f32 0.0, %v1146
    %v1148 = vpop.f32.mrb[0].mxu0
    %v1149 = vadd.f32 0.0, %v1148
    %1150 = vmatprep.mubr.bf16.mxu0 %v567
    %1151 = vmatmul.mubr.bf16.gmra.mrb[0].mxu0 %v566
    %v1152 = vpop.f32.mrb[0].mxu0
    %v1153 = vadd.f32 0.0, %v1152
    %v1154 = vpop.f32.mrb[0].mxu0
    %v1155 = vadd.f32 0.0, %v1154
    %v1156 = vpop.f32.mrb[0].mxu0
    %v1157 = vadd.f32 0.0, %v1156
    %v1158 = vpop.f32.mrb[0].mxu0
    %v1159 = vadd.f32 0.0, %v1158
    %1160 = vmatprep.mubr.bf16.mxu0 %v571
    %1161 = vmatmul.mubr.bf16.gmra.mrb[0].mxu0 %v570
    %v1162 = vpop.f32.mrb[0].mxu0
    %v1163 = vadd.f32 0.0, %v1162
    %v1164 = vpop.f32.mrb[0].mxu0
    %v1165 = vadd.f32 0.0, %v1164
    %v1166 = vpop.f32.mrb[0].mxu0
    %v1167 = vadd.f32 0.0, %v1166
    %v1168 = vpop.f32.mrb[0].mxu0
    %v1169 = vadd.f32 0.0, %v1168
    %1170 = vmatprep.mubr.bf16.mxu0 %v575
    %1171 = vmatmul.mubr.bf16.gmra.mrb[0].mxu0 %v574
    %v1172 = vpop.f32.mrb[0].mxu0
    %v1173 = vadd.f32 0.0, %v1172
    %v1174 = vpop.f32.mrb[0].mxu0
    %v1175 = vadd.f32 0.0, %v1174
    %v1176 = vpop.f32.mrb[0].mxu0
    %v1177 = vadd.f32 0.0, %v1176
    %v1178 = vpop.f32.mrb[0].mxu0
    %v1179 = vadd.f32 0.0, %v1178
    %1180 = vmatprep.mubr.bf16.mxu0 %v579
    %1181 = vmatmul.mubr.bf16.gmra.mrb[0].mxu0 %v578
    %v1182 = vpop.f32.mrb[0].mxu0
    %v1183 = vadd.f32 0.0, %v1182
    %v1184 = vpop.f32.mrb[0].mxu0
    %v1185 = vadd.f32 0.0, %v1184
    %v1186 = vpop.f32.mrb[0].mxu0
    %v1187 = vadd.f32 0.0, %v1186
    %v1188 = vpop.f32.mrb[0].mxu0
    %v1189 = vadd.f32 0.0, %v1188
    %1190 = vmatprep.mubr.bf16.mxu0 %v583
    %1191 = vmatmul.mubr.bf16.gmra.mrb[0].mxu0 %v582
    %v1192 = vpop.f32.mrb[0].mxu0
    %v1193 = vadd.f32 0.0, %v1192
    %v1194 = vpop.f32.mrb[0].mxu0
    %v1195 = vadd.f32 0.0, %v1194
    %v1196 = vpop.f32.mrb[0].mxu0
    %v1197 = vadd.f32 0.0, %v1196
    %v1198 = vpop.f32.mrb[0].mxu0
    %v1199 = vadd.f32 0.0, %v1198
    %1200 = vmatprep.mubr.bf16.mxu0 %v587
    %1201 = vmatmul.mubr.bf16.gmra.mrb[0].mxu0 %v586
    %v1202 = vpop.f32.mrb[0].mxu0
    %v1203 = vadd.f32 0.0, %v1202
    %v1204 = vpop.f32.mrb[0].mxu0
    %v1205 = vadd.f32 0.0, %v1204
    %v1206 = vpop.f32.mrb[0].mxu0
    %v1207 = vadd.f32 0.0, %v1206
    %v1208 = vpop.f32.mrb[0].mxu0
    %v1209 = vadd.f32 0.0, %v1208
    %1210 = vmatprep.mubr.bf16.mxu0 %v591
    %1211 = vmatmul.mubr.bf16.gmra.mrb[0].mxu0 %v590
    %v1212 = vpop.f32.mrb[0].mxu0
    %v1213 = vadd.f32 0.0, %v1212
    %v1214 = vpop.f32.mrb[0].mxu0
    %v1215 = vadd.f32 0.0, %v1214
    %v1216 = vpop.f32.mrb[0].mxu0
    %v1217 = vadd.f32 0.0, %v1216
    %v1218 = vpop.f32.mrb[0].mxu0
    %v1219 = vadd.f32 0.0, %v1218
    %1220 = vmatprep.mubr.bf16.mxu0 %v595
    %1221 = vmatmul.mubr.bf16.gmra.mrb[0].mxu0 %v594
    %v1222 = vpop.f32.mrb[0].mxu0
    %v1223 = vadd.f32 0.0, %v1222
    %v1224 = vpop.f32.mrb[0].mxu0
    %v1225 = vadd.f32 0.0, %v1224
    %v1226 = vpop.f32.mrb[0].mxu0
    %v1227 = vadd.f32 0.0, %v1226
    %v1228 = vpop.f32.mrb[0].mxu0
    %v1229 = vadd.f32 0.0, %v1228
    %1230 = vdwg.mxu0
    %1231 = vmatprep.subr.bf16.mxu0 %v903
    %1232 = vmatpush1.bf16.msra.mxu0 %v902
    %1233 = vmatprep.subr.bf16.mxu0 %v905
    %1234 = vmatpush1.bf16.msra.mxu0 %v904
    %1235 = vmatprep.subr.bf16.mxu0 %v907
    %1236 = vmatpush1.bf16.msra.mxu0 %v906
    %1237 = vmatprep.subr.bf16.mxu0 %v909
    %1238 = vmatpush1.bf16.msra.mxu0 %v908
    %1239 = vmatprep.subr.bf16.mxu0 %v911
    %1240 = vmatpush1.bf16.msra.mxu0 %v910
    %1241 = vmatprep.subr.bf16.mxu0 %v913
    %1242 = vmatpush1.bf16.msra.mxu0 %v912
    %1243 = vmatprep.subr.bf16.mxu0 %v915
    %1244 = vmatpush1.bf16.msra.mxu0 %v914
    %1245 = vmatprep.subr.bf16.mxu0 %v917
    %1246 = vmatpush1.bf16.msra.mxu0 %v916
    %1247 = vmatprep.subr.bf16.mxu0 %v919
    %1248 = vmatpush1.bf16.msra.mxu0 %v918
    %1249 = vmatprep.subr.bf16.mxu0 %v921
    %1250 = vmatpush1.bf16.msra.mxu0 %v920
    %1251 = vmatprep.subr.bf16.mxu0 %v923
    %1252 = vmatpush1.bf16.msra.mxu0 %v922
    %1253 = vmatprep.subr.bf16.mxu0 %v925
    %1254 = vmatpush1.bf16.msra.mxu0 %v924
    %1255 = vmatprep.subr.bf16.mxu0 %v927
    %1256 = vmatpush1.bf16.msra.mxu0 %v926
    %1257 = vmatprep.subr.bf16.mxu0 %v929
    %1258 = vmatpush1.bf16.msra.mxu0 %v928
    %1259 = vmatprep.subr.bf16.mxu0 %v931
    %1260 = vmatpush1.bf16.msra.mxu0 %v930
    %1261 = vmatprep.subr.bf16.mxu0 %v933
    %1262 = vmatpush1.bf16.msra.mxu0 %v932
    %1263 = vmatprep.mubr.bf16.mxu0 %v521
    %1264 = vmatmul.mubr.bf16.gmra.mrb[0].mxu0 %v520
    %v1265 = vpop.f32.mrb[0].mxu0
    %v1266 = vadd.f32 %v1033, %v1265
    %v1267 = vpop.f32.mrb[0].mxu0
    %v1268 = vadd.f32 %v1035, %v1267
    %v1269 = vpop.f32.mrb[0].mxu0
    %v1270 = vadd.f32 %v1037, %v1269
    %v1271 = vpop.f32.mrb[0].mxu0
    %v1272 = vadd.f32 %v1039, %v1271
    %1273 = vmatprep.mubr.bf16.mxu0 %v525
    %1274 = vmatmul.mubr.bf16.gmra.mrb[0].mxu0 %v524
    %v1275 = vpop.f32.mrb[0].mxu0
    %v1276 = vadd.f32 %v1043, %v1275
    %v1277 = vpop.f32.mrb[0].mxu0
    %v1278 = vadd.f32 %v1045, %v1277
    %v1279 = vpop.f32.mrb[0].mxu0
    %v1280 = vadd.f32 %v1047, %v1279
    %v1281 = vpop.f32.mrb[0].mxu0
    %v1282 = vadd.f32 %v1049, %v1281
    %1283 = vmatprep.mubr.bf16.mxu0 %v529
    %1284 = vmatmul.mubr.bf16.gmra.mrb[0].mxu0 %v528
    %v1285 = vpop.f32.mrb[0].mxu0
    %v1286 = vadd.f32 %v1053, %v1285
    %v1287 = vpop.f32.mrb[0].mxu0
    %v1288 = vadd.f32 %v1055, %v1287
    %v1289 = vpop.f32.mrb[0].mxu0
    %v1290 = vadd.f32 %v1057, %v1289
    %v1291 = vpop.f32.mrb[0].mxu0
    %v1292 = vadd.f32 %v1059, %v1291
    %1293 = vmatprep.mubr.bf16.mxu0 %v533
    %1294 = vmatmul.mubr.bf16.gmra.mrb[0].mxu0 %v532
    %v1295 = vpop.f32.mrb[0].mxu0
    %v1296 = vadd.f32 %v1063, %v1295
    %v1297 = vpop.f32.mrb[0].mxu0
    %v1298 = vadd.f32 %v1065, %v1297
    %v1299 = vpop.f32.mrb[0].mxu0
    %v1300 = vadd.f32 %v1067, %v1299
    %v1301 = vpop.f32.mrb[0].mxu0
    %v1302 = vadd.f32 %v1069, %v1301
    %1303 = vmatprep.mubr.bf16.mxu0 %v537
    %1304 = vmatmul.mubr.bf16.gmra.mrb[0].mxu0 %v536
    %v1305 = vpop.f32.mrb[0].mxu0
    %v1306 = vadd.f32 %v1073, %v1305
    %v1307 = vpop.f32.mrb[0].mxu0
    %v1308 = vadd.f32 %v1075, %v1307
    %v1309 = vpop.f32.mrb[0].mxu0
    %v1310 = vadd.f32 %v1077, %v1309
    %v1311 = vpop.f32.mrb[0].mxu0
    %v1312 = vadd.f32 %v1079, %v1311
    %1313 = vmatprep.mubr.bf16.mxu0 %v541
    %1314 = vmatmul.mubr.bf16.gmra.mrb[0].mxu0 %v540
    %v1315 = vpop.f32.mrb[0].mxu0
    %v1316 = vadd.f32 %v1083, %v1315
    %v1317 = vpop.f32.mrb[0].mxu0
    %v1318 = vadd.f32 %v1085, %v1317
    %v1319 = vpop.f32.mrb[0].mxu0
    %v1320 = vadd.f32 %v1087, %v1319
    %v1321 = vpop.f32.mrb[0].mxu0
    %v1322 = vadd.f32 %v1089, %v1321
    %1323 = vmatprep.mubr.bf16.mxu0 %v545
    %1324 = vmatmul.mubr.bf16.gmra.mrb[0].mxu0 %v544
    %v1325 = vpop.f32.mrb[0].mxu0
    %v1326 = vadd.f32 %v1093, %v1325
    %v1327 = vpop.f32.mrb[0].mxu0
    %v1328 = vadd.f32 %v1095, %v1327
    %v1329 = vpop.f32.mrb[0].mxu0
    %v1330 = vadd.f32 %v1097, %v1329
    %v1331 = vpop.f32.mrb[0].mxu0
    %v1332 = vadd.f32 %v1099, %v1331
    %1333 = vmatprep.mubr.bf16.mxu0 %v549
    %1334 = vmatmul.mubr.bf16.gmra.mrb[0].mxu0 %v548
    %v1335 = vpop.f32.mrb[0].mxu0
    %v1336 = vadd.f32 %v1103, %v1335
    %v1337 = vpop.f32.mrb[0].mxu0
    %v1338 = vadd.f32 %v1105, %v1337
    %v1339 = vpop.f32.mrb[0].mxu0
    %v1340 = vadd.f32 %v1107, %v1339
    %v1341 = vpop.f32.mrb[0].mxu0
    %v1342 = vadd.f32 %v1109, %v1341
    %1343 = vmatprep.mubr.bf16.mxu0 %v553
    %1344 = vmatmul.mubr.bf16.gmra.mrb[0].mxu0 %v552
    %v1345 = vpop.f32.mrb[0].mxu0
    %v1346 = vadd.f32 %v1113, %v1345
    %v1347 = vpop.f32.mrb[0].mxu0
    %v1348 = vadd.f32 %v1115, %v1347
    %v1349 = vpop.f32.mrb[0].mxu0
    %v1350 = vadd.f32 %v1117, %v1349
    %v1351 = vpop.f32.mrb[0].mxu0
    %v1352 = vadd.f32 %v1119, %v1351
    %1353 = vmatprep.mubr.bf16.mxu0 %v557
    %1354 = vmatmul.mubr.bf16.gmra.mrb[0].mxu0 %v556
    %v1355 = vpop.f32.mrb[0].mxu0
    %v1356 = vadd.f32 %v1123, %v1355
    %v1357 = vpop.f32.mrb[0].mxu0
    %v1358 = vadd.f32 %v1125, %v1357
    %v1359 = vpop.f32.mrb[0].mxu0
    %v1360 = vadd.f32 %v1127, %v1359
    %v1361 = vpop.f32.mrb[0].mxu0
    %v1362 = vadd.f32 %v1129, %v1361
    %1363 = vmatprep.mubr.bf16.mxu0 %v561
    %1364 = vmatmul.mubr.bf16.gmra.mrb[0].mxu0 %v560
    %v1365 = vpop.f32.mrb[0].mxu0
    %v1366 = vadd.f32 %v1133, %v1365
    %v1367 = vpop.f32.mrb[0].mxu0
    %v1368 = vadd.f32 %v1135, %v1367
    %v1369 = vpop.f32.mrb[0].mxu0
    %v1370 = vadd.f32 %v1137, %v1369
    %v1371 = vpop.f32.mrb[0].mxu0
    %v1372 = vadd.f32 %v1139, %v1371
    %1373 = vmatprep.mubr.bf16.mxu0 %v565
    %1374 = vmatmul.mubr.bf16.gmra.mrb[0].mxu0 %v564
    %v1375 = vpop.f32.mrb[0].mxu0
    %v1376 = vadd.f32 %v1143, %v1375
    %v1377 = vpop.f32.mrb[0].mxu0
    %v1378 = vadd.f32 %v1145, %v1377
    %v1379 = vpop.f32.mrb[0].mxu0
    %v1380 = vadd.f32 %v1147, %v1379
    %v1381 = vpop.f32.mrb[0].mxu0
    %v1382 = vadd.f32 %v1149, %v1381
    %1383 = vmatprep.mubr.bf16.mxu0 %v569
    %1384 = vmatmul.mubr.bf16.gmra.mrb[0].mxu0 %v568
    %v1385 = vpop.f32.mrb[0].mxu0
    %v1386 = vadd.f32 %v1153, %v1385
    %v1387 = vpop.f32.mrb[0].mxu0
    %v1388 = vadd.f32 %v1155, %v1387
    %v1389 = vpop.f32.mrb[0].mxu0
    %v1390 = vadd.f32 %v1157, %v1389
    %v1391 = vpop.f32.mrb[0].mxu0
    %v1392 = vadd.f32 %v1159, %v1391
    %1393 = vmatprep.mubr.bf16.mxu0 %v573
    %1394 = vmatmul.mubr.bf16.gmra.mrb[0].mxu0 %v572
    %v1395 = vpop.f32.mrb[0].mxu0
    %v1396 = vadd.f32 %v1163, %v1395
    %v1397 = vpop.f32.mrb[0].mxu0
    %v1398 = vadd.f32 %v1165, %v1397
    %v1399 = vpop.f32.mrb[0].mxu0
    %v1400 = vadd.f32 %v1167, %v1399
    %v1401 = vpop.f32.mrb[0].mxu0
    %v1402 = vadd.f32 %v1169, %v1401
    %1403 = vmatprep.mubr.bf16.mxu0 %v577
    %1404 = vmatmul.mubr.bf16.gmra.mrb[0].mxu0 %v576
    %v1405 = vpop.f32.mrb[0].mxu0
    %v1406 = vadd.f32 %v1173, %v1405
    %v1407 = vpop.f32.mrb[0].mxu0
    %v1408 = vadd.f32 %v1175, %v1407
    %v1409 = vpop.f32.mrb[0].mxu0
    %v1410 = vadd.f32 %v1177, %v1409
    %v1411 = vpop.f32.mrb[0].mxu0
    %v1412 = vadd.f32 %v1179, %v1411
    %1413 = vmatprep.mubr.bf16.mxu0 %v581
    %1414 = vmatmul.mubr.bf16.gmra.mrb[0].mxu0 %v580
    %v1415 = vpop.f32.mrb[0].mxu0
    %v1416 = vadd.f32 %v1183, %v1415
    %v1417 = vpop.f32.mrb[0].mxu0
    %v1418 = vadd.f32 %v1185, %v1417
    %v1419 = vpop.f32.mrb[0].mxu0
    %v1420 = vadd.f32 %v1187, %v1419
    %v1421 = vpop.f32.mrb[0].mxu0
    %v1422 = vadd.f32 %v1189, %v1421
    %1423 = vmatprep.mubr.bf16.mxu0 %v585
    %1424 = vmatmul.mubr.bf16.gmra.mrb[0].mxu0 %v584
    %v1425 = vpop.f32.mrb[0].mxu0
    %v1426 = vadd.f32 %v1193, %v1425
    %v1427 = vpop.f32.mrb[0].mxu0
    %v1428 = vadd.f32 %v1195, %v1427
    %v1429 = vpop.f32.mrb[0].mxu0
    %v1430 = vadd.f32 %v1197, %v1429
    %v1431 = vpop.f32.mrb[0].mxu0
    %v1432 = vadd.f32 %v1199, %v1431
    %1433 = vmatprep.mubr.bf16.mxu0 %v589
    %1434 = vmatmul.mubr.bf16.gmra.mrb[0].mxu0 %v588
    %v1435 = vpop.f32.mrb[0].mxu0
    %v1436 = vadd.f32 %v1203, %v1435
    %v1437 = vpop.f32.mrb[0].mxu0
    %v1438 = vadd.f32 %v1205, %v1437
    %v1439 = vpop.f32.mrb[0].mxu0
    %v1440 = vadd.f32 %v1207, %v1439
    %v1441 = vpop.f32.mrb[0].mxu0
    %v1442 = vadd.f32 %v1209, %v1441
    %1443 = vmatprep.mubr.bf16.mxu0 %v593
    %1444 = vmatmul.mubr.bf16.gmra.mrb[0].mxu0 %v592
    %v1445 = vpop.f32.mrb[0].mxu0
    %v1446 = vadd.f32 %v1213, %v1445
    %v1447 = vpop.f32.mrb[0].mxu0
    %v1448 = vadd.f32 %v1215, %v1447
    %v1449 = vpop.f32.mrb[0].mxu0
    %v1450 = vadd.f32 %v1217, %v1449
    %v1451 = vpop.f32.mrb[0].mxu0
    %v1452 = vadd.f32 %v1219, %v1451
    %1453 = vmatprep.mubr.bf16.mxu0 %v597
    %1454 = vmatmul.mubr.bf16.gmra.mrb[0].mxu0 %v596
    %v1455 = vpop.f32.mrb[0].mxu0
    %v1456 = vadd.f32 %v1223, %v1455
    %v1457 = vpop.f32.mrb[0].mxu0
    %v1458 = vadd.f32 %v1225, %v1457
    %v1459 = vpop.f32.mrb[0].mxu0
    %v1460 = vadd.f32 %v1227, %v1459
    %v1461 = vpop.f32.mrb[0].mxu0
    %v1462 = vadd.f32 %v1229, %v1461
    %1463 = vdwg.mxu0
    %v1464 = vadd.f32 %v1266, %v1270
    %v1465 = vadd.f32 %v1464, %v1276
    %v1466 = vadd.f32 %v1465, %v1280
    %v1467 = vadd.f32 %v1466, %v1286
    %v1468 = vadd.f32 %v1467, %v1290
    %v1469 = vadd.f32 %v1468, %v1296
    %v1470 = vadd.f32 %v1469, %v1300
    %v1471 = vadd.f32 %v1470, %v1306
    %v1472 = vadd.f32 %v1471, %v1310
    %v1473 = vadd.f32 %v1472, %v1316
    %v1474 = vadd.f32 %v1473, %v1320
    %v1475 = vadd.f32 %v1474, %v1326
    %v1476 = vadd.f32 %v1475, %v1330
    %v1477 = vadd.f32 %v1476, %v1336
    %v1478 = vadd.f32 %v1477, %v1340
    %v1479 = vadd.f32 %v1478, %v1346
    %v1480 = vadd.f32 %v1479, %v1350
    %v1481 = vadd.f32 %v1480, %v1356
    %v1482 = vadd.f32 %v1481, %v1360
    %v1483 = vadd.f32 %v1482, %v1366
    %v1484 = vadd.f32 %v1483, %v1370
    %v1485 = vadd.f32 %v1484, %v1376
    %v1486 = vadd.f32 %v1485, %v1380
    %v1487 = vadd.f32 %v1486, %v1386
    %v1488 = vadd.f32 %v1487, %v1390
    %v1489 = vadd.f32 %v1488, %v1396
    %v1490 = vadd.f32 %v1489, %v1400
    %v1491 = vadd.f32 %v1490, %v1406
    %v1492 = vadd.f32 %v1491, %v1410
    %v1493 = vadd.f32 %v1492, %v1416
    %v1494 = vadd.f32 %v1493, %v1420
    %v1495 = vadd.f32 %v1494, %v1426
    %v1496 = vadd.f32 %v1495, %v1430
    %v1497 = vadd.f32 %v1496, %v1436
    %v1498 = vadd.f32 %v1497, %v1440
    %v1499 = vadd.f32 %v1498, %v1446
    %v1500 = vadd.f32 %v1499, %v1450
    %v1501 = vadd.f32 %v1500, %v1456
    %v1502 = vadd.f32 %v1501, %v1460
    %v1503 = vrot.slane %v1502, 4
    %v1504 = vadd.f32 %v1502, %v1503
    %v1505 = vrot.slane %v1504, 2
    %v1506 = vadd.f32 %v1504, %v1505
    %v1507 = vrot.slane %v1506, 1
    %v1508 = vadd.f32 %v1506, %v1507
    %v1509 = vadd.f32 %v1268, %v1272
    %v1510 = vadd.f32 %v1509, %v1278
    %v1511 = vadd.f32 %v1510, %v1282
    %v1512 = vadd.f32 %v1511, %v1288
    %v1513 = vadd.f32 %v1512, %v1292
    %v1514 = vadd.f32 %v1513, %v1298
    %v1515 = vadd.f32 %v1514, %v1302
    %v1516 = vadd.f32 %v1515, %v1308
    %v1517 = vadd.f32 %v1516, %v1312
    %v1518 = vadd.f32 %v1517, %v1318
    %v1519 = vadd.f32 %v1518, %v1322
    %v1520 = vadd.f32 %v1519, %v1328
    %v1521 = vadd.f32 %v1520, %v1332
    %v1522 = vadd.f32 %v1521, %v1338
    %v1523 = vadd.f32 %v1522, %v1342
    %v1524 = vadd.f32 %v1523, %v1348
    %v1525 = vadd.f32 %v1524, %v1352
    %v1526 = vadd.f32 %v1525, %v1358
    %v1527 = vadd.f32 %v1526, %v1362
    %v1528 = vadd.f32 %v1527, %v1368
    %v1529 = vadd.f32 %v1528, %v1372
    %v1530 = vadd.f32 %v1529, %v1378
    %v1531 = vadd.f32 %v1530, %v1382
    %v1532 = vadd.f32 %v1531, %v1388
    %v1533 = vadd.f32 %v1532, %v1392
    %v1534 = vadd.f32 %v1533, %v1398
    %v1535 = vadd.f32 %v1534, %v1402
    %v1536 = vadd.f32 %v1535, %v1408
    %v1537 = vadd.f32 %v1536, %v1412
    %v1538 = vadd.f32 %v1537, %v1418
    %v1539 = vadd.f32 %v1538, %v1422
    %v1540 = vadd.f32 %v1539, %v1428
    %v1541 = vadd.f32 %v1540, %v1432
    %v1542 = vadd.f32 %v1541, %v1438
    %v1543 = vadd.f32 %v1542, %v1442
    %v1544 = vadd.f32 %v1543, %v1448
    %v1545 = vadd.f32 %v1544, %v1452
    %v1546 = vadd.f32 %v1545, %v1458
    %v1547 = vadd.f32 %v1546, %v1462
    %v1548 = vrot.slane %v1547, 4
    %v1549 = vadd.f32 %v1547, %v1548
    %v1550 = vrot.slane %v1549, 2
    %v1551 = vadd.f32 %v1549, %v1550
    %v1552 = vrot.slane %v1551, 1
    %v1553 = vadd.f32 %v1551, %v1552
    %v1554 = vmul.f32 %v1508, 0.0078125
    %v1555 = vmul.f32 %v1553, 0.0078125
    %v1556 = vmul.f32 %v1266, %v1266
    %v1557 = vmul.f32 %v1268, %v1268
    %v1558 = vmul.f32 %v1270, %v1270
    %v1559 = vmul.f32 %v1272, %v1272
    %v1560 = vmul.f32 %v1276, %v1276
    %v1561 = vmul.f32 %v1278, %v1278
    %v1562 = vmul.f32 %v1280, %v1280
    %v1563 = vmul.f32 %v1282, %v1282
    %v1564 = vmul.f32 %v1286, %v1286
    %v1565 = vmul.f32 %v1288, %v1288
    %v1566 = vmul.f32 %v1290, %v1290
    %v1567 = vmul.f32 %v1292, %v1292
    %v1568 = vmul.f32 %v1296, %v1296
    %v1569 = vmul.f32 %v1298, %v1298
    %v1570 = vmul.f32 %v1300, %v1300
    %v1571 = vmul.f32 %v1302, %v1302
    %v1572 = vmul.f32 %v1306, %v1306
    %v1573 = vmul.f32 %v1308, %v1308
    %v1574 = vmul.f32 %v1310, %v1310
    %v1575 = vmul.f32 %v1312, %v1312
    %v1576 = vmul.f32 %v1316, %v1316
    %v1577 = vmul.f32 %v1318, %v1318
    %v1578 = vmul.f32 %v1320, %v1320
    %v1579 = vmul.f32 %v1322, %v1322
    %v1580 = vmul.f32 %v1326, %v1326
    %v1581 = vmul.f32 %v1328, %v1328
    %v1582 = vmul.f32 %v1330, %v1330
    %v1583 = vmul.f32 %v1332, %v1332
    %v1584 = vmul.f32 %v1336, %v1336
    %v1585 = vmul.f32 %v1338, %v1338
    %v1586 = vmul.f32 %v1340, %v1340
    %v1587 = vmul.f32 %v1342, %v1342
    %v1588 = vmul.f32 %v1346, %v1346
    %v1589 = vmul.f32 %v1348, %v1348
    %v1590 = vmul.f32 %v1350, %v1350
    %v1591 = vmul.f32 %v1352, %v1352
    %v1592 = vmul.f32 %v1356, %v1356
    %v1593 = vmul.f32 %v1358, %v1358
    %v1594 = vmul.f32 %v1360, %v1360
    %v1595 = vmul.f32 %v1362, %v1362
    %v1596 = vmul.f32 %v1366, %v1366
    %v1597 = vmul.f32 %v1368, %v1368
    %v1598 = vmul.f32 %v1370, %v1370
    %v1599 = vmul.f32 %v1372, %v1372
    %v1600 = vmul.f32 %v1376, %v1376
    %v1601 = vmul.f32 %v1378, %v1378
    %v1602 = vmul.f32 %v1380, %v1380
    %v1603 = vmul.f32 %v1382, %v1382
    %v1604 = vmul.f32 %v1386, %v1386
    %v1605 = vmul.f32 %v1388, %v1388
    %v1606 = vmul.f32 %v1390, %v1390
    %v1607 = vmul.f32 %v1392, %v1392
    %v1608 = vmul.f32 %v1396, %v1396
    %v1609 = vmul.f32 %v1398, %v1398
    %v1610 = vmul.f32 %v1400, %v1400
    %v1611 = vmul.f32 %v1402, %v1402
    %v1612 = vmul.f32 %v1406, %v1406
    %v1613 = vmul.f32 %v1408, %v1408
    %v1614 = vmul.f32 %v1410, %v1410
    %v1615 = vmul.f32 %v1412, %v1412
    %v1616 = vmul.f32 %v1416, %v1416
    %v1617 = vmul.f32 %v1418, %v1418
    %v1618 = vmul.f32 %v1420, %v1420
    %v1619 = vmul.f32 %v1422, %v1422
    %v1620 = vmul.f32 %v1426, %v1426
    %v1621 = vmul.f32 %v1428, %v1428
    %v1622 = vmul.f32 %v1430, %v1430
    %v1623 = vmul.f32 %v1432, %v1432
    %v1624 = vmul.f32 %v1436, %v1436
    %v1625 = vmul.f32 %v1438, %v1438
    %v1626 = vmul.f32 %v1440, %v1440
    %v1627 = vmul.f32 %v1442, %v1442
    %v1628 = vmul.f32 %v1446, %v1446
    %v1629 = vmul.f32 %v1448, %v1448
    %v1630 = vmul.f32 %v1450, %v1450
    %v1631 = vmul.f32 %v1452, %v1452
    %v1632 = vmul.f32 %v1456, %v1456
    %v1633 = vmul.f32 %v1458, %v1458
    %v1634 = vmul.f32 %v1460, %v1460
    %v1635 = vmul.f32 %v1462, %v1462
    %v1636 = vadd.f32 %v1556, %v1558
    %v1637 = vadd.f32 %v1636, %v1560
    %v1638 = vadd.f32 %v1637, %v1562
    %v1639 = vadd.f32 %v1638, %v1564
    %v1640 = vadd.f32 %v1639, %v1566
    %v1641 = vadd.f32 %v1640, %v1568
    %v1642 = vadd.f32 %v1641, %v1570
    %v1643 = vadd.f32 %v1642, %v1572
    %v1644 = vadd.f32 %v1643, %v1574
    %v1645 = vadd.f32 %v1644, %v1576
    %v1646 = vadd.f32 %v1645, %v1578
    %v1647 = vadd.f32 %v1646, %v1580
    %v1648 = vadd.f32 %v1647, %v1582
    %v1649 = vadd.f32 %v1648, %v1584
    %v1650 = vadd.f32 %v1649, %v1586
    %v1651 = vadd.f32 %v1650, %v1588
    %v1652 = vadd.f32 %v1651, %v1590
    %v1653 = vadd.f32 %v1652, %v1592
    %v1654 = vadd.f32 %v1653, %v1594
    %v1655 = vadd.f32 %v1654, %v1596
    %v1656 = vadd.f32 %v1655, %v1598
    %v1657 = vadd.f32 %v1656, %v1600
    %v1658 = vadd.f32 %v1657, %v1602
    %v1659 = vadd.f32 %v1658, %v1604
    %v1660 = vadd.f32 %v1659, %v1606
    %v1661 = vadd.f32 %v1660, %v1608
    %v1662 = vadd.f32 %v1661, %v1610
    %v1663 = vadd.f32 %v1662, %v1612
    %v1664 = vadd.f32 %v1663, %v1614
    %v1665 = vadd.f32 %v1664, %v1616
    %v1666 = vadd.f32 %v1665, %v1618
    %v1667 = vadd.f32 %v1666, %v1620
    %v1668 = vadd.f32 %v1667, %v1622
    %v1669 = vadd.f32 %v1668, %v1624
    %v1670 = vadd.f32 %v1669, %v1626
    %v1671 = vadd.f32 %v1670, %v1628
    %v1672 = vadd.f32 %v1671, %v1630
    %v1673 = vadd.f32 %v1672, %v1632
    %v1674 = vadd.f32 %v1673, %v1634
    %v1675 = vrot.slane %v1674, 4
    %v1676 = vadd.f32 %v1674, %v1675
    %v1677 = vrot.slane %v1676, 2
    %v1678 = vadd.f32 %v1676, %v1677
    %v1679 = vrot.slane %v1678, 1
    %v1680 = vadd.f32 %v1678, %v1679
    %v1681 = vadd.f32 %v1557, %v1559
    %v1682 = vadd.f32 %v1681, %v1561
    %v1683 = vadd.f32 %v1682, %v1563
    %v1684 = vadd.f32 %v1683, %v1565
    %v1685 = vadd.f32 %v1684, %v1567
    %v1686 = vadd.f32 %v1685, %v1569
    %v1687 = vadd.f32 %v1686, %v1571
    %v1688 = vadd.f32 %v1687, %v1573
    %v1689 = vadd.f32 %v1688, %v1575
    %v1690 = vadd.f32 %v1689, %v1577
    %v1691 = vadd.f32 %v1690, %v1579
    %v1692 = vadd.f32 %v1691, %v1581
    %v1693 = vadd.f32 %v1692, %v1583
    %v1694 = vadd.f32 %v1693, %v1585
    %v1695 = vadd.f32 %v1694, %v1587
    %v1696 = vadd.f32 %v1695, %v1589
    %v1697 = vadd.f32 %v1696, %v1591
    %v1698 = vadd.f32 %v1697, %v1593
    %v1699 = vadd.f32 %v1698, %v1595
    %v1700 = vadd.f32 %v1699, %v1597
    %v1701 = vadd.f32 %v1700, %v1599
    %v1702 = vadd.f32 %v1701, %v1601
    %v1703 = vadd.f32 %v1702, %v1603
    %v1704 = vadd.f32 %v1703, %v1605
    %v1705 = vadd.f32 %v1704, %v1607
    %v1706 = vadd.f32 %v1705, %v1609
    %v1707 = vadd.f32 %v1706, %v1611
    %v1708 = vadd.f32 %v1707, %v1613
    %v1709 = vadd.f32 %v1708, %v1615
    %v1710 = vadd.f32 %v1709, %v1617
    %v1711 = vadd.f32 %v1710, %v1619
    %v1712 = vadd.f32 %v1711, %v1621
    %v1713 = vadd.f32 %v1712, %v1623
    %v1714 = vadd.f32 %v1713, %v1625
    %v1715 = vadd.f32 %v1714, %v1627
    %v1716 = vadd.f32 %v1715, %v1629
    %v1717 = vadd.f32 %v1716, %v1631
    %v1718 = vadd.f32 %v1717, %v1633
    %v1719 = vadd.f32 %v1718, %v1635
    %v1720 = vrot.slane %v1719, 4
    %v1721 = vadd.f32 %v1719, %v1720
    %v1722 = vrot.slane %v1721, 2
    %v1723 = vadd.f32 %v1721, %v1722
    %v1724 = vrot.slane %v1723, 1
    %v1725 = vadd.f32 %v1723, %v1724
    %v1726 = vmul.f32 %v1680, 0.0078125
    %v1727 = vmul.f32 %v1725, 0.0078125
    %v1728 = vmul.f32 %v1554, %v1554
    %v1729 = vmul.f32 %v1555, %v1555
    %v1730 = vsub.f32 %v1726, %v1728
    %v1731 = vsub.f32 %v1727, %v1729
    %v1732 = vmax.f32 %v1730, 0.0
    %v1733 = vmax.f32 %v1731, 0.0
    %v1734 = vsub.f32 %v1266, %v1554
    %v1735 = vsub.f32 %v1268, %v1555
    %v1736 = vsub.f32 %v1270, %v1554
    %v1737 = vsub.f32 %v1272, %v1555
    %v1738 = vsub.f32 %v1276, %v1554
    %v1739 = vsub.f32 %v1278, %v1555
    %v1740 = vsub.f32 %v1280, %v1554
    %v1741 = vsub.f32 %v1282, %v1555
    %v1742 = vsub.f32 %v1286, %v1554
    %v1743 = vsub.f32 %v1288, %v1555
    %v1744 = vsub.f32 %v1290, %v1554
    %v1745 = vsub.f32 %v1292, %v1555
    %v1746 = vsub.f32 %v1296, %v1554
    %v1747 = vsub.f32 %v1298, %v1555
    %v1748 = vsub.f32 %v1300, %v1554
    %v1749 = vsub.f32 %v1302, %v1555
    %v1750 = vsub.f32 %v1306, %v1554
    %v1751 = vsub.f32 %v1308, %v1555
    %v1752 = vsub.f32 %v1310, %v1554
    %v1753 = vsub.f32 %v1312, %v1555
    %v1754 = vsub.f32 %v1316, %v1554
    %v1755 = vsub.f32 %v1318, %v1555
    %v1756 = vsub.f32 %v1320, %v1554
    %v1757 = vsub.f32 %v1322, %v1555
    %v1758 = vsub.f32 %v1326, %v1554
    %v1759 = vsub.f32 %v1328, %v1555
    %v1760 = vsub.f32 %v1330, %v1554
    %v1761 = vsub.f32 %v1332, %v1555
    %v1762 = vsub.f32 %v1336, %v1554
    %v1763 = vsub.f32 %v1338, %v1555
    %v1764 = vsub.f32 %v1340, %v1554
    %v1765 = vsub.f32 %v1342, %v1555
    %v1766 = vsub.f32 %v1346, %v1554
    %v1767 = vsub.f32 %v1348, %v1555
    %v1768 = vsub.f32 %v1350, %v1554
    %v1769 = vsub.f32 %v1352, %v1555
    %v1770 = vsub.f32 %v1356, %v1554
    %v1771 = vsub.f32 %v1358, %v1555
    %v1772 = vsub.f32 %v1360, %v1554
    %v1773 = vsub.f32 %v1362, %v1555
    %v1774 = vsub.f32 %v1366, %v1554
    %v1775 = vsub.f32 %v1368, %v1555
    %v1776 = vsub.f32 %v1370, %v1554
    %v1777 = vsub.f32 %v1372, %v1555
    %v1778 = vsub.f32 %v1376, %v1554
    %v1779 = vsub.f32 %v1378, %v1555
    %v1780 = vsub.f32 %v1380, %v1554
    %v1781 = vsub.f32 %v1382, %v1555
    %v1782 = vsub.f32 %v1386, %v1554
    %v1783 = vsub.f32 %v1388, %v1555
    %v1784 = vsub.f32 %v1390, %v1554
    %v1785 = vsub.f32 %v1392, %v1555
    %v1786 = vsub.f32 %v1396, %v1554
    %v1787 = vsub.f32 %v1398, %v1555
    %v1788 = vsub.f32 %v1400, %v1554
    %v1789 = vsub.f32 %v1402, %v1555
    %v1790 = vsub.f32 %v1406, %v1554
    %v1791 = vsub.f32 %v1408, %v1555
    %v1792 = vsub.f32 %v1410, %v1554
    %v1793 = vsub.f32 %v1412, %v1555
    %v1794 = vsub.f32 %v1416, %v1554
    %v1795 = vsub.f32 %v1418, %v1555
    %v1796 = vsub.f32 %v1420, %v1554
    %v1797 = vsub.f32 %v1422, %v1555
    %v1798 = vsub.f32 %v1426, %v1554
    %v1799 = vsub.f32 %v1428, %v1555
    %v1800 = vsub.f32 %v1430, %v1554
    %v1801 = vsub.f32 %v1432, %v1555
    %v1802 = vsub.f32 %v1436, %v1554
    %v1803 = vsub.f32 %v1438, %v1555
    %v1804 = vsub.f32 %v1440, %v1554
    %v1805 = vsub.f32 %v1442, %v1555
    %v1806 = vsub.f32 %v1446, %v1554
    %v1807 = vsub.f32 %v1448, %v1555
    %v1808 = vsub.f32 %v1450, %v1554
    %v1809 = vsub.f32 %v1452, %v1555
    %v1810 = vsub.f32 %v1456, %v1554
    %v1811 = vsub.f32 %v1458, %v1555
    %v1812 = vsub.f32 %v1460, %v1554
    %v1813 = vsub.f32 %v1462, %v1555
    %v1814 = vadd.f32 %v1732, 1e-05
    %v1815 = vadd.f32 %v1733, 1e-05
    %v1816 = vrsqrt.pop %v1814
    %v1817 = vrsqrt.pop %v1815
    %v1818 = vmul.f32 %v1734, %v1816
    %v1819 = vmul.f32 %v1735, %v1817
    %v1820 = vmul.f32 %v1736, %v1816
    %v1821 = vmul.f32 %v1737, %v1817
    %v1822 = vmul.f32 %v1738, %v1816
    %v1823 = vmul.f32 %v1739, %v1817
    %v1824 = vmul.f32 %v1740, %v1816
    %v1825 = vmul.f32 %v1741, %v1817
    %v1826 = vmul.f32 %v1742, %v1816
    %v1827 = vmul.f32 %v1743, %v1817
    %v1828 = vmul.f32 %v1744, %v1816
    %v1829 = vmul.f32 %v1745, %v1817
    %v1830 = vmul.f32 %v1746, %v1816
    %v1831 = vmul.f32 %v1747, %v1817
    %v1832 = vmul.f32 %v1748, %v1816
    %v1833 = vmul.f32 %v1749, %v1817
    %v1834 = vmul.f32 %v1750, %v1816
    %v1835 = vmul.f32 %v1751, %v1817
    %v1836 = vmul.f32 %v1752, %v1816
    %v1837 = vmul.f32 %v1753, %v1817
    %v1838 = vmul.f32 %v1754, %v1816
    %v1839 = vmul.f32 %v1755, %v1817
    %v1840 = vmul.f32 %v1756, %v1816
    %v1841 = vmul.f32 %v1757, %v1817
    %v1842 = vmul.f32 %v1758, %v1816
    %v1843 = vmul.f32 %v1759, %v1817
    %v1844 = vmul.f32 %v1760, %v1816
    %v1845 = vmul.f32 %v1761, %v1817
    %v1846 = vmul.f32 %v1762, %v1816
    %v1847 = vmul.f32 %v1763, %v1817
    %v1848 = vmul.f32 %v1764, %v1816
    %v1849 = vmul.f32 %v1765, %v1817
    %v1850 = vmul.f32 %v1766, %v1816
    %v1851 = vmul.f32 %v1767, %v1817
    %v1852 = vmul.f32 %v1768, %v1816
    %v1853 = vmul.f32 %v1769, %v1817
    %v1854 = vmul.f32 %v1770, %v1816
    %v1855 = vmul.f32 %v1771, %v1817
    %v1856 = vmul.f32 %v1772, %v1816
    %v1857 = vmul.f32 %v1773, %v1817
    %v1858 = vmul.f32 %v1774, %v1816
    %v1859 = vmul.f32 %v1775, %v1817
    %v1860 = vmul.f32 %v1776, %v1816
    %v1861 = vmul.f32 %v1777, %v1817
    %v1862 = vmul.f32 %v1778, %v1816
    %v1863 = vmul.f32 %v1779, %v1817
    %v1864 = vmul.f32 %v1780, %v1816
    %v1865 = vmul.f32 %v1781, %v1817
    %v1866 = vmul.f32 %v1782, %v1816
    %v1867 = vmul.f32 %v1783, %v1817
    %v1868 = vmul.f32 %v1784, %v1816
    %v1869 = vmul.f32 %v1785, %v1817
    %v1870 = vmul.f32 %v1786, %v1816
    %v1871 = vmul.f32 %v1787, %v1817
    %v1872 = vmul.f32 %v1788, %v1816
    %v1873 = vmul.f32 %v1789, %v1817
    %v1874 = vmul.f32 %v1790, %v1816
    %v1875 = vmul.f32 %v1791, %v1817
    %v1876 = vmul.f32 %v1792, %v1816
    %v1877 = vmul.f32 %v1793, %v1817
    %v1878 = vmul.f32 %v1794, %v1816
    %v1879 = vmul.f32 %v1795, %v1817
    %v1880 = vmul.f32 %v1796, %v1816
    %v1881 = vmul.f32 %v1797, %v1817
    %v1882 = vmul.f32 %v1798, %v1816
    %v1883 = vmul.f32 %v1799, %v1817
    %v1884 = vmul.f32 %v1800, %v1816
    %v1885 = vmul.f32 %v1801, %v1817
    %v1886 = vmul.f32 %v1802, %v1816
    %v1887 = vmul.f32 %v1803, %v1817
    %v1888 = vmul.f32 %v1804, %v1816
    %v1889 = vmul.f32 %v1805, %v1817
    %v1890 = vmul.f32 %v1806, %v1816
    %v1891 = vmul.f32 %v1807, %v1817
    %v1892 = vmul.f32 %v1808, %v1816
    %v1893 = vmul.f32 %v1809, %v1817
    %v1894 = vmul.f32 %v1810, %v1816
    %v1895 = vmul.f32 %v1811, %v1817
    %v1896 = vmul.f32 %v1812, %v1816
    %v1897 = vmul.f32 %v1813, %v1817
    %v1898 = vld [vmem:[#allocation11] sm:$0x3]
    %v1900 = vlaneseq
    %v1901 = vshrl.u32 %v1900, 7
    %v1902 = vsub.s32 0, %v1901
    %v1903 = vrot.slane %v1898, %v1902
    %v1904 = vlaneseq
    %v1905 = vshrl.u32 %v1904, 7
    %v1906 = vsub.s32 1, %v1905
    %v1907 = vrot.slane %v1898, %v1906
    %v1910 = vmul.f32 %v1818, %v1903
    %v1911 = vmul.f32 %v1819, %v1907
    %v1912 = vmul.f32 %v1820, %v1903
    %v1913 = vmul.f32 %v1821, %v1907
    %v1914 = vmul.f32 %v1822, %v1903
    %v1915 = vmul.f32 %v1823, %v1907
    %v1916 = vmul.f32 %v1824, %v1903
    %v1917 = vmul.f32 %v1825, %v1907
    %v1918 = vmul.f32 %v1826, %v1903
    %v1919 = vmul.f32 %v1827, %v1907
    %v1920 = vmul.f32 %v1828, %v1903
    %v1921 = vmul.f32 %v1829, %v1907
    %v1922 = vmul.f32 %v1830, %v1903
    %v1923 = vmul.f32 %v1831, %v1907
    %v1924 = vmul.f32 %v1832, %v1903
    %v1925 = vmul.f32 %v1833, %v1907
    %v1926 = vmul.f32 %v1834, %v1903
    %v1927 = vmul.f32 %v1835, %v1907
    %v1928 = vmul.f32 %v1836, %v1903
    %v1929 = vmul.f32 %v1837, %v1907
    %v1930 = vmul.f32 %v1838, %v1903
    %v1931 = vmul.f32 %v1839, %v1907
    %v1932 = vmul.f32 %v1840, %v1903
    %v1933 = vmul.f32 %v1841, %v1907
    %v1934 = vmul.f32 %v1842, %v1903
    %v1935 = vmul.f32 %v1843, %v1907
    %v1936 = vmul.f32 %v1844, %v1903
    %v1937 = vmul.f32 %v1845, %v1907
    %v1938 = vmul.f32 %v1846, %v1903
    %v1939 = vmul.f32 %v1847, %v1907
    %v1940 = vmul.f32 %v1848, %v1903
    %v1941 = vmul.f32 %v1849, %v1907
    %v1942 = vmul.f32 %v1850, %v1903
    %v1943 = vmul.f32 %v1851, %v1907
    %v1944 = vmul.f32 %v1852, %v1903
    %v1945 = vmul.f32 %v1853, %v1907
    %v1946 = vmul.f32 %v1854, %v1903
    %v1947 = vmul.f32 %v1855, %v1907
    %v1948 = vmul.f32 %v1856, %v1903
    %v1949 = vmul.f32 %v1857, %v1907
    %v1950 = vmul.f32 %v1858, %v1903
    %v1951 = vmul.f32 %v1859, %v1907
    %v1952 = vmul.f32 %v1860, %v1903
    %v1953 = vmul.f32 %v1861, %v1907
    %v1954 = vmul.f32 %v1862, %v1903
    %v1955 = vmul.f32 %v1863, %v1907
    %v1956 = vmul.f32 %v1864, %v1903
    %v1957 = vmul.f32 %v1865, %v1907
    %v1958 = vmul.f32 %v1866, %v1903
    %v1959 = vmul.f32 %v1867, %v1907
    %v1960 = vmul.f32 %v1868, %v1903
    %v1961 = vmul.f32 %v1869, %v1907
    %v1962 = vmul.f32 %v1870, %v1903
    %v1963 = vmul.f32 %v1871, %v1907
    %v1964 = vmul.f32 %v1872, %v1903
    %v1965 = vmul.f32 %v1873, %v1907
    %v1966 = vmul.f32 %v1874, %v1903
    %v1967 = vmul.f32 %v1875, %v1907
    %v1968 = vmul.f32 %v1876, %v1903
    %v1969 = vmul.f32 %v1877, %v1907
    %v1970 = vmul.f32 %v1878, %v1903
    %v1971 = vmul.f32 %v1879, %v1907
    %v1972 = vmul.f32 %v1880, %v1903
    %v1973 = vmul.f32 %v1881, %v1907
    %v1974 = vmul.f32 %v1882, %v1903
    %v1975 = vmul.f32 %v1883, %v1907
    %v1976 = vmul.f32 %v1884, %v1903
    %v1977 = vmul.f32 %v1885, %v1907
    %v1978 = vmul.f32 %v1886, %v1903
    %v1979 = vmul.f32 %v1887, %v1907
    %v1980 = vmul.f32 %v1888, %v1903
    %v1981 = vmul.f32 %v1889, %v1907
    %v1982 = vmul.f32 %v1890, %v1903
    %v1983 = vmul.f32 %v1891, %v1907
    %v1984 = vmul.f32 %v1892, %v1903
    %v1985 = vmul.f32 %v1893, %v1907
    %v1986 = vmul.f32 %v1894, %v1903
    %v1987 = vmul.f32 %v1895, %v1907
    %v1988 = vmul.f32 %v1896, %v1903
    %v1989 = vmul.f32 %v1897, %v1907
    %v1990 = vld [vmem:[#allocation12] sm:$0x3]
    %v1992 = vlaneseq
    %v1993 = vshrl.u32 %v1992, 7
    %v1994 = vsub.s32 0, %v1993
    %v1995 = vrot.slane %v1990, %v1994
    %v1996 = vlaneseq
    %v1997 = vshrl.u32 %v1996, 7
    %v1998 = vsub.s32 1, %v1997
    %v1999 = vrot.slane %v1990, %v1998
    %v2002 = vadd.f32 %v1910, %v1995
    %v2003 = vadd.f32 %v1911, %v1999
    %v2004 = vadd.f32 %v1912, %v1995
    %v2005 = vadd.f32 %v1913, %v1999
    %v2006 = vadd.f32 %v1914, %v1995
    %v2007 = vadd.f32 %v1915, %v1999
    %v2008 = vadd.f32 %v1916, %v1995
    %v2009 = vadd.f32 %v1917, %v1999
    %v2010 = vadd.f32 %v1918, %v1995
    %v2011 = vadd.f32 %v1919, %v1999
    %v2012 = vadd.f32 %v1920, %v1995
    %v2013 = vadd.f32 %v1921, %v1999
    %v2014 = vadd.f32 %v1922, %v1995
    %v2015 = vadd.f32 %v1923, %v1999
    %v2016 = vadd.f32 %v1924, %v1995
    %v2017 = vadd.f32 %v1925, %v1999
    %v2018 = vadd.f32 %v1926, %v1995
    %v2019 = vadd.f32 %v1927, %v1999
    %v2020 = vadd.f32 %v1928, %v1995
    %v2021 = vadd.f32 %v1929, %v1999
    %v2022 = vadd.f32 %v1930, %v1995
    %v2023 = vadd.f32 %v1931, %v1999
    %v2024 = vadd.f32 %v1932, %v1995
    %v2025 = vadd.f32 %v1933, %v1999
    %v2026 = vadd.f32 %v1934, %v1995
    %v2027 = vadd.f32 %v1935, %v1999
    %v2028 = vadd.f32 %v1936, %v1995
    %v2029 = vadd.f32 %v1937, %v1999
    %v2030 = vadd.f32 %v1938, %v1995
    %v2031 = vadd.f32 %v1939, %v1999
    %v2032 = vadd.f32 %v1940, %v1995
    %v2033 = vadd.f32 %v1941, %v1999
    %v2034 = vadd.f32 %v1942, %v1995
    %v2035 = vadd.f32 %v1943, %v1999
    %v2036 = vadd.f32 %v1944, %v1995
    %v2037 = vadd.f32 %v1945, %v1999
    %v2038 = vadd.f32 %v1946, %v1995
    %v2039 = vadd.f32 %v1947, %v1999
    %v2040 = vadd.f32 %v1948, %v1995
    %v2041 = vadd.f32 %v1949, %v1999
    %v2042 = vadd.f32 %v1950, %v1995
    %v2043 = vadd.f32 %v1951, %v1999
    %v2044 = vadd.f32 %v1952, %v1995
    %v2045 = vadd.f32 %v1953, %v1999
    %v2046 = vadd.f32 %v1954, %v1995
    %v2047 = vadd.f32 %v1955, %v1999
    %v2048 = vadd.f32 %v1956, %v1995
    %v2049 = vadd.f32 %v1957, %v1999
    %v2050 = vadd.f32 %v1958, %v1995
    %v2051 = vadd.f32 %v1959, %v1999
    %v2052 = vadd.f32 %v1960, %v1995
    %v2053 = vadd.f32 %v1961, %v1999
    %v2054 = vadd.f32 %v1962, %v1995
    %v2055 = vadd.f32 %v1963, %v1999
    %v2056 = vadd.f32 %v1964, %v1995
    %v2057 = vadd.f32 %v1965, %v1999
    %v2058 = vadd.f32 %v1966, %v1995
    %v2059 = vadd.f32 %v1967, %v1999
    %v2060 = vadd.f32 %v1968, %v1995
    %v2061 = vadd.f32 %v1969, %v1999
    %v2062 = vadd.f32 %v1970, %v1995
    %v2063 = vadd.f32 %v1971, %v1999
    %v2064 = vadd.f32 %v1972, %v1995
    %v2065 = vadd.f32 %v1973, %v1999
    %v2066 = vadd.f32 %v1974, %v1995
    %v2067 = vadd.f32 %v1975, %v1999
    %v2068 = vadd.f32 %v1976, %v1995
    %v2069 = vadd.f32 %v1977, %v1999
    %v2070 = vadd.f32 %v1978, %v1995
    %v2071 = vadd.f32 %v1979, %v1999
    %v2072 = vadd.f32 %v1980, %v1995
    %v2073 = vadd.f32 %v1981, %v1999
    %v2074 = vadd.f32 %v1982, %v1995
    %v2075 = vadd.f32 %v1983, %v1999
    %v2076 = vadd.f32 %v1984, %v1995
    %v2077 = vadd.f32 %v1985, %v1999
    %v2078 = vadd.f32 %v1986, %v1995
    %v2079 = vadd.f32 %v1987, %v1999
    %v2080 = vadd.f32 %v1988, %v1995
    %v2081 = vadd.f32 %v1989, %v1999
    %v2082 = vmul.f32 %v2002, 0.1
    %v2083 = vmul.f32 %v2003, 0.1
    %v2084 = vmul.f32 %v2004, 0.1
    %v2085 = vmul.f32 %v2005, 0.1
    %v2086 = vmul.f32 %v2006, 0.1
    %v2087 = vmul.f32 %v2007, 0.1
    %v2088 = vmul.f32 %v2008, 0.1
    %v2089 = vmul.f32 %v2009, 0.1
    %v2090 = vmul.f32 %v2010, 0.1
    %v2091 = vmul.f32 %v2011, 0.1
    %v2092 = vmul.f32 %v2012, 0.1
    %v2093 = vmul.f32 %v2013, 0.1
    %v2094 = vmul.f32 %v2014, 0.1
    %v2095 = vmul.f32 %v2015, 0.1
    %v2096 = vmul.f32 %v2016, 0.1
    %v2097 = vmul.f32 %v2017, 0.1
    %v2098 = vmul.f32 %v2018, 0.1
    %v2099 = vmul.f32 %v2019, 0.1
    %v2100 = vmul.f32 %v2020, 0.1
    %v2101 = vmul.f32 %v2021, 0.1
    %v2102 = vmul.f32 %v2022, 0.1
    %v2103 = vmul.f32 %v2023, 0.1
    %v2104 = vmul.f32 %v2024, 0.1
    %v2105 = vmul.f32 %v2025, 0.1
    %v2106 = vmul.f32 %v2026, 0.1
    %v2107 = vmul.f32 %v2027, 0.1
    %v2108 = vmul.f32 %v2028, 0.1
    %v2109 = vmul.f32 %v2029, 0.1
    %v2110 = vmul.f32 %v2030, 0.1
    %v2111 = vmul.f32 %v2031, 0.1
    %v2112 = vmul.f32 %v2032, 0.1
    %v2113 = vmul.f32 %v2033, 0.1
    %v2114 = vmul.f32 %v2034, 0.1
    %v2115 = vmul.f32 %v2035, 0.1
    %v2116 = vmul.f32 %v2036, 0.1
    %v2117 = vmul.f32 %v2037, 0.1
    %v2118 = vmul.f32 %v2038, 0.1
    %v2119 = vmul.f32 %v2039, 0.1
    %v2120 = vmul.f32 %v2040, 0.1
    %v2121 = vmul.f32 %v2041, 0.1
    %v2122 = vmul.f32 %v2042, 0.1
    %v2123 = vmul.f32 %v2043, 0.1
    %v2124 = vmul.f32 %v2044, 0.1
    %v2125 = vmul.f32 %v2045, 0.1
    %v2126 = vmul.f32 %v2046, 0.1
    %v2127 = vmul.f32 %v2047, 0.1
    %v2128 = vmul.f32 %v2048, 0.1
    %v2129 = vmul.f32 %v2049, 0.1
    %v2130 = vmul.f32 %v2050, 0.1
    %v2131 = vmul.f32 %v2051, 0.1
    %v2132 = vmul.f32 %v2052, 0.1
    %v2133 = vmul.f32 %v2053, 0.1
    %v2134 = vmul.f32 %v2054, 0.1
    %v2135 = vmul.f32 %v2055, 0.1
    %v2136 = vmul.f32 %v2056, 0.1
    %v2137 = vmul.f32 %v2057, 0.1
    %v2138 = vmul.f32 %v2058, 0.1
    %v2139 = vmul.f32 %v2059, 0.1
    %v2140 = vmul.f32 %v2060, 0.1
    %v2141 = vmul.f32 %v2061, 0.1
    %v2142 = vmul.f32 %v2062, 0.1
    %v2143 = vmul.f32 %v2063, 0.1
    %v2144 = vmul.f32 %v2064, 0.1
    %v2145 = vmul.f32 %v2065, 0.1
    %v2146 = vmul.f32 %v2066, 0.1
    %v2147 = vmul.f32 %v2067, 0.1
    %v2148 = vmul.f32 %v2068, 0.1
    %v2149 = vmul.f32 %v2069, 0.1
    %v2150 = vmul.f32 %v2070, 0.1
    %v2151 = vmul.f32 %v2071, 0.1
    %v2152 = vmul.f32 %v2072, 0.1
    %v2153 = vmul.f32 %v2073, 0.1
    %v2154 = vmul.f32 %v2074, 0.1
    %v2155 = vmul.f32 %v2075, 0.1
    %v2156 = vmul.f32 %v2076, 0.1
    %v2157 = vmul.f32 %v2077, 0.1
    %v2158 = vmul.f32 %v2078, 0.1
    %v2159 = vmul.f32 %v2079, 0.1
    %v2160 = vmul.f32 %v2080, 0.1
    %v2161 = vmul.f32 %v2081, 0.1
    %v2162 = vmax.f32 %v2002, %v2082
    %v2163 = vmax.f32 %v2003, %v2083
    %v2164 = vmax.f32 %v2004, %v2084
    %v2165 = vmax.f32 %v2005, %v2085
    %v2166 = vmax.f32 %v2006, %v2086
    %v2167 = vmax.f32 %v2007, %v2087
    %v2168 = vmax.f32 %v2008, %v2088
    %v2169 = vmax.f32 %v2009, %v2089
    %v2170 = vmax.f32 %v2010, %v2090
    %v2171 = vmax.f32 %v2011, %v2091
    %v2172 = vmax.f32 %v2012, %v2092
    %v2173 = vmax.f32 %v2013, %v2093
    %v2174 = vmax.f32 %v2014, %v2094
    %v2175 = vmax.f32 %v2015, %v2095
    %v2176 = vmax.f32 %v2016, %v2096
    %v2177 = vmax.f32 %v2017, %v2097
    %v2178 = vmax.f32 %v2018, %v2098
    %v2179 = vmax.f32 %v2019, %v2099
    %v2180 = vmax.f32 %v2020, %v2100
    %v2181 = vmax.f32 %v2021, %v2101
    %v2182 = vmax.f32 %v2022, %v2102
    %v2183 = vmax.f32 %v2023, %v2103
    %v2184 = vmax.f32 %v2024, %v2104
    %v2185 = vmax.f32 %v2025, %v2105
    %v2186 = vmax.f32 %v2026, %v2106
    %v2187 = vmax.f32 %v2027, %v2107
    %v2188 = vmax.f32 %v2028, %v2108
    %v2189 = vmax.f32 %v2029, %v2109
    %v2190 = vmax.f32 %v2030, %v2110
    %v2191 = vmax.f32 %v2031, %v2111
    %v2192 = vmax.f32 %v2032, %v2112
    %v2193 = vmax.f32 %v2033, %v2113
    %v2194 = vmax.f32 %v2034, %v2114
    %v2195 = vmax.f32 %v2035, %v2115
    %v2196 = vmax.f32 %v2036, %v2116
    %v2197 = vmax.f32 %v2037, %v2117
    %v2198 = vmax.f32 %v2038, %v2118
    %v2199 = vmax.f32 %v2039, %v2119
    %v2200 = vmax.f32 %v2040, %v2120
    %v2201 = vmax.f32 %v2041, %v2121
    %v2202 = vmax.f32 %v2042, %v2122
    %v2203 = vmax.f32 %v2043, %v2123
    %v2204 = vmax.f32 %v2044, %v2124
    %v2205 = vmax.f32 %v2045, %v2125
    %v2206 = vmax.f32 %v2046, %v2126
    %v2207 = vmax.f32 %v2047, %v2127
    %v2208 = vmax.f32 %v2048, %v2128
    %v2209 = vmax.f32 %v2049, %v2129
    %v2210 = vmax.f32 %v2050, %v2130
    %v2211 = vmax.f32 %v2051, %v2131
    %v2212 = vmax.f32 %v2052, %v2132
    %v2213 = vmax.f32 %v2053, %v2133
    %v2214 = vmax.f32 %v2054, %v2134
    %v2215 = vmax.f32 %v2055, %v2135
    %v2216 = vmax.f32 %v2056, %v2136
    %v2217 = vmax.f32 %v2057, %v2137
    %v2218 = vmax.f32 %v2058, %v2138
    %v2219 = vmax.f32 %v2059, %v2139
    %v2220 = vmax.f32 %v2060, %v2140
    %v2221 = vmax.f32 %v2061, %v2141
    %v2222 = vmax.f32 %v2062, %v2142
    %v2223 = vmax.f32 %v2063, %v2143
    %v2224 = vmax.f32 %v2064, %v2144
    %v2225 = vmax.f32 %v2065, %v2145
    %v2226 = vmax.f32 %v2066, %v2146
    %v2227 = vmax.f32 %v2067, %v2147
    %v2228 = vmax.f32 %v2068, %v2148
    %v2229 = vmax.f32 %v2069, %v2149
    %v2230 = vmax.f32 %v2070, %v2150
    %v2231 = vmax.f32 %v2071, %v2151
    %v2232 = vmax.f32 %v2072, %v2152
    %v2233 = vmax.f32 %v2073, %v2153
    %v2234 = vmax.f32 %v2074, %v2154
    %v2235 = vmax.f32 %v2075, %v2155
    %v2236 = vmax.f32 %v2076, %v2156
    %v2237 = vmax.f32 %v2077, %v2157
    %v2238 = vmax.f32 %v2078, %v2158
    %v2239 = vmax.f32 %v2079, %v2159
    %v2240 = vmax.f32 %v2080, %v2160
    %v2241 = vmax.f32 %v2081, %v2161
    %v2242 = vld [vmem:[%s2] sm:$0xff]
    %v2243 = vld [vmem:[%s2 + $0x8] sm:$0xff]
    %v2244 = vld [vmem:[%s2 + $0x10] sm:$0xff]
    %v2245 = vld [vmem:[%s2 + $0x18] sm:$0xff]
    %v2246 = vld [vmem:[%s2 + $0x20] sm:$0xff]
    %v2247 = vld [vmem:[%s2 + $0x28] sm:$0xff]
    %v2248 = vld [vmem:[%s2 + $0x30] sm:$0xff]
    %v2249 = vld [vmem:[%s2 + $0x38] sm:$0xff]
    %v2250 = vld [vmem:[%s2 + $0x40] sm:$0xff]
    %v2251 = vld [vmem:[%s2 + $0x48] sm:$0xff]
    %v2252 = vld [vmem:[%s2 + $0x50] sm:$0xff]
    %v2253 = vld [vmem:[%s2 + $0x58] sm:$0xff]
    %v2254 = vld [vmem:[%s2 + $0x60] sm:$0xff]
    %v2255 = vld [vmem:[%s2 + $0x68] sm:$0xff]
    %v2256 = vld [vmem:[%s2 + $0x70] sm:$0xff]
    %v2257 = vld [vmem:[%s2 + $0x78] sm:$0xff]
    %v2258 = vld [vmem:[%s2 + $0x80] sm:$0xff]
    %v2259 = vld [vmem:[%s2 + $0x88] sm:$0xff]
    %v2260 = vld [vmem:[%s2 + $0x90] sm:$0xff]
    %v2261 = vld [vmem:[%s2 + $0x98] sm:$0xff]
    %v2262 = vld [vmem:[%s2 + $0xa0] sm:$0xff]
    %v2263 = vld [vmem:[%s2 + $0xa8] sm:$0xff]
    %v2264 = vld [vmem:[%s2 + $0xb0] sm:$0xff]
    %v2265 = vld [vmem:[%s2 + $0xb8] sm:$0xff]
    %v2266 = vld [vmem:[%s2 + $0xc0] sm:$0xff]
    %v2267 = vld [vmem:[%s2 + $0xc8] sm:$0xff]
    %v2268 = vld [vmem:[%s2 + $0xd0] sm:$0xff]
    %v2269 = vld [vmem:[%s2 + $0xd8] sm:$0xff]
    %v2270 = vld [vmem:[%s2 + $0xe0] sm:$0xff]
    %v2271 = vld [vmem:[%s2 + $0xe8] sm:$0xff]
    %v2272 = vld [vmem:[%s2 + $0xf0] sm:$0xff]
    %v2273 = vld [vmem:[%s2 + $0xf8] sm:$0xff]
    %v2274 = vld [vmem:[%s2 + $0x100] sm:$0xff]
    %v2275 = vld [vmem:[%s2 + $0x108] sm:$0xff]
    %v2276 = vld [vmem:[%s2 + $0x110] sm:$0xff]
    %v2277 = vld [vmem:[%s2 + $0x118] sm:$0xff]
    %v2278 = vld [vmem:[%s2 + $0x120] sm:$0xff]
    %v2279 = vld [vmem:[%s2 + $0x128] sm:$0xff]
    %v2280 = vld [vmem:[%s2 + $0x130] sm:$0xff]
    %v2281 = vld [vmem:[%s2 + $0x138] sm:$0xff]
    %2283 = vset.pattern.permute.xlu0 0
    %2284 = vperm.xlu0 %2283, %v2242
    %v2285 = vpop.permute.xlu0 %2284
    %2288 = vset.pattern.permute.xlu0 0
    %2289 = vperm.xlu0 %2288, %v2243
    %v2290 = vpop.permute.xlu0 %2289
    %2293 = vset.pattern.permute.xlu0 0
    %2294 = vperm.xlu0 %2293, %v2244
    %v2295 = vpop.permute.xlu0 %2294
    %2298 = vset.pattern.permute.xlu0 0
    %2299 = vperm.xlu0 %2298, %v2245
    %v2300 = vpop.permute.xlu0 %2299
    %2303 = vset.pattern.permute.xlu0 0
    %2304 = vperm.xlu0 %2303, %v2246
    %v2305 = vpop.permute.xlu0 %2304
    %2308 = vset.pattern.permute.xlu0 0
    %2309 = vperm.xlu0 %2308, %v2247
    %v2310 = vpop.permute.xlu0 %2309
    %2313 = vset.pattern.permute.xlu0 0
    %2314 = vperm.xlu0 %2313, %v2248
    %v2315 = vpop.permute.xlu0 %2314
    %2318 = vset.pattern.permute.xlu0 0
    %2319 = vperm.xlu0 %2318, %v2249
    %v2320 = vpop.permute.xlu0 %2319
    %2323 = vset.pattern.permute.xlu0 0
    %2324 = vperm.xlu0 %2323, %v2250
    %v2325 = vpop.permute.xlu0 %2324
    %2328 = vset.pattern.permute.xlu0 0
    %2329 = vperm.xlu0 %2328, %v2251
    %v2330 = vpop.permute.xlu0 %2329
    %2333 = vset.pattern.permute.xlu0 0
    %2334 = vperm.xlu0 %2333, %v2252
    %v2335 = vpop.permute.xlu0 %2334
    %2338 = vset.pattern.permute.xlu0 0
    %2339 = vperm.xlu0 %2338, %v2253
    %v2340 = vpop.permute.xlu0 %2339
    %2343 = vset.pattern.permute.xlu0 0
    %2344 = vperm.xlu0 %2343, %v2254
    %v2345 = vpop.permute.xlu0 %2344
    %2348 = vset.pattern.permute.xlu0 0
    %2349 = vperm.xlu0 %2348, %v2255
    %v2350 = vpop.permute.xlu0 %2349
    %2353 = vset.pattern.permute.xlu0 0
    %2354 = vperm.xlu0 %2353, %v2256
    %v2355 = vpop.permute.xlu0 %2354
    %2358 = vset.pattern.permute.xlu0 0
    %2359 = vperm.xlu0 %2358, %v2257
    %v2360 = vpop.permute.xlu0 %2359
    %2363 = vset.pattern.permute.xlu0 0
    %2364 = vperm.xlu0 %2363, %v2258
    %v2365 = vpop.permute.xlu0 %2364
    %2368 = vset.pattern.permute.xlu0 0
    %2369 = vperm.xlu0 %2368, %v2259
    %v2370 = vpop.permute.xlu0 %2369
    %2373 = vset.pattern.permute.xlu0 0
    %2374 = vperm.xlu0 %2373, %v2260
    %v2375 = vpop.permute.xlu0 %2374
    %2378 = vset.pattern.permute.xlu0 0
    %2379 = vperm.xlu0 %2378, %v2261
    %v2380 = vpop.permute.xlu0 %2379
    %2383 = vset.pattern.permute.xlu0 0
    %2384 = vperm.xlu0 %2383, %v2262
    %v2385 = vpop.permute.xlu0 %2384
    %2388 = vset.pattern.permute.xlu0 0
    %2389 = vperm.xlu0 %2388, %v2263
    %v2390 = vpop.permute.xlu0 %2389
    %2393 = vset.pattern.permute.xlu0 0
    %2394 = vperm.xlu0 %2393, %v2264
    %v2395 = vpop.permute.xlu0 %2394
    %2398 = vset.pattern.permute.xlu0 0
    %2399 = vperm.xlu0 %2398, %v2265
    %v2400 = vpop.permute.xlu0 %2399
    %2403 = vset.pattern.permute.xlu0 0
    %2404 = vperm.xlu0 %2403, %v2266
    %v2405 = vpop.permute.xlu0 %2404
    %2408 = vset.pattern.permute.xlu0 0
    %2409 = vperm.xlu0 %2408, %v2267
    %v2410 = vpop.permute.xlu0 %2409
    %2413 = vset.pattern.permute.xlu0 0
    %2414 = vperm.xlu0 %2413, %v2268
    %v2415 = vpop.permute.xlu0 %2414
    %2418 = vset.pattern.permute.xlu0 0
    %2419 = vperm.xlu0 %2418, %v2269
    %v2420 = vpop.permute.xlu0 %2419
    %2423 = vset.pattern.permute.xlu0 0
    %2424 = vperm.xlu0 %2423, %v2270
    %v2425 = vpop.permute.xlu0 %2424
    %2428 = vset.pattern.permute.xlu0 0
    %2429 = vperm.xlu0 %2428, %v2271
    %v2430 = vpop.permute.xlu0 %2429
    %2433 = vset.pattern.permute.xlu0 0
    %2434 = vperm.xlu0 %2433, %v2272
    %v2435 = vpop.permute.xlu0 %2434
    %2438 = vset.pattern.permute.xlu0 0
    %2439 = vperm.xlu0 %2438, %v2273
    %v2440 = vpop.permute.xlu0 %2439
    %2443 = vset.pattern.permute.xlu0 0
    %2444 = vperm.xlu0 %2443, %v2274
    %v2445 = vpop.permute.xlu0 %2444
    %2448 = vset.pattern.permute.xlu0 0
    %2449 = vperm.xlu0 %2448, %v2275
    %v2450 = vpop.permute.xlu0 %2449
    %2453 = vset.pattern.permute.xlu0 0
    %2454 = vperm.xlu0 %2453, %v2276
    %v2455 = vpop.permute.xlu0 %2454
    %2458 = vset.pattern.permute.xlu0 0
    %2459 = vperm.xlu0 %2458, %v2277
    %v2460 = vpop.permute.xlu0 %2459
    %2463 = vset.pattern.permute.xlu0 0
    %2464 = vperm.xlu0 %2463, %v2278
    %v2465 = vpop.permute.xlu0 %2464
    %2468 = vset.pattern.permute.xlu0 0
    %2469 = vperm.xlu0 %2468, %v2279
    %v2470 = vpop.permute.xlu0 %2469
    %2473 = vset.pattern.permute.xlu0 0
    %2474 = vperm.xlu0 %2473, %v2280
    %v2475 = vpop.permute.xlu0 %2474
    %2478 = vset.pattern.permute.xlu0 0
    %2479 = vperm.xlu0 %2478, %v2281
    %v2480 = vpop.permute.xlu0 %2479
    %v2482 = vmul.f32 %v2162, %v2285
    %v2483 = vmul.f32 %v2163, %v2285
    %v2484 = vmul.f32 %v2164, %v2290
    %v2485 = vmul.f32 %v2165, %v2290
    %v2486 = vmul.f32 %v2166, %v2295
    %v2487 = vmul.f32 %v2167, %v2295
    %v2488 = vmul.f32 %v2168, %v2300
    %v2489 = vmul.f32 %v2169, %v2300
    %v2490 = vmul.f32 %v2170, %v2305
    %v2491 = vmul.f32 %v2171, %v2305
    %v2492 = vmul.f32 %v2172, %v2310
    %v2493 = vmul.f32 %v2173, %v2310
    %v2494 = vmul.f32 %v2174, %v2315
    %v2495 = vmul.f32 %v2175, %v2315
    %v2496 = vmul.f32 %v2176, %v2320
    %v2497 = vmul.f32 %v2177, %v2320
    %v2498 = vmul.f32 %v2178, %v2325
    %v2499 = vmul.f32 %v2179, %v2325
    %v2500 = vmul.f32 %v2180, %v2330
    %v2501 = vmul.f32 %v2181, %v2330
    %v2502 = vmul.f32 %v2182, %v2335
    %v2503 = vmul.f32 %v2183, %v2335
    %v2504 = vmul.f32 %v2184, %v2340
    %v2505 = vmul.f32 %v2185, %v2340
    %v2506 = vmul.f32 %v2186, %v2345
    %v2507 = vmul.f32 %v2187, %v2345
    %v2508 = vmul.f32 %v2188, %v2350
    %v2509 = vmul.f32 %v2189, %v2350
    %v2510 = vmul.f32 %v2190, %v2355
    %v2511 = vmul.f32 %v2191, %v2355
    %v2512 = vmul.f32 %v2192, %v2360
    %v2513 = vmul.f32 %v2193, %v2360
    %v2514 = vmul.f32 %v2194, %v2365
    %v2515 = vmul.f32 %v2195, %v2365
    %v2516 = vmul.f32 %v2196, %v2370
    %v2517 = vmul.f32 %v2197, %v2370
    %v2518 = vmul.f32 %v2198, %v2375
    %v2519 = vmul.f32 %v2199, %v2375
    %v2520 = vmul.f32 %v2200, %v2380
    %v2521 = vmul.f32 %v2201, %v2380
    %v2522 = vmul.f32 %v2202, %v2385
    %v2523 = vmul.f32 %v2203, %v2385
    %v2524 = vmul.f32 %v2204, %v2390
    %v2525 = vmul.f32 %v2205, %v2390
    %v2526 = vmul.f32 %v2206, %v2395
    %v2527 = vmul.f32 %v2207, %v2395
    %v2528 = vmul.f32 %v2208, %v2400
    %v2529 = vmul.f32 %v2209, %v2400
    %v2530 = vmul.f32 %v2210, %v2405
    %v2531 = vmul.f32 %v2211, %v2405
    %v2532 = vmul.f32 %v2212, %v2410
    %v2533 = vmul.f32 %v2213, %v2410
    %v2534 = vmul.f32 %v2214, %v2415
    %v2535 = vmul.f32 %v2215, %v2415
    %v2536 = vmul.f32 %v2216, %v2420
    %v2537 = vmul.f32 %v2217, %v2420
    %v2538 = vmul.f32 %v2218, %v2425
    %v2539 = vmul.f32 %v2219, %v2425
    %v2540 = vmul.f32 %v2220, %v2430
    %v2541 = vmul.f32 %v2221, %v2430
    %v2542 = vmul.f32 %v2222, %v2435
    %v2543 = vmul.f32 %v2223, %v2435
    %v2544 = vmul.f32 %v2224, %v2440
    %v2545 = vmul.f32 %v2225, %v2440
    %v2546 = vmul.f32 %v2226, %v2445
    %v2547 = vmul.f32 %v2227, %v2445
    %v2548 = vmul.f32 %v2228, %v2450
    %v2549 = vmul.f32 %v2229, %v2450
    %v2550 = vmul.f32 %v2230, %v2455
    %v2551 = vmul.f32 %v2231, %v2455
    %v2552 = vmul.f32 %v2232, %v2460
    %v2553 = vmul.f32 %v2233, %v2460
    %v2554 = vmul.f32 %v2234, %v2465
    %v2555 = vmul.f32 %v2235, %v2465
    %v2556 = vmul.f32 %v2236, %v2470
    %v2557 = vmul.f32 %v2237, %v2470
    %v2558 = vmul.f32 %v2238, %v2475
    %v2559 = vmul.f32 %v2239, %v2475
    %v2560 = vmul.f32 %v2240, %v2480
    %v2561 = vmul.f32 %v2241, %v2480
    %2562 = vst [vmem:[#allocation2] sm:$0xff] %v2482
    %2563 = vst [vmem:[#allocation2 + $0x8] sm:$0xff] %v2483
    %2564 = vst [vmem:[#allocation2 + $0x10] sm:$0xff] %v2484
    %2565 = vst [vmem:[#allocation2 + $0x18] sm:$0xff] %v2485
    %2566 = vst [vmem:[#allocation2 + $0x20] sm:$0xff] %v2486
    %2567 = vst [vmem:[#allocation2 + $0x28] sm:$0xff] %v2487
    %2568 = vst [vmem:[#allocation2 + $0x30] sm:$0xff] %v2488
    %2569 = vst [vmem:[#allocation2 + $0x38] sm:$0xff] %v2489
    %2570 = vst [vmem:[#allocation2 + $0x40] sm:$0xff] %v2490
    %2571 = vst [vmem:[#allocation2 + $0x48] sm:$0xff] %v2491
    %2572 = vst [vmem:[#allocation2 + $0x50] sm:$0xff] %v2492
    %2573 = vst [vmem:[#allocation2 + $0x58] sm:$0xff] %v2493
    %2574 = vst [vmem:[#allocation2 + $0x60] sm:$0xff] %v2494
    %2575 = vst [vmem:[#allocation2 + $0x68] sm:$0xff] %v2495
    %2576 = vst [vmem:[#allocation2 + $0x70] sm:$0xff] %v2496
    %2577 = vst [vmem:[#allocation2 + $0x78] sm:$0xff] %v2497
    %2578 = vst [vmem:[#allocation2 + $0x80] sm:$0xff] %v2498
    %2579 = vst [vmem:[#allocation2 + $0x88] sm:$0xff] %v2499
    %2580 = vst [vmem:[#allocation2 + $0x90] sm:$0xff] %v2500
    %2581 = vst [vmem:[#allocation2 + $0x98] sm:$0xff] %v2501
    %2582 = vst [vmem:[#allocation2 + $0xa0] sm:$0xff] %v2502
    %2583 = vst [vmem:[#allocation2 + $0xa8] sm:$0xff] %v2503
    %2584 = vst [vmem:[#allocation2 + $0xb0] sm:$0xff] %v2504
    %2585 = vst [vmem:[#allocation2 + $0xb8] sm:$0xff] %v2505
    %2586 = vst [vmem:[#allocation2 + $0xc0] sm:$0xff] %v2506
    %2587 = vst [vmem:[#allocation2 + $0xc8] sm:$0xff] %v2507
    %2588 = vst [vmem:[#allocation2 + $0xd0] sm:$0xff] %v2508
    %2589 = vst [vmem:[#allocation2 + $0xd8] sm:$0xff] %v2509
    %2590 = vst [vmem:[#allocation2 + $0xe0] sm:$0xff] %v2510
    %2591 = vst [vmem:[#allocation2 + $0xe8] sm:$0xff] %v2511
    %2592 = vst [vmem:[#allocation2 + $0xf0] sm:$0xff] %v2512
    %2593 = vst [vmem:[#allocation2 + $0xf8] sm:$0xff] %v2513
    %2594 = vst [vmem:[#allocation2 + $0x100] sm:$0xff] %v2514
    %2595 = vst [vmem:[#allocation2 + $0x108] sm:$0xff] %v2515
    %2596 = vst [vmem:[#allocation2 + $0x110] sm:$0xff] %v2516
    %2597 = vst [vmem:[#allocation2 + $0x118] sm:$0xff] %v2517
    %2598 = vst [vmem:[#allocation2 + $0x120] sm:$0xff] %v2518
    %2599 = vst [vmem:[#allocation2 + $0x128] sm:$0xff] %v2519
    %2600 = vst [vmem:[#allocation2 + $0x130] sm:$0xff] %v2520
    %2601 = vst [vmem:[#allocation2 + $0x138] sm:$0xff] %v2521
    %2602 = vst [vmem:[#allocation2 + $0x140] sm:$0xff] %v2522
    %2603 = vst [vmem:[#allocation2 + $0x148] sm:$0xff] %v2523
    %2604 = vst [vmem:[#allocation2 + $0x150] sm:$0xff] %v2524
    %2605 = vst [vmem:[#allocation2 + $0x158] sm:$0xff] %v2525
    %2606 = vst [vmem:[#allocation2 + $0x160] sm:$0xff] %v2526
    %2607 = vst [vmem:[#allocation2 + $0x168] sm:$0xff] %v2527
    %2608 = vst [vmem:[#allocation2 + $0x170] sm:$0xff] %v2528
    %2609 = vst [vmem:[#allocation2 + $0x178] sm:$0xff] %v2529
    %2610 = vst [vmem:[#allocation2 + $0x180] sm:$0xff] %v2530
    %2611 = vst [vmem:[#allocation2 + $0x188] sm:$0xff] %v2531
    %2612 = vst [vmem:[#allocation2 + $0x190] sm:$0xff] %v2532
    %2613 = vst [vmem:[#allocation2 + $0x198] sm:$0xff] %v2533
    %2614 = vst [vmem:[#allocation2 + $0x1a0] sm:$0xff] %v2534
    %2615 = vst [vmem:[#allocation2 + $0x1a8] sm:$0xff] %v2535
    %2616 = vst [vmem:[#allocation2 + $0x1b0] sm:$0xff] %v2536
    %2617 = vst [vmem:[#allocation2 + $0x1b8] sm:$0xff] %v2537
    %2618 = vst [vmem:[#allocation2 + $0x1c0] sm:$0xff] %v2538
    %2619 = vst [vmem:[#allocation2 + $0x1c8] sm:$0xff] %v2539
    %2620 = vst [vmem:[#allocation2 + $0x1d0] sm:$0xff] %v2540
    %2621 = vst [vmem:[#allocation2 + $0x1d8] sm:$0xff] %v2541
    %2622 = vst [vmem:[#allocation2 + $0x1e0] sm:$0xff] %v2542
    %2623 = vst [vmem:[#allocation2 + $0x1e8] sm:$0xff] %v2543
    %2624 = vst [vmem:[#allocation2 + $0x1f0] sm:$0xff] %v2544
    %2625 = vst [vmem:[#allocation2 + $0x1f8] sm:$0xff] %v2545
    %2626 = vst [vmem:[#allocation2 + $0x200] sm:$0xff] %v2546
    %2627 = vst [vmem:[#allocation2 + $0x208] sm:$0xff] %v2547
    %2628 = vst [vmem:[#allocation2 + $0x210] sm:$0xff] %v2548
    %2629 = vst [vmem:[#allocation2 + $0x218] sm:$0xff] %v2549
    %2630 = vst [vmem:[#allocation2 + $0x220] sm:$0xff] %v2550
    %2631 = vst [vmem:[#allocation2 + $0x228] sm:$0xff] %v2551
    %2632 = vst [vmem:[#allocation2 + $0x230] sm:$0xff] %v2552
    %2633 = vst [vmem:[#allocation2 + $0x238] sm:$0xff] %v2553
    %2634 = vst [vmem:[#allocation2 + $0x240] sm:$0xff] %v2554
    %2635 = vst [vmem:[#allocation2 + $0x248] sm:$0xff] %v2555
    %2636 = vst [vmem:[#allocation2 + $0x250] sm:$0xff] %v2556
    %2637 = vst [vmem:[#allocation2 + $0x258] sm:$0xff] %v2557
    %2638 = vst [vmem:[#allocation2 + $0x260] sm:$0xff] %v2558
    %2639 = vst [vmem:[#allocation2 + $0x268] sm:$0xff] %v2559
    %2640 = vst [vmem:[#allocation2 + $0x270] sm:$0xff] %v2560
    %2641 = vst [vmem:[#allocation2 + $0x278] sm:$0xff] %v2561
    %v2642 = vld [vmem:[#allocation2] sm:$0xff]
    %v2643 = vld [vmem:[#allocation2 + $0x8] sm:$0xff]
    %v2644 = vld [vmem:[#allocation2 + $0x20] sm:$0xff]
    %v2645 = vld [vmem:[#allocation2 + $0x28] sm:$0xff]
    %v2646 = vld [vmem:[#allocation2 + $0x40] sm:$0xff]
    %v2647 = vld [vmem:[#allocation2 + $0x48] sm:$0xff]
    %v2648 = vld [vmem:[#allocation2 + $0x60] sm:$0xff]
    %v2649 = vld [vmem:[#allocation2 + $0x68] sm:$0xff]
    %v2650 = vld [vmem:[#allocation2 + $0x80] sm:$0xff]
    %v2651 = vld [vmem:[#allocation2 + $0x88] sm:$0xff]
    %v2652 = vld [vmem:[#allocation2 + $0xa0] sm:$0xff]
    %v2653 = vld [vmem:[#allocation2 + $0xa8] sm:$0xff]
    %v2654 = vld [vmem:[#allocation2 + $0xc0] sm:$0xff]
    %v2655 = vld [vmem:[#allocation2 + $0xc8] sm:$0xff]
    %v2656 = vld [vmem:[#allocation2 + $0xe0] sm:$0xff]
    %v2657 = vld [vmem:[#allocation2 + $0xe8] sm:$0xff]
    %v2658 = vld [vmem:[#allocation2 + $0x140] sm:$0xff]
    %v2659 = vld [vmem:[#allocation2 + $0x148] sm:$0xff]
    %v2660 = vld [vmem:[#allocation2 + $0x160] sm:$0xff]
    %v2661 = vld [vmem:[#allocation2 + $0x168] sm:$0xff]
    %v2662 = vld [vmem:[#allocation2 + $0x180] sm:$0xff]
    %v2663 = vld [vmem:[#allocation2 + $0x188] sm:$0xff]
    %v2664 = vld [vmem:[#allocation2 + $0x1a0] sm:$0xff]
    %v2665 = vld [vmem:[#allocation2 + $0x1a8] sm:$0xff]
    %v2666 = vld [vmem:[#allocation2 + $0x1c0] sm:$0xff]
    %v2667 = vld [vmem:[#allocation2 + $0x1c8] sm:$0xff]
    %v2668 = vld [vmem:[#allocation2 + $0x1e0] sm:$0xff]
    %v2669 = vld [vmem:[#allocation2 + $0x1e8] sm:$0xff]
    %v2670 = vld [vmem:[#allocation2 + $0x200] sm:$0xff]
    %v2671 = vld [vmem:[#allocation2 + $0x208] sm:$0xff]
    %v2672 = vld [vmem:[#allocation2 + $0x220] sm:$0xff]
    %v2673 = vld [vmem:[#allocation2 + $0x228] sm:$0xff]
    %v2674 = vld [vmem:[#allocation2] sm:$0xfe]
    %v2675 = vld [vmem:[#allocation2 + $0x8] sm:$0xfe]
    %v2676 = vld [vmem:[#allocation2 + $0x10] sm:$0x1]
    %v2677 = vld [vmem:[#allocation2 + $0x18] sm:$0x1]
    %v2678 = vld [vmem:[#allocation2 + $0x20] sm:$0xfe]
    %v2679 = vld [vmem:[#allocation2 + $0x28] sm:$0xfe]
    %v2680 = vld [vmem:[#allocation2 + $0x30] sm:$0x1]
    %v2681 = vld [vmem:[#allocation2 + $0x38] sm:$0x1]
    %v2682 = vld [vmem:[#allocation2 + $0x40] sm:$0xfe]
    %v2683 = vld [vmem:[#allocation2 + $0x48] sm:$0xfe]
    %v2684 = vld [vmem:[#allocation2 + $0x50] sm:$0x1]
    %v2685 = vld [vmem:[#allocation2 + $0x58] sm:$0x1]
    %v2686 = vld [vmem:[#allocation2 + $0x60] sm:$0xfe]
    %v2687 = vld [vmem:[#allocation2 + $0x68] sm:$0xfe]
    %v2688 = vld [vmem:[#allocation2 + $0x70] sm:$0x1]
    %v2689 = vld [vmem:[#allocation2 + $0x78] sm:$0x1]
    %v2690 = vld [vmem:[#allocation2 + $0x80] sm:$0xfe]
    %v2691 = vld [vmem:[#allocation2 + $0x88] sm:$0xfe]
    %v2692 = vld [vmem:[#allocation2 + $0x90] sm:$0x1]
    %v2693 = vld [vmem:[#allocation2 + $0x98] sm:$0x1]
    %v2694 = vld [vmem:[#allocation2 + $0xa0] sm:$0xfe]
    %v2695 = vld [vmem:[#allocation2 + $0xa8] sm:$0xfe]
    %v2696 = vld [vmem:[#allocation2 + $0xb0] sm:$0x1]
    %v2697 = vld [vmem:[#allocation2 + $0xb8] sm:$0x1]
    %v2698 = vld [vmem:[#allocation2 + $0xc0] sm:$0xfe]
    %v2699 = vld [vmem:[#allocation2 + $0xc8] sm:$0xfe]
    %v2700 = vld [vmem:[#allocation2 + $0xd0] sm:$0x1]
    %v2701 = vld [vmem:[#allocation2 + $0xd8] sm:$0x1]
    %v2702 = vld [vmem:[#allocation2 + $0xe0] sm:$0xfe]
    %v2703 = vld [vmem:[#allocation2 + $0xe8] sm:$0xfe]
    %v2704 = vld [vmem:[#allocation2 + $0xf0] sm:$0x1]
    %v2705 = vld [vmem:[#allocation2 + $0xf8] sm:$0x1]
    %v2706 = vld [vmem:[#allocation2 + $0x140] sm:$0xfe]
    %v2707 = vld [vmem:[#allocation2 + $0x148] sm:$0xfe]
    %v2708 = vld [vmem:[#allocation2 + $0x150] sm:$0x1]
    %v2709 = vld [vmem:[#allocation2 + $0x158] sm:$0x1]
    %v2710 = vld [vmem:[#allocation2 + $0x160] sm:$0xfe]
    %v2711 = vld [vmem:[#allocation2 + $0x168] sm:$0xfe]
    %v2712 = vld [vmem:[#allocation2 + $0x170] sm:$0x1]
    %v2713 = vld [vmem:[#allocation2 + $0x178] sm:$0x1]
    %v2714 = vld [vmem:[#allocation2 + $0x180] sm:$0xfe]
    %v2715 = vld [vmem:[#allocation2 + $0x188] sm:$0xfe]
    %v2716 = vld [vmem:[#allocation2 + $0x190] sm:$0x1]
    %v2717 = vld [vmem:[#allocation2 + $0x198] sm:$0x1]
    %v2718 = vld [vmem:[#allocation2 + $0x1a0] sm:$0xfe]
    %v2719 = vld [vmem:[#allocation2 + $0x1a8] sm:$0xfe]
    %v2720 = vld [vmem:[#allocation2 + $0x1b0] sm:$0x1]
    %v2721 = vld [vmem:[#allocation2 + $0x1b8] sm:$0x1]
    %v2722 = vld [vmem:[#allocation2 + $0x1c0] sm:$0xfe]
    %v2723 = vld [vmem:[#allocation2 + $0x1c8] sm:$0xfe]
    %v2724 = vld [vmem:[#allocation2 + $0x1d0] sm:$0x1]
    %v2725 = vld [vmem:[#allocation2 + $0x1d8] sm:$0x1]
    %v2726 = vld [vmem:[#allocation2 + $0x1e0] sm:$0xfe]
    %v2727 = vld [vmem:[#allocation2 + $0x1e8] sm:$0xfe]
    %v2728 = vld [vmem:[#allocation2 + $0x1f0] sm:$0x1]
    %v2729 = vld [vmem:[#allocation2 + $0x1f8] sm:$0x1]
    %v2730 = vld [vmem:[#allocation2 + $0x200] sm:$0xfe]
    %v2731 = vld [vmem:[#allocation2 + $0x208] sm:$0xfe]
    %v2732 = vld [vmem:[#allocation2 + $0x210] sm:$0x1]
    %v2733 = vld [vmem:[#allocation2 + $0x218] sm:$0x1]
    %v2734 = vld [vmem:[#allocation2 + $0x220] sm:$0xfe]
    %v2735 = vld [vmem:[#allocation2 + $0x228] sm:$0xfe]
    %v2736 = vld [vmem:[#allocation2 + $0x230] sm:$0x1]
    %v2737 = vld [vmem:[#allocation2 + $0x238] sm:$0x1]
    %vm2802 = vcmask 1046528
    %v2803 = vrot.slane %v2674, 1
    %v2804 = vrot.slane %v2676, 1
    %v2805 = vsel %vm2802, %v2803, %v2804
    %v2806 = vrot.slane %v2675, 1
    %v2807 = vrot.slane %v2677, 1
    %v2808 = vsel %vm2802, %v2806, %v2807
    %v2809 = vrot.slane %v2678, 1
    %v2810 = vrot.slane %v2680, 1
    %v2811 = vsel %vm2802, %v2809, %v2810
    %v2812 = vrot.slane %v2679, 1
    %v2813 = vrot.slane %v2681, 1
    %v2814 = vsel %vm2802, %v2812, %v2813
    %v2815 = vrot.slane %v2682, 1
    %v2816 = vrot.slane %v2684, 1
    %v2817 = vsel %vm2802, %v2815, %v2816
    %v2818 = vrot.slane %v2683, 1
    %v2819 = vrot.slane %v2685, 1
    %v2820 = vsel %vm2802, %v2818, %v2819
    %v2821 = vrot.slane %v2686, 1
    %v2822 = vrot.slane %v2688, 1
    %v2823 = vsel %vm2802, %v2821, %v2822
    %v2824 = vrot.slane %v2687, 1
    %v2825 = vrot.slane %v2689, 1
    %v2826 = vsel %vm2802, %v2824, %v2825
    %v2827 = vrot.slane %v2690, 1
    %v2828 = vrot.slane %v2692, 1
    %v2829 = vsel %vm2802, %v2827, %v2828
    %v2830 = vrot.slane %v2691, 1
    %v2831 = vrot.slane %v2693, 1
    %v2832 = vsel %vm2802, %v2830, %v2831
    %v2833 = vrot.slane %v2694, 1
    %v2834 = vrot.slane %v2696, 1
    %v2835 = vsel %vm2802, %v2833, %v2834
    %v2836 = vrot.slane %v2695, 1
    %v2837 = vrot.slane %v2697, 1
    %v2838 = vsel %vm2802, %v2836, %v2837
    %v2839 = vrot.slane %v2698, 1
    %v2840 = vrot.slane %v2700, 1
    %v2841 = vsel %vm2802, %v2839, %v2840
    %v2842 = vrot.slane %v2699, 1
    %v2843 = vrot.slane %v2701, 1
    %v2844 = vsel %vm2802, %v2842, %v2843
    %v2845 = vrot.slane %v2702, 1
    %v2846 = vrot.slane %v2704, 1
    %v2847 = vsel %vm2802, %v2845, %v2846
    %v2848 = vrot.slane %v2703, 1
    %v2849 = vrot.slane %v2705, 1
    %v2850 = vsel %vm2802, %v2848, %v2849
    %v2851 = vrot.slane %v2706, 1
    %v2852 = vrot.slane %v2708, 1
    %v2853 = vsel %vm2802, %v2851, %v2852
    %v2854 = vrot.slane %v2707, 1
    %v2855 = vrot.slane %v2709, 1
    %v2856 = vsel %vm2802, %v2854, %v2855
    %v2857 = vrot.slane %v2710, 1
    %v2858 = vrot.slane %v2712, 1
    %v2859 = vsel %vm2802, %v2857, %v2858
    %v2860 = vrot.slane %v2711, 1
    %v2861 = vrot.slane %v2713, 1
    %v2862 = vsel %vm2802, %v2860, %v2861
    %v2863 = vrot.slane %v2714, 1
    %v2864 = vrot.slane %v2716, 1
    %v2865 = vsel %vm2802, %v2863, %v2864
    %v2866 = vrot.slane %v2715, 1
    %v2867 = vrot.slane %v2717, 1
    %v2868 = vsel %vm2802, %v2866, %v2867
    %v2869 = vrot.slane %v2718, 1
    %v2870 = vrot.slane %v2720, 1
    %v2871 = vsel %vm2802, %v2869, %v2870
    %v2872 = vrot.slane %v2719, 1
    %v2873 = vrot.slane %v2721, 1
    %v2874 = vsel %vm2802, %v2872, %v2873
    %v2875 = vrot.slane %v2722, 1
    %v2876 = vrot.slane %v2724, 1
    %v2877 = vsel %vm2802, %v2875, %v2876
    %v2878 = vrot.slane %v2723, 1
    %v2879 = vrot.slane %v2725, 1
    %v2880 = vsel %vm2802, %v2878, %v2879
    %v2881 = vrot.slane %v2726, 1
    %v2882 = vrot.slane %v2728, 1
    %v2883 = vsel %vm2802, %v2881, %v2882
    %v2884 = vrot.slane %v2727, 1
    %v2885 = vrot.slane %v2729, 1
    %v2886 = vsel %vm2802, %v2884, %v2885
    %v2887 = vrot.slane %v2730, 1
    %v2888 = vrot.slane %v2732, 1
    %v2889 = vsel %vm2802, %v2887, %v2888
    %v2890 = vrot.slane %v2731, 1
    %v2891 = vrot.slane %v2733, 1
    %v2892 = vsel %vm2802, %v2890, %v2891
    %v2893 = vrot.slane %v2734, 1
    %v2894 = vrot.slane %v2736, 1
    %v2895 = vsel %vm2802, %v2893, %v2894
    %v2896 = vrot.slane %v2735, 1
    %v2897 = vrot.slane %v2737, 1
    %v2898 = vsel %vm2802, %v2896, %v2897
    %v2931 = vld [vmem:[#allocation2] sm:$0xfc]
    %v2932 = vld [vmem:[#allocation2 + $0x8] sm:$0xfc]
    %v2933 = vld [vmem:[#allocation2 + $0x10] sm:$0x3]
    %v2934 = vld [vmem:[#allocation2 + $0x18] sm:$0x3]
    %v2935 = vld [vmem:[#allocation2 + $0x20] sm:$0xfc]
    %v2936 = vld [vmem:[#allocation2 + $0x28] sm:$0xfc]
    %v2937 = vld [vmem:[#allocation2 + $0x30] sm:$0x3]
    %v2938 = vld [vmem:[#allocation2 + $0x38] sm:$0x3]
    %v2939 = vld [vmem:[#allocation2 + $0x40] sm:$0xfc]
    %v2940 = vld [vmem:[#allocation2 + $0x48] sm:$0xfc]
    %v2941 = vld [vmem:[#allocation2 + $0x50] sm:$0x3]
    %v2942 = vld [vmem:[#allocation2 + $0x58] sm:$0x3]
    %v2943 = vld [vmem:[#allocation2 + $0x60] sm:$0xfc]
    %v2944 = vld [vmem:[#allocation2 + $0x68] sm:$0xfc]
    %v2945 = vld [vmem:[#allocation2 + $0x70] sm:$0x3]
    %v2946 = vld [vmem:[#allocation2 + $0x78] sm:$0x3]
    %v2947 = vld [vmem:[#allocation2 + $0x80] sm:$0xfc]
    %v2948 = vld [vmem:[#allocation2 + $0x88] sm:$0xfc]
    %v2949 = vld [vmem:[#allocation2 + $0x90] sm:$0x3]
    %v2950 = vld [vmem:[#allocation2 + $0x98] sm:$0x3]
    %v2951 = vld [vmem:[#allocation2 + $0xa0] sm:$0xfc]
    %v2952 = vld [vmem:[#allocation2 + $0xa8] sm:$0xfc]
    %v2953 = vld [vmem:[#allocation2 + $0xb0] sm:$0x3]
    %v2954 = vld [vmem:[#allocation2 + $0xb8] sm:$0x3]
    %v2955 = vld [vmem:[#allocation2 + $0xc0] sm:$0xfc]
    %v2956 = vld [vmem:[#allocation2 + $0xc8] sm:$0xfc]
    %v2957 = vld [vmem:[#allocation2 + $0xd0] sm:$0x3]
    %v2958 = vld [vmem:[#allocation2 + $0xd8] sm:$0x3]
    %v2959 = vld [vmem:[#allocation2 + $0xe0] sm:$0xfc]
    %v2960 = vld [vmem:[#allocation2 + $0xe8] sm:$0xfc]
    %v2961 = vld [vmem:[#allocation2 + $0xf0] sm:$0x3]
    %v2962 = vld [vmem:[#allocation2 + $0xf8] sm:$0x3]
    %v2963 = vld [vmem:[#allocation2 + $0x140] sm:$0xfc]
    %v2964 = vld [vmem:[#allocation2 + $0x148] sm:$0xfc]
    %v2965 = vld [vmem:[#allocation2 + $0x150] sm:$0x3]
    %v2966 = vld [vmem:[#allocation2 + $0x158] sm:$0x3]
    %v2967 = vld [vmem:[#allocation2 + $0x160] sm:$0xfc]
    %v2968 = vld [vmem:[#allocation2 + $0x168] sm:$0xfc]
    %v2969 = vld [vmem:[#allocation2 + $0x170] sm:$0x3]
    %v2970 = vld [vmem:[#allocation2 + $0x178] sm:$0x3]
    %v2971 = vld [vmem:[#allocation2 + $0x180] sm:$0xfc]
    %v2972 = vld [vmem:[#allocation2 + $0x188] sm:$0xfc]
    %v2973 = vld [vmem:[#allocation2 + $0x190] sm:$0x3]
    %v2974 = vld [vmem:[#allocation2 + $0x198] sm:$0x3]
    %v2975 = vld [vmem:[#allocation2 + $0x1a0] sm:$0xfc]
    %v2976 = vld [vmem:[#allocation2 + $0x1a8] sm:$0xfc]
    %v2977 = vld [vmem:[#allocation2 + $0x1b0] sm:$0x3]
    %v2978 = vld [vmem:[#allocation2 + $0x1b8] sm:$0x3]
    %v2979 = vld [vmem:[#allocation2 + $0x1c0] sm:$0xfc]
    %v2980 = vld [vmem:[#allocation2 + $0x1c8] sm:$0xfc]
    %v2981 = vld [vmem:[#allocation2 + $0x1d0] sm:$0x3]
    %v2982 = vld [vmem:[#allocation2 + $0x1d8] sm:$0x3]
    %v2983 = vld [vmem:[#allocation2 + $0x1e0] sm:$0xfc]
    %v2984 = vld [vmem:[#allocation2 + $0x1e8] sm:$0xfc]
    %v2985 = vld [vmem:[#allocation2 + $0x1f0] sm:$0x3]
    %v2986 = vld [vmem:[#allocation2 + $0x1f8] sm:$0x3]
    %v2987 = vld [vmem:[#allocation2 + $0x200] sm:$0xfc]
    %v2988 = vld [vmem:[#allocation2 + $0x208] sm:$0xfc]
    %v2989 = vld [vmem:[#allocation2 + $0x210] sm:$0x3]
    %v2990 = vld [vmem:[#allocation2 + $0x218] sm:$0x3]
    %v2991 = vld [vmem:[#allocation2 + $0x220] sm:$0xfc]
    %v2992 = vld [vmem:[#allocation2 + $0x228] sm:$0xfc]
    %v2993 = vld [vmem:[#allocation2 + $0x230] sm:$0x3]
    %v2994 = vld [vmem:[#allocation2 + $0x238] sm:$0x3]
    %vm3059 = vcmask 1045504
    %v3060 = vrot.slane %v2931, 2
    %v3061 = vrot.slane %v2933, 2
    %v3062 = vsel %vm3059, %v3060, %v3061
    %v3063 = vrot.slane %v2932, 2
    %v3064 = vrot.slane %v2934, 2
    %v3065 = vsel %vm3059, %v3063, %v3064
    %v3066 = vrot.slane %v2935, 2
    %v3067 = vrot.slane %v2937, 2
    %v3068 = vsel %vm3059, %v3066, %v3067
    %v3069 = vrot.slane %v2936, 2
    %v3070 = vrot.slane %v2938, 2
    %v3071 = vsel %vm3059, %v3069, %v3070
    %v3072 = vrot.slane %v2939, 2
    %v3073 = vrot.slane %v2941, 2
    %v3074 = vsel %vm3059, %v3072, %v3073
    %v3075 = vrot.slane %v2940, 2
    %v3076 = vrot.slane %v2942, 2
    %v3077 = vsel %vm3059, %v3075, %v3076
    %v3078 = vrot.slane %v2943, 2
    %v3079 = vrot.slane %v2945, 2
    %v3080 = vsel %vm3059, %v3078, %v3079
    %v3081 = vrot.slane %v2944, 2
    %v3082 = vrot.slane %v2946, 2
    %v3083 = vsel %vm3059, %v3081, %v3082
    %v3084 = vrot.slane %v2947, 2
    %v3085 = vrot.slane %v2949, 2
    %v3086 = vsel %vm3059, %v3084, %v3085
    %v3087 = vrot.slane %v2948, 2
    %v3088 = vrot.slane %v2950, 2
    %v3089 = vsel %vm3059, %v3087, %v3088
    %v3090 = vrot.slane %v2951, 2
    %v3091 = vrot.slane %v2953, 2
    %v3092 = vsel %vm3059, %v3090, %v3091
    %v3093 = vrot.slane %v2952, 2
    %v3094 = vrot.slane %v2954, 2
    %v3095 = vsel %vm3059, %v3093, %v3094
    %v3096 = vrot.slane %v2955, 2
    %v3097 = vrot.slane %v2957, 2
    %v3098 = vsel %vm3059, %v3096, %v3097
    %v3099 = vrot.slane %v2956, 2
    %v3100 = vrot.slane %v2958, 2
    %v3101 = vsel %vm3059, %v3099, %v3100
    %v3102 = vrot.slane %v2959, 2
    %v3103 = vrot.slane %v2961, 2
    %v3104 = vsel %vm3059, %v3102, %v3103
    %v3105 = vrot.slane %v2960, 2
    %v3106 = vrot.slane %v2962, 2
    %v3107 = vsel %vm3059, %v3105, %v3106
    %v3108 = vrot.slane %v2963, 2
    %v3109 = vrot.slane %v2965, 2
    %v3110 = vsel %vm3059, %v3108, %v3109
    %v3111 = vrot.slane %v2964, 2
    %v3112 = vrot.slane %v2966, 2
    %v3113 = vsel %vm3059, %v3111, %v3112
    %v3114 = vrot.slane %v2967, 2
    %v3115 = vrot.slane %v2969, 2
    %v3116 = vsel %vm3059, %v3114, %v3115
    %v3117 = vrot.slane %v2968, 2
    %v3118 = vrot.slane %v2970, 2
    %v3119 = vsel %vm3059, %v3117, %v3118
    %v3120 = vrot.slane %v2971, 2
    %v3121 = vrot.slane %v2973, 2
    %v3122 = vsel %vm3059, %v3120, %v3121
    %v3123 = vrot.slane %v2972, 2
    %v3124 = vrot.slane %v2974, 2
    %v3125 = vsel %vm3059, %v3123, %v3124
    %v3126 = vrot.slane %v2975, 2
    %v3127 = vrot.slane %v2977, 2
    %v3128 = vsel %vm3059, %v3126, %v3127
    %v3129 = vrot.slane %v2976, 2
    %v3130 = vrot.slane %v2978, 2
    %v3131 = vsel %vm3059, %v3129, %v3130
    %v3132 = vrot.slane %v2979, 2
    %v3133 = vrot.slane %v2981, 2
    %v3134 = vsel %vm3059, %v3132, %v3133
    %v3135 = vrot.slane %v2980, 2
    %v3136 = vrot.slane %v2982, 2
    %v3137 = vsel %vm3059, %v3135, %v3136
    %v3138 = vrot.slane %v2983, 2
    %v3139 = vrot.slane %v2985, 2
    %v3140 = vsel %vm3059, %v3138, %v3139
    %v3141 = vrot.slane %v2984, 2
    %v3142 = vrot.slane %v2986, 2
    %v3143 = vsel %vm3059, %v3141, %v3142
    %v3144 = vrot.slane %v2987, 2
    %v3145 = vrot.slane %v2989, 2
    %v3146 = vsel %vm3059, %v3144, %v3145
    %v3147 = vrot.slane %v2988, 2
    %v3148 = vrot.slane %v2990, 2
    %v3149 = vsel %vm3059, %v3147, %v3148
    %v3150 = vrot.slane %v2991, 2
    %v3151 = vrot.slane %v2993, 2
    %v3152 = vsel %vm3059, %v3150, %v3151
    %v3153 = vrot.slane %v2992, 2
    %v3154 = vrot.slane %v2994, 2
    %v3155 = vsel %vm3059, %v3153, %v3154
    %s3188 = scalar_lea.vmem [#allocation2], 32
    %v3189 = vld [vmem:[%s3188] sm:$0xff]
    %v3190 = vld [vmem:[%s3188 + $0x8] sm:$0xff]
    %v3191 = vld [vmem:[%s3188 + $0x20] sm:$0xff]
    %v3192 = vld [vmem:[%s3188 + $0x28] sm:$0xff]
    %v3193 = vld [vmem:[%s3188 + $0x40] sm:$0xff]
    %v3194 = vld [vmem:[%s3188 + $0x48] sm:$0xff]
    %v3195 = vld [vmem:[%s3188 + $0x60] sm:$0xff]
    %v3196 = vld [vmem:[%s3188 + $0x68] sm:$0xff]
    %v3197 = vld [vmem:[%s3188 + $0x80] sm:$0xff]
    %v3198 = vld [vmem:[%s3188 + $0x88] sm:$0xff]
    %v3199 = vld [vmem:[%s3188 + $0xa0] sm:$0xff]
    %v3200 = vld [vmem:[%s3188 + $0xa8] sm:$0xff]
    %v3201 = vld [vmem:[%s3188 + $0xc0] sm:$0xff]
    %v3202 = vld [vmem:[%s3188 + $0xc8] sm:$0xff]
    %v3203 = vld [vmem:[%s3188 + $0xe0] sm:$0xff]
    %v3204 = vld [vmem:[%s3188 + $0xe8] sm:$0xff]
    %v3205 = vld [vmem:[%s3188 + $0x140] sm:$0xff]
    %v3206 = vld [vmem:[%s3188 + $0x148] sm:$0xff]
    %v3207 = vld [vmem:[%s3188 + $0x160] sm:$0xff]
    %v3208 = vld [vmem:[%s3188 + $0x168] sm:$0xff]
    %v3209 = vld [vmem:[%s3188 + $0x180] sm:$0xff]
    %v3210 = vld [vmem:[%s3188 + $0x188] sm:$0xff]
    %v3211 = vld [vmem:[%s3188 + $0x1a0] sm:$0xff]
    %v3212 = vld [vmem:[%s3188 + $0x1a8] sm:$0xff]
    %v3213 = vld [vmem:[%s3188 + $0x1c0] sm:$0xff]
    %v3214 = vld [vmem:[%s3188 + $0x1c8] sm:$0xff]
    %v3215 = vld [vmem:[%s3188 + $0x1e0] sm:$0xff]
    %v3216 = vld [vmem:[%s3188 + $0x1e8] sm:$0xff]
    %v3217 = vld [vmem:[%s3188 + $0x200] sm:$0xff]
    %v3218 = vld [vmem:[%s3188 + $0x208] sm:$0xff]
    %v3219 = vld [vmem:[%s3188 + $0x220] sm:$0xff]
    %v3220 = vld [vmem:[%s3188 + $0x228] sm:$0xff]
    %v3221 = vld [vmem:[%s3188] sm:$0xfe]
    %v3222 = vld [vmem:[%s3188 + $0x8] sm:$0xfe]
    %v3223 = vld [vmem:[%s3188 + $0x10] sm:$0x1]
    %v3224 = vld [vmem:[%s3188 + $0x18] sm:$0x1]
    %v3225 = vld [vmem:[%s3188 + $0x20] sm:$0xfe]
    %v3226 = vld [vmem:[%s3188 + $0x28] sm:$0xfe]
    %v3227 = vld [vmem:[%s3188 + $0x30] sm:$0x1]
    %v3228 = vld [vmem:[%s3188 + $0x38] sm:$0x1]
    %v3229 = vld [vmem:[%s3188 + $0x40] sm:$0xfe]
    %v3230 = vld [vmem:[%s3188 + $0x48] sm:$0xfe]
    %v3231 = vld [vmem:[%s3188 + $0x50] sm:$0x1]
    %v3232 = vld [vmem:[%s3188 + $0x58] sm:$0x1]
    %v3233 = vld [vmem:[%s3188 + $0x60] sm:$0xfe]
    %v3234 = vld [vmem:[%s3188 + $0x68] sm:$0xfe]
    %v3235 = vld [vmem:[%s3188 + $0x70] sm:$0x1]
    %v3236 = vld [vmem:[%s3188 + $0x78] sm:$0x1]
    %v3237 = vld [vmem:[%s3188 + $0x80] sm:$0xfe]
    %v3238 = vld [vmem:[%s3188 + $0x88] sm:$0xfe]
    %v3239 = vld [vmem:[%s3188 + $0x90] sm:$0x1]
    %v3240 = vld [vmem:[%s3188 + $0x98] sm:$0x1]
    %v3241 = vld [vmem:[%s3188 + $0xa0] sm:$0xfe]
    %v3242 = vld [vmem:[%s3188 + $0xa8] sm:$0xfe]
    %v3243 = vld [vmem:[%s3188 + $0xb0] sm:$0x1]
    %v3244 = vld [vmem:[%s3188 + $0xb8] sm:$0x1]
    %v3245 = vld [vmem:[%s3188 + $0xc0] sm:$0xfe]
    %v3246 = vld [vmem:[%s3188 + $0xc8] sm:$0xfe]
    %v3247 = vld [vmem:[%s3188 + $0xd0] sm:$0x1]
    %v3248 = vld [vmem:[%s3188 + $0xd8] sm:$0x1]
    %v3249 = vld [vmem:[%s3188 + $0xe0] sm:$0xfe]
    %v3250 = vld [vmem:[%s3188 + $0xe8] sm:$0xfe]
    %v3251 = vld [vmem:[%s3188 + $0xf0] sm:$0x1]
    %v3252 = vld [vmem:[%s3188 + $0xf8] sm:$0x1]
    %v3253 = vld [vmem:[%s3188 + $0x140] sm:$0xfe]
    %v3254 = vld [vmem:[%s3188 + $0x148] sm:$0xfe]
    %v3255 = vld [vmem:[%s3188 + $0x150] sm:$0x1]
    %v3256 = vld [vmem:[%s3188 + $0x158] sm:$0x1]
    %v3257 = vld [vmem:[%s3188 + $0x160] sm:$0xfe]
    %v3258 = vld [vmem:[%s3188 + $0x168] sm:$0xfe]
    %v3259 = vld [vmem:[%s3188 + $0x170] sm:$0x1]
    %v3260 = vld [vmem:[%s3188 + $0x178] sm:$0x1]
    %v3261 = vld [vmem:[%s3188 + $0x180] sm:$0xfe]
    %v3262 = vld [vmem:[%s3188 + $0x188] sm:$0xfe]
    %v3263 = vld [vmem:[%s3188 + $0x190] sm:$0x1]
    %v3264 = vld [vmem:[%s3188 + $0x198] sm:$0x1]
    %v3265 = vld [vmem:[%s3188 + $0x1a0] sm:$0xfe]
    %v3266 = vld [vmem:[%s3188 + $0x1a8] sm:$0xfe]
    %v3267 = vld [vmem:[%s3188 + $0x1b0] sm:$0x1]
    %v3268 = vld [vmem:[%s3188 + $0x1b8] sm:$0x1]
    %v3269 = vld [vmem:[%s3188 + $0x1c0] sm:$0xfe]
    %v3270 = vld [vmem:[%s3188 + $0x1c8] sm:$0xfe]
    %v3271 = vld [vmem:[%s3188 + $0x1d0] sm:$0x1]
    %v3272 = vld [vmem:[%s3188 + $0x1d8] sm:$0x1]
    %v3273 = vld [vmem:[%s3188 + $0x1e0] sm:$0xfe]
    %v3274 = vld [vmem:[%s3188 + $0x1e8] sm:$0xfe]
    %v3275 = vld [vmem:[%s3188 + $0x1f0] sm:$0x1]
    %v3276 = vld [vmem:[%s3188 + $0x1f8] sm:$0x1]
    %v3277 = vld [vmem:[%s3188 + $0x200] sm:$0xfe]
    %v3278 = vld [vmem:[%s3188 + $0x208] sm:$0xfe]
    %v3279 = vld [vmem:[%s3188 + $0x210] sm:$0x1]
    %v3280 = vld [vmem:[%s3188 + $0x218] sm:$0x1]
    %v3281 = vld [vmem:[%s3188 + $0x220] sm:$0xfe]
    %v3282 = vld [vmem:[%s3188 + $0x228] sm:$0xfe]
    %v3283 = vld [vmem:[%s3188 + $0x230] sm:$0x1]
    %v3284 = vld [vmem:[%s3188 + $0x238] sm:$0x1]
    %v3349 = vrot.slane %v3221, 1
    %v3350 = vrot.slane %v3223, 1
    %v3351 = vsel %vm2802, %v3349, %v3350
    %v3352 = vrot.slane %v3222, 1
    %v3353 = vrot.slane %v3224, 1
    %v3354 = vsel %vm2802, %v3352, %v3353
    %v3355 = vrot.slane %v3225, 1
    %v3356 = vrot.slane %v3227, 1
    %v3357 = vsel %vm2802, %v3355, %v3356
    %v3358 = vrot.slane %v3226, 1
    %v3359 = vrot.slane %v3228, 1
    %v3360 = vsel %vm2802, %v3358, %v3359
    %v3361 = vrot.slane %v3229, 1
    %v3362 = vrot.slane %v3231, 1
    %v3363 = vsel %vm2802, %v3361, %v3362
    %v3364 = vrot.slane %v3230, 1
    %v3365 = vrot.slane %v3232, 1
    %v3366 = vsel %vm2802, %v3364, %v3365
    %v3367 = vrot.slane %v3233, 1
    %v3368 = vrot.slane %v3235, 1
    %v3369 = vsel %vm2802, %v3367, %v3368
    %v3370 = vrot.slane %v3234, 1
    %v3371 = vrot.slane %v3236, 1
    %v3372 = vsel %vm2802, %v3370, %v3371
    %v3373 = vrot.slane %v3237, 1
    %v3374 = vrot.slane %v3239, 1
    %v3375 = vsel %vm2802, %v3373, %v3374
    %v3376 = vrot.slane %v3238, 1
    %v3377 = vrot.slane %v3240, 1
    %v3378 = vsel %vm2802, %v3376, %v3377
    %v3379 = vrot.slane %v3241, 1
    %v3380 = vrot.slane %v3243, 1
    %v3381 = vsel %vm2802, %v3379, %v3380
    %v3382 = vrot.slane %v3242, 1
    %v3383 = vrot.slane %v3244, 1
    %v3384 = vsel %vm2802, %v3382, %v3383
    %v3385 = vrot.slane %v3245, 1
    %v3386 = vrot.slane %v3247, 1
    %v3387 = vsel %vm2802, %v3385, %v3386
    %v3388 = vrot.slane %v3246, 1
    %v3389 = vrot.slane %v3248, 1
    %v3390 = vsel %vm2802, %v3388, %v3389
    %v3391 = vrot.slane %v3249, 1
    %v3392 = vrot.slane %v3251, 1
    %v3393 = vsel %vm2802, %v3391, %v3392
    %v3394 = vrot.slane %v3250, 1
    %v3395 = vrot.slane %v3252, 1
    %v3396 = vsel %vm2802, %v3394, %v3395
    %v3397 = vrot.slane %v3253, 1
    %v3398 = vrot.slane %v3255, 1
    %v3399 = vsel %vm2802, %v3397, %v3398
    %v3400 = vrot.slane %v3254, 1
    %v3401 = vrot.slane %v3256, 1
    %v3402 = vsel %vm2802, %v3400, %v3401
    %v3403 = vrot.slane %v3257, 1
    %v3404 = vrot.slane %v3259, 1
    %v3405 = vsel %vm2802, %v3403, %v3404
    %v3406 = vrot.slane %v3258, 1
    %v3407 = vrot.slane %v3260, 1
    %v3408 = vsel %vm2802, %v3406, %v3407
    %v3409 = vrot.slane %v3261, 1
    %v3410 = vrot.slane %v3263, 1
    %v3411 = vsel %vm2802, %v3409, %v3410
    %v3412 = vrot.slane %v3262, 1
    %v3413 = vrot.slane %v3264, 1
    %v3414 = vsel %vm2802, %v3412, %v3413
    %v3415 = vrot.slane %v3265, 1
    %v3416 = vrot.slane %v3267, 1
    %v3417 = vsel %vm2802, %v3415, %v3416
    %v3418 = vrot.slane %v3266, 1
    %v3419 = vrot.slane %v3268, 1
    %v3420 = vsel %vm2802, %v3418, %v3419
    %v3421 = vrot.slane %v3269, 1
    %v3422 = vrot.slane %v3271, 1
    %v3423 = vsel %vm2802, %v3421, %v3422
    %v3424 = vrot.slane %v3270, 1
    %v3425 = vrot.slane %v3272, 1
    %v3426 = vsel %vm2802, %v3424, %v3425
    %v3427 = vrot.slane %v3273, 1
    %v3428 = vrot.slane %v3275, 1
    %v3429 = vsel %vm2802, %v3427, %v3428
    %v3430 = vrot.slane %v3274, 1
    %v3431 = vrot.slane %v3276, 1
    %v3432 = vsel %vm2802, %v3430, %v3431
    %v3433 = vrot.slane %v3277, 1
    %v3434 = vrot.slane %v3279, 1
    %v3435 = vsel %vm2802, %v3433, %v3434
    %v3436 = vrot.slane %v3278, 1
    %v3437 = vrot.slane %v3280, 1
    %v3438 = vsel %vm2802, %v3436, %v3437
    %v3439 = vrot.slane %v3281, 1
    %v3440 = vrot.slane %v3283, 1
    %v3441 = vsel %vm2802, %v3439, %v3440
    %v3442 = vrot.slane %v3282, 1
    %v3443 = vrot.slane %v3284, 1
    %v3444 = vsel %vm2802, %v3442, %v3443
    %v3477 = vld [vmem:[%s3188] sm:$0xfc]
    %v3478 = vld [vmem:[%s3188 + $0x8] sm:$0xfc]
    %v3479 = vld [vmem:[%s3188 + $0x10] sm:$0x3]
    %v3480 = vld [vmem:[%s3188 + $0x18] sm:$0x3]
    %v3481 = vld [vmem:[%s3188 + $0x20] sm:$0xfc]
    %v3482 = vld [vmem:[%s3188 + $0x28] sm:$0xfc]
    %v3483 = vld [vmem:[%s3188 + $0x30] sm:$0x3]
    %v3484 = vld [vmem:[%s3188 + $0x38] sm:$0x3]
    %v3485 = vld [vmem:[%s3188 + $0x40] sm:$0xfc]
    %v3486 = vld [vmem:[%s3188 + $0x48] sm:$0xfc]
    %v3487 = vld [vmem:[%s3188 + $0x50] sm:$0x3]
    %v3488 = vld [vmem:[%s3188 + $0x58] sm:$0x3]
    %v3489 = vld [vmem:[%s3188 + $0x60] sm:$0xfc]
    %v3490 = vld [vmem:[%s3188 + $0x68] sm:$0xfc]
    %v3491 = vld [vmem:[%s3188 + $0x70] sm:$0x3]
    %v3492 = vld [vmem:[%s3188 + $0x78] sm:$0x3]
    %v3493 = vld [vmem:[%s3188 + $0x80] sm:$0xfc]
    %v3494 = vld [vmem:[%s3188 + $0x88] sm:$0xfc]
    %v3495 = vld [vmem:[%s3188 + $0x90] sm:$0x3]
    %v3496 = vld [vmem:[%s3188 + $0x98] sm:$0x3]
    %v3497 = vld [vmem:[%s3188 + $0xa0] sm:$0xfc]
    %v3498 = vld [vmem:[%s3188 + $0xa8] sm:$0xfc]
    %v3499 = vld [vmem:[%s3188 + $0xb0] sm:$0x3]
    %v3500 = vld [vmem:[%s3188 + $0xb8] sm:$0x3]
    %v3501 = vld [vmem:[%s3188 + $0xc0] sm:$0xfc]
    %v3502 = vld [vmem:[%s3188 + $0xc8] sm:$0xfc]
    %v3503 = vld [vmem:[%s3188 + $0xd0] sm:$0x3]
    %v3504 = vld [vmem:[%s3188 + $0xd8] sm:$0x3]
    %v3505 = vld [vmem:[%s3188 + $0xe0] sm:$0xfc]
    %v3506 = vld [vmem:[%s3188 + $0xe8] sm:$0xfc]
    %v3507 = vld [vmem:[%s3188 + $0xf0] sm:$0x3]
    %v3508 = vld [vmem:[%s3188 + $0xf8] sm:$0x3]
    %v3509 = vld [vmem:[%s3188 + $0x140] sm:$0xfc]
    %v3510 = vld [vmem:[%s3188 + $0x148] sm:$0xfc]
    %v3511 = vld [vmem:[%s3188 + $0x150] sm:$0x3]
    %v3512 = vld [vmem:[%s3188 + $0x158] sm:$0x3]
    %v3513 = vld [vmem:[%s3188 + $0x160] sm:$0xfc]
    %v3514 = vld [vmem:[%s3188 + $0x168] sm:$0xfc]
    %v3515 = vld [vmem:[%s3188 + $0x170] sm:$0x3]
    %v3516 = vld [vmem:[%s3188 + $0x178] sm:$0x3]
    %v3517 = vld [vmem:[%s3188 + $0x180] sm:$0xfc]
    %v3518 = vld [vmem:[%s3188 + $0x188] sm:$0xfc]
    %v3519 = vld [vmem:[%s3188 + $0x190] sm:$0x3]
    %v3520 = vld [vmem:[%s3188 + $0x198] sm:$0x3]
    %v3521 = vld [vmem:[%s3188 + $0x1a0] sm:$0xfc]
    %v3522 = vld [vmem:[%s3188 + $0x1a8] sm:$0xfc]
    %v3523 = vld [vmem:[%s3188 + $0x1b0] sm:$0x3]
    %v3524 = vld [vmem:[%s3188 + $0x1b8] sm:$0x3]
    %v3525 = vld [vmem:[%s3188 + $0x1c0] sm:$0xfc]
    %v3526 = vld [vmem:[%s3188 + $0x1c8] sm:$0xfc]
    %v3527 = vld [vmem:[%s3188 + $0x1d0] sm:$0x3]
    %v3528 = vld [vmem:[%s3188 + $0x1d8] sm:$0x3]
    %v3529 = vld [vmem:[%s3188 + $0x1e0] sm:$0xfc]
    %v3530 = vld [vmem:[%s3188 + $0x1e8] sm:$0xfc]
    %v3531 = vld [vmem:[%s3188 + $0x1f0] sm:$0x3]
    %v3532 = vld [vmem:[%s3188 + $0x1f8] sm:$0x3]
    %v3533 = vld [vmem:[%s3188 + $0x200] sm:$0xfc]
    %v3534 = vld [vmem:[%s3188 + $0x208] sm:$0xfc]
    %v3535 = vld [vmem:[%s3188 + $0x210] sm:$0x3]
    %v3536 = vld [vmem:[%s3188 + $0x218] sm:$0x3]
    %v3537 = vld [vmem:[%s3188 + $0x220] sm:$0xfc]
    %v3538 = vld [vmem:[%s3188 + $0x228] sm:$0xfc]
    %v3539 = vld [vmem:[%s3188 + $0x230] sm:$0x3]
    %v3540 = vld [vmem:[%s3188 + $0x238] sm:$0x3]
    %v3605 = vrot.slane %v3477, 2
    %v3606 = vrot.slane %v3479, 2
    %v3607 = vsel %vm3059, %v3605, %v3606
    %v3608 = vrot.slane %v3478, 2
    %v3609 = vrot.slane %v3480, 2
    %v3610 = vsel %vm3059, %v3608, %v3609
    %v3611 = vrot.slane %v3481, 2
    %v3612 = vrot.slane %v3483, 2
    %v3613 = vsel %vm3059, %v3611, %v3612
    %v3614 = vrot.slane %v3482, 2
    %v3615 = vrot.slane %v3484, 2
    %v3616 = vsel %vm3059, %v3614, %v3615
    %v3617 = vrot.slane %v3485, 2
    %v3618 = vrot.slane %v3487, 2
    %v3619 = vsel %vm3059, %v3617, %v3618
    %v3620 = vrot.slane %v3486, 2
    %v3621 = vrot.slane %v3488, 2
    %v3622 = vsel %vm3059, %v3620, %v3621
    %v3623 = vrot.slane %v3489, 2
    %v3624 = vrot.slane %v3491, 2
    %v3625 = vsel %vm3059, %v3623, %v3624
    %v3626 = vrot.slane %v3490, 2
    %v3627 = vrot.slane %v3492, 2
    %v3628 = vsel %vm3059, %v3626, %v3627
    %v3629 = vrot.slane %v3493, 2
    %v3630 = vrot.slane %v3495, 2
    %v3631 = vsel %vm3059, %v3629, %v3630
    %v3632 = vrot.slane %v3494, 2
    %v3633 = vrot.slane %v3496, 2
    %v3634 = vsel %vm3059, %v3632, %v3633
    %v3635 = vrot.slane %v3497, 2
    %v3636 = vrot.slane %v3499, 2
    %v3637 = vsel %vm3059, %v3635, %v3636
    %v3638 = vrot.slane %v3498, 2
    %v3639 = vrot.slane %v3500, 2
    %v3640 = vsel %vm3059, %v3638, %v3639
    %v3641 = vrot.slane %v3501, 2
    %v3642 = vrot.slane %v3503, 2
    %v3643 = vsel %vm3059, %v3641, %v3642
    %v3644 = vrot.slane %v3502, 2
    %v3645 = vrot.slane %v3504, 2
    %v3646 = vsel %vm3059, %v3644, %v3645
    %v3647 = vrot.slane %v3505, 2
    %v3648 = vrot.slane %v3507, 2
    %v3649 = vsel %vm3059, %v3647, %v3648
    %v3650 = vrot.slane %v3506, 2
    %v3651 = vrot.slane %v3508, 2
    %v3652 = vsel %vm3059, %v3650, %v3651
    %v3653 = vrot.slane %v3509, 2
    %v3654 = vrot.slane %v3511, 2
    %v3655 = vsel %vm3059, %v3653, %v3654
    %v3656 = vrot.slane %v3510, 2
    %v3657 = vrot.slane %v3512, 2
    %v3658 = vsel %vm3059, %v3656, %v3657
    %v3659 = vrot.slane %v3513, 2
    %v3660 = vrot.slane %v3515, 2
    %v3661 = vsel %vm3059, %v3659, %v3660
    %v3662 = vrot.slane %v3514, 2
    %v3663 = vrot.slane %v3516, 2
    %v3664 = vsel %vm3059, %v3662, %v3663
    %v3665 = vrot.slane %v3517, 2
    %v3666 = vrot.slane %v3519, 2
    %v3667 = vsel %vm3059, %v3665, %v3666
    %v3668 = vrot.slane %v3518, 2
    %v3669 = vrot.slane %v3520, 2
    %v3670 = vsel %vm3059, %v3668, %v3669
    %v3671 = vrot.slane %v3521, 2
    %v3672 = vrot.slane %v3523, 2
    %v3673 = vsel %vm3059, %v3671, %v3672
    %v3674 = vrot.slane %v3522, 2
    %v3675 = vrot.slane %v3524, 2
    %v3676 = vsel %vm3059, %v3674, %v3675
    %v3677 = vrot.slane %v3525, 2
    %v3678 = vrot.slane %v3527, 2
    %v3679 = vsel %vm3059, %v3677, %v3678
    %v3680 = vrot.slane %v3526, 2
    %v3681 = vrot.slane %v3528, 2
    %v3682 = vsel %vm3059, %v3680, %v3681
    %v3683 = vrot.slane %v3529, 2
    %v3684 = vrot.slane %v3531, 2
    %v3685 = vsel %vm3059, %v3683, %v3684
    %v3686 = vrot.slane %v3530, 2
    %v3687 = vrot.slane %v3532, 2
    %v3688 = vsel %vm3059, %v3686, %v3687
    %v3689 = vrot.slane %v3533, 2
    %v3690 = vrot.slane %v3535, 2
    %v3691 = vsel %vm3059, %v3689, %v3690
    %v3692 = vrot.slane %v3534, 2
    %v3693 = vrot.slane %v3536, 2
    %v3694 = vsel %vm3059, %v3692, %v3693
    %v3695 = vrot.slane %v3537, 2
    %v3696 = vrot.slane %v3539, 2
    %v3697 = vsel %vm3059, %v3695, %v3696
    %v3698 = vrot.slane %v3538, 2
    %v3699 = vrot.slane %v3540, 2
    %v3700 = vsel %vm3059, %v3698, %v3699
    %s3733 = scalar_lea.vmem [#allocation2], 64
    %v3734 = vld [vmem:[%s3733] sm:$0xff]
    %v3735 = vld [vmem:[%s3733 + $0x8] sm:$0xff]
    %v3736 = vld [vmem:[%s3733 + $0x20] sm:$0xff]
    %v3737 = vld [vmem:[%s3733 + $0x28] sm:$0xff]
    %v3738 = vld [vmem:[%s3733 + $0x40] sm:$0xff]
    %v3739 = vld [vmem:[%s3733 + $0x48] sm:$0xff]
    %v3740 = vld [vmem:[%s3733 + $0x60] sm:$0xff]
    %v3741 = vld [vmem:[%s3733 + $0x68] sm:$0xff]
    %v3742 = vld [vmem:[%s3733 + $0x80] sm:$0xff]
    %v3743 = vld [vmem:[%s3733 + $0x88] sm:$0xff]
    %v3744 = vld [vmem:[%s3733 + $0xa0] sm:$0xff]
    %v3745 = vld [vmem:[%s3733 + $0xa8] sm:$0xff]
    %v3746 = vld [vmem:[%s3733 + $0xc0] sm:$0xff]
    %v3747 = vld [vmem:[%s3733 + $0xc8] sm:$0xff]
    %v3748 = vld [vmem:[%s3733 + $0xe0] sm:$0xff]
    %v3749 = vld [vmem:[%s3733 + $0xe8] sm:$0xff]
    %v3750 = vld [vmem:[%s3733 + $0x140] sm:$0xff]
    %v3751 = vld [vmem:[%s3733 + $0x148] sm:$0xff]
    %v3752 = vld [vmem:[%s3733 + $0x160] sm:$0xff]
    %v3753 = vld [vmem:[%s3733 + $0x168] sm:$0xff]
    %v3754 = vld [vmem:[%s3733 + $0x180] sm:$0xff]
    %v3755 = vld [vmem:[%s3733 + $0x188] sm:$0xff]
    %v3756 = vld [vmem:[%s3733 + $0x1a0] sm:$0xff]
    %v3757 = vld [vmem:[%s3733 + $0x1a8] sm:$0xff]
    %v3758 = vld [vmem:[%s3733 + $0x1c0] sm:$0xff]
    %v3759 = vld [vmem:[%s3733 + $0x1c8] sm:$0xff]
    %v3760 = vld [vmem:[%s3733 + $0x1e0] sm:$0xff]
    %v3761 = vld [vmem:[%s3733 + $0x1e8] sm:$0xff]
    %v3762 = vld [vmem:[%s3733 + $0x200] sm:$0xff]
    %v3763 = vld [vmem:[%s3733 + $0x208] sm:$0xff]
    %v3764 = vld [vmem:[%s3733 + $0x220] sm:$0xff]
    %v3765 = vld [vmem:[%s3733 + $0x228] sm:$0xff]
    %v3766 = vld [vmem:[%s3733] sm:$0xfe]
    %v3767 = vld [vmem:[%s3733 + $0x8] sm:$0xfe]
    %v3768 = vld [vmem:[%s3733 + $0x10] sm:$0x1]
    %v3769 = vld [vmem:[%s3733 + $0x18] sm:$0x1]
    %v3770 = vld [vmem:[%s3733 + $0x20] sm:$0xfe]
    %v3771 = vld [vmem:[%s3733 + $0x28] sm:$0xfe]
    %v3772 = vld [vmem:[%s3733 + $0x30] sm:$0x1]
    %v3773 = vld [vmem:[%s3733 + $0x38] sm:$0x1]
    %v3774 = vld [vmem:[%s3733 + $0x40] sm:$0xfe]
    %v3775 = vld [vmem:[%s3733 + $0x48] sm:$0xfe]
    %v3776 = vld [vmem:[%s3733 + $0x50] sm:$0x1]
    %v3777 = vld [vmem:[%s3733 + $0x58] sm:$0x1]
    %v3778 = vld [vmem:[%s3733 + $0x60] sm:$0xfe]
    %v3779 = vld [vmem:[%s3733 + $0x68] sm:$0xfe]
    %v3780 = vld [vmem:[%s3733 + $0x70] sm:$0x1]
    %v3781 = vld [vmem:[%s3733 + $0x78] sm:$0x1]
    %v3782 = vld [vmem:[%s3733 + $0x80] sm:$0xfe]
    %v3783 = vld [vmem:[%s3733 + $0x88] sm:$0xfe]
    %v3784 = vld [vmem:[%s3733 + $0x90] sm:$0x1]
    %v3785 = vld [vmem:[%s3733 + $0x98] sm:$0x1]
    %v3786 = vld [vmem:[%s3733 + $0xa0] sm:$0xfe]
    %v3787 = vld [vmem:[%s3733 + $0xa8] sm:$0xfe]
    %v3788 = vld [vmem:[%s3733 + $0xb0] sm:$0x1]
    %v3789 = vld [vmem:[%s3733 + $0xb8] sm:$0x1]
    %v3790 = vld [vmem:[%s3733 + $0xc0] sm:$0xfe]
    %v3791 = vld [vmem:[%s3733 + $0xc8] sm:$0xfe]
    %v3792 = vld [vmem:[%s3733 + $0xd0] sm:$0x1]
    %v3793 = vld [vmem:[%s3733 + $0xd8] sm:$0x1]
    %v3794 = vld [vmem:[%s3733 + $0xe0] sm:$0xfe]
    %v3795 = vld [vmem:[%s3733 + $0xe8] sm:$0xfe]
    %v3796 = vld [vmem:[%s3733 + $0xf0] sm:$0x1]
    %v3797 = vld [vmem:[%s3733 + $0xf8] sm:$0x1]
    %v3798 = vld [vmem:[%s3733 + $0x140] sm:$0xfe]
    %v3799 = vld [vmem:[%s3733 + $0x148] sm:$0xfe]
    %v3800 = vld [vmem:[%s3733 + $0x150] sm:$0x1]
    %v3801 = vld [vmem:[%s3733 + $0x158] sm:$0x1]
    %v3802 = vld [vmem:[%s3733 + $0x160] sm:$0xfe]
    %v3803 = vld [vmem:[%s3733 + $0x168] sm:$0xfe]
    %v3804 = vld [vmem:[%s3733 + $0x170] sm:$0x1]
    %v3805 = vld [vmem:[%s3733 + $0x178] sm:$0x1]
    %v3806 = vld [vmem:[%s3733 + $0x180] sm:$0xfe]
    %v3807 = vld [vmem:[%s3733 + $0x188] sm:$0xfe]
    %v3808 = vld [vmem:[%s3733 + $0x190] sm:$0x1]
    %v3809 = vld [vmem:[%s3733 + $0x198] sm:$0x1]
    %v3810 = vld [vmem:[%s3733 + $0x1a0] sm:$0xfe]
    %v3811 = vld [vmem:[%s3733 + $0x1a8] sm:$0xfe]
    %v3812 = vld [vmem:[%s3733 + $0x1b0] sm:$0x1]
    %v3813 = vld [vmem:[%s3733 + $0x1b8] sm:$0x1]
    %v3814 = vld [vmem:[%s3733 + $0x1c0] sm:$0xfe]
    %v3815 = vld [vmem:[%s3733 + $0x1c8] sm:$0xfe]
    %v3816 = vld [vmem:[%s3733 + $0x1d0] sm:$0x1]
    %v3817 = vld [vmem:[%s3733 + $0x1d8] sm:$0x1]
    %v3818 = vld [vmem:[%s3733 + $0x1e0] sm:$0xfe]
    %v3819 = vld [vmem:[%s3733 + $0x1e8] sm:$0xfe]
    %v3820 = vld [vmem:[%s3733 + $0x1f0] sm:$0x1]
    %v3821 = vld [vmem:[%s3733 + $0x1f8] sm:$0x1]
    %v3822 = vld [vmem:[%s3733 + $0x200] sm:$0xfe]
    %v3823 = vld [vmem:[%s3733 + $0x208] sm:$0xfe]
    %v3824 = vld [vmem:[%s3733 + $0x210] sm:$0x1]
    %v3825 = vld [vmem:[%s3733 + $0x218] sm:$0x1]
    %v3826 = vld [vmem:[%s3733 + $0x220] sm:$0xfe]
    %v3827 = vld [vmem:[%s3733 + $0x228] sm:$0xfe]
    %v3828 = vld [vmem:[%s3733 + $0x230] sm:$0x1]
    %v3829 = vld [vmem:[%s3733 + $0x238] sm:$0x1]
    %v3894 = vrot.slane %v3766, 1
    %v3895 = vrot.slane %v3768, 1
    %v3896 = vsel %vm2802, %v3894, %v3895
    %v3897 = vrot.slane %v3767, 1
    %v3898 = vrot.slane %v3769, 1
    %v3899 = vsel %vm2802, %v3897, %v3898
    %v3900 = vrot.slane %v3770, 1
    %v3901 = vrot.slane %v3772, 1
    %v3902 = vsel %vm2802, %v3900, %v3901
    %v3903 = vrot.slane %v3771, 1
    %v3904 = vrot.slane %v3773, 1
    %v3905 = vsel %vm2802, %v3903, %v3904
    %v3906 = vrot.slane %v3774, 1
    %v3907 = vrot.slane %v3776, 1
    %v3908 = vsel %vm2802, %v3906, %v3907
    %v3909 = vrot.slane %v3775, 1
    %v3910 = vrot.slane %v3777, 1
    %v3911 = vsel %vm2802, %v3909, %v3910
    %v3912 = vrot.slane %v3778, 1
    %v3913 = vrot.slane %v3780, 1
    %v3914 = vsel %vm2802, %v3912, %v3913
    %v3915 = vrot.slane %v3779, 1
    %v3916 = vrot.slane %v3781, 1
    %v3917 = vsel %vm2802, %v3915, %v3916
    %v3918 = vrot.slane %v3782, 1
    %v3919 = vrot.slane %v3784, 1
    %v3920 = vsel %vm2802, %v3918, %v3919
    %v3921 = vrot.slane %v3783, 1
    %v3922 = vrot.slane %v3785, 1
    %v3923 = vsel %vm2802, %v3921, %v3922
    %v3924 = vrot.slane %v3786, 1
    %v3925 = vrot.slane %v3788, 1
    %v3926 = vsel %vm2802, %v3924, %v3925
    %v3927 = vrot.slane %v3787, 1
    %v3928 = vrot.slane %v3789, 1
    %v3929 = vsel %vm2802, %v3927, %v3928
    %v3930 = vrot.slane %v3790, 1
    %v3931 = vrot.slane %v3792, 1
    %v3932 = vsel %vm2802, %v3930, %v3931
    %v3933 = vrot.slane %v3791, 1
    %v3934 = vrot.slane %v3793, 1
    %v3935 = vsel %vm2802, %v3933, %v3934
    %v3936 = vrot.slane %v3794, 1
    %v3937 = vrot.slane %v3796, 1
    %v3938 = vsel %vm2802, %v3936, %v3937
    %v3939 = vrot.slane %v3795, 1
    %v3940 = vrot.slane %v3797, 1
    %v3941 = vsel %vm2802, %v3939, %v3940
    %v3942 = vrot.slane %v3798, 1
    %v3943 = vrot.slane %v3800, 1
    %v3944 = vsel %vm2802, %v3942, %v3943
    %v3945 = vrot.slane %v3799, 1
    %v3946 = vrot.slane %v3801, 1
    %v3947 = vsel %vm2802, %v3945, %v3946
    %v3948 = vrot.slane %v3802, 1
    %v3949 = vrot.slane %v3804, 1
    %v3950 = vsel %vm2802, %v3948, %v3949
    %v3951 = vrot.slane %v3803, 1
    %v3952 = vrot.slane %v3805, 1
    %v3953 = vsel %vm2802, %v3951, %v3952
    %v3954 = vrot.slane %v3806, 1
    %v3955 = vrot.slane %v3808, 1
    %v3956 = vsel %vm2802, %v3954, %v3955
    %v3957 = vrot.slane %v3807, 1
    %v3958 = vrot.slane %v3809, 1
    %v3959 = vsel %vm2802, %v3957, %v3958
    %v3960 = vrot.slane %v3810, 1
    %v3961 = vrot.slane %v3812, 1
    %v3962 = vsel %vm2802, %v3960, %v3961
    %v3963 = vrot.slane %v3811, 1
    %v3964 = vrot.slane %v3813, 1
    %v3965 = vsel %vm2802, %v3963, %v3964
    %v3966 = vrot.slane %v3814, 1
    %v3967 = vrot.slane %v3816, 1
    %v3968 = vsel %vm2802, %v3966, %v3967
    %v3969 = vrot.slane %v3815, 1
    %v3970 = vrot.slane %v3817, 1
    %v3971 = vsel %vm2802, %v3969, %v3970
    %v3972 = vrot.slane %v3818, 1
    %v3973 = vrot.slane %v3820, 1
    %v3974 = vsel %vm2802, %v3972, %v3973
    %v3975 = vrot.slane %v3819, 1
    %v3976 = vrot.slane %v3821, 1
    %v3977 = vsel %vm2802, %v3975, %v3976
    %v3978 = vrot.slane %v3822, 1
    %v3979 = vrot.slane %v3824, 1
    %v3980 = vsel %vm2802, %v3978, %v3979
    %v3981 = vrot.slane %v3823, 1
    %v3982 = vrot.slane %v3825, 1
    %v3983 = vsel %vm2802, %v3981, %v3982
    %v3984 = vrot.slane %v3826, 1
    %v3985 = vrot.slane %v3828, 1
    %v3986 = vsel %vm2802, %v3984, %v3985
    %v3987 = vrot.slane %v3827, 1
    %v3988 = vrot.slane %v3829, 1
    %v3989 = vsel %vm2802, %v3987, %v3988
    %v4022 = vld [vmem:[%s3733] sm:$0xfc]
    %v4023 = vld [vmem:[%s3733 + $0x8] sm:$0xfc]
    %v4024 = vld [vmem:[%s3733 + $0x10] sm:$0x3]
    %v4025 = vld [vmem:[%s3733 + $0x18] sm:$0x3]
    %v4026 = vld [vmem:[%s3733 + $0x20] sm:$0xfc]
    %v4027 = vld [vmem:[%s3733 + $0x28] sm:$0xfc]
    %v4028 = vld [vmem:[%s3733 + $0x30] sm:$0x3]
    %v4029 = vld [vmem:[%s3733 + $0x38] sm:$0x3]
    %v4030 = vld [vmem:[%s3733 + $0x40] sm:$0xfc]
    %v4031 = vld [vmem:[%s3733 + $0x48] sm:$0xfc]
    %v4032 = vld [vmem:[%s3733 + $0x50] sm:$0x3]
    %v4033 = vld [vmem:[%s3733 + $0x58] sm:$0x3]
    %v4034 = vld [vmem:[%s3733 + $0x60] sm:$0xfc]
    %v4035 = vld [vmem:[%s3733 + $0x68] sm:$0xfc]
    %v4036 = vld [vmem:[%s3733 + $0x70] sm:$0x3]
    %v4037 = vld [vmem:[%s3733 + $0x78] sm:$0x3]
    %v4038 = vld [vmem:[%s3733 + $0x80] sm:$0xfc]
    %v4039 = vld [vmem:[%s3733 + $0x88] sm:$0xfc]
    %v4040 = vld [vmem:[%s3733 + $0x90] sm:$0x3]
    %v4041 = vld [vmem:[%s3733 + $0x98] sm:$0x3]
    %v4042 = vld [vmem:[%s3733 + $0xa0] sm:$0xfc]
    %v4043 = vld [vmem:[%s3733 + $0xa8] sm:$0xfc]
    %v4044 = vld [vmem:[%s3733 + $0xb0] sm:$0x3]
    %v4045 = vld [vmem:[%s3733 + $0xb8] sm:$0x3]
    %v4046 = vld [vmem:[%s3733 + $0xc0] sm:$0xfc]
    %v4047 = vld [vmem:[%s3733 + $0xc8] sm:$0xfc]
    %v4048 = vld [vmem:[%s3733 + $0xd0] sm:$0x3]
    %v4049 = vld [vmem:[%s3733 + $0xd8] sm:$0x3]
    %v4050 = vld [vmem:[%s3733 + $0xe0] sm:$0xfc]
    %v4051 = vld [vmem:[%s3733 + $0xe8] sm:$0xfc]
    %v4052 = vld [vmem:[%s3733 + $0xf0] sm:$0x3]
    %v4053 = vld [vmem:[%s3733 + $0xf8] sm:$0x3]
    %v4054 = vld [vmem:[%s3733 + $0x140] sm:$0xfc]
    %v4055 = vld [vmem:[%s3733 + $0x148] sm:$0xfc]
    %v4056 = vld [vmem:[%s3733 + $0x150] sm:$0x3]
    %v4057 = vld [vmem:[%s3733 + $0x158] sm:$0x3]
    %v4058 = vld [vmem:[%s3733 + $0x160] sm:$0xfc]
    %v4059 = vld [vmem:[%s3733 + $0x168] sm:$0xfc]
    %v4060 = vld [vmem:[%s3733 + $0x170] sm:$0x3]
    %v4061 = vld [vmem:[%s3733 + $0x178] sm:$0x3]
    %v4062 = vld [vmem:[%s3733 + $0x180] sm:$0xfc]
    %v4063 = vld [vmem:[%s3733 + $0x188] sm:$0xfc]
    %v4064 = vld [vmem:[%s3733 + $0x190] sm:$0x3]
    %v4065 = vld [vmem:[%s3733 + $0x198] sm:$0x3]
    %v4066 = vld [vmem:[%s3733 + $0x1a0] sm:$0xfc]
    %v4067 = vld [vmem:[%s3733 + $0x1a8] sm:$0xfc]
    %v4068 = vld [vmem:[%s3733 + $0x1b0] sm:$0x3]
    %v4069 = vld [vmem:[%s3733 + $0x1b8] sm:$0x3]
    %v4070 = vld [vmem:[%s3733 + $0x1c0] sm:$0xfc]
    %v4071 = vld [vmem:[%s3733 + $0x1c8] sm:$0xfc]
    %v4072 = vld [vmem:[%s3733 + $0x1d0] sm:$0x3]
    %v4073 = vld [vmem:[%s3733 + $0x1d8] sm:$0x3]
    %v4074 = vld [vmem:[%s3733 + $0x1e0] sm:$0xfc]
    %v4075 = vld [vmem:[%s3733 + $0x1e8] sm:$0xfc]
    %v4076 = vld [vmem:[%s3733 + $0x1f0] sm:$0x3]
    %v4077 = vld [vmem:[%s3733 + $0x1f8] sm:$0x3]
    %v4078 = vld [vmem:[%s3733 + $0x200] sm:$0xfc]
    %v4079 = vld [vmem:[%s3733 + $0x208] sm:$0xfc]
    %v4080 = vld [vmem:[%s3733 + $0x210] sm:$0x3]
    %v4081 = vld [vmem:[%s3733 + $0x218] sm:$0x3]
    %v4082 = vld [vmem:[%s3733 + $0x220] sm:$0xfc]
    %v4083 = vld [vmem:[%s3733 + $0x228] sm:$0xfc]
    %v4084 = vld [vmem:[%s3733 + $0x230] sm:$0x3]
    %v4085 = vld [vmem:[%s3733 + $0x238] sm:$0x3]
    %v4150 = vrot.slane %v4022, 2
    %v4151 = vrot.slane %v4024, 2
    %v4152 = vsel %vm3059, %v4150, %v4151
    %v4153 = vrot.slane %v4023, 2
    %v4154 = vrot.slane %v4025, 2
    %v4155 = vsel %vm3059, %v4153, %v4154
    %v4156 = vrot.slane %v4026, 2
    %v4157 = vrot.slane %v4028, 2
    %v4158 = vsel %vm3059, %v4156, %v4157
    %v4159 = vrot.slane %v4027, 2
    %v4160 = vrot.slane %v4029, 2
    %v4161 = vsel %vm3059, %v4159, %v4160
    %v4162 = vrot.slane %v4030, 2
    %v4163 = vrot.slane %v4032, 2
    %v4164 = vsel %vm3059, %v4162, %v4163
    %v4165 = vrot.slane %v4031, 2
    %v4166 = vrot.slane %v4033, 2
    %v4167 = vsel %vm3059, %v4165, %v4166
    %v4168 = vrot.slane %v4034, 2
    %v4169 = vrot.slane %v4036, 2
    %v4170 = vsel %vm3059, %v4168, %v4169
    %v4171 = vrot.slane %v4035, 2
    %v4172 = vrot.slane %v4037, 2
    %v4173 = vsel %vm3059, %v4171, %v4172
    %v4174 = vrot.slane %v4038, 2
    %v4175 = vrot.slane %v4040, 2
    %v4176 = vsel %vm3059, %v4174, %v4175
    %v4177 = vrot.slane %v4039, 2
    %v4178 = vrot.slane %v4041, 2
    %v4179 = vsel %vm3059, %v4177, %v4178
    %v4180 = vrot.slane %v4042, 2
    %v4181 = vrot.slane %v4044, 2
    %v4182 = vsel %vm3059, %v4180, %v4181
    %v4183 = vrot.slane %v4043, 2
    %v4184 = vrot.slane %v4045, 2
    %v4185 = vsel %vm3059, %v4183, %v4184
    %v4186 = vrot.slane %v4046, 2
    %v4187 = vrot.slane %v4048, 2
    %v4188 = vsel %vm3059, %v4186, %v4187
    %v4189 = vrot.slane %v4047, 2
    %v4190 = vrot.slane %v4049, 2
    %v4191 = vsel %vm3059, %v4189, %v4190
    %v4192 = vrot.slane %v4050, 2
    %v4193 = vrot.slane %v4052, 2
    %v4194 = vsel %vm3059, %v4192, %v4193
    %v4195 = vrot.slane %v4051, 2
    %v4196 = vrot.slane %v4053, 2
    %v4197 = vsel %vm3059, %v4195, %v4196
    %v4198 = vrot.slane %v4054, 2
    %v4199 = vrot.slane %v4056, 2
    %v4200 = vsel %vm3059, %v4198, %v4199
    %v4201 = vrot.slane %v4055, 2
    %v4202 = vrot.slane %v4057, 2
    %v4203 = vsel %vm3059, %v4201, %v4202
    %v4204 = vrot.slane %v4058, 2
    %v4205 = vrot.slane %v4060, 2
    %v4206 = vsel %vm3059, %v4204, %v4205
    %v4207 = vrot.slane %v4059, 2
    %v4208 = vrot.slane %v4061, 2
    %v4209 = vsel %vm3059, %v4207, %v4208
    %v4210 = vrot.slane %v4062, 2
    %v4211 = vrot.slane %v4064, 2
    %v4212 = vsel %vm3059, %v4210, %v4211
    %v4213 = vrot.slane %v4063, 2
    %v4214 = vrot.slane %v4065, 2
    %v4215 = vsel %vm3059, %v4213, %v4214
    %v4216 = vrot.slane %v4066, 2
    %v4217 = vrot.slane %v4068, 2
    %v4218 = vsel %vm3059, %v4216, %v4217
    %v4219 = vrot.slane %v4067, 2
    %v4220 = vrot.slane %v4069, 2
    %v4221 = vsel %vm3059, %v4219, %v4220
    %v4222 = vrot.slane %v4070, 2
    %v4223 = vrot.slane %v4072, 2
    %v4224 = vsel %vm3059, %v4222, %v4223
    %v4225 = vrot.slane %v4071, 2
    %v4226 = vrot.slane %v4073, 2
    %v4227 = vsel %vm3059, %v4225, %v4226
    %v4228 = vrot.slane %v4074, 2
    %v4229 = vrot.slane %v4076, 2
    %v4230 = vsel %vm3059, %v4228, %v4229
    %v4231 = vrot.slane %v4075, 2
    %v4232 = vrot.slane %v4077, 2
    %v4233 = vsel %vm3059, %v4231, %v4232
    %v4234 = vrot.slane %v4078, 2
    %v4235 = vrot.slane %v4080, 2
    %v4236 = vsel %vm3059, %v4234, %v4235
    %v4237 = vrot.slane %v4079, 2
    %v4238 = vrot.slane %v4081, 2
    %v4239 = vsel %vm3059, %v4237, %v4238
    %v4240 = vrot.slane %v4082, 2
    %v4241 = vrot.slane %v4084, 2
    %v4242 = vsel %vm3059, %v4240, %v4241
    %v4243 = vrot.slane %v4083, 2
    %v4244 = vrot.slane %v4085, 2
    %v4245 = vsel %vm3059, %v4243, %v4244
    %v4278 = vpack.c.bf16 %v2644, %v2642
    %v4279 = vpack.c.bf16 %v2645, %v2643
    %v4280 = vpack.c.bf16 %v2811, %v2805
    %v4281 = vpack.c.bf16 %v2814, %v2808
    %v4282 = vpack.c.bf16 %v3068, %v3062
    %v4283 = vpack.c.bf16 %v3071, %v3065
    %v4284 = vpack.c.bf16 %v3191, %v3189
    %v4285 = vpack.c.bf16 %v3192, %v3190
    %v4286 = vpack.c.bf16 %v3357, %v3351
    %v4287 = vpack.c.bf16 %v3360, %v3354
    %v4288 = vpack.c.bf16 %v3613, %v3607
    %v4289 = vpack.c.bf16 %v3616, %v3610
    %v4290 = vpack.c.bf16 %v3736, %v3734
    %v4291 = vpack.c.bf16 %v3737, %v3735
    %v4292 = vpack.c.bf16 %v3902, %v3896
    %v4293 = vpack.c.bf16 %v3905, %v3899
    %v4294 = vpack.c.bf16 %v4158, %v4152
    %v4295 = vpack.c.bf16 %v4161, %v4155
    %v4296 = vpack.c.bf16 %v2648, %v2646
    %v4297 = vpack.c.bf16 %v2649, %v2647
    %v4298 = vpack.c.bf16 %v2823, %v2817
    %v4299 = vpack.c.bf16 %v2826, %v2820
    %v4300 = vpack.c.bf16 %v3080, %v3074
    %v4301 = vpack.c.bf16 %v3083, %v3077
    %v4302 = vpack.c.bf16 %v3195, %v3193
    %v4303 = vpack.c.bf16 %v3196, %v3194
    %v4304 = vpack.c.bf16 %v3369, %v3363
    %v4305 = vpack.c.bf16 %v3372, %v3366
    %v4306 = vpack.c.bf16 %v3625, %v3619
    %v4307 = vpack.c.bf16 %v3628, %v3622
    %v4308 = vpack.c.bf16 %v3740, %v3738
    %v4309 = vpack.c.bf16 %v3741, %v3739
    %v4310 = vpack.c.bf16 %v3914, %v3908
    %v4311 = vpack.c.bf16 %v3917, %v3911
    %v4312 = vpack.c.bf16 %v4170, %v4164
    %v4313 = vpack.c.bf16 %v4173, %v4167
    %v4314 = vpack.c.bf16 %v2652, %v2650
    %v4315 = vpack.c.bf16 %v2653, %v2651
    %v4316 = vpack.c.bf16 %v2835, %v2829
    %v4317 = vpack.c.bf16 %v2838, %v2832
    %v4318 = vpack.c.bf16 %v3092, %v3086
    %v4319 = vpack.c.bf16 %v3095, %v3089
    %v4320 = vpack.c.bf16 %v3199, %v3197
    %v4321 = vpack.c.bf16 %v3200, %v3198
    %v4322 = vpack.c.bf16 %v3381, %v3375
    %v4323 = vpack.c.bf16 %v3384, %v3378
    %v4324 = vpack.c.bf16 %v3637, %v3631
    %v4325 = vpack.c.bf16 %v3640, %v3634
    %v4326 = vpack.c.bf16 %v3744, %v3742
    %v4327 = vpack.c.bf16 %v3745, %v3743
    %v4328 = vpack.c.bf16 %v3926, %v3920
    %v4329 = vpack.c.bf16 %v3929, %v3923
    %v4330 = vpack.c.bf16 %v4182, %v4176
    %v4331 = vpack.c.bf16 %v4185, %v4179
    %v4332 = vpack.c.bf16 %v2656, %v2654
    %v4333 = vpack.c.bf16 %v2657, %v2655
    %v4334 = vpack.c.bf16 %v2847, %v2841
    %v4335 = vpack.c.bf16 %v2850, %v2844
    %v4336 = vpack.c.bf16 %v3104, %v3098
    %v4337 = vpack.c.bf16 %v3107, %v3101
    %v4338 = vpack.c.bf16 %v3203, %v3201
    %v4339 = vpack.c.bf16 %v3204, %v3202
    %v4340 = vpack.c.bf16 %v3393, %v3387
    %v4341 = vpack.c.bf16 %v3396, %v3390
    %v4342 = vpack.c.bf16 %v3649, %v3643
    %v4343 = vpack.c.bf16 %v3652, %v3646
    %v4344 = vpack.c.bf16 %v3748, %v3746
    %v4345 = vpack.c.bf16 %v3749, %v3747
    %v4346 = vpack.c.bf16 %v3938, %v3932
    %v4347 = vpack.c.bf16 %v3941, %v3935
    %v4348 = vpack.c.bf16 %v4194, %v4188
    %v4349 = vpack.c.bf16 %v4197, %v4191
    %v4350 = vpack.c.bf16 %v2660, %v2658
    %v4351 = vpack.c.bf16 %v2661, %v2659
    %v4352 = vpack.c.bf16 %v2859, %v2853
    %v4353 = vpack.c.bf16 %v2862, %v2856
    %v4354 = vpack.c.bf16 %v3116, %v3110
    %v4355 = vpack.c.bf16 %v3119, %v3113
    %v4356 = vpack.c.bf16 %v3207, %v3205
    %v4357 = vpack.c.bf16 %v3208, %v3206
    %v4358 = vpack.c.bf16 %v3405, %v3399
    %v4359 = vpack.c.bf16 %v3408, %v3402
    %v4360 = vpack.c.bf16 %v3661, %v3655
    %v4361 = vpack.c.bf16 %v3664, %v3658
    %v4362 = vpack.c.bf16 %v3752, %v3750
    %v4363 = vpack.c.bf16 %v3753, %v3751
    %v4364 = vpack.c.bf16 %v3950, %v3944
    %v4365 = vpack.c.bf16 %v3953, %v3947
    %v4366 = vpack.c.bf16 %v4206, %v4200
    %v4367 = vpack.c.bf16 %v4209, %v4203
    %v4368 = vpack.c.bf16 %v2664, %v2662
    %v4369 = vpack.c.bf16 %v2665, %v2663
    %v4370 = vpack.c.bf16 %v2871, %v2865
    %v4371 = vpack.c.bf16 %v2874, %v2868
    %v4372 = vpack.c.bf16 %v3128, %v3122
    %v4373 = vpack.c.bf16 %v3131, %v3125
    %v4374 = vpack.c.bf16 %v3211, %v3209
    %v4375 = vpack.c.bf16 %v3212, %v3210
    %v4376 = vpack.c.bf16 %v3417, %v3411
    %v4377 = vpack.c.bf16 %v3420, %v3414
    %v4378 = vpack.c.bf16 %v3673, %v3667
    %v4379 = vpack.c.bf16 %v3676, %v3670
    %v4380 = vpack.c.bf16 %v3756, %v3754
    %v4381 = vpack.c.bf16 %v3757, %v3755
    %v4382 = vpack.c.bf16 %v3962, %v3956
    %v4383 = vpack.c.bf16 %v3965, %v3959
    %v4384 = vpack.c.bf16 %v4218, %v4212
    %v4385 = vpack.c.bf16 %v4221, %v4215
    %v4386 = vpack.c.bf16 %v2668, %v2666
    %v4387 = vpack.c.bf16 %v2669, %v2667
    %v4388 = vpack.c.bf16 %v2883, %v2877
    %v4389 = vpack.c.bf16 %v2886, %v2880
    %v4390 = vpack.c.bf16 %v3140, %v3134
    %v4391 = vpack.c.bf16 %v3143, %v3137
    %v4392 = vpack.c.bf16 %v3215, %v3213
    %v4393 = vpack.c.bf16 %v3216, %v3214
    %v4394 = vpack.c.bf16 %v3429, %v3423
    %v4395 = vpack.c.bf16 %v3432, %v3426
    %v4396 = vpack.c.bf16 %v3685, %v3679
    %v4397 = vpack.c.bf16 %v3688, %v3682
    %v4398 = vpack.c.bf16 %v3760, %v3758
    %v4399 = vpack.c.bf16 %v3761, %v3759
    %v4400 = vpack.c.bf16 %v3974, %v3968
    %v4401 = vpack.c.bf16 %v3977, %v3971
    %v4402 = vpack.c.bf16 %v4230, %v4224
    %v4403 = vpack.c.bf16 %v4233, %v4227
    %v4404 = vpack.c.bf16 %v2672, %v2670
    %v4405 = vpack.c.bf16 %v2673, %v2671
    %v4406 = vpack.c.bf16 %v2895, %v2889
    %v4407 = vpack.c.bf16 %v2898, %v2892
    %v4408 = vpack.c.bf16 %v3152, %v3146
    %v4409 = vpack.c.bf16 %v3155, %v3149
    %v4410 = vpack.c.bf16 %v3219, %v3217
    %v4411 = vpack.c.bf16 %v3220, %v3218
    %v4412 = vpack.c.bf16 %v3441, %v3435
    %v4413 = vpack.c.bf16 %v3444, %v3438
    %v4414 = vpack.c.bf16 %v3697, %v3691
    %v4415 = vpack.c.bf16 %v3700, %v3694
    %v4416 = vpack.c.bf16 %v3764, %v3762
    %v4417 = vpack.c.bf16 %v3765, %v3763
    %v4418 = vpack.c.bf16 %v3986, %v3980
    %v4419 = vpack.c.bf16 %v3989, %v3983
    %v4420 = vpack.c.bf16 %v4242, %v4236
    %v4421 = vpack.c.bf16 %v4245, %v4239
    %v4422 = vld [vmem:[#allocation9] sm:$0xff]
    %v4423 = vld [vmem:[#allocation9 + $0x8] sm:$0xff]
    %v4424 = vld [vmem:[#allocation9 + $0x10] sm:$0xff]
    %v4425 = vld [vmem:[#allocation9 + $0x18] sm:$0xff]
    %v4426 = vld [vmem:[#allocation9 + $0x20] sm:$0xff]
    %v4427 = vld [vmem:[#allocation9 + $0x28] sm:$0xff]
    %v4428 = vld [vmem:[#allocation9 + $0x30] sm:$0xff]
    %v4429 = vld [vmem:[#allocation9 + $0x38] sm:$0xff]
    %v4430 = vld [vmem:[#allocation9 + $0x40] sm:$0xff]
    %v4431 = vld [vmem:[#allocation9 + $0x48] sm:$0xff]
    %v4432 = vld [vmem:[#allocation9 + $0x50] sm:$0xff]
    %v4433 = vld [vmem:[#allocation9 + $0x58] sm:$0xff]
    %v4434 = vld [vmem:[#allocation9 + $0x60] sm:$0xff]
    %v4435 = vld [vmem:[#allocation9 + $0x68] sm:$0xff]
    %v4436 = vld [vmem:[#allocation9 + $0x70] sm:$0xff]
    %v4437 = vld [vmem:[#allocation9 + $0x78] sm:$0xff]
    %v4438 = vld [vmem:[#allocation9 + $0x80] sm:$0xff]
    %v4439 = vld [vmem:[#allocation9 + $0x88] sm:$0xff]
    %v4440 = vld [vmem:[#allocation9 + $0x90] sm:$0xff]
    %v4441 = vld [vmem:[#allocation9 + $0x98] sm:$0xff]
    %v4442 = vld [vmem:[#allocation9 + $0xa0] sm:$0xff]
    %v4443 = vld [vmem:[#allocation9 + $0xa8] sm:$0xff]
    %v4444 = vld [vmem:[#allocation9 + $0xb0] sm:$0xff]
    %v4445 = vld [vmem:[#allocation9 + $0xb8] sm:$0xff]
    %v4446 = vld [vmem:[#allocation9 + $0xc0] sm:$0xff]
    %v4447 = vld [vmem:[#allocation9 + $0xc8] sm:$0xff]
    %v4448 = vld [vmem:[#allocation9 + $0xd0] sm:$0xff]
    %v4449 = vld [vmem:[#allocation9 + $0xd8] sm:$0xff]
    %v4450 = vld [vmem:[#allocation9 + $0xe0] sm:$0xff]
    %v4451 = vld [vmem:[#allocation9 + $0xe8] sm:$0xff]
    %v4452 = vld [vmem:[#allocation9 + $0xf0] sm:$0xff]
    %v4453 = vld [vmem:[#allocation9 + $0xf8] sm:$0xff]
    %v4454 = vld [vmem:[#allocation9 + $0x100] sm:$0xff]
    %v4455 = vld [vmem:[#allocation9 + $0x108] sm:$0xff]
    %v4456 = vld [vmem:[#allocation9 + $0x110] sm:$0xff]
    %v4457 = vld [vmem:[#allocation9 + $0x118] sm:$0xff]
    %v4458 = vld [vmem:[#allocation9 + $0x120] sm:$0xff]
    %v4459 = vld [vmem:[#allocation9 + $0x128] sm:$0xff]
    %v4460 = vld [vmem:[#allocation9 + $0x130] sm:$0xff]
    %v4461 = vld [vmem:[#allocation9 + $0x138] sm:$0xff]
    %v4462 = vld [vmem:[#allocation9 + $0x140] sm:$0xff]
    %v4463 = vld [vmem:[#allocation9 + $0x148] sm:$0xff]
    %v4464 = vld [vmem:[#allocation9 + $0x150] sm:$0xff]
    %v4465 = vld [vmem:[#allocation9 + $0x158] sm:$0xff]
    %v4466 = vld [vmem:[#allocation9 + $0x160] sm:$0xff]
    %v4467 = vld [vmem:[#allocation9 + $0x168] sm:$0xff]
    %v4468 = vld [vmem:[#allocation9 + $0x170] sm:$0xff]
    %v4469 = vld [vmem:[#allocation9 + $0x178] sm:$0xff]
    %v4470 = vld [vmem:[#allocation9 + $0x180] sm:$0xff]
    %v4471 = vld [vmem:[#allocation9 + $0x188] sm:$0xff]
    %v4472 = vld [vmem:[#allocation9 + $0x190] sm:$0xff]
    %v4473 = vld [vmem:[#allocation9 + $0x198] sm:$0xff]
    %v4474 = vld [vmem:[#allocation9 + $0x1a0] sm:$0xff]
    %v4475 = vld [vmem:[#allocation9 + $0x1a8] sm:$0xff]
    %v4476 = vld [vmem:[#allocation9 + $0x1b0] sm:$0xff]
    %v4477 = vld [vmem:[#allocation9 + $0x1b8] sm:$0xff]
    %v4478 = vld [vmem:[#allocation9 + $0x1c0] sm:$0xff]
    %v4479 = vld [vmem:[#allocation9 + $0x1c8] sm:$0xff]
    %v4480 = vld [vmem:[#allocation9 + $0x1d0] sm:$0xff]
    %v4481 = vld [vmem:[#allocation9 + $0x1d8] sm:$0xff]
    %v4482 = vld [vmem:[#allocation9 + $0x1e0] sm:$0xff]
    %v4483 = vld [vmem:[#allocation9 + $0x1e8] sm:$0xff]
    %v4484 = vld [vmem:[#allocation9 + $0x1f0] sm:$0xff]
    %v4485 = vld [vmem:[#allocation9 + $0x1f8] sm:$0xff]
    %v4486 = vld [vmem:[#allocation9 + $0x200] sm:$0xff]
    %v4487 = vld [vmem:[#allocation9 + $0x208] sm:$0xff]
    %v4488 = vld [vmem:[#allocation9 + $0x210] sm:$0xff]
    %v4489 = vld [vmem:[#allocation9 + $0x218] sm:$0xff]
    %v4490 = vld [vmem:[#allocation9 + $0x220] sm:$0xff]
    %v4491 = vld [vmem:[#allocation9 + $0x228] sm:$0xff]
    %v4492 = vld [vmem:[#allocation9 + $0x230] sm:$0xff]
    %v4493 = vld [vmem:[#allocation9 + $0x238] sm:$0xff]
    %v4494 = vld [vmem:[#allocation9 + $0x240] sm:$0xff]
    %v4495 = vld [vmem:[#allocation9 + $0x248] sm:$0xff]
    %v4496 = vld [vmem:[#allocation9 + $0x250] sm:$0xff]
    %v4497 = vld [vmem:[#allocation9 + $0x258] sm:$0xff]
    %v4498 = vld [vmem:[#allocation9 + $0x260] sm:$0xff]
    %v4499 = vld [vmem:[#allocation9 + $0x268] sm:$0xff]
    %v4500 = vld [vmem:[#allocation9 + $0x270] sm:$0xff]
    %v4501 = vld [vmem:[#allocation9 + $0x278] sm:$0xff]
    %v4502 = vld [vmem:[#allocation9 + $0x280] sm:$0xff]
    %v4503 = vld [vmem:[#allocation9 + $0x288] sm:$0xff]
    %v4504 = vld [vmem:[#allocation9 + $0x290] sm:$0xff]
    %v4505 = vld [vmem:[#allocation9 + $0x298] sm:$0xff]
    %v4506 = vld [vmem:[#allocation9 + $0x2a0] sm:$0xff]
    %v4507 = vld [vmem:[#allocation9 + $0x2a8] sm:$0xff]
    %v4508 = vld [vmem:[#allocation9 + $0x2b0] sm:$0xff]
    %v4509 = vld [vmem:[#allocation9 + $0x2b8] sm:$0xff]
    %v4510 = vld [vmem:[#allocation9 + $0x2c0] sm:$0xff]
    %v4511 = vld [vmem:[#allocation9 + $0x2c8] sm:$0xff]
    %v4512 = vld [vmem:[#allocation9 + $0x2d0] sm:$0xff]
    %v4513 = vld [vmem:[#allocation9 + $0x2d8] sm:$0xff]
    %v4514 = vld [vmem:[#allocation9 + $0x2e0] sm:$0xff]
    %v4515 = vld [vmem:[#allocation9 + $0x2e8] sm:$0xff]
    %v4516 = vld [vmem:[#allocation9 + $0x2f0] sm:$0xff]
    %v4517 = vld [vmem:[#allocation9 + $0x2f8] sm:$0xff]
    %v4518 = vld [vmem:[#allocation9 + $0x300] sm:$0xff]
    %v4519 = vld [vmem:[#allocation9 + $0x308] sm:$0xff]
    %v4520 = vld [vmem:[#allocation9 + $0x310] sm:$0xff]
    %v4521 = vld [vmem:[#allocation9 + $0x318] sm:$0xff]
    %v4522 = vld [vmem:[#allocation9 + $0x320] sm:$0xff]
    %v4523 = vld [vmem:[#allocation9 + $0x328] sm:$0xff]
    %v4524 = vld [vmem:[#allocation9 + $0x330] sm:$0xff]
    %v4525 = vld [vmem:[#allocation9 + $0x338] sm:$0xff]
    %v4526 = vld [vmem:[#allocation9 + $0x340] sm:$0xff]
    %v4527 = vld [vmem:[#allocation9 + $0x348] sm:$0xff]
    %v4528 = vld [vmem:[#allocation9 + $0x350] sm:$0xff]
    %v4529 = vld [vmem:[#allocation9 + $0x358] sm:$0xff]
    %v4530 = vld [vmem:[#allocation9 + $0x360] sm:$0xff]
    %v4531 = vld [vmem:[#allocation9 + $0x368] sm:$0xff]
    %v4532 = vld [vmem:[#allocation9 + $0x370] sm:$0xff]
    %v4533 = vld [vmem:[#allocation9 + $0x378] sm:$0xff]
    %v4534 = vld [vmem:[#allocation9 + $0x380] sm:$0xff]
    %v4535 = vld [vmem:[#allocation9 + $0x388] sm:$0xff]
    %v4536 = vld [vmem:[#allocation9 + $0x390] sm:$0xff]
    %v4537 = vld [vmem:[#allocation9 + $0x398] sm:$0xff]
    %v4538 = vld [vmem:[#allocation9 + $0x3a0] sm:$0xff]
    %v4539 = vld [vmem:[#allocation9 + $0x3a8] sm:$0xff]
    %v4540 = vld [vmem:[#allocation9 + $0x3b0] sm:$0xff]
    %v4541 = vld [vmem:[#allocation9 + $0x3b8] sm:$0xff]
    %v4542 = vld [vmem:[#allocation9 + $0x3c0] sm:$0xff]
    %v4543 = vld [vmem:[#allocation9 + $0x3c8] sm:$0xff]
    %v4544 = vld [vmem:[#allocation9 + $0x3d0] sm:$0xff]
    %v4545 = vld [vmem:[#allocation9 + $0x3d8] sm:$0xff]
    %v4546 = vld [vmem:[#allocation9 + $0x3e0] sm:$0xff]
    %v4547 = vld [vmem:[#allocation9 + $0x3e8] sm:$0xff]
    %v4548 = vld [vmem:[#allocation9 + $0x3f0] sm:$0xff]
    %v4549 = vld [vmem:[#allocation9 + $0x3f8] sm:$0xff]
    %v4550 = vld [vmem:[#allocation9 + $0x400] sm:$0xff]
    %v4551 = vld [vmem:[#allocation9 + $0x408] sm:$0xff]
    %v4552 = vld [vmem:[#allocation9 + $0x410] sm:$0xff]
    %v4553 = vld [vmem:[#allocation9 + $0x418] sm:$0xff]
    %v4554 = vld [vmem:[#allocation9 + $0x420] sm:$0xff]
    %v4555 = vld [vmem:[#allocation9 + $0x428] sm:$0xff]
    %v4556 = vld [vmem:[#allocation9 + $0x430] sm:$0xff]
    %v4557 = vld [vmem:[#allocation9 + $0x438] sm:$0xff]
    %v4558 = vld [vmem:[#allocation9 + $0x440] sm:$0xff]
    %v4559 = vld [vmem:[#allocation9 + $0x448] sm:$0xff]
    %v4560 = vld [vmem:[#allocation9 + $0x450] sm:$0xff]
    %v4561 = vld [vmem:[#allocation9 + $0x458] sm:$0xff]
    %v4562 = vld [vmem:[#allocation9 + $0x460] sm:$0xff]
    %v4563 = vld [vmem:[#allocation9 + $0x468] sm:$0xff]
    %v4564 = vld [vmem:[#allocation9 + $0x470] sm:$0xff]
    %v4565 = vld [vmem:[#allocation9 + $0x478] sm:$0xff]
    %v4566 = vld [vmem:[#allocation9 + $0x480] sm:$0xff]
    %v4567 = vld [vmem:[#allocation9 + $0x488] sm:$0xff]
    %v4568 = vld [vmem:[#allocation9 + $0x490] sm:$0xff]
    %v4569 = vld [vmem:[#allocation9 + $0x498] sm:$0xff]
    %v4570 = vld [vmem:[#allocation9 + $0x4a0] sm:$0xff]
    %v4571 = vld [vmem:[#allocation9 + $0x4a8] sm:$0xff]
    %v4572 = vld [vmem:[#allocation9 + $0x4b0] sm:$0xff]
    %v4573 = vld [vmem:[#allocation9 + $0x4b8] sm:$0xff]
    %v4574 = vld [vmem:[#allocation9 + $0x4c0] sm:$0xff]
    %v4575 = vld [vmem:[#allocation9 + $0x4c8] sm:$0xff]
    %v4576 = vld [vmem:[#allocation9 + $0x4d0] sm:$0xff]
    %v4577 = vld [vmem:[#allocation9 + $0x4d8] sm:$0xff]
    %v4578 = vld [vmem:[#allocation9 + $0x4e0] sm:$0xff]
    %v4579 = vld [vmem:[#allocation9 + $0x4e8] sm:$0xff]
    %v4580 = vld [vmem:[#allocation9 + $0x4f0] sm:$0xff]
    %v4581 = vld [vmem:[#allocation9 + $0x4f8] sm:$0xff]
    %v4582 = vld [vmem:[#allocation9 + $0x500] sm:$0xff]
    %v4583 = vld [vmem:[#allocation9 + $0x508] sm:$0xff]
    %v4584 = vld [vmem:[#allocation9 + $0x510] sm:$0xff]
    %v4585 = vld [vmem:[#allocation9 + $0x518] sm:$0xff]
    %v4586 = vld [vmem:[#allocation9 + $0x520] sm:$0xff]
    %v4587 = vld [vmem:[#allocation9 + $0x528] sm:$0xff]
    %v4588 = vld [vmem:[#allocation9 + $0x530] sm:$0xff]
    %v4589 = vld [vmem:[#allocation9 + $0x538] sm:$0xff]
    %v4590 = vld [vmem:[#allocation9 + $0x540] sm:$0xff]
    %v4591 = vld [vmem:[#allocation9 + $0x548] sm:$0xff]
    %v4592 = vld [vmem:[#allocation9 + $0x550] sm:$0xff]
    %v4593 = vld [vmem:[#allocation9 + $0x558] sm:$0xff]
    %v4594 = vld [vmem:[#allocation9 + $0x560] sm:$0xff]
    %v4595 = vld [vmem:[#allocation9 + $0x568] sm:$0xff]
    %v4596 = vld [vmem:[#allocation9 + $0x570] sm:$0xff]
    %v4597 = vld [vmem:[#allocation9 + $0x578] sm:$0xff]
    %v4598 = vld [vmem:[#allocation9 + $0x580] sm:$0xff]
    %v4599 = vld [vmem:[#allocation9 + $0x588] sm:$0xff]
    %v4600 = vld [vmem:[#allocation9 + $0x590] sm:$0xff]
    %v4601 = vld [vmem:[#allocation9 + $0x598] sm:$0xff]
    %v4602 = vld [vmem:[#allocation9 + $0x5a0] sm:$0xff]
    %v4603 = vld [vmem:[#allocation9 + $0x5a8] sm:$0xff]
    %v4604 = vld [vmem:[#allocation9 + $0x5b0] sm:$0xff]
    %v4605 = vld [vmem:[#allocation9 + $0x5b8] sm:$0xff]
    %v4606 = vld [vmem:[#allocation9 + $0x5c0] sm:$0xff]
    %v4607 = vld [vmem:[#allocation9 + $0x5c8] sm:$0xff]
    %v4608 = vld [vmem:[#allocation9 + $0x5d0] sm:$0xff]
    %v4609 = vld [vmem:[#allocation9 + $0x5d8] sm:$0xff]
    %v4610 = vld [vmem:[#allocation9 + $0x5e0] sm:$0xff]
    %v4611 = vld [vmem:[#allocation9 + $0x5e8] sm:$0xff]
    %v4612 = vld [vmem:[#allocation9 + $0x5f0] sm:$0xff]
    %v4613 = vld [vmem:[#allocation9 + $0x5f8] sm:$0xff]
    %v4614 = vld [vmem:[#allocation9 + $0x600] sm:$0xff]
    %v4615 = vld [vmem:[#allocation9 + $0x608] sm:$0xff]
    %v4616 = vld [vmem:[#allocation9 + $0x610] sm:$0xff]
    %v4617 = vld [vmem:[#allocation9 + $0x618] sm:$0xff]
    %v4618 = vld [vmem:[#allocation9 + $0x620] sm:$0xff]
    %v4619 = vld [vmem:[#allocation9 + $0x628] sm:$0xff]
    %v4620 = vld [vmem:[#allocation9 + $0x630] sm:$0xff]
    %v4621 = vld [vmem:[#allocation9 + $0x638] sm:$0xff]
    %v4622 = vld [vmem:[#allocation9 + $0x640] sm:$0xff]
    %v4623 = vld [vmem:[#allocation9 + $0x648] sm:$0xff]
    %v4624 = vld [vmem:[#allocation9 + $0x650] sm:$0xff]
    %v4625 = vld [vmem:[#allocation9 + $0x658] sm:$0xff]
    %v4626 = vld [vmem:[#allocation9 + $0x660] sm:$0xff]
    %v4627 = vld [vmem:[#allocation9 + $0x668] sm:$0xff]
    %v4628 = vld [vmem:[#allocation9 + $0x670] sm:$0xff]
    %v4629 = vld [vmem:[#allocation9 + $0x678] sm:$0xff]
    %v4630 = vld [vmem:[#allocation9 + $0x680] sm:$0xff]
    %v4631 = vld [vmem:[#allocation9 + $0x688] sm:$0xff]
    %v4632 = vld [vmem:[#allocation9 + $0x690] sm:$0xff]
    %v4633 = vld [vmem:[#allocation9 + $0x698] sm:$0xff]
    %v4634 = vld [vmem:[#allocation9 + $0x6a0] sm:$0xff]
    %v4635 = vld [vmem:[#allocation9 + $0x6a8] sm:$0xff]
    %v4636 = vld [vmem:[#allocation9 + $0x6b0] sm:$0xff]
    %v4637 = vld [vmem:[#allocation9 + $0x6b8] sm:$0xff]
    %v4638 = vld [vmem:[#allocation9 + $0x6c0] sm:$0xff]
    %v4639 = vld [vmem:[#allocation9 + $0x6c8] sm:$0xff]
    %v4640 = vld [vmem:[#allocation9 + $0x6d0] sm:$0xff]
    %v4641 = vld [vmem:[#allocation9 + $0x6d8] sm:$0xff]
    %v4642 = vld [vmem:[#allocation9 + $0x6e0] sm:$0xff]
    %v4643 = vld [vmem:[#allocation9 + $0x6e8] sm:$0xff]
    %v4644 = vld [vmem:[#allocation9 + $0x6f0] sm:$0xff]
    %v4645 = vld [vmem:[#allocation9 + $0x6f8] sm:$0xff]
    %v4646 = vld [vmem:[#allocation9 + $0x700] sm:$0xff]
    %v4647 = vld [vmem:[#allocation9 + $0x708] sm:$0xff]
    %v4648 = vld [vmem:[#allocation9 + $0x710] sm:$0xff]
    %v4649 = vld [vmem:[#allocation9 + $0x718] sm:$0xff]
    %v4650 = vld [vmem:[#allocation9 + $0x720] sm:$0xff]
    %v4651 = vld [vmem:[#allocation9 + $0x728] sm:$0xff]
    %v4652 = vld [vmem:[#allocation9 + $0x730] sm:$0xff]
    %v4653 = vld [vmem:[#allocation9 + $0x738] sm:$0xff]
    %v4654 = vld [vmem:[#allocation9 + $0x740] sm:$0xff]
    %v4655 = vld [vmem:[#allocation9 + $0x748] sm:$0xff]
    %v4656 = vld [vmem:[#allocation9 + $0x750] sm:$0xff]
    %v4657 = vld [vmem:[#allocation9 + $0x758] sm:$0xff]
    %v4658 = vld [vmem:[#allocation9 + $0x760] sm:$0xff]
    %v4659 = vld [vmem:[#allocation9 + $0x768] sm:$0xff]
    %v4660 = vld [vmem:[#allocation9 + $0x770] sm:$0xff]
    %v4661 = vld [vmem:[#allocation9 + $0x778] sm:$0xff]
    %v4662 = vld [vmem:[#allocation9 + $0x780] sm:$0xff]
    %v4663 = vld [vmem:[#allocation9 + $0x788] sm:$0xff]
    %v4664 = vld [vmem:[#allocation9 + $0x790] sm:$0xff]
    %v4665 = vld [vmem:[#allocation9 + $0x798] sm:$0xff]
    %v4666 = vld [vmem:[#allocation9 + $0x7a0] sm:$0xff]
    %v4667 = vld [vmem:[#allocation9 + $0x7a8] sm:$0xff]
    %v4668 = vld [vmem:[#allocation9 + $0x7b0] sm:$0xff]
    %v4669 = vld [vmem:[#allocation9 + $0x7b8] sm:$0xff]
    %v4670 = vld [vmem:[#allocation9 + $0x7c0] sm:$0xff]
    %v4671 = vld [vmem:[#allocation9 + $0x7c8] sm:$0xff]
    %v4672 = vld [vmem:[#allocation9 + $0x7d0] sm:$0xff]
    %v4673 = vld [vmem:[#allocation9 + $0x7d8] sm:$0xff]
    %v4674 = vld [vmem:[#allocation9 + $0x7e0] sm:$0xff]
    %v4675 = vld [vmem:[#allocation9 + $0x7e8] sm:$0xff]
    %v4676 = vld [vmem:[#allocation9 + $0x7f0] sm:$0xff]
    %v4677 = vld [vmem:[#allocation9 + $0x7f8] sm:$0xff]
    %v4678 = vld [vmem:[#allocation9 + $0x800] sm:$0xff]
    %v4679 = vld [vmem:[#allocation9 + $0x808] sm:$0xff]
    %v4680 = vld [vmem:[#allocation9 + $0x810] sm:$0xff]
    %v4681 = vld [vmem:[#allocation9 + $0x818] sm:$0xff]
    %v4682 = vld [vmem:[#allocation9 + $0x820] sm:$0xff]
    %v4683 = vld [vmem:[#allocation9 + $0x828] sm:$0xff]
    %v4684 = vld [vmem:[#allocation9 + $0x830] sm:$0xff]
    %v4685 = vld [vmem:[#allocation9 + $0x838] sm:$0xff]
    %v4686 = vld [vmem:[#allocation9 + $0x840] sm:$0xff]
    %v4687 = vld [vmem:[#allocation9 + $0x848] sm:$0xff]
    %v4688 = vld [vmem:[#allocation9 + $0x850] sm:$0xff]
    %v4689 = vld [vmem:[#allocation9 + $0x858] sm:$0xff]
    %v4690 = vld [vmem:[#allocation9 + $0x860] sm:$0xff]
    %v4691 = vld [vmem:[#allocation9 + $0x868] sm:$0xff]
    %v4692 = vld [vmem:[#allocation9 + $0x870] sm:$0xff]
    %v4693 = vld [vmem:[#allocation9 + $0x878] sm:$0xff]
    %v4694 = vld [vmem:[#allocation9 + $0x880] sm:$0xff]
    %v4695 = vld [vmem:[#allocation9 + $0x888] sm:$0xff]
    %v4696 = vld [vmem:[#allocation9 + $0x890] sm:$0xff]
    %v4697 = vld [vmem:[#allocation9 + $0x898] sm:$0xff]
    %v4698 = vld [vmem:[#allocation9 + $0x8a0] sm:$0xff]
    %v4699 = vld [vmem:[#allocation9 + $0x8a8] sm:$0xff]
    %v4700 = vld [vmem:[#allocation9 + $0x8b0] sm:$0xff]
    %v4701 = vld [vmem:[#allocation9 + $0x8b8] sm:$0xff]
    %v4702 = vld [vmem:[#allocation9 + $0x8c0] sm:$0xff]
    %v4703 = vld [vmem:[#allocation9 + $0x8c8] sm:$0xff]
    %v4704 = vld [vmem:[#allocation9 + $0x8d0] sm:$0xff]
    %v4705 = vld [vmem:[#allocation9 + $0x8d8] sm:$0xff]
    %v4706 = vld [vmem:[#allocation9 + $0x8e0] sm:$0xff]
    %v4707 = vld [vmem:[#allocation9 + $0x8e8] sm:$0xff]
    %v4708 = vld [vmem:[#allocation9 + $0x8f0] sm:$0xff]
    %v4709 = vld [vmem:[#allocation9 + $0x8f8] sm:$0xff]
    %v4710 = vld [vmem:[#allocation9 + $0x900] sm:$0xff]
    %v4711 = vld [vmem:[#allocation9 + $0x908] sm:$0xff]
    %v4712 = vld [vmem:[#allocation9 + $0x910] sm:$0xff]
    %v4713 = vld [vmem:[#allocation9 + $0x918] sm:$0xff]
    %v4714 = vld [vmem:[#allocation9 + $0x920] sm:$0xff]
    %v4715 = vld [vmem:[#allocation9 + $0x928] sm:$0xff]
    %v4716 = vld [vmem:[#allocation9 + $0x930] sm:$0xff]
    %v4717 = vld [vmem:[#allocation9 + $0x938] sm:$0xff]
    %v4718 = vld [vmem:[#allocation9 + $0x940] sm:$0xff]
    %v4719 = vld [vmem:[#allocation9 + $0x948] sm:$0xff]
    %v4720 = vld [vmem:[#allocation9 + $0x950] sm:$0xff]
    %v4721 = vld [vmem:[#allocation9 + $0x958] sm:$0xff]
    %v4722 = vld [vmem:[#allocation9 + $0x960] sm:$0xff]
    %v4723 = vld [vmem:[#allocation9 + $0x968] sm:$0xff]
    %v4724 = vld [vmem:[#allocation9 + $0x970] sm:$0xff]
    %v4725 = vld [vmem:[#allocation9 + $0x978] sm:$0xff]
    %v4726 = vld [vmem:[#allocation9 + $0x980] sm:$0xff]
    %v4727 = vld [vmem:[#allocation9 + $0x988] sm:$0xff]
    %v4728 = vld [vmem:[#allocation9 + $0x990] sm:$0xff]
    %v4729 = vld [vmem:[#allocation9 + $0x998] sm:$0xff]
    %v4730 = vld [vmem:[#allocation9 + $0x9a0] sm:$0xff]
    %v4731 = vld [vmem:[#allocation9 + $0x9a8] sm:$0xff]
    %v4732 = vld [vmem:[#allocation9 + $0x9b0] sm:$0xff]
    %v4733 = vld [vmem:[#allocation9 + $0x9b8] sm:$0xff]
    %v4734 = vld [vmem:[#allocation9 + $0x9c0] sm:$0xff]
    %v4735 = vld [vmem:[#allocation9 + $0x9c8] sm:$0xff]
    %v4736 = vld [vmem:[#allocation9 + $0x9d0] sm:$0xff]
    %v4737 = vld [vmem:[#allocation9 + $0x9d8] sm:$0xff]
    %v4738 = vld [vmem:[#allocation9 + $0x9e0] sm:$0xff]
    %v4739 = vld [vmem:[#allocation9 + $0x9e8] sm:$0xff]
    %v4740 = vld [vmem:[#allocation9 + $0x9f0] sm:$0xff]
    %v4741 = vld [vmem:[#allocation9 + $0x9f8] sm:$0xff]
    %v4742 = vld [vmem:[#allocation9 + $0xa00] sm:$0xff]
    %v4743 = vld [vmem:[#allocation9 + $0xa08] sm:$0xff]
    %v4744 = vld [vmem:[#allocation9 + $0xa10] sm:$0xff]
    %v4745 = vld [vmem:[#allocation9 + $0xa18] sm:$0xff]
    %v4746 = vld [vmem:[#allocation9 + $0xa20] sm:$0xff]
    %v4747 = vld [vmem:[#allocation9 + $0xa28] sm:$0xff]
    %v4748 = vld [vmem:[#allocation9 + $0xa30] sm:$0xff]
    %v4749 = vld [vmem:[#allocation9 + $0xa38] sm:$0xff]
    %v4750 = vld [vmem:[#allocation9 + $0xa40] sm:$0xff]
    %v4751 = vld [vmem:[#allocation9 + $0xa48] sm:$0xff]
    %v4752 = vld [vmem:[#allocation9 + $0xa50] sm:$0xff]
    %v4753 = vld [vmem:[#allocation9 + $0xa58] sm:$0xff]
    %v4754 = vld [vmem:[#allocation9 + $0xa60] sm:$0xff]
    %v4755 = vld [vmem:[#allocation9 + $0xa68] sm:$0xff]
    %v4756 = vld [vmem:[#allocation9 + $0xa70] sm:$0xff]
    %v4757 = vld [vmem:[#allocation9 + $0xa78] sm:$0xff]
    %v4758 = vld [vmem:[#allocation9 + $0xa80] sm:$0xff]
    %v4759 = vld [vmem:[#allocation9 + $0xa88] sm:$0xff]
    %v4760 = vld [vmem:[#allocation9 + $0xa90] sm:$0xff]
    %v4761 = vld [vmem:[#allocation9 + $0xa98] sm:$0xff]
    %v4762 = vld [vmem:[#allocation9 + $0xaa0] sm:$0xff]
    %v4763 = vld [vmem:[#allocation9 + $0xaa8] sm:$0xff]
    %v4764 = vld [vmem:[#allocation9 + $0xab0] sm:$0xff]
    %v4765 = vld [vmem:[#allocation9 + $0xab8] sm:$0xff]
    %v4766 = vld [vmem:[#allocation9 + $0xac0] sm:$0xff]
    %v4767 = vld [vmem:[#allocation9 + $0xac8] sm:$0xff]
    %v4768 = vld [vmem:[#allocation9 + $0xad0] sm:$0xff]
    %v4769 = vld [vmem:[#allocation9 + $0xad8] sm:$0xff]
    %v4770 = vld [vmem:[#allocation9 + $0xae0] sm:$0xff]
    %v4771 = vld [vmem:[#allocation9 + $0xae8] sm:$0xff]
    %v4772 = vld [vmem:[#allocation9 + $0xaf0] sm:$0xff]
    %v4773 = vld [vmem:[#allocation9 + $0xaf8] sm:$0xff]
    %v4774 = vld [vmem:[#allocation9 + $0xb00] sm:$0xff]
    %v4775 = vld [vmem:[#allocation9 + $0xb08] sm:$0xff]
    %v4776 = vld [vmem:[#allocation9 + $0xb10] sm:$0xff]
    %v4777 = vld [vmem:[#allocation9 + $0xb18] sm:$0xff]
    %v4778 = vld [vmem:[#allocation9 + $0xb20] sm:$0xff]
    %v4779 = vld [vmem:[#allocation9 + $0xb28] sm:$0xff]
    %v4780 = vld [vmem:[#allocation9 + $0xb30] sm:$0xff]
    %v4781 = vld [vmem:[#allocation9 + $0xb38] sm:$0xff]
    %v4782 = vld [vmem:[#allocation9 + $0xb40] sm:$0xff]
    %v4783 = vld [vmem:[#allocation9 + $0xb48] sm:$0xff]
    %v4784 = vld [vmem:[#allocation9 + $0xb50] sm:$0xff]
    %v4785 = vld [vmem:[#allocation9 + $0xb58] sm:$0xff]
    %v4786 = vld [vmem:[#allocation9 + $0xb60] sm:$0xff]
    %v4787 = vld [vmem:[#allocation9 + $0xb68] sm:$0xff]
    %v4788 = vld [vmem:[#allocation9 + $0xb70] sm:$0xff]
    %v4789 = vld [vmem:[#allocation9 + $0xb78] sm:$0xff]
    %v4790 = vld [vmem:[#allocation9 + $0xb80] sm:$0xff]
    %v4791 = vld [vmem:[#allocation9 + $0xb88] sm:$0xff]
    %v4792 = vld [vmem:[#allocation9 + $0xb90] sm:$0xff]
    %v4793 = vld [vmem:[#allocation9 + $0xb98] sm:$0xff]
    %v4794 = vld [vmem:[#allocation9 + $0xba0] sm:$0xff]
    %v4795 = vld [vmem:[#allocation9 + $0xba8] sm:$0xff]
    %v4796 = vld [vmem:[#allocation9 + $0xbb0] sm:$0xff]
    %v4797 = vld [vmem:[#allocation9 + $0xbb8] sm:$0xff]
    %v4798 = vld [vmem:[#allocation9 + $0xbc0] sm:$0xff]
    %v4799 = vld [vmem:[#allocation9 + $0xbc8] sm:$0xff]
    %v4800 = vld [vmem:[#allocation9 + $0xbd0] sm:$0xff]
    %v4801 = vld [vmem:[#allocation9 + $0xbd8] sm:$0xff]
    %v4802 = vld [vmem:[#allocation9 + $0xbe0] sm:$0xff]
    %v4803 = vld [vmem:[#allocation9 + $0xbe8] sm:$0xff]
    %v4804 = vld [vmem:[#allocation9 + $0xbf0] sm:$0xff]
    %v4805 = vld [vmem:[#allocation9 + $0xbf8] sm:$0xff]
    %v4806 = vld [vmem:[#allocation9 + $0xc00] sm:$0xff]
    %v4807 = vld [vmem:[#allocation9 + $0xc08] sm:$0xff]
    %v4808 = vld [vmem:[#allocation9 + $0xc10] sm:$0xff]
    %v4809 = vld [vmem:[#allocation9 + $0xc18] sm:$0xff]
    %v4810 = vld [vmem:[#allocation9 + $0xc20] sm:$0xff]
    %v4811 = vld [vmem:[#allocation9 + $0xc28] sm:$0xff]
    %v4812 = vld [vmem:[#allocation9 + $0xc30] sm:$0xff]
    %v4813 = vld [vmem:[#allocation9 + $0xc38] sm:$0xff]
    %v4814 = vld [vmem:[#allocation9 + $0xc40] sm:$0xff]
    %v4815 = vld [vmem:[#allocation9 + $0xc48] sm:$0xff]
    %v4816 = vld [vmem:[#allocation9 + $0xc50] sm:$0xff]
    %v4817 = vld [vmem:[#allocation9 + $0xc58] sm:$0xff]
    %v4818 = vld [vmem:[#allocation9 + $0xc60] sm:$0xff]
    %v4819 = vld [vmem:[#allocation9 + $0xc68] sm:$0xff]
    %v4820 = vld [vmem:[#allocation9 + $0xc70] sm:$0xff]
    %v4821 = vld [vmem:[#allocation9 + $0xc78] sm:$0xff]
    %v4822 = vld [vmem:[#allocation9 + $0xc80] sm:$0xff]
    %v4823 = vld [vmem:[#allocation9 + $0xc88] sm:$0xff]
    %v4824 = vld [vmem:[#allocation9 + $0xc90] sm:$0xff]
    %v4825 = vld [vmem:[#allocation9 + $0xc98] sm:$0xff]
    %v4826 = vld [vmem:[#allocation9 + $0xca0] sm:$0xff]
    %v4827 = vld [vmem:[#allocation9 + $0xca8] sm:$0xff]
    %v4828 = vld [vmem:[#allocation9 + $0xcb0] sm:$0xff]
    %v4829 = vld [vmem:[#allocation9 + $0xcb8] sm:$0xff]
    %v4830 = vld [vmem:[#allocation9 + $0xcc0] sm:$0xff]
    %v4831 = vld [vmem:[#allocation9 + $0xcc8] sm:$0xff]
    %v4832 = vld [vmem:[#allocation9 + $0xcd0] sm:$0xff]
    %v4833 = vld [vmem:[#allocation9 + $0xcd8] sm:$0xff]
    %v4834 = vld [vmem:[#allocation9 + $0xce0] sm:$0xff]
    %v4835 = vld [vmem:[#allocation9 + $0xce8] sm:$0xff]
    %v4836 = vld [vmem:[#allocation9 + $0xcf0] sm:$0xff]
    %v4837 = vld [vmem:[#allocation9 + $0xcf8] sm:$0xff]
    %v4838 = vld [vmem:[#allocation9 + $0xd00] sm:$0xff]
    %v4839 = vld [vmem:[#allocation9 + $0xd08] sm:$0xff]
    %v4840 = vld [vmem:[#allocation9 + $0xd10] sm:$0xff]
    %v4841 = vld [vmem:[#allocation9 + $0xd18] sm:$0xff]
    %v4842 = vld [vmem:[#allocation9 + $0xd20] sm:$0xff]
    %v4843 = vld [vmem:[#allocation9 + $0xd28] sm:$0xff]
    %v4844 = vld [vmem:[#allocation9 + $0xd30] sm:$0xff]
    %v4845 = vld [vmem:[#allocation9 + $0xd38] sm:$0xff]
    %v4846 = vld [vmem:[#allocation9 + $0xd40] sm:$0xff]
    %v4847 = vld [vmem:[#allocation9 + $0xd48] sm:$0xff]
    %v4848 = vld [vmem:[#allocation9 + $0xd50] sm:$0xff]
    %v4849 = vld [vmem:[#allocation9 + $0xd58] sm:$0xff]
    %v4850 = vld [vmem:[#allocation9 + $0xd60] sm:$0xff]
    %v4851 = vld [vmem:[#allocation9 + $0xd68] sm:$0xff]
    %v4852 = vld [vmem:[#allocation9 + $0xd70] sm:$0xff]
    %v4853 = vld [vmem:[#allocation9 + $0xd78] sm:$0xff]
    %v4854 = vld [vmem:[#allocation9 + $0xd80] sm:$0xff]
    %v4855 = vld [vmem:[#allocation9 + $0xd88] sm:$0xff]
    %v4856 = vld [vmem:[#allocation9 + $0xd90] sm:$0xff]
    %v4857 = vld [vmem:[#allocation9 + $0xd98] sm:$0xff]
    %v4858 = vld [vmem:[#allocation9 + $0xda0] sm:$0xff]
    %v4859 = vld [vmem:[#allocation9 + $0xda8] sm:$0xff]
    %v4860 = vld [vmem:[#allocation9 + $0xdb0] sm:$0xff]
    %v4861 = vld [vmem:[#allocation9 + $0xdb8] sm:$0xff]
    %v4862 = vld [vmem:[#allocation9 + $0xdc0] sm:$0xff]
    %v4863 = vld [vmem:[#allocation9 + $0xdc8] sm:$0xff]
    %v4864 = vld [vmem:[#allocation9 + $0xdd0] sm:$0xff]
    %v4865 = vld [vmem:[#allocation9 + $0xdd8] sm:$0xff]
    %v4866 = vld [vmem:[#allocation9 + $0xde0] sm:$0xff]
    %v4867 = vld [vmem:[#allocation9 + $0xde8] sm:$0xff]
    %v4868 = vld [vmem:[#allocation9 + $0xdf0] sm:$0xff]
    %v4869 = vld [vmem:[#allocation9 + $0xdf8] sm:$0xff]
    %v4870 = vld [vmem:[#allocation9 + $0xe00] sm:$0xff]
    %v4871 = vld [vmem:[#allocation9 + $0xe08] sm:$0xff]
    %v4872 = vld [vmem:[#allocation9 + $0xe10] sm:$0xff]
    %v4873 = vld [vmem:[#allocation9 + $0xe18] sm:$0xff]
    %v4874 = vld [vmem:[#allocation9 + $0xe20] sm:$0xff]
    %v4875 = vld [vmem:[#allocation9 + $0xe28] sm:$0xff]
    %v4876 = vld [vmem:[#allocation9 + $0xe30] sm:$0xff]
    %v4877 = vld [vmem:[#allocation9 + $0xe38] sm:$0xff]
    %v4878 = vld [vmem:[#allocation9 + $0xe40] sm:$0xff]
    %v4879 = vld [vmem:[#allocation9 + $0xe48] sm:$0xff]
    %v4880 = vld [vmem:[#allocation9 + $0xe50] sm:$0xff]
    %v4881 = vld [vmem:[#allocation9 + $0xe58] sm:$0xff]
    %v4882 = vld [vmem:[#allocation9 + $0xe60] sm:$0xff]
    %v4883 = vld [vmem:[#allocation9 + $0xe68] sm:$0xff]
    %v4884 = vld [vmem:[#allocation9 + $0xe70] sm:$0xff]
    %v4885 = vld [vmem:[#allocation9 + $0xe78] sm:$0xff]
    %v4886 = vld [vmem:[#allocation9 + $0xe80] sm:$0xff]
    %v4887 = vld [vmem:[#allocation9 + $0xe88] sm:$0xff]
    %v4888 = vld [vmem:[#allocation9 + $0xe90] sm:$0xff]
    %v4889 = vld [vmem:[#allocation9 + $0xe98] sm:$0xff]
    %v4890 = vld [vmem:[#allocation9 + $0xea0] sm:$0xff]
    %v4891 = vld [vmem:[#allocation9 + $0xea8] sm:$0xff]
    %v4892 = vld [vmem:[#allocation9 + $0xeb0] sm:$0xff]
    %v4893 = vld [vmem:[#allocation9 + $0xeb8] sm:$0xff]
    %v4894 = vld [vmem:[#allocation9 + $0xec0] sm:$0xff]
    %v4895 = vld [vmem:[#allocation9 + $0xec8] sm:$0xff]
    %v4896 = vld [vmem:[#allocation9 + $0xed0] sm:$0xff]
    %v4897 = vld [vmem:[#allocation9 + $0xed8] sm:$0xff]
    %v4898 = vld [vmem:[#allocation9 + $0xee0] sm:$0xff]
    %v4899 = vld [vmem:[#allocation9 + $0xee8] sm:$0xff]
    %v4900 = vld [vmem:[#allocation9 + $0xef0] sm:$0xff]
    %v4901 = vld [vmem:[#allocation9 + $0xef8] sm:$0xff]
    %v4902 = vld [vmem:[#allocation9 + $0xf00] sm:$0xff]
    %v4903 = vld [vmem:[#allocation9 + $0xf08] sm:$0xff]
    %v4904 = vld [vmem:[#allocation9 + $0xf10] sm:$0xff]
    %v4905 = vld [vmem:[#allocation9 + $0xf18] sm:$0xff]
    %v4906 = vld [vmem:[#allocation9 + $0xf20] sm:$0xff]
    %v4907 = vld [vmem:[#allocation9 + $0xf28] sm:$0xff]
    %v4908 = vld [vmem:[#allocation9 + $0xf30] sm:$0xff]
    %v4909 = vld [vmem:[#allocation9 + $0xf38] sm:$0xff]
    %v4910 = vld [vmem:[#allocation9 + $0xf40] sm:$0xff]
    %v4911 = vld [vmem:[#allocation9 + $0xf48] sm:$0xff]
    %v4912 = vld [vmem:[#allocation9 + $0xf50] sm:$0xff]
    %v4913 = vld [vmem:[#allocation9 + $0xf58] sm:$0xff]
    %v4914 = vld [vmem:[#allocation9 + $0xf60] sm:$0xff]
    %v4915 = vld [vmem:[#allocation9 + $0xf68] sm:$0xff]
    %v4916 = vld [vmem:[#allocation9 + $0xf70] sm:$0xff]
    %v4917 = vld [vmem:[#allocation9 + $0xf78] sm:$0xff]
    %v4918 = vld [vmem:[#allocation9 + $0xf80] sm:$0xff]
    %v4919 = vld [vmem:[#allocation9 + $0xf88] sm:$0xff]
    %v4920 = vld [vmem:[#allocation9 + $0xf90] sm:$0xff]
    %v4921 = vld [vmem:[#allocation9 + $0xf98] sm:$0xff]
    %v4922 = vld [vmem:[#allocation9 + $0xfa0] sm:$0xff]
    %v4923 = vld [vmem:[#allocation9 + $0xfa8] sm:$0xff]
    %v4924 = vld [vmem:[#allocation9 + $0xfb0] sm:$0xff]
    %v4925 = vld [vmem:[#allocation9 + $0xfb8] sm:$0xff]
    %v4926 = vld [vmem:[#allocation9 + $0xfc0] sm:$0xff]
    %v4927 = vld [vmem:[#allocation9 + $0xfc8] sm:$0xff]
    %v4928 = vld [vmem:[#allocation9 + $0xfd0] sm:$0xff]
    %v4929 = vld [vmem:[#allocation9 + $0xfd8] sm:$0xff]
    %v4930 = vld [vmem:[#allocation9 + $0xfe0] sm:$0xff]
    %v4931 = vld [vmem:[#allocation9 + $0xfe8] sm:$0xff]
    %v4932 = vld [vmem:[#allocation9 + $0xff0] sm:$0xff]
    %v4933 = vld [vmem:[#allocation9 + $0xff8] sm:$0xff]
    %v4934 = vld [vmem:[#allocation9 + $0x1000] sm:$0xff]
    %v4935 = vld [vmem:[#allocation9 + $0x1008] sm:$0xff]
    %v4936 = vld [vmem:[#allocation9 + $0x1010] sm:$0xff]
    %v4937 = vld [vmem:[#allocation9 + $0x1018] sm:$0xff]
    %v4938 = vld [vmem:[#allocation9 + $0x1020] sm:$0xff]
    %v4939 = vld [vmem:[#allocation9 + $0x1028] sm:$0xff]
    %v4940 = vld [vmem:[#allocation9 + $0x1030] sm:$0xff]
    %v4941 = vld [vmem:[#allocation9 + $0x1038] sm:$0xff]
    %v4942 = vld [vmem:[#allocation9 + $0x1040] sm:$0xff]
    %v4943 = vld [vmem:[#allocation9 + $0x1048] sm:$0xff]
    %v4944 = vld [vmem:[#allocation9 + $0x1050] sm:$0xff]
    %v4945 = vld [vmem:[#allocation9 + $0x1058] sm:$0xff]
    %v4946 = vld [vmem:[#allocation9 + $0x1060] sm:$0xff]
    %v4947 = vld [vmem:[#allocation9 + $0x1068] sm:$0xff]
    %v4948 = vld [vmem:[#allocation9 + $0x1070] sm:$0xff]
    %v4949 = vld [vmem:[#allocation9 + $0x1078] sm:$0xff]
    %v4950 = vld [vmem:[#allocation9 + $0x1080] sm:$0xff]
    %v4951 = vld [vmem:[#allocation9 + $0x1088] sm:$0xff]
    %v4952 = vld [vmem:[#allocation9 + $0x1090] sm:$0xff]
    %v4953 = vld [vmem:[#allocation9 + $0x1098] sm:$0xff]
    %v4954 = vld [vmem:[#allocation9 + $0x10a0] sm:$0xff]
    %v4955 = vld [vmem:[#allocation9 + $0x10a8] sm:$0xff]
    %v4956 = vld [vmem:[#allocation9 + $0x10b0] sm:$0xff]
    %v4957 = vld [vmem:[#allocation9 + $0x10b8] sm:$0xff]
    %v4958 = vld [vmem:[#allocation9 + $0x10c0] sm:$0xff]
    %v4959 = vld [vmem:[#allocation9 + $0x10c8] sm:$0xff]
    %v4960 = vld [vmem:[#allocation9 + $0x10d0] sm:$0xff]
    %v4961 = vld [vmem:[#allocation9 + $0x10d8] sm:$0xff]
    %v4962 = vld [vmem:[#allocation9 + $0x10e0] sm:$0xff]
    %v4963 = vld [vmem:[#allocation9 + $0x10e8] sm:$0xff]
    %v4964 = vld [vmem:[#allocation9 + $0x10f0] sm:$0xff]
    %v4965 = vld [vmem:[#allocation9 + $0x10f8] sm:$0xff]
    %v4966 = vld [vmem:[#allocation9 + $0x1100] sm:$0xff]
    %v4967 = vld [vmem:[#allocation9 + $0x1108] sm:$0xff]
    %v4968 = vld [vmem:[#allocation9 + $0x1110] sm:$0xff]
    %v4969 = vld [vmem:[#allocation9 + $0x1118] sm:$0xff]
    %v4970 = vld [vmem:[#allocation9 + $0x1120] sm:$0xff]
    %v4971 = vld [vmem:[#allocation9 + $0x1128] sm:$0xff]
    %v4972 = vld [vmem:[#allocation9 + $0x1130] sm:$0xff]
    %v4973 = vld [vmem:[#allocation9 + $0x1138] sm:$0xff]
    %v4974 = vld [vmem:[#allocation9 + $0x1140] sm:$0xff]
    %v4975 = vld [vmem:[#allocation9 + $0x1148] sm:$0xff]
    %v4976 = vld [vmem:[#allocation9 + $0x1150] sm:$0xff]
    %v4977 = vld [vmem:[#allocation9 + $0x1158] sm:$0xff]
    %v4978 = vld [vmem:[#allocation9 + $0x1160] sm:$0xff]
    %v4979 = vld [vmem:[#allocation9 + $0x1168] sm:$0xff]
    %v4980 = vld [vmem:[#allocation9 + $0x1170] sm:$0xff]
    %v4981 = vld [vmem:[#allocation9 + $0x1178] sm:$0xff]
    %v4982 = vld [vmem:[#allocation9 + $0x1180] sm:$0xff]
    %v4983 = vld [vmem:[#allocation9 + $0x1188] sm:$0xff]
    %v4984 = vld [vmem:[#allocation9 + $0x1190] sm:$0xff]
    %v4985 = vld [vmem:[#allocation9 + $0x1198] sm:$0xff]
    %v4986 = vld [vmem:[#allocation9 + $0x11a0] sm:$0xff]
    %v4987 = vld [vmem:[#allocation9 + $0x11a8] sm:$0xff]
    %v4988 = vld [vmem:[#allocation9 + $0x11b0] sm:$0xff]
    %v4989 = vld [vmem:[#allocation9 + $0x11b8] sm:$0xff]
    %v4990 = vld [vmem:[#allocation9 + $0x11c0] sm:$0xff]
    %v4991 = vld [vmem:[#allocation9 + $0x11c8] sm:$0xff]
    %v4992 = vld [vmem:[#allocation9 + $0x11d0] sm:$0xff]
    %v4993 = vld [vmem:[#allocation9 + $0x11d8] sm:$0xff]
    %v4994 = vld [vmem:[#allocation9 + $0x11e0] sm:$0xff]
    %v4995 = vld [vmem:[#allocation9 + $0x11e8] sm:$0xff]
    %v4996 = vld [vmem:[#allocation9 + $0x11f0] sm:$0xff]
    %v4997 = vld [vmem:[#allocation9 + $0x11f8] sm:$0xff]
    %v5574 = vunpack.c.l.b16 %v4422
    %v5575 = vunpack.c.h.b16 %v4422
    %v5576 = vunpack.c.l.b16 %v4423
    %v5577 = vunpack.c.h.b16 %v4423
    %v5578 = vunpack.c.l.b16 %v4424
    %v5579 = vunpack.c.h.b16 %v4424
    %v5580 = vunpack.c.l.b16 %v4425
    %v5581 = vunpack.c.h.b16 %v4425
    %v5582 = vunpack.c.l.b16 %v4426
    %v5583 = vunpack.c.h.b16 %v4426
    %v5584 = vunpack.c.l.b16 %v4427
    %v5585 = vunpack.c.h.b16 %v4427
    %v5586 = vunpack.c.l.b16 %v4428
    %v5587 = vunpack.c.h.b16 %v4428
    %v5588 = vunpack.c.l.b16 %v4429
    %v5589 = vunpack.c.h.b16 %v4429
    %v5590 = vunpack.c.l.b16 %v4430
    %v5591 = vunpack.c.h.b16 %v4430
    %v5592 = vunpack.c.l.b16 %v4431
    %v5593 = vunpack.c.h.b16 %v4431
    %v5594 = vunpack.c.l.b16 %v4432
    %v5595 = vunpack.c.h.b16 %v4432
    %v5596 = vunpack.c.l.b16 %v4433
    %v5597 = vunpack.c.h.b16 %v4433
    %v5598 = vunpack.c.l.b16 %v4434
    %v5599 = vunpack.c.h.b16 %v4434
    %v5600 = vunpack.c.l.b16 %v4435
    %v5601 = vunpack.c.h.b16 %v4435
    %v5602 = vunpack.c.l.b16 %v4436
    %v5603 = vunpack.c.h.b16 %v4436
    %v5604 = vunpack.c.l.b16 %v4437
    %v5605 = vunpack.c.h.b16 %v4437
    %v5606 = vunpack.c.l.b16 %v4438
    %v5607 = vunpack.c.h.b16 %v4438
    %v5608 = vunpack.c.l.b16 %v4439
    %v5609 = vunpack.c.h.b16 %v4439
    %v5610 = vunpack.c.l.b16 %v4440
    %v5611 = vunpack.c.h.b16 %v4440
    %v5612 = vunpack.c.l.b16 %v4441
    %v5613 = vunpack.c.h.b16 %v4441
    %v5614 = vunpack.c.l.b16 %v4442
    %v5615 = vunpack.c.h.b16 %v4442
    %v5616 = vunpack.c.l.b16 %v4443
    %v5617 = vunpack.c.h.b16 %v4443
    %v5618 = vunpack.c.l.b16 %v4444
    %v5619 = vunpack.c.h.b16 %v4444
    %v5620 = vunpack.c.l.b16 %v4445
    %v5621 = vunpack.c.h.b16 %v4445
    %v5622 = vunpack.c.l.b16 %v4446
    %v5623 = vunpack.c.h.b16 %v4446
    %v5624 = vunpack.c.l.b16 %v4447
    %v5625 = vunpack.c.h.b16 %v4447
    %v5626 = vunpack.c.l.b16 %v4448
    %v5627 = vunpack.c.h.b16 %v4448
    %v5628 = vunpack.c.l.b16 %v4449
    %v5629 = vunpack.c.h.b16 %v4449
    %v5630 = vunpack.c.l.b16 %v4450
    %v5631 = vunpack.c.h.b16 %v4450
    %v5632 = vunpack.c.l.b16 %v4451
    %v5633 = vunpack.c.h.b16 %v4451
    %v5634 = vunpack.c.l.b16 %v4452
    %v5635 = vunpack.c.h.b16 %v4452
    %v5636 = vunpack.c.l.b16 %v4453
    %v5637 = vunpack.c.h.b16 %v4453
    %v5638 = vunpack.c.l.b16 %v4454
    %v5639 = vunpack.c.h.b16 %v4454
    %v5640 = vunpack.c.l.b16 %v4455
    %v5641 = vunpack.c.h.b16 %v4455
    %v5642 = vunpack.c.l.b16 %v4456
    %v5643 = vunpack.c.h.b16 %v4456
    %v5644 = vunpack.c.l.b16 %v4457
    %v5645 = vunpack.c.h.b16 %v4457
    %v5646 = vunpack.c.l.b16 %v4458
    %v5647 = vunpack.c.h.b16 %v4458
    %v5648 = vunpack.c.l.b16 %v4459
    %v5649 = vunpack.c.h.b16 %v4459
    %v5650 = vunpack.c.l.b16 %v4460
    %v5651 = vunpack.c.h.b16 %v4460
    %v5652 = vunpack.c.l.b16 %v4461
    %v5653 = vunpack.c.h.b16 %v4461
    %v5654 = vunpack.c.l.b16 %v4462
    %v5655 = vunpack.c.h.b16 %v4462
    %v5656 = vunpack.c.l.b16 %v4463
    %v5657 = vunpack.c.h.b16 %v4463
    %v5658 = vunpack.c.l.b16 %v4464
    %v5659 = vunpack.c.h.b16 %v4464
    %v5660 = vunpack.c.l.b16 %v4465
    %v5661 = vunpack.c.h.b16 %v4465
    %v5662 = vunpack.c.l.b16 %v4466
    %v5663 = vunpack.c.h.b16 %v4466
    %v5664 = vunpack.c.l.b16 %v4467
    %v5665 = vunpack.c.h.b16 %v4467
    %v5666 = vunpack.c.l.b16 %v4468
    %v5667 = vunpack.c.h.b16 %v4468
    %v5668 = vunpack.c.l.b16 %v4469
    %v5669 = vunpack.c.h.b16 %v4469
    %v5670 = vunpack.c.l.b16 %v4470
    %v5671 = vunpack.c.h.b16 %v4470
    %v5672 = vunpack.c.l.b16 %v4471
    %v5673 = vunpack.c.h.b16 %v4471
    %v5674 = vunpack.c.l.b16 %v4472
    %v5675 = vunpack.c.h.b16 %v4472
    %v5676 = vunpack.c.l.b16 %v4473
    %v5677 = vunpack.c.h.b16 %v4473
    %v5678 = vunpack.c.l.b16 %v4474
    %v5679 = vunpack.c.h.b16 %v4474
    %v5680 = vunpack.c.l.b16 %v4475
    %v5681 = vunpack.c.h.b16 %v4475
    %v5682 = vunpack.c.l.b16 %v4476
    %v5683 = vunpack.c.h.b16 %v4476
    %v5684 = vunpack.c.l.b16 %v4477
    %v5685 = vunpack.c.h.b16 %v4477
    %v5686 = vunpack.c.l.b16 %v4478
    %v5687 = vunpack.c.h.b16 %v4478
    %v5688 = vunpack.c.l.b16 %v4479
    %v5689 = vunpack.c.h.b16 %v4479
    %v5690 = vunpack.c.l.b16 %v4480
    %v5691 = vunpack.c.h.b16 %v4480
    %v5692 = vunpack.c.l.b16 %v4481
    %v5693 = vunpack.c.h.b16 %v4481
    %v5694 = vunpack.c.l.b16 %v4482
    %v5695 = vunpack.c.h.b16 %v4482
    %v5696 = vunpack.c.l.b16 %v4483
    %v5697 = vunpack.c.h.b16 %v4483
    %v5698 = vunpack.c.l.b16 %v4484
    %v5699 = vunpack.c.h.b16 %v4484
    %v5700 = vunpack.c.l.b16 %v4485
    %v5701 = vunpack.c.h.b16 %v4485
    %v5702 = vunpack.c.l.b16 %v4486
    %v5703 = vunpack.c.h.b16 %v4486
    %v5704 = vunpack.c.l.b16 %v4487
    %v5705 = vunpack.c.h.b16 %v4487
    %v5706 = vunpack.c.l.b16 %v4488
    %v5707 = vunpack.c.h.b16 %v4488
    %v5708 = vunpack.c.l.b16 %v4489
    %v5709 = vunpack.c.h.b16 %v4489
    %v5710 = vunpack.c.l.b16 %v4490
    %v5711 = vunpack.c.h.b16 %v4490
    %v5712 = vunpack.c.l.b16 %v4491
    %v5713 = vunpack.c.h.b16 %v4491
    %v5714 = vunpack.c.l.b16 %v4492
    %v5715 = vunpack.c.h.b16 %v4492
    %v5716 = vunpack.c.l.b16 %v4493
    %v5717 = vunpack.c.h.b16 %v4493
    %v5718 = vunpack.c.l.b16 %v4494
    %v5719 = vunpack.c.h.b16 %v4494
    %v5720 = vunpack.c.l.b16 %v4495
    %v5721 = vunpack.c.h.b16 %v4495
    %v5722 = vunpack.c.l.b16 %v4496
    %v5723 = vunpack.c.h.b16 %v4496
    %v5724 = vunpack.c.l.b16 %v4497
    %v5725 = vunpack.c.h.b16 %v4497
    %v5726 = vunpack.c.l.b16 %v4498
    %v5727 = vunpack.c.h.b16 %v4498
    %v5728 = vunpack.c.l.b16 %v4499
    %v5729 = vunpack.c.h.b16 %v4499
    %v5730 = vunpack.c.l.b16 %v4500
    %v5731 = vunpack.c.h.b16 %v4500
    %v5732 = vunpack.c.l.b16 %v4501
    %v5733 = vunpack.c.h.b16 %v4501
    %v5734 = vunpack.c.l.b16 %v4502
    %v5735 = vunpack.c.h.b16 %v4502
    %v5736 = vunpack.c.l.b16 %v4503
    %v5737 = vunpack.c.h.b16 %v4503
    %v5738 = vunpack.c.l.b16 %v4504
    %v5739 = vunpack.c.h.b16 %v4504
    %v5740 = vunpack.c.l.b16 %v4505
    %v5741 = vunpack.c.h.b16 %v4505
    %v5742 = vunpack.c.l.b16 %v4506
    %v5743 = vunpack.c.h.b16 %v4506
    %v5744 = vunpack.c.l.b16 %v4507
    %v5745 = vunpack.c.h.b16 %v4507
    %v5746 = vunpack.c.l.b16 %v4508
    %v5747 = vunpack.c.h.b16 %v4508
    %v5748 = vunpack.c.l.b16 %v4509
    %v5749 = vunpack.c.h.b16 %v4509
    %v5750 = vunpack.c.l.b16 %v4510
    %v5751 = vunpack.c.h.b16 %v4510
    %v5752 = vunpack.c.l.b16 %v4511
    %v5753 = vunpack.c.h.b16 %v4511
    %v5754 = vunpack.c.l.b16 %v4512
    %v5755 = vunpack.c.h.b16 %v4512
    %v5756 = vunpack.c.l.b16 %v4513
    %v5757 = vunpack.c.h.b16 %v4513
    %v5758 = vunpack.c.l.b16 %v4514
    %v5759 = vunpack.c.h.b16 %v4514
    %v5760 = vunpack.c.l.b16 %v4515
    %v5761 = vunpack.c.h.b16 %v4515
    %v5762 = vunpack.c.l.b16 %v4516
    %v5763 = vunpack.c.h.b16 %v4516
    %v5764 = vunpack.c.l.b16 %v4517
    %v5765 = vunpack.c.h.b16 %v4517
    %v5766 = vunpack.c.l.b16 %v4518
    %v5767 = vunpack.c.h.b16 %v4518
    %v5768 = vunpack.c.l.b16 %v4519
    %v5769 = vunpack.c.h.b16 %v4519
    %v5770 = vunpack.c.l.b16 %v4520
    %v5771 = vunpack.c.h.b16 %v4520
    %v5772 = vunpack.c.l.b16 %v4521
    %v5773 = vunpack.c.h.b16 %v4521
    %v5774 = vunpack.c.l.b16 %v4522
    %v5775 = vunpack.c.h.b16 %v4522
    %v5776 = vunpack.c.l.b16 %v4523
    %v5777 = vunpack.c.h.b16 %v4523
    %v5778 = vunpack.c.l.b16 %v4524
    %v5779 = vunpack.c.h.b16 %v4524
    %v5780 = vunpack.c.l.b16 %v4525
    %v5781 = vunpack.c.h.b16 %v4525
    %v5782 = vunpack.c.l.b16 %v4526
    %v5783 = vunpack.c.h.b16 %v4526
    %v5784 = vunpack.c.l.b16 %v4527
    %v5785 = vunpack.c.h.b16 %v4527
    %v5786 = vunpack.c.l.b16 %v4528
    %v5787 = vunpack.c.h.b16 %v4528
    %v5788 = vunpack.c.l.b16 %v4529
    %v5789 = vunpack.c.h.b16 %v4529
    %v5790 = vunpack.c.l.b16 %v4530
    %v5791 = vunpack.c.h.b16 %v4530
    %v5792 = vunpack.c.l.b16 %v4531
    %v5793 = vunpack.c.h.b16 %v4531
    %v5794 = vunpack.c.l.b16 %v4532
    %v5795 = vunpack.c.h.b16 %v4532
    %v5796 = vunpack.c.l.b16 %v4533
    %v5797 = vunpack.c.h.b16 %v4533
    %v5798 = vunpack.c.l.b16 %v4534
    %v5799 = vunpack.c.h.b16 %v4534
    %v5800 = vunpack.c.l.b16 %v4535
    %v5801 = vunpack.c.h.b16 %v4535
    %v5802 = vunpack.c.l.b16 %v4536
    %v5803 = vunpack.c.h.b16 %v4536
    %v5804 = vunpack.c.l.b16 %v4537
    %v5805 = vunpack.c.h.b16 %v4537
    %v5806 = vunpack.c.l.b16 %v4538
    %v5807 = vunpack.c.h.b16 %v4538
    %v5808 = vunpack.c.l.b16 %v4539
    %v5809 = vunpack.c.h.b16 %v4539
    %v5810 = vunpack.c.l.b16 %v4540
    %v5811 = vunpack.c.h.b16 %v4540
    %v5812 = vunpack.c.l.b16 %v4541
    %v5813 = vunpack.c.h.b16 %v4541
    %v5814 = vunpack.c.l.b16 %v4542
    %v5815 = vunpack.c.h.b16 %v4542
    %v5816 = vunpack.c.l.b16 %v4543
    %v5817 = vunpack.c.h.b16 %v4543
    %v5818 = vunpack.c.l.b16 %v4544
    %v5819 = vunpack.c.h.b16 %v4544
    %v5820 = vunpack.c.l.b16 %v4545
    %v5821 = vunpack.c.h.b16 %v4545
    %v5822 = vunpack.c.l.b16 %v4546
    %v5823 = vunpack.c.h.b16 %v4546
    %v5824 = vunpack.c.l.b16 %v4547
    %v5825 = vunpack.c.h.b16 %v4547
    %v5826 = vunpack.c.l.b16 %v4548
    %v5827 = vunpack.c.h.b16 %v4548
    %v5828 = vunpack.c.l.b16 %v4549
    %v5829 = vunpack.c.h.b16 %v4549
    %v5830 = vunpack.c.l.b16 %v4550
    %v5831 = vunpack.c.h.b16 %v4550
    %v5832 = vunpack.c.l.b16 %v4551
    %v5833 = vunpack.c.h.b16 %v4551
    %v5834 = vunpack.c.l.b16 %v4552
    %v5835 = vunpack.c.h.b16 %v4552
    %v5836 = vunpack.c.l.b16 %v4553
    %v5837 = vunpack.c.h.b16 %v4553
    %v5838 = vunpack.c.l.b16 %v4554
    %v5839 = vunpack.c.h.b16 %v4554
    %v5840 = vunpack.c.l.b16 %v4555
    %v5841 = vunpack.c.h.b16 %v4555
    %v5842 = vunpack.c.l.b16 %v4556
    %v5843 = vunpack.c.h.b16 %v4556
    %v5844 = vunpack.c.l.b16 %v4557
    %v5845 = vunpack.c.h.b16 %v4557
    %v5846 = vunpack.c.l.b16 %v4558
    %v5847 = vunpack.c.h.b16 %v4558
    %v5848 = vunpack.c.l.b16 %v4559
    %v5849 = vunpack.c.h.b16 %v4559
    %v5850 = vunpack.c.l.b16 %v4560
    %v5851 = vunpack.c.h.b16 %v4560
    %v5852 = vunpack.c.l.b16 %v4561
    %v5853 = vunpack.c.h.b16 %v4561
    %v5854 = vunpack.c.l.b16 %v4562
    %v5855 = vunpack.c.h.b16 %v4562
    %v5856 = vunpack.c.l.b16 %v4563
    %v5857 = vunpack.c.h.b16 %v4563
    %v5858 = vunpack.c.l.b16 %v4564
    %v5859 = vunpack.c.h.b16 %v4564
    %v5860 = vunpack.c.l.b16 %v4565
    %v5861 = vunpack.c.h.b16 %v4565
    %v5862 = vunpack.c.l.b16 %v4566
    %v5863 = vunpack.c.h.b16 %v4566
    %v5864 = vunpack.c.l.b16 %v4567
    %v5865 = vunpack.c.h.b16 %v4567
    %v5866 = vunpack.c.l.b16 %v4568
    %v5867 = vunpack.c.h.b16 %v4568
    %v5868 = vunpack.c.l.b16 %v4569
    %v5869 = vunpack.c.h.b16 %v4569
    %v5870 = vunpack.c.l.b16 %v4570
    %v5871 = vunpack.c.h.b16 %v4570
    %v5872 = vunpack.c.l.b16 %v4571
    %v5873 = vunpack.c.h.b16 %v4571
    %v5874 = vunpack.c.l.b16 %v4572
    %v5875 = vunpack.c.h.b16 %v4572
    %v5876 = vunpack.c.l.b16 %v4573
    %v5877 = vunpack.c.h.b16 %v4573
    %v5878 = vunpack.c.l.b16 %v4574
    %v5879 = vunpack.c.h.b16 %v4574
    %v5880 = vunpack.c.l.b16 %v4575
    %v5881 = vunpack.c.h.b16 %v4575
    %v5882 = vunpack.c.l.b16 %v4576
    %v5883 = vunpack.c.h.b16 %v4576
    %v5884 = vunpack.c.l.b16 %v4577
    %v5885 = vunpack.c.h.b16 %v4577
    %v5886 = vunpack.c.l.b16 %v4578
    %v5887 = vunpack.c.h.b16 %v4578
    %v5888 = vunpack.c.l.b16 %v4579
    %v5889 = vunpack.c.h.b16 %v4579
    %v5890 = vunpack.c.l.b16 %v4580
    %v5891 = vunpack.c.h.b16 %v4580
    %v5892 = vunpack.c.l.b16 %v4581
    %v5893 = vunpack.c.h.b16 %v4581
    %v5894 = vunpack.c.l.b16 %v4582
    %v5895 = vunpack.c.h.b16 %v4582
    %v5896 = vunpack.c.l.b16 %v4583
    %v5897 = vunpack.c.h.b16 %v4583
    %v5898 = vunpack.c.l.b16 %v4584
    %v5899 = vunpack.c.h.b16 %v4584
    %v5900 = vunpack.c.l.b16 %v4585
    %v5901 = vunpack.c.h.b16 %v4585
    %v5902 = vunpack.c.l.b16 %v4586
    %v5903 = vunpack.c.h.b16 %v4586
    %v5904 = vunpack.c.l.b16 %v4587
    %v5905 = vunpack.c.h.b16 %v4587
    %v5906 = vunpack.c.l.b16 %v4588
    %v5907 = vunpack.c.h.b16 %v4588
    %v5908 = vunpack.c.l.b16 %v4589
    %v5909 = vunpack.c.h.b16 %v4589
    %v5910 = vunpack.c.l.b16 %v4590
    %v5911 = vunpack.c.h.b16 %v4590
    %v5912 = vunpack.c.l.b16 %v4591
    %v5913 = vunpack.c.h.b16 %v4591
    %v5914 = vunpack.c.l.b16 %v4592
    %v5915 = vunpack.c.h.b16 %v4592
    %v5916 = vunpack.c.l.b16 %v4593
    %v5917 = vunpack.c.h.b16 %v4593
    %v5918 = vunpack.c.l.b16 %v4594
    %v5919 = vunpack.c.h.b16 %v4594
    %v5920 = vunpack.c.l.b16 %v4595
    %v5921 = vunpack.c.h.b16 %v4595
    %v5922 = vunpack.c.l.b16 %v4596
    %v5923 = vunpack.c.h.b16 %v4596
    %v5924 = vunpack.c.l.b16 %v4597
    %v5925 = vunpack.c.h.b16 %v4597
    %v5926 = vunpack.c.l.b16 %v4598
    %v5927 = vunpack.c.h.b16 %v4598
    %v5928 = vunpack.c.l.b16 %v4599
    %v5929 = vunpack.c.h.b16 %v4599
    %v5930 = vunpack.c.l.b16 %v4600
    %v5931 = vunpack.c.h.b16 %v4600
    %v5932 = vunpack.c.l.b16 %v4601
    %v5933 = vunpack.c.h.b16 %v4601
    %v5934 = vunpack.c.l.b16 %v4602
    %v5935 = vunpack.c.h.b16 %v4602
    %v5936 = vunpack.c.l.b16 %v4603
    %v5937 = vunpack.c.h.b16 %v4603
    %v5938 = vunpack.c.l.b16 %v4604
    %v5939 = vunpack.c.h.b16 %v4604
    %v5940 = vunpack.c.l.b16 %v4605
    %v5941 = vunpack.c.h.b16 %v4605
    %v5942 = vunpack.c.l.b16 %v4606
    %v5943 = vunpack.c.h.b16 %v4606
    %v5944 = vunpack.c.l.b16 %v4607
    %v5945 = vunpack.c.h.b16 %v4607
    %v5946 = vunpack.c.l.b16 %v4608
    %v5947 = vunpack.c.h.b16 %v4608
    %v5948 = vunpack.c.l.b16 %v4609
    %v5949 = vunpack.c.h.b16 %v4609
    %v5950 = vunpack.c.l.b16 %v4610
    %v5951 = vunpack.c.h.b16 %v4610
    %v5952 = vunpack.c.l.b16 %v4611
    %v5953 = vunpack.c.h.b16 %v4611
    %v5954 = vunpack.c.l.b16 %v4612
    %v5955 = vunpack.c.h.b16 %v4612
    %v5956 = vunpack.c.l.b16 %v4613
    %v5957 = vunpack.c.h.b16 %v4613
    %v5958 = vunpack.c.l.b16 %v4614
    %v5959 = vunpack.c.h.b16 %v4614
    %v5960 = vunpack.c.l.b16 %v4615
    %v5961 = vunpack.c.h.b16 %v4615
    %v5962 = vunpack.c.l.b16 %v4616
    %v5963 = vunpack.c.h.b16 %v4616
    %v5964 = vunpack.c.l.b16 %v4617
    %v5965 = vunpack.c.h.b16 %v4617
    %v5966 = vunpack.c.l.b16 %v4618
    %v5967 = vunpack.c.h.b16 %v4618
    %v5968 = vunpack.c.l.b16 %v4619
    %v5969 = vunpack.c.h.b16 %v4619
    %v5970 = vunpack.c.l.b16 %v4620
    %v5971 = vunpack.c.h.b16 %v4620
    %v5972 = vunpack.c.l.b16 %v4621
    %v5973 = vunpack.c.h.b16 %v4621
    %v5974 = vunpack.c.l.b16 %v4622
    %v5975 = vunpack.c.h.b16 %v4622
    %v5976 = vunpack.c.l.b16 %v4623
    %v5977 = vunpack.c.h.b16 %v4623
    %v5978 = vunpack.c.l.b16 %v4624
    %v5979 = vunpack.c.h.b16 %v4624
    %v5980 = vunpack.c.l.b16 %v4625
    %v5981 = vunpack.c.h.b16 %v4625
    %v5982 = vunpack.c.l.b16 %v4626
    %v5983 = vunpack.c.h.b16 %v4626
    %v5984 = vunpack.c.l.b16 %v4627
    %v5985 = vunpack.c.h.b16 %v4627
    %v5986 = vunpack.c.l.b16 %v4628
    %v5987 = vunpack.c.h.b16 %v4628
    %v5988 = vunpack.c.l.b16 %v4629
    %v5989 = vunpack.c.h.b16 %v4629
    %v5990 = vunpack.c.l.b16 %v4630
    %v5991 = vunpack.c.h.b16 %v4630
    %v5992 = vunpack.c.l.b16 %v4631
    %v5993 = vunpack.c.h.b16 %v4631
    %v5994 = vunpack.c.l.b16 %v4632
    %v5995 = vunpack.c.h.b16 %v4632
    %v5996 = vunpack.c.l.b16 %v4633
    %v5997 = vunpack.c.h.b16 %v4633
    %v5998 = vunpack.c.l.b16 %v4634
    %v5999 = vunpack.c.h.b16 %v4634
    %v6000 = vunpack.c.l.b16 %v4635
    %v6001 = vunpack.c.h.b16 %v4635
    %v6002 = vunpack.c.l.b16 %v4636
    %v6003 = vunpack.c.h.b16 %v4636
    %v6004 = vunpack.c.l.b16 %v4637
    %v6005 = vunpack.c.h.b16 %v4637
    %v6006 = vunpack.c.l.b16 %v4638
    %v6007 = vunpack.c.h.b16 %v4638
    %v6008 = vunpack.c.l.b16 %v4639
    %v6009 = vunpack.c.h.b16 %v4639
    %v6010 = vunpack.c.l.b16 %v4640
    %v6011 = vunpack.c.h.b16 %v4640
    %v6012 = vunpack.c.l.b16 %v4641
    %v6013 = vunpack.c.h.b16 %v4641
    %v6014 = vunpack.c.l.b16 %v4642
    %v6015 = vunpack.c.h.b16 %v4642
    %v6016 = vunpack.c.l.b16 %v4643
    %v6017 = vunpack.c.h.b16 %v4643
    %v6018 = vunpack.c.l.b16 %v4644
    %v6019 = vunpack.c.h.b16 %v4644
    %v6020 = vunpack.c.l.b16 %v4645
    %v6021 = vunpack.c.h.b16 %v4645
    %v6022 = vunpack.c.l.b16 %v4646
    %v6023 = vunpack.c.h.b16 %v4646
    %v6024 = vunpack.c.l.b16 %v4647
    %v6025 = vunpack.c.h.b16 %v4647
    %v6026 = vunpack.c.l.b16 %v4648
    %v6027 = vunpack.c.h.b16 %v4648
    %v6028 = vunpack.c.l.b16 %v4649
    %v6029 = vunpack.c.h.b16 %v4649
    %v6030 = vunpack.c.l.b16 %v4650
    %v6031 = vunpack.c.h.b16 %v4650
    %v6032 = vunpack.c.l.b16 %v4651
    %v6033 = vunpack.c.h.b16 %v4651
    %v6034 = vunpack.c.l.b16 %v4652
    %v6035 = vunpack.c.h.b16 %v4652
    %v6036 = vunpack.c.l.b16 %v4653
    %v6037 = vunpack.c.h.b16 %v4653
    %v6038 = vunpack.c.l.b16 %v4654
    %v6039 = vunpack.c.h.b16 %v4654
    %v6040 = vunpack.c.l.b16 %v4655
    %v6041 = vunpack.c.h.b16 %v4655
    %v6042 = vunpack.c.l.b16 %v4656
    %v6043 = vunpack.c.h.b16 %v4656
    %v6044 = vunpack.c.l.b16 %v4657
    %v6045 = vunpack.c.h.b16 %v4657
    %v6046 = vunpack.c.l.b16 %v4658
    %v6047 = vunpack.c.h.b16 %v4658
    %v6048 = vunpack.c.l.b16 %v4659
    %v6049 = vunpack.c.h.b16 %v4659
    %v6050 = vunpack.c.l.b16 %v4660
    %v6051 = vunpack.c.h.b16 %v4660
    %v6052 = vunpack.c.l.b16 %v4661
    %v6053 = vunpack.c.h.b16 %v4661
    %v6054 = vunpack.c.l.b16 %v4662
    %v6055 = vunpack.c.h.b16 %v4662
    %v6056 = vunpack.c.l.b16 %v4663
    %v6057 = vunpack.c.h.b16 %v4663
    %v6058 = vunpack.c.l.b16 %v4664
    %v6059 = vunpack.c.h.b16 %v4664
    %v6060 = vunpack.c.l.b16 %v4665
    %v6061 = vunpack.c.h.b16 %v4665
    %v6062 = vunpack.c.l.b16 %v4666
    %v6063 = vunpack.c.h.b16 %v4666
    %v6064 = vunpack.c.l.b16 %v4667
    %v6065 = vunpack.c.h.b16 %v4667
    %v6066 = vunpack.c.l.b16 %v4668
    %v6067 = vunpack.c.h.b16 %v4668
    %v6068 = vunpack.c.l.b16 %v4669
    %v6069 = vunpack.c.h.b16 %v4669
    %v6070 = vunpack.c.l.b16 %v4670
    %v6071 = vunpack.c.h.b16 %v4670
    %v6072 = vunpack.c.l.b16 %v4671
    %v6073 = vunpack.c.h.b16 %v4671
    %v6074 = vunpack.c.l.b16 %v4672
    %v6075 = vunpack.c.h.b16 %v4672
    %v6076 = vunpack.c.l.b16 %v4673
    %v6077 = vunpack.c.h.b16 %v4673
    %v6078 = vunpack.c.l.b16 %v4674
    %v6079 = vunpack.c.h.b16 %v4674
    %v6080 = vunpack.c.l.b16 %v4675
    %v6081 = vunpack.c.h.b16 %v4675
    %v6082 = vunpack.c.l.b16 %v4676
    %v6083 = vunpack.c.h.b16 %v4676
    %v6084 = vunpack.c.l.b16 %v4677
    %v6085 = vunpack.c.h.b16 %v4677
    %v6086 = vunpack.c.l.b16 %v4678
    %v6087 = vunpack.c.h.b16 %v4678
    %v6088 = vunpack.c.l.b16 %v4679
    %v6089 = vunpack.c.h.b16 %v4679
    %v6090 = vunpack.c.l.b16 %v4680
    %v6091 = vunpack.c.h.b16 %v4680
    %v6092 = vunpack.c.l.b16 %v4681
    %v6093 = vunpack.c.h.b16 %v4681
    %v6094 = vunpack.c.l.b16 %v4682
    %v6095 = vunpack.c.h.b16 %v4682
    %v6096 = vunpack.c.l.b16 %v4683
    %v6097 = vunpack.c.h.b16 %v4683
    %v6098 = vunpack.c.l.b16 %v4684
    %v6099 = vunpack.c.h.b16 %v4684
    %v6100 = vunpack.c.l.b16 %v4685
    %v6101 = vunpack.c.h.b16 %v4685
    %v6102 = vunpack.c.l.b16 %v4686
    %v6103 = vunpack.c.h.b16 %v4686
    %v6104 = vunpack.c.l.b16 %v4687
    %v6105 = vunpack.c.h.b16 %v4687
    %v6106 = vunpack.c.l.b16 %v4688
    %v6107 = vunpack.c.h.b16 %v4688
    %v6108 = vunpack.c.l.b16 %v4689
    %v6109 = vunpack.c.h.b16 %v4689
    %v6110 = vunpack.c.l.b16 %v4690
    %v6111 = vunpack.c.h.b16 %v4690
    %v6112 = vunpack.c.l.b16 %v4691
    %v6113 = vunpack.c.h.b16 %v4691
    %v6114 = vunpack.c.l.b16 %v4692
    %v6115 = vunpack.c.h.b16 %v4692
    %v6116 = vunpack.c.l.b16 %v4693
    %v6117 = vunpack.c.h.b16 %v4693
    %v6118 = vunpack.c.l.b16 %v4694
    %v6119 = vunpack.c.h.b16 %v4694
    %v6120 = vunpack.c.l.b16 %v4695
    %v6121 = vunpack.c.h.b16 %v4695
    %v6122 = vunpack.c.l.b16 %v4696
    %v6123 = vunpack.c.h.b16 %v4696
    %v6124 = vunpack.c.l.b16 %v4697
    %v6125 = vunpack.c.h.b16 %v4697
    %v6126 = vunpack.c.l.b16 %v4698
    %v6127 = vunpack.c.h.b16 %v4698
    %v6128 = vunpack.c.l.b16 %v4699
    %v6129 = vunpack.c.h.b16 %v4699
    %v6130 = vunpack.c.l.b16 %v4700
    %v6131 = vunpack.c.h.b16 %v4700
    %v6132 = vunpack.c.l.b16 %v4701
    %v6133 = vunpack.c.h.b16 %v4701
    %v6134 = vunpack.c.l.b16 %v4702
    %v6135 = vunpack.c.h.b16 %v4702
    %v6136 = vunpack.c.l.b16 %v4703
    %v6137 = vunpack.c.h.b16 %v4703
    %v6138 = vunpack.c.l.b16 %v4704
    %v6139 = vunpack.c.h.b16 %v4704
    %v6140 = vunpack.c.l.b16 %v4705
    %v6141 = vunpack.c.h.b16 %v4705
    %v6142 = vunpack.c.l.b16 %v4706
    %v6143 = vunpack.c.h.b16 %v4706
    %v6144 = vunpack.c.l.b16 %v4707
    %v6145 = vunpack.c.h.b16 %v4707
    %v6146 = vunpack.c.l.b16 %v4708
    %v6147 = vunpack.c.h.b16 %v4708
    %v6148 = vunpack.c.l.b16 %v4709
    %v6149 = vunpack.c.h.b16 %v4709
    %v6150 = vunpack.c.l.b16 %v4710
    %v6151 = vunpack.c.h.b16 %v4710
    %v6152 = vunpack.c.l.b16 %v4711
    %v6153 = vunpack.c.h.b16 %v4711
    %v6154 = vunpack.c.l.b16 %v4712
    %v6155 = vunpack.c.h.b16 %v4712
    %v6156 = vunpack.c.l.b16 %v4713
    %v6157 = vunpack.c.h.b16 %v4713
    %v6158 = vunpack.c.l.b16 %v4714
    %v6159 = vunpack.c.h.b16 %v4714
    %v6160 = vunpack.c.l.b16 %v4715
    %v6161 = vunpack.c.h.b16 %v4715
    %v6162 = vunpack.c.l.b16 %v4716
    %v6163 = vunpack.c.h.b16 %v4716
    %v6164 = vunpack.c.l.b16 %v4717
    %v6165 = vunpack.c.h.b16 %v4717
    %v6166 = vunpack.c.l.b16 %v4718
    %v6167 = vunpack.c.h.b16 %v4718
    %v6168 = vunpack.c.l.b16 %v4719
    %v6169 = vunpack.c.h.b16 %v4719
    %v6170 = vunpack.c.l.b16 %v4720
    %v6171 = vunpack.c.h.b16 %v4720
    %v6172 = vunpack.c.l.b16 %v4721
    %v6173 = vunpack.c.h.b16 %v4721
    %v6174 = vunpack.c.l.b16 %v4722
    %v6175 = vunpack.c.h.b16 %v4722
    %v6176 = vunpack.c.l.b16 %v4723
    %v6177 = vunpack.c.h.b16 %v4723
    %v6178 = vunpack.c.l.b16 %v4724
    %v6179 = vunpack.c.h.b16 %v4724
    %v6180 = vunpack.c.l.b16 %v4725
    %v6181 = vunpack.c.h.b16 %v4725
    %v6182 = vunpack.c.l.b16 %v4726
    %v6183 = vunpack.c.h.b16 %v4726
    %v6184 = vunpack.c.l.b16 %v4727
    %v6185 = vunpack.c.h.b16 %v4727
    %v6186 = vunpack.c.l.b16 %v4728
    %v6187 = vunpack.c.h.b16 %v4728
    %v6188 = vunpack.c.l.b16 %v4729
    %v6189 = vunpack.c.h.b16 %v4729
    %v6190 = vunpack.c.l.b16 %v4730
    %v6191 = vunpack.c.h.b16 %v4730
    %v6192 = vunpack.c.l.b16 %v4731
    %v6193 = vunpack.c.h.b16 %v4731
    %v6194 = vunpack.c.l.b16 %v4732
    %v6195 = vunpack.c.h.b16 %v4732
    %v6196 = vunpack.c.l.b16 %v4733
    %v6197 = vunpack.c.h.b16 %v4733
    %v6198 = vunpack.c.l.b16 %v4734
    %v6199 = vunpack.c.h.b16 %v4734
    %v6200 = vunpack.c.l.b16 %v4735
    %v6201 = vunpack.c.h.b16 %v4735
    %v6202 = vunpack.c.l.b16 %v4736
    %v6203 = vunpack.c.h.b16 %v4736
    %v6204 = vunpack.c.l.b16 %v4737
    %v6205 = vunpack.c.h.b16 %v4737
    %v6206 = vunpack.c.l.b16 %v4738
    %v6207 = vunpack.c.h.b16 %v4738
    %v6208 = vunpack.c.l.b16 %v4739
    %v6209 = vunpack.c.h.b16 %v4739
    %v6210 = vunpack.c.l.b16 %v4740
    %v6211 = vunpack.c.h.b16 %v4740
    %v6212 = vunpack.c.l.b16 %v4741
    %v6213 = vunpack.c.h.b16 %v4741
    %v6214 = vunpack.c.l.b16 %v4742
    %v6215 = vunpack.c.h.b16 %v4742
    %v6216 = vunpack.c.l.b16 %v4743
    %v6217 = vunpack.c.h.b16 %v4743
    %v6218 = vunpack.c.l.b16 %v4744
    %v6219 = vunpack.c.h.b16 %v4744
    %v6220 = vunpack.c.l.b16 %v4745
    %v6221 = vunpack.c.h.b16 %v4745
    %v6222 = vunpack.c.l.b16 %v4746
    %v6223 = vunpack.c.h.b16 %v4746
    %v6224 = vunpack.c.l.b16 %v4747
    %v6225 = vunpack.c.h.b16 %v4747
    %v6226 = vunpack.c.l.b16 %v4748
    %v6227 = vunpack.c.h.b16 %v4748
    %v6228 = vunpack.c.l.b16 %v4749
    %v6229 = vunpack.c.h.b16 %v4749
    %v6230 = vunpack.c.l.b16 %v4750
    %v6231 = vunpack.c.h.b16 %v4750
    %v6232 = vunpack.c.l.b16 %v4751
    %v6233 = vunpack.c.h.b16 %v4751
    %v6234 = vunpack.c.l.b16 %v4752
    %v6235 = vunpack.c.h.b16 %v4752
    %v6236 = vunpack.c.l.b16 %v4753
    %v6237 = vunpack.c.h.b16 %v4753
    %v6238 = vunpack.c.l.b16 %v4754
    %v6239 = vunpack.c.h.b16 %v4754
    %v6240 = vunpack.c.l.b16 %v4755
    %v6241 = vunpack.c.h.b16 %v4755
    %v6242 = vunpack.c.l.b16 %v4756
    %v6243 = vunpack.c.h.b16 %v4756
    %v6244 = vunpack.c.l.b16 %v4757
    %v6245 = vunpack.c.h.b16 %v4757
    %v6246 = vunpack.c.l.b16 %v4758
    %v6247 = vunpack.c.h.b16 %v4758
    %v6248 = vunpack.c.l.b16 %v4759
    %v6249 = vunpack.c.h.b16 %v4759
    %v6250 = vunpack.c.l.b16 %v4760
    %v6251 = vunpack.c.h.b16 %v4760
    %v6252 = vunpack.c.l.b16 %v4761
    %v6253 = vunpack.c.h.b16 %v4761
    %v6254 = vunpack.c.l.b16 %v4762
    %v6255 = vunpack.c.h.b16 %v4762
    %v6256 = vunpack.c.l.b16 %v4763
    %v6257 = vunpack.c.h.b16 %v4763
    %v6258 = vunpack.c.l.b16 %v4764
    %v6259 = vunpack.c.h.b16 %v4764
    %v6260 = vunpack.c.l.b16 %v4765
    %v6261 = vunpack.c.h.b16 %v4765
    %v6262 = vunpack.c.l.b16 %v4766
    %v6263 = vunpack.c.h.b16 %v4766
    %v6264 = vunpack.c.l.b16 %v4767
    %v6265 = vunpack.c.h.b16 %v4767
    %v6266 = vunpack.c.l.b16 %v4768
    %v6267 = vunpack.c.h.b16 %v4768
    %v6268 = vunpack.c.l.b16 %v4769
    %v6269 = vunpack.c.h.b16 %v4769
    %v6270 = vunpack.c.l.b16 %v4770
    %v6271 = vunpack.c.h.b16 %v4770
    %v6272 = vunpack.c.l.b16 %v4771
    %v6273 = vunpack.c.h.b16 %v4771
    %v6274 = vunpack.c.l.b16 %v4772
    %v6275 = vunpack.c.h.b16 %v4772
    %v6276 = vunpack.c.l.b16 %v4773
    %v6277 = vunpack.c.h.b16 %v4773
    %v6278 = vunpack.c.l.b16 %v4774
    %v6279 = vunpack.c.h.b16 %v4774
    %v6280 = vunpack.c.l.b16 %v4775
    %v6281 = vunpack.c.h.b16 %v4775
    %v6282 = vunpack.c.l.b16 %v4776
    %v6283 = vunpack.c.h.b16 %v4776
    %v6284 = vunpack.c.l.b16 %v4777
    %v6285 = vunpack.c.h.b16 %v4777
    %v6286 = vunpack.c.l.b16 %v4778
    %v6287 = vunpack.c.h.b16 %v4778
    %v6288 = vunpack.c.l.b16 %v4779
    %v6289 = vunpack.c.h.b16 %v4779
    %v6290 = vunpack.c.l.b16 %v4780
    %v6291 = vunpack.c.h.b16 %v4780
    %v6292 = vunpack.c.l.b16 %v4781
    %v6293 = vunpack.c.h.b16 %v4781
    %v6294 = vunpack.c.l.b16 %v4782
    %v6295 = vunpack.c.h.b16 %v4782
    %v6296 = vunpack.c.l.b16 %v4783
    %v6297 = vunpack.c.h.b16 %v4783
    %v6298 = vunpack.c.l.b16 %v4784
    %v6299 = vunpack.c.h.b16 %v4784
    %v6300 = vunpack.c.l.b16 %v4785
    %v6301 = vunpack.c.h.b16 %v4785
    %v6302 = vunpack.c.l.b16 %v4786
    %v6303 = vunpack.c.h.b16 %v4786
    %v6304 = vunpack.c.l.b16 %v4787
    %v6305 = vunpack.c.h.b16 %v4787
    %v6306 = vunpack.c.l.b16 %v4788
    %v6307 = vunpack.c.h.b16 %v4788
    %v6308 = vunpack.c.l.b16 %v4789
    %v6309 = vunpack.c.h.b16 %v4789
    %v6310 = vunpack.c.l.b16 %v4790
    %v6311 = vunpack.c.h.b16 %v4790
    %v6312 = vunpack.c.l.b16 %v4791
    %v6313 = vunpack.c.h.b16 %v4791
    %v6314 = vunpack.c.l.b16 %v4792
    %v6315 = vunpack.c.h.b16 %v4792
    %v6316 = vunpack.c.l.b16 %v4793
    %v6317 = vunpack.c.h.b16 %v4793
    %v6318 = vunpack.c.l.b16 %v4794
    %v6319 = vunpack.c.h.b16 %v4794
    %v6320 = vunpack.c.l.b16 %v4795
    %v6321 = vunpack.c.h.b16 %v4795
    %v6322 = vunpack.c.l.b16 %v4796
    %v6323 = vunpack.c.h.b16 %v4796
    %v6324 = vunpack.c.l.b16 %v4797
    %v6325 = vunpack.c.h.b16 %v4797
    %v6326 = vunpack.c.l.b16 %v4798
    %v6327 = vunpack.c.h.b16 %v4798
    %v6328 = vunpack.c.l.b16 %v4799
    %v6329 = vunpack.c.h.b16 %v4799
    %v6330 = vunpack.c.l.b16 %v4800
    %v6331 = vunpack.c.h.b16 %v4800
    %v6332 = vunpack.c.l.b16 %v4801
    %v6333 = vunpack.c.h.b16 %v4801
    %v6334 = vunpack.c.l.b16 %v4802
    %v6335 = vunpack.c.h.b16 %v4802
    %v6336 = vunpack.c.l.b16 %v4803
    %v6337 = vunpack.c.h.b16 %v4803
    %v6338 = vunpack.c.l.b16 %v4804
    %v6339 = vunpack.c.h.b16 %v4804
    %v6340 = vunpack.c.l.b16 %v4805
    %v6341 = vunpack.c.h.b16 %v4805
    %v6342 = vunpack.c.l.b16 %v4806
    %v6343 = vunpack.c.h.b16 %v4806
    %v6344 = vunpack.c.l.b16 %v4807
    %v6345 = vunpack.c.h.b16 %v4807
    %v6346 = vunpack.c.l.b16 %v4808
    %v6347 = vunpack.c.h.b16 %v4808
    %v6348 = vunpack.c.l.b16 %v4809
    %v6349 = vunpack.c.h.b16 %v4809
    %v6350 = vunpack.c.l.b16 %v4810
    %v6351 = vunpack.c.h.b16 %v4810
    %v6352 = vunpack.c.l.b16 %v4811
    %v6353 = vunpack.c.h.b16 %v4811
    %v6354 = vunpack.c.l.b16 %v4812
    %v6355 = vunpack.c.h.b16 %v4812
    %v6356 = vunpack.c.l.b16 %v4813
    %v6357 = vunpack.c.h.b16 %v4813
    %v6358 = vunpack.c.l.b16 %v4814
    %v6359 = vunpack.c.h.b16 %v4814
    %v6360 = vunpack.c.l.b16 %v4815
    %v6361 = vunpack.c.h.b16 %v4815
    %v6362 = vunpack.c.l.b16 %v4816
    %v6363 = vunpack.c.h.b16 %v4816
    %v6364 = vunpack.c.l.b16 %v4817
    %v6365 = vunpack.c.h.b16 %v4817
    %v6366 = vunpack.c.l.b16 %v4818
    %v6367 = vunpack.c.h.b16 %v4818
    %v6368 = vunpack.c.l.b16 %v4819
    %v6369 = vunpack.c.h.b16 %v4819
    %v6370 = vunpack.c.l.b16 %v4820
    %v6371 = vunpack.c.h.b16 %v4820
    %v6372 = vunpack.c.l.b16 %v4821
    %v6373 = vunpack.c.h.b16 %v4821
    %v6374 = vunpack.c.l.b16 %v4822
    %v6375 = vunpack.c.h.b16 %v4822
    %v6376 = vunpack.c.l.b16 %v4823
    %v6377 = vunpack.c.h.b16 %v4823
    %v6378 = vunpack.c.l.b16 %v4824
    %v6379 = vunpack.c.h.b16 %v4824
    %v6380 = vunpack.c.l.b16 %v4825
    %v6381 = vunpack.c.h.b16 %v4825
    %v6382 = vunpack.c.l.b16 %v4826
    %v6383 = vunpack.c.h.b16 %v4826
    %v6384 = vunpack.c.l.b16 %v4827
    %v6385 = vunpack.c.h.b16 %v4827
    %v6386 = vunpack.c.l.b16 %v4828
    %v6387 = vunpack.c.h.b16 %v4828
    %v6388 = vunpack.c.l.b16 %v4829
    %v6389 = vunpack.c.h.b16 %v4829
    %v6390 = vunpack.c.l.b16 %v4830
    %v6391 = vunpack.c.h.b16 %v4830
    %v6392 = vunpack.c.l.b16 %v4831
    %v6393 = vunpack.c.h.b16 %v4831
    %v6394 = vunpack.c.l.b16 %v4832
    %v6395 = vunpack.c.h.b16 %v4832
    %v6396 = vunpack.c.l.b16 %v4833
    %v6397 = vunpack.c.h.b16 %v4833
    %v6398 = vunpack.c.l.b16 %v4834
    %v6399 = vunpack.c.h.b16 %v4834
    %v6400 = vunpack.c.l.b16 %v4835
    %v6401 = vunpack.c.h.b16 %v4835
    %v6402 = vunpack.c.l.b16 %v4836
    %v6403 = vunpack.c.h.b16 %v4836
    %v6404 = vunpack.c.l.b16 %v4837
    %v6405 = vunpack.c.h.b16 %v4837
    %v6406 = vunpack.c.l.b16 %v4838
    %v6407 = vunpack.c.h.b16 %v4838
    %v6408 = vunpack.c.l.b16 %v4839
    %v6409 = vunpack.c.h.b16 %v4839
    %v6410 = vunpack.c.l.b16 %v4840
    %v6411 = vunpack.c.h.b16 %v4840
    %v6412 = vunpack.c.l.b16 %v4841
    %v6413 = vunpack.c.h.b16 %v4841
    %v6414 = vunpack.c.l.b16 %v4842
    %v6415 = vunpack.c.h.b16 %v4842
    %v6416 = vunpack.c.l.b16 %v4843
    %v6417 = vunpack.c.h.b16 %v4843
    %v6418 = vunpack.c.l.b16 %v4844
    %v6419 = vunpack.c.h.b16 %v4844
    %v6420 = vunpack.c.l.b16 %v4845
    %v6421 = vunpack.c.h.b16 %v4845
    %v6422 = vunpack.c.l.b16 %v4846
    %v6423 = vunpack.c.h.b16 %v4846
    %v6424 = vunpack.c.l.b16 %v4847
    %v6425 = vunpack.c.h.b16 %v4847
    %v6426 = vunpack.c.l.b16 %v4848
    %v6427 = vunpack.c.h.b16 %v4848
    %v6428 = vunpack.c.l.b16 %v4849
    %v6429 = vunpack.c.h.b16 %v4849
    %v6430 = vunpack.c.l.b16 %v4850
    %v6431 = vunpack.c.h.b16 %v4850
    %v6432 = vunpack.c.l.b16 %v4851
    %v6433 = vunpack.c.h.b16 %v4851
    %v6434 = vunpack.c.l.b16 %v4852
    %v6435 = vunpack.c.h.b16 %v4852
    %v6436 = vunpack.c.l.b16 %v4853
    %v6437 = vunpack.c.h.b16 %v4853
    %v6438 = vunpack.c.l.b16 %v4854
    %v6439 = vunpack.c.h.b16 %v4854
    %v6440 = vunpack.c.l.b16 %v4855
    %v6441 = vunpack.c.h.b16 %v4855
    %v6442 = vunpack.c.l.b16 %v4856
    %v6443 = vunpack.c.h.b16 %v4856
    %v6444 = vunpack.c.l.b16 %v4857
    %v6445 = vunpack.c.h.b16 %v4857
    %v6446 = vunpack.c.l.b16 %v4858
    %v6447 = vunpack.c.h.b16 %v4858
    %v6448 = vunpack.c.l.b16 %v4859
    %v6449 = vunpack.c.h.b16 %v4859
    %v6450 = vunpack.c.l.b16 %v4860
    %v6451 = vunpack.c.h.b16 %v4860
    %v6452 = vunpack.c.l.b16 %v4861
    %v6453 = vunpack.c.h.b16 %v4861
    %v6454 = vunpack.c.l.b16 %v4862
    %v6455 = vunpack.c.h.b16 %v4862
    %v6456 = vunpack.c.l.b16 %v4863
    %v6457 = vunpack.c.h.b16 %v4863
    %v6458 = vunpack.c.l.b16 %v4864
    %v6459 = vunpack.c.h.b16 %v4864
    %v6460 = vunpack.c.l.b16 %v4865
    %v6461 = vunpack.c.h.b16 %v4865
    %v6462 = vunpack.c.l.b16 %v4866
    %v6463 = vunpack.c.h.b16 %v4866
    %v6464 = vunpack.c.l.b16 %v4867
    %v6465 = vunpack.c.h.b16 %v4867
    %v6466 = vunpack.c.l.b16 %v4868
    %v6467 = vunpack.c.h.b16 %v4868
    %v6468 = vunpack.c.l.b16 %v4869
    %v6469 = vunpack.c.h.b16 %v4869
    %v6470 = vunpack.c.l.b16 %v4870
    %v6471 = vunpack.c.h.b16 %v4870
    %v6472 = vunpack.c.l.b16 %v4871
    %v6473 = vunpack.c.h.b16 %v4871
    %v6474 = vunpack.c.l.b16 %v4872
    %v6475 = vunpack.c.h.b16 %v4872
    %v6476 = vunpack.c.l.b16 %v4873
    %v6477 = vunpack.c.h.b16 %v4873
    %v6478 = vunpack.c.l.b16 %v4874
    %v6479 = vunpack.c.h.b16 %v4874
    %v6480 = vunpack.c.l.b16 %v4875
    %v6481 = vunpack.c.h.b16 %v4875
    %v6482 = vunpack.c.l.b16 %v4876
    %v6483 = vunpack.c.h.b16 %v4876
    %v6484 = vunpack.c.l.b16 %v4877
    %v6485 = vunpack.c.h.b16 %v4877
    %v6486 = vunpack.c.l.b16 %v4878
    %v6487 = vunpack.c.h.b16 %v4878
    %v6488 = vunpack.c.l.b16 %v4879
    %v6489 = vunpack.c.h.b16 %v4879
    %v6490 = vunpack.c.l.b16 %v4880
    %v6491 = vunpack.c.h.b16 %v4880
    %v6492 = vunpack.c.l.b16 %v4881
    %v6493 = vunpack.c.h.b16 %v4881
    %v6494 = vunpack.c.l.b16 %v4882
    %v6495 = vunpack.c.h.b16 %v4882
    %v6496 = vunpack.c.l.b16 %v4883
    %v6497 = vunpack.c.h.b16 %v4883
    %v6498 = vunpack.c.l.b16 %v4884
    %v6499 = vunpack.c.h.b16 %v4884
    %v6500 = vunpack.c.l.b16 %v4885
    %v6501 = vunpack.c.h.b16 %v4885
    %v6502 = vunpack.c.l.b16 %v4886
    %v6503 = vunpack.c.h.b16 %v4886
    %v6504 = vunpack.c.l.b16 %v4887
    %v6505 = vunpack.c.h.b16 %v4887
    %v6506 = vunpack.c.l.b16 %v4888
    %v6507 = vunpack.c.h.b16 %v4888
    %v6508 = vunpack.c.l.b16 %v4889
    %v6509 = vunpack.c.h.b16 %v4889
    %v6510 = vunpack.c.l.b16 %v4890
    %v6511 = vunpack.c.h.b16 %v4890
    %v6512 = vunpack.c.l.b16 %v4891
    %v6513 = vunpack.c.h.b16 %v4891
    %v6514 = vunpack.c.l.b16 %v4892
    %v6515 = vunpack.c.h.b16 %v4892
    %v6516 = vunpack.c.l.b16 %v4893
    %v6517 = vunpack.c.h.b16 %v4893
    %v6518 = vunpack.c.l.b16 %v4894
    %v6519 = vunpack.c.h.b16 %v4894
    %v6520 = vunpack.c.l.b16 %v4895
    %v6521 = vunpack.c.h.b16 %v4895
    %v6522 = vunpack.c.l.b16 %v4896
    %v6523 = vunpack.c.h.b16 %v4896
    %v6524 = vunpack.c.l.b16 %v4897
    %v6525 = vunpack.c.h.b16 %v4897
    %v6526 = vunpack.c.l.b16 %v4898
    %v6527 = vunpack.c.h.b16 %v4898
    %v6528 = vunpack.c.l.b16 %v4899
    %v6529 = vunpack.c.h.b16 %v4899
    %v6530 = vunpack.c.l.b16 %v4900
    %v6531 = vunpack.c.h.b16 %v4900
    %v6532 = vunpack.c.l.b16 %v4901
    %v6533 = vunpack.c.h.b16 %v4901
    %v6534 = vunpack.c.l.b16 %v4902
    %v6535 = vunpack.c.h.b16 %v4902
    %v6536 = vunpack.c.l.b16 %v4903
    %v6537 = vunpack.c.h.b16 %v4903
    %v6538 = vunpack.c.l.b16 %v4904
    %v6539 = vunpack.c.h.b16 %v4904
    %v6540 = vunpack.c.l.b16 %v4905
    %v6541 = vunpack.c.h.b16 %v4905
    %v6542 = vunpack.c.l.b16 %v4906
    %v6543 = vunpack.c.h.b16 %v4906
    %v6544 = vunpack.c.l.b16 %v4907
    %v6545 = vunpack.c.h.b16 %v4907
    %v6546 = vunpack.c.l.b16 %v4908
    %v6547 = vunpack.c.h.b16 %v4908
    %v6548 = vunpack.c.l.b16 %v4909
    %v6549 = vunpack.c.h.b16 %v4909
    %v6550 = vunpack.c.l.b16 %v4910
    %v6551 = vunpack.c.h.b16 %v4910
    %v6552 = vunpack.c.l.b16 %v4911
    %v6553 = vunpack.c.h.b16 %v4911
    %v6554 = vunpack.c.l.b16 %v4912
    %v6555 = vunpack.c.h.b16 %v4912
    %v6556 = vunpack.c.l.b16 %v4913
    %v6557 = vunpack.c.h.b16 %v4913
    %v6558 = vunpack.c.l.b16 %v4914
    %v6559 = vunpack.c.h.b16 %v4914
    %v6560 = vunpack.c.l.b16 %v4915
    %v6561 = vunpack.c.h.b16 %v4915
    %v6562 = vunpack.c.l.b16 %v4916
    %v6563 = vunpack.c.h.b16 %v4916
    %v6564 = vunpack.c.l.b16 %v4917
    %v6565 = vunpack.c.h.b16 %v4917
    %v6566 = vunpack.c.l.b16 %v4918
    %v6567 = vunpack.c.h.b16 %v4918
    %v6568 = vunpack.c.l.b16 %v4919
    %v6569 = vunpack.c.h.b16 %v4919
    %v6570 = vunpack.c.l.b16 %v4920
    %v6571 = vunpack.c.h.b16 %v4920
    %v6572 = vunpack.c.l.b16 %v4921
    %v6573 = vunpack.c.h.b16 %v4921
    %v6574 = vunpack.c.l.b16 %v4922
    %v6575 = vunpack.c.h.b16 %v4922
    %v6576 = vunpack.c.l.b16 %v4923
    %v6577 = vunpack.c.h.b16 %v4923
    %v6578 = vunpack.c.l.b16 %v4924
    %v6579 = vunpack.c.h.b16 %v4924
    %v6580 = vunpack.c.l.b16 %v4925
    %v6581 = vunpack.c.h.b16 %v4925
    %v6582 = vunpack.c.l.b16 %v4926
    %v6583 = vunpack.c.h.b16 %v4926
    %v6584 = vunpack.c.l.b16 %v4927
    %v6585 = vunpack.c.h.b16 %v4927
    %v6586 = vunpack.c.l.b16 %v4928
    %v6587 = vunpack.c.h.b16 %v4928
    %v6588 = vunpack.c.l.b16 %v4929
    %v6589 = vunpack.c.h.b16 %v4929
    %v6590 = vunpack.c.l.b16 %v4930
    %v6591 = vunpack.c.h.b16 %v4930
    %v6592 = vunpack.c.l.b16 %v4931
    %v6593 = vunpack.c.h.b16 %v4931
    %v6594 = vunpack.c.l.b16 %v4932
    %v6595 = vunpack.c.h.b16 %v4932
    %v6596 = vunpack.c.l.b16 %v4933
    %v6597 = vunpack.c.h.b16 %v4933
    %v6598 = vunpack.c.l.b16 %v4934
    %v6599 = vunpack.c.h.b16 %v4934
    %v6600 = vunpack.c.l.b16 %v4935
    %v6601 = vunpack.c.h.b16 %v4935
    %v6602 = vunpack.c.l.b16 %v4936
    %v6603 = vunpack.c.h.b16 %v4936
    %v6604 = vunpack.c.l.b16 %v4937
    %v6605 = vunpack.c.h.b16 %v4937
    %v6606 = vunpack.c.l.b16 %v4938
    %v6607 = vunpack.c.h.b16 %v4938
    %v6608 = vunpack.c.l.b16 %v4939
    %v6609 = vunpack.c.h.b16 %v4939
    %v6610 = vunpack.c.l.b16 %v4940
    %v6611 = vunpack.c.h.b16 %v4940
    %v6612 = vunpack.c.l.b16 %v4941
    %v6613 = vunpack.c.h.b16 %v4941
    %v6614 = vunpack.c.l.b16 %v4942
    %v6615 = vunpack.c.h.b16 %v4942
    %v6616 = vunpack.c.l.b16 %v4943
    %v6617 = vunpack.c.h.b16 %v4943
    %v6618 = vunpack.c.l.b16 %v4944
    %v6619 = vunpack.c.h.b16 %v4944
    %v6620 = vunpack.c.l.b16 %v4945
    %v6621 = vunpack.c.h.b16 %v4945
    %v6622 = vunpack.c.l.b16 %v4946
    %v6623 = vunpack.c.h.b16 %v4946
    %v6624 = vunpack.c.l.b16 %v4947
    %v6625 = vunpack.c.h.b16 %v4947
    %v6626 = vunpack.c.l.b16 %v4948
    %v6627 = vunpack.c.h.b16 %v4948
    %v6628 = vunpack.c.l.b16 %v4949
    %v6629 = vunpack.c.h.b16 %v4949
    %v6630 = vunpack.c.l.b16 %v4950
    %v6631 = vunpack.c.h.b16 %v4950
    %v6632 = vunpack.c.l.b16 %v4951
    %v6633 = vunpack.c.h.b16 %v4951
    %v6634 = vunpack.c.l.b16 %v4952
    %v6635 = vunpack.c.h.b16 %v4952
    %v6636 = vunpack.c.l.b16 %v4953
    %v6637 = vunpack.c.h.b16 %v4953
    %v6638 = vunpack.c.l.b16 %v4954
    %v6639 = vunpack.c.h.b16 %v4954
    %v6640 = vunpack.c.l.b16 %v4955
    %v6641 = vunpack.c.h.b16 %v4955
    %v6642 = vunpack.c.l.b16 %v4956
    %v6643 = vunpack.c.h.b16 %v4956
    %v6644 = vunpack.c.l.b16 %v4957
    %v6645 = vunpack.c.h.b16 %v4957
    %v6646 = vunpack.c.l.b16 %v4958
    %v6647 = vunpack.c.h.b16 %v4958
    %v6648 = vunpack.c.l.b16 %v4959
    %v6649 = vunpack.c.h.b16 %v4959
    %v6650 = vunpack.c.l.b16 %v4960
    %v6651 = vunpack.c.h.b16 %v4960
    %v6652 = vunpack.c.l.b16 %v4961
    %v6653 = vunpack.c.h.b16 %v4961
    %v6654 = vunpack.c.l.b16 %v4962
    %v6655 = vunpack.c.h.b16 %v4962
    %v6656 = vunpack.c.l.b16 %v4963
    %v6657 = vunpack.c.h.b16 %v4963
    %v6658 = vunpack.c.l.b16 %v4964
    %v6659 = vunpack.c.h.b16 %v4964
    %v6660 = vunpack.c.l.b16 %v4965
    %v6661 = vunpack.c.h.b16 %v4965
    %v6662 = vunpack.c.l.b16 %v4966
    %v6663 = vunpack.c.h.b16 %v4966
    %v6664 = vunpack.c.l.b16 %v4967
    %v6665 = vunpack.c.h.b16 %v4967
    %v6666 = vunpack.c.l.b16 %v4968
    %v6667 = vunpack.c.h.b16 %v4968
    %v6668 = vunpack.c.l.b16 %v4969
    %v6669 = vunpack.c.h.b16 %v4969
    %v6670 = vunpack.c.l.b16 %v4970
    %v6671 = vunpack.c.h.b16 %v4970
    %v6672 = vunpack.c.l.b16 %v4971
    %v6673 = vunpack.c.h.b16 %v4971
    %v6674 = vunpack.c.l.b16 %v4972
    %v6675 = vunpack.c.h.b16 %v4972
    %v6676 = vunpack.c.l.b16 %v4973
    %v6677 = vunpack.c.h.b16 %v4973
    %v6678 = vunpack.c.l.b16 %v4974
    %v6679 = vunpack.c.h.b16 %v4974
    %v6680 = vunpack.c.l.b16 %v4975
    %v6681 = vunpack.c.h.b16 %v4975
    %v6682 = vunpack.c.l.b16 %v4976
    %v6683 = vunpack.c.h.b16 %v4976
    %v6684 = vunpack.c.l.b16 %v4977
    %v6685 = vunpack.c.h.b16 %v4977
    %v6686 = vunpack.c.l.b16 %v4978
    %v6687 = vunpack.c.h.b16 %v4978
    %v6688 = vunpack.c.l.b16 %v4979
    %v6689 = vunpack.c.h.b16 %v4979
    %v6690 = vunpack.c.l.b16 %v4980
    %v6691 = vunpack.c.h.b16 %v4980
    %v6692 = vunpack.c.l.b16 %v4981
    %v6693 = vunpack.c.h.b16 %v4981
    %v6694 = vunpack.c.l.b16 %v4982
    %v6695 = vunpack.c.h.b16 %v4982
    %v6696 = vunpack.c.l.b16 %v4983
    %v6697 = vunpack.c.h.b16 %v4983
    %v6698 = vunpack.c.l.b16 %v4984
    %v6699 = vunpack.c.h.b16 %v4984
    %v6700 = vunpack.c.l.b16 %v4985
    %v6701 = vunpack.c.h.b16 %v4985
    %v6702 = vunpack.c.l.b16 %v4986
    %v6703 = vunpack.c.h.b16 %v4986
    %v6704 = vunpack.c.l.b16 %v4987
    %v6705 = vunpack.c.h.b16 %v4987
    %v6706 = vunpack.c.l.b16 %v4988
    %v6707 = vunpack.c.h.b16 %v4988
    %v6708 = vunpack.c.l.b16 %v4989
    %v6709 = vunpack.c.h.b16 %v4989
    %v6710 = vunpack.c.l.b16 %v4990
    %v6711 = vunpack.c.h.b16 %v4990
    %v6712 = vunpack.c.l.b16 %v4991
    %v6713 = vunpack.c.h.b16 %v4991
    %v6714 = vunpack.c.l.b16 %v4992
    %v6715 = vunpack.c.h.b16 %v4992
    %v6716 = vunpack.c.l.b16 %v4993
    %v6717 = vunpack.c.h.b16 %v4993
    %v6718 = vunpack.c.l.b16 %v4994
    %v6719 = vunpack.c.h.b16 %v4994
    %v6720 = vunpack.c.l.b16 %v4995
    %v6721 = vunpack.c.h.b16 %v4995
    %v6722 = vunpack.c.l.b16 %v4996
    %v6723 = vunpack.c.h.b16 %v4996
    %v6724 = vunpack.c.l.b16 %v4997
    %v6725 = vunpack.c.h.b16 %v4997
    %v6726 = vpack.c.b16 %v5578, %v5574
    %v6727 = vpack.c.b16 %v5579, %v5575
    %v6728 = vpack.c.b16 %v5580, %v5576
    %v6729 = vpack.c.b16 %v5581, %v5577
    %v6730 = vpack.c.b16 %v5586, %v5582
    %v6731 = vpack.c.b16 %v5587, %v5583
    %v6732 = vpack.c.b16 %v5588, %v5584
    %v6733 = vpack.c.b16 %v5589, %v5585
    %v6734 = vpack.c.b16 %v5594, %v5590
    %v6735 = vpack.c.b16 %v5595, %v5591
    %v6736 = vpack.c.b16 %v5596, %v5592
    %v6737 = vpack.c.b16 %v5597, %v5593
    %v6738 = vpack.c.b16 %v5602, %v5598
    %v6739 = vpack.c.b16 %v5603, %v5599
    %v6740 = vpack.c.b16 %v5604, %v5600
    %v6741 = vpack.c.b16 %v5605, %v5601
    %v6742 = vpack.c.b16 %v5610, %v5606
    %v6743 = vpack.c.b16 %v5611, %v5607
    %v6744 = vpack.c.b16 %v5612, %v5608
    %v6745 = vpack.c.b16 %v5613, %v5609
    %v6746 = vpack.c.b16 %v5618, %v5614
    %v6747 = vpack.c.b16 %v5619, %v5615
    %v6748 = vpack.c.b16 %v5620, %v5616
    %v6749 = vpack.c.b16 %v5621, %v5617
    %v6750 = vpack.c.b16 %v5626, %v5622
    %v6751 = vpack.c.b16 %v5627, %v5623
    %v6752 = vpack.c.b16 %v5628, %v5624
    %v6753 = vpack.c.b16 %v5629, %v5625
    %v6754 = vpack.c.b16 %v5634, %v5630
    %v6755 = vpack.c.b16 %v5635, %v5631
    %v6756 = vpack.c.b16 %v5636, %v5632
    %v6757 = vpack.c.b16 %v5637, %v5633
    %v6758 = vpack.c.b16 %v5642, %v5638
    %v6759 = vpack.c.b16 %v5643, %v5639
    %v6760 = vpack.c.b16 %v5644, %v5640
    %v6761 = vpack.c.b16 %v5645, %v5641
    %v6762 = vpack.c.b16 %v5650, %v5646
    %v6763 = vpack.c.b16 %v5651, %v5647
    %v6764 = vpack.c.b16 %v5652, %v5648
    %v6765 = vpack.c.b16 %v5653, %v5649
    %v6766 = vpack.c.b16 %v5658, %v5654
    %v6767 = vpack.c.b16 %v5659, %v5655
    %v6768 = vpack.c.b16 %v5660, %v5656
    %v6769 = vpack.c.b16 %v5661, %v5657
    %v6770 = vpack.c.b16 %v5666, %v5662
    %v6771 = vpack.c.b16 %v5667, %v5663
    %v6772 = vpack.c.b16 %v5668, %v5664
    %v6773 = vpack.c.b16 %v5669, %v5665
    %v6774 = vpack.c.b16 %v5674, %v5670
    %v6775 = vpack.c.b16 %v5675, %v5671
    %v6776 = vpack.c.b16 %v5676, %v5672
    %v6777 = vpack.c.b16 %v5677, %v5673
    %v6778 = vpack.c.b16 %v5682, %v5678
    %v6779 = vpack.c.b16 %v5683, %v5679
    %v6780 = vpack.c.b16 %v5684, %v5680
    %v6781 = vpack.c.b16 %v5685, %v5681
    %v6782 = vpack.c.b16 %v5690, %v5686
    %v6783 = vpack.c.b16 %v5691, %v5687
    %v6784 = vpack.c.b16 %v5692, %v5688
    %v6785 = vpack.c.b16 %v5693, %v5689
    %v6786 = vpack.c.b16 %v5698, %v5694
    %v6787 = vpack.c.b16 %v5699, %v5695
    %v6788 = vpack.c.b16 %v5700, %v5696
    %v6789 = vpack.c.b16 %v5701, %v5697
    %v6790 = vpack.c.b16 %v5706, %v5702
    %v6791 = vpack.c.b16 %v5707, %v5703
    %v6792 = vpack.c.b16 %v5708, %v5704
    %v6793 = vpack.c.b16 %v5709, %v5705
    %v6794 = vpack.c.b16 %v5714, %v5710
    %v6795 = vpack.c.b16 %v5715, %v5711
    %v6796 = vpack.c.b16 %v5716, %v5712
    %v6797 = vpack.c.b16 %v5717, %v5713
    %v6798 = vpack.c.b16 %v5722, %v5718
    %v6799 = vpack.c.b16 %v5723, %v5719
    %v6800 = vpack.c.b16 %v5724, %v5720
    %v6801 = vpack.c.b16 %v5725, %v5721
    %v6802 = vpack.c.b16 %v5730, %v5726
    %v6803 = vpack.c.b16 %v5731, %v5727
    %v6804 = vpack.c.b16 %v5732, %v5728
    %v6805 = vpack.c.b16 %v5733, %v5729
    %v6806 = vpack.c.b16 %v5738, %v5734
    %v6807 = vpack.c.b16 %v5739, %v5735
    %v6808 = vpack.c.b16 %v5740, %v5736
    %v6809 = vpack.c.b16 %v5741, %v5737
    %v6810 = vpack.c.b16 %v5746, %v5742
    %v6811 = vpack.c.b16 %v5747, %v5743
    %v6812 = vpack.c.b16 %v5748, %v5744
    %v6813 = vpack.c.b16 %v5749, %v5745
    %v6814 = vpack.c.b16 %v5754, %v5750
    %v6815 = vpack.c.b16 %v5755, %v5751
    %v6816 = vpack.c.b16 %v5756, %v5752
    %v6817 = vpack.c.b16 %v5757, %v5753
    %v6818 = vpack.c.b16 %v5762, %v5758
    %v6819 = vpack.c.b16 %v5763, %v5759
    %v6820 = vpack.c.b16 %v5764, %v5760
    %v6821 = vpack.c.b16 %v5765, %v5761
    %v6822 = vpack.c.b16 %v5770, %v5766
    %v6823 = vpack.c.b16 %v5771, %v5767
    %v6824 = vpack.c.b16 %v5772, %v5768
    %v6825 = vpack.c.b16 %v5773, %v5769
    %v6826 = vpack.c.b16 %v5778, %v5774
    %v6827 = vpack.c.b16 %v5779, %v5775
    %v6828 = vpack.c.b16 %v5780, %v5776
    %v6829 = vpack.c.b16 %v5781, %v5777
    %v6830 = vpack.c.b16 %v5786, %v5782
    %v6831 = vpack.c.b16 %v5787, %v5783
    %v6832 = vpack.c.b16 %v5788, %v5784
    %v6833 = vpack.c.b16 %v5789, %v5785
    %v6834 = vpack.c.b16 %v5794, %v5790
    %v6835 = vpack.c.b16 %v5795, %v5791
    %v6836 = vpack.c.b16 %v5796, %v5792
    %v6837 = vpack.c.b16 %v5797, %v5793
    %v6838 = vpack.c.b16 %v5802, %v5798
    %v6839 = vpack.c.b16 %v5803, %v5799
    %v6840 = vpack.c.b16 %v5804, %v5800
    %v6841 = vpack.c.b16 %v5805, %v5801
    %v6842 = vpack.c.b16 %v5810, %v5806
    %v6843 = vpack.c.b16 %v5811, %v5807
    %v6844 = vpack.c.b16 %v5812, %v5808
    %v6845 = vpack.c.b16 %v5813, %v5809
    %v6846 = vpack.c.b16 %v5818, %v5814
    %v6847 = vpack.c.b16 %v5819, %v5815
    %v6848 = vpack.c.b16 %v5820, %v5816
    %v6849 = vpack.c.b16 %v5821, %v5817
    %v6850 = vpack.c.b16 %v5826, %v5822
    %v6851 = vpack.c.b16 %v5827, %v5823
    %v6852 = vpack.c.b16 %v5828, %v5824
    %v6853 = vpack.c.b16 %v5829, %v5825
    %v6854 = vpack.c.b16 %v5834, %v5830
    %v6855 = vpack.c.b16 %v5835, %v5831
    %v6856 = vpack.c.b16 %v5836, %v5832
    %v6857 = vpack.c.b16 %v5837, %v5833
    %v6858 = vpack.c.b16 %v5842, %v5838
    %v6859 = vpack.c.b16 %v5843, %v5839
    %v6860 = vpack.c.b16 %v5844, %v5840
    %v6861 = vpack.c.b16 %v5845, %v5841
    %v6862 = vpack.c.b16 %v5850, %v5846
    %v6863 = vpack.c.b16 %v5851, %v5847
    %v6864 = vpack.c.b16 %v5852, %v5848
    %v6865 = vpack.c.b16 %v5853, %v5849
    %v6866 = vpack.c.b16 %v5858, %v5854
    %v6867 = vpack.c.b16 %v5859, %v5855
    %v6868 = vpack.c.b16 %v5860, %v5856
    %v6869 = vpack.c.b16 %v5861, %v5857
    %v6870 = vpack.c.b16 %v5866, %v5862
    %v6871 = vpack.c.b16 %v5867, %v5863
    %v6872 = vpack.c.b16 %v5868, %v5864
    %v6873 = vpack.c.b16 %v5869, %v5865
    %v6874 = vpack.c.b16 %v5874, %v5870
    %v6875 = vpack.c.b16 %v5875, %v5871
    %v6876 = vpack.c.b16 %v5876, %v5872
    %v6877 = vpack.c.b16 %v5877, %v5873
    %v6878 = vpack.c.b16 %v5882, %v5878
    %v6879 = vpack.c.b16 %v5883, %v5879
    %v6880 = vpack.c.b16 %v5884, %v5880
    %v6881 = vpack.c.b16 %v5885, %v5881
    %v6882 = vpack.c.b16 %v5890, %v5886
    %v6883 = vpack.c.b16 %v5891, %v5887
    %v6884 = vpack.c.b16 %v5892, %v5888
    %v6885 = vpack.c.b16 %v5893, %v5889
    %v6886 = vpack.c.b16 %v5898, %v5894
    %v6887 = vpack.c.b16 %v5899, %v5895
    %v6888 = vpack.c.b16 %v5900, %v5896
    %v6889 = vpack.c.b16 %v5901, %v5897
    %v6890 = vpack.c.b16 %v5906, %v5902
    %v6891 = vpack.c.b16 %v5907, %v5903
    %v6892 = vpack.c.b16 %v5908, %v5904
    %v6893 = vpack.c.b16 %v5909, %v5905
    %v6894 = vpack.c.b16 %v5914, %v5910
    %v6895 = vpack.c.b16 %v5915, %v5911
    %v6896 = vpack.c.b16 %v5916, %v5912
    %v6897 = vpack.c.b16 %v5917, %v5913
    %v6898 = vpack.c.b16 %v5922, %v5918
    %v6899 = vpack.c.b16 %v5923, %v5919
    %v6900 = vpack.c.b16 %v5924, %v5920
    %v6901 = vpack.c.b16 %v5925, %v5921
    %v6902 = vpack.c.b16 %v5930, %v5926
    %v6903 = vpack.c.b16 %v5931, %v5927
    %v6904 = vpack.c.b16 %v5932, %v5928
    %v6905 = vpack.c.b16 %v5933, %v5929
    %v6906 = vpack.c.b16 %v5938, %v5934
    %v6907 = vpack.c.b16 %v5939, %v5935
    %v6908 = vpack.c.b16 %v5940, %v5936
    %v6909 = vpack.c.b16 %v5941, %v5937
    %v6910 = vpack.c.b16 %v5946, %v5942
    %v6911 = vpack.c.b16 %v5947, %v5943
    %v6912 = vpack.c.b16 %v5948, %v5944
    %v6913 = vpack.c.b16 %v5949, %v5945
    %v6914 = vpack.c.b16 %v5954, %v5950
    %v6915 = vpack.c.b16 %v5955, %v5951
    %v6916 = vpack.c.b16 %v5956, %v5952
    %v6917 = vpack.c.b16 %v5957, %v5953
    %v6918 = vpack.c.b16 %v5962, %v5958
    %v6919 = vpack.c.b16 %v5963, %v5959
    %v6920 = vpack.c.b16 %v5964, %v5960
    %v6921 = vpack.c.b16 %v5965, %v5961
    %v6922 = vpack.c.b16 %v5970, %v5966
    %v6923 = vpack.c.b16 %v5971, %v5967
    %v6924 = vpack.c.b16 %v5972, %v5968
    %v6925 = vpack.c.b16 %v5973, %v5969
    %v6926 = vpack.c.b16 %v5978, %v5974
    %v6927 = vpack.c.b16 %v5979, %v5975
    %v6928 = vpack.c.b16 %v5980, %v5976
    %v6929 = vpack.c.b16 %v5981, %v5977
    %v6930 = vpack.c.b16 %v5986, %v5982
    %v6931 = vpack.c.b16 %v5987, %v5983
    %v6932 = vpack.c.b16 %v5988, %v5984
    %v6933 = vpack.c.b16 %v5989, %v5985
    %v6934 = vpack.c.b16 %v5994, %v5990
    %v6935 = vpack.c.b16 %v5995, %v5991
    %v6936 = vpack.c.b16 %v5996, %v5992
    %v6937 = vpack.c.b16 %v5997, %v5993
    %v6938 = vpack.c.b16 %v6002, %v5998
    %v6939 = vpack.c.b16 %v6003, %v5999
    %v6940 = vpack.c.b16 %v6004, %v6000
    %v6941 = vpack.c.b16 %v6005, %v6001
    %v6942 = vpack.c.b16 %v6010, %v6006
    %v6943 = vpack.c.b16 %v6011, %v6007
    %v6944 = vpack.c.b16 %v6012, %v6008
    %v6945 = vpack.c.b16 %v6013, %v6009
    %v6946 = vpack.c.b16 %v6018, %v6014
    %v6947 = vpack.c.b16 %v6019, %v6015
    %v6948 = vpack.c.b16 %v6020, %v6016
    %v6949 = vpack.c.b16 %v6021, %v6017
    %v6950 = vpack.c.b16 %v6026, %v6022
    %v6951 = vpack.c.b16 %v6027, %v6023
    %v6952 = vpack.c.b16 %v6028, %v6024
    %v6953 = vpack.c.b16 %v6029, %v6025
    %v6954 = vpack.c.b16 %v6034, %v6030
    %v6955 = vpack.c.b16 %v6035, %v6031
    %v6956 = vpack.c.b16 %v6036, %v6032
    %v6957 = vpack.c.b16 %v6037, %v6033
    %v6958 = vpack.c.b16 %v6042, %v6038
    %v6959 = vpack.c.b16 %v6043, %v6039
    %v6960 = vpack.c.b16 %v6044, %v6040
    %v6961 = vpack.c.b16 %v6045, %v6041
    %v6962 = vpack.c.b16 %v6050, %v6046
    %v6963 = vpack.c.b16 %v6051, %v6047
    %v6964 = vpack.c.b16 %v6052, %v6048
    %v6965 = vpack.c.b16 %v6053, %v6049
    %v6966 = vpack.c.b16 %v6058, %v6054
    %v6967 = vpack.c.b16 %v6059, %v6055
    %v6968 = vpack.c.b16 %v6060, %v6056
    %v6969 = vpack.c.b16 %v6061, %v6057
    %v6970 = vpack.c.b16 %v6066, %v6062
    %v6971 = vpack.c.b16 %v6067, %v6063
    %v6972 = vpack.c.b16 %v6068, %v6064
    %v6973 = vpack.c.b16 %v6069, %v6065
    %v6974 = vpack.c.b16 %v6074, %v6070
    %v6975 = vpack.c.b16 %v6075, %v6071
    %v6976 = vpack.c.b16 %v6076, %v6072
    %v6977 = vpack.c.b16 %v6077, %v6073
    %v6978 = vpack.c.b16 %v6082, %v6078
    %v6979 = vpack.c.b16 %v6083, %v6079
    %v6980 = vpack.c.b16 %v6084, %v6080
    %v6981 = vpack.c.b16 %v6085, %v6081
    %v6982 = vpack.c.b16 %v6090, %v6086
    %v6983 = vpack.c.b16 %v6091, %v6087
    %v6984 = vpack.c.b16 %v6092, %v6088
    %v6985 = vpack.c.b16 %v6093, %v6089
    %v6986 = vpack.c.b16 %v6098, %v6094
    %v6987 = vpack.c.b16 %v6099, %v6095
    %v6988 = vpack.c.b16 %v6100, %v6096
    %v6989 = vpack.c.b16 %v6101, %v6097
    %v6990 = vpack.c.b16 %v6106, %v6102
    %v6991 = vpack.c.b16 %v6107, %v6103
    %v6992 = vpack.c.b16 %v6108, %v6104
    %v6993 = vpack.c.b16 %v6109, %v6105
    %v6994 = vpack.c.b16 %v6114, %v6110
    %v6995 = vpack.c.b16 %v6115, %v6111
    %v6996 = vpack.c.b16 %v6116, %v6112
    %v6997 = vpack.c.b16 %v6117, %v6113
    %v6998 = vpack.c.b16 %v6122, %v6118
    %v6999 = vpack.c.b16 %v6123, %v6119
    %v7000 = vpack.c.b16 %v6124, %v6120
    %v7001 = vpack.c.b16 %v6125, %v6121
    %v7002 = vpack.c.b16 %v6130, %v6126
    %v7003 = vpack.c.b16 %v6131, %v6127
    %v7004 = vpack.c.b16 %v6132, %v6128
    %v7005 = vpack.c.b16 %v6133, %v6129
    %v7006 = vpack.c.b16 %v6138, %v6134
    %v7007 = vpack.c.b16 %v6139, %v6135
    %v7008 = vpack.c.b16 %v6140, %v6136
    %v7009 = vpack.c.b16 %v6141, %v6137
    %v7010 = vpack.c.b16 %v6146, %v6142
    %v7011 = vpack.c.b16 %v6147, %v6143
    %v7012 = vpack.c.b16 %v6148, %v6144
    %v7013 = vpack.c.b16 %v6149, %v6145
    %v7014 = vpack.c.b16 %v6154, %v6150
    %v7015 = vpack.c.b16 %v6155, %v6151
    %v7016 = vpack.c.b16 %v6156, %v6152
    %v7017 = vpack.c.b16 %v6157, %v6153
    %v7018 = vpack.c.b16 %v6162, %v6158
    %v7019 = vpack.c.b16 %v6163, %v6159
    %v7020 = vpack.c.b16 %v6164, %v6160
    %v7021 = vpack.c.b16 %v6165, %v6161
    %v7022 = vpack.c.b16 %v6170, %v6166
    %v7023 = vpack.c.b16 %v6171, %v6167
    %v7024 = vpack.c.b16 %v6172, %v6168
    %v7025 = vpack.c.b16 %v6173, %v6169
    %v7026 = vpack.c.b16 %v6178, %v6174
    %v7027 = vpack.c.b16 %v6179, %v6175
    %v7028 = vpack.c.b16 %v6180, %v6176
    %v7029 = vpack.c.b16 %v6181, %v6177
    %v7030 = vpack.c.b16 %v6186, %v6182
    %v7031 = vpack.c.b16 %v6187, %v6183
    %v7032 = vpack.c.b16 %v6188, %v6184
    %v7033 = vpack.c.b16 %v6189, %v6185
    %v7034 = vpack.c.b16 %v6194, %v6190
    %v7035 = vpack.c.b16 %v6195, %v6191
    %v7036 = vpack.c.b16 %v6196, %v6192
    %v7037 = vpack.c.b16 %v6197, %v6193
    %v7038 = vpack.c.b16 %v6202, %v6198
    %v7039 = vpack.c.b16 %v6203, %v6199
    %v7040 = vpack.c.b16 %v6204, %v6200
    %v7041 = vpack.c.b16 %v6205, %v6201
    %v7042 = vpack.c.b16 %v6210, %v6206
    %v7043 = vpack.c.b16 %v6211, %v6207
    %v7044 = vpack.c.b16 %v6212, %v6208
    %v7045 = vpack.c.b16 %v6213, %v6209
    %v7046 = vpack.c.b16 %v6218, %v6214
    %v7047 = vpack.c.b16 %v6219, %v6215
    %v7048 = vpack.c.b16 %v6220, %v6216
    %v7049 = vpack.c.b16 %v6221, %v6217
    %v7050 = vpack.c.b16 %v6226, %v6222
    %v7051 = vpack.c.b16 %v6227, %v6223
    %v7052 = vpack.c.b16 %v6228, %v6224
    %v7053 = vpack.c.b16 %v6229, %v6225
    %v7054 = vpack.c.b16 %v6234, %v6230
    %v7055 = vpack.c.b16 %v6235, %v6231
    %v7056 = vpack.c.b16 %v6236, %v6232
    %v7057 = vpack.c.b16 %v6237, %v6233
    %v7058 = vpack.c.b16 %v6242, %v6238
    %v7059 = vpack.c.b16 %v6243, %v6239
    %v7060 = vpack.c.b16 %v6244, %v6240
    %v7061 = vpack.c.b16 %v6245, %v6241
    %v7062 = vpack.c.b16 %v6250, %v6246
    %v7063 = vpack.c.b16 %v6251, %v6247
    %v7064 = vpack.c.b16 %v6252, %v6248
    %v7065 = vpack.c.b16 %v6253, %v6249
    %v7066 = vpack.c.b16 %v6258, %v6254
    %v7067 = vpack.c.b16 %v6259, %v6255
    %v7068 = vpack.c.b16 %v6260, %v6256
    %v7069 = vpack.c.b16 %v6261, %v6257
    %v7070 = vpack.c.b16 %v6266, %v6262
    %v7071 = vpack.c.b16 %v6267, %v6263
    %v7072 = vpack.c.b16 %v6268, %v6264
    %v7073 = vpack.c.b16 %v6269, %v6265
    %v7074 = vpack.c.b16 %v6274, %v6270
    %v7075 = vpack.c.b16 %v6275, %v6271
    %v7076 = vpack.c.b16 %v6276, %v6272
    %v7077 = vpack.c.b16 %v6277, %v6273
    %v7078 = vpack.c.b16 %v6282, %v6278
    %v7079 = vpack.c.b16 %v6283, %v6279
    %v7080 = vpack.c.b16 %v6284, %v6280
    %v7081 = vpack.c.b16 %v6285, %v6281
    %v7082 = vpack.c.b16 %v6290, %v6286
    %v7083 = vpack.c.b16 %v6291, %v6287
    %v7084 = vpack.c.b16 %v6292, %v6288
    %v7085 = vpack.c.b16 %v6293, %v6289
    %v7086 = vpack.c.b16 %v6298, %v6294
    %v7087 = vpack.c.b16 %v6299, %v6295
    %v7088 = vpack.c.b16 %v6300, %v6296
    %v7089 = vpack.c.b16 %v6301, %v6297
    %v7090 = vpack.c.b16 %v6306, %v6302
    %v7091 = vpack.c.b16 %v6307, %v6303
    %v7092 = vpack.c.b16 %v6308, %v6304
    %v7093 = vpack.c.b16 %v6309, %v6305
    %v7094 = vpack.c.b16 %v6314, %v6310
    %v7095 = vpack.c.b16 %v6315, %v6311
    %v7096 = vpack.c.b16 %v6316, %v6312
    %v7097 = vpack.c.b16 %v6317, %v6313
    %v7098 = vpack.c.b16 %v6322, %v6318
    %v7099 = vpack.c.b16 %v6323, %v6319
    %v7100 = vpack.c.b16 %v6324, %v6320
    %v7101 = vpack.c.b16 %v6325, %v6321
    %v7102 = vpack.c.b16 %v6330, %v6326
    %v7103 = vpack.c.b16 %v6331, %v6327
    %v7104 = vpack.c.b16 %v6332, %v6328
    %v7105 = vpack.c.b16 %v6333, %v6329
    %v7106 = vpack.c.b16 %v6338, %v6334
    %v7107 = vpack.c.b16 %v6339, %v6335
    %v7108 = vpack.c.b16 %v6340, %v6336
    %v7109 = vpack.c.b16 %v6341, %v6337
    %v7110 = vpack.c.b16 %v6346, %v6342
    %v7111 = vpack.c.b16 %v6347, %v6343
    %v7112 = vpack.c.b16 %v6348, %v6344
    %v7113 = vpack.c.b16 %v6349, %v6345
    %v7114 = vpack.c.b16 %v6354, %v6350
    %v7115 = vpack.c.b16 %v6355, %v6351
    %v7116 = vpack.c.b16 %v6356, %v6352
    %v7117 = vpack.c.b16 %v6357, %v6353
    %v7118 = vpack.c.b16 %v6362, %v6358
    %v7119 = vpack.c.b16 %v6363, %v6359
    %v7120 = vpack.c.b16 %v6364, %v6360
    %v7121 = vpack.c.b16 %v6365, %v6361
    %v7122 = vpack.c.b16 %v6370, %v6366
    %v7123 = vpack.c.b16 %v6371, %v6367
    %v7124 = vpack.c.b16 %v6372, %v6368
    %v7125 = vpack.c.b16 %v6373, %v6369
    %v7126 = vpack.c.b16 %v6378, %v6374
    %v7127 = vpack.c.b16 %v6379, %v6375
    %v7128 = vpack.c.b16 %v6380, %v6376
    %v7129 = vpack.c.b16 %v6381, %v6377
    %v7130 = vpack.c.b16 %v6386, %v6382
    %v7131 = vpack.c.b16 %v6387, %v6383
    %v7132 = vpack.c.b16 %v6388, %v6384
    %v7133 = vpack.c.b16 %v6389, %v6385
    %v7134 = vpack.c.b16 %v6394, %v6390
    %v7135 = vpack.c.b16 %v6395, %v6391
    %v7136 = vpack.c.b16 %v6396, %v6392
    %v7137 = vpack.c.b16 %v6397, %v6393
    %v7138 = vpack.c.b16 %v6402, %v6398
    %v7139 = vpack.c.b16 %v6403, %v6399
    %v7140 = vpack.c.b16 %v6404, %v6400
    %v7141 = vpack.c.b16 %v6405, %v6401
    %v7142 = vpack.c.b16 %v6410, %v6406
    %v7143 = vpack.c.b16 %v6411, %v6407
    %v7144 = vpack.c.b16 %v6412, %v6408
    %v7145 = vpack.c.b16 %v6413, %v6409
    %v7146 = vpack.c.b16 %v6418, %v6414
    %v7147 = vpack.c.b16 %v6419, %v6415
    %v7148 = vpack.c.b16 %v6420, %v6416
    %v7149 = vpack.c.b16 %v6421, %v6417
    %v7150 = vpack.c.b16 %v6426, %v6422
    %v7151 = vpack.c.b16 %v6427, %v6423
    %v7152 = vpack.c.b16 %v6428, %v6424
    %v7153 = vpack.c.b16 %v6429, %v6425
    %v7154 = vpack.c.b16 %v6434, %v6430
    %v7155 = vpack.c.b16 %v6435, %v6431
    %v7156 = vpack.c.b16 %v6436, %v6432
    %v7157 = vpack.c.b16 %v6437, %v6433
    %v7158 = vpack.c.b16 %v6442, %v6438
    %v7159 = vpack.c.b16 %v6443, %v6439
    %v7160 = vpack.c.b16 %v6444, %v6440
    %v7161 = vpack.c.b16 %v6445, %v6441
    %v7162 = vpack.c.b16 %v6450, %v6446
    %v7163 = vpack.c.b16 %v6451, %v6447
    %v7164 = vpack.c.b16 %v6452, %v6448
    %v7165 = vpack.c.b16 %v6453, %v6449
    %v7166 = vpack.c.b16 %v6458, %v6454
    %v7167 = vpack.c.b16 %v6459, %v6455
    %v7168 = vpack.c.b16 %v6460, %v6456
    %v7169 = vpack.c.b16 %v6461, %v6457
    %v7170 = vpack.c.b16 %v6466, %v6462
    %v7171 = vpack.c.b16 %v6467, %v6463
    %v7172 = vpack.c.b16 %v6468, %v6464
    %v7173 = vpack.c.b16 %v6469, %v6465
    %v7174 = vpack.c.b16 %v6474, %v6470
    %v7175 = vpack.c.b16 %v6475, %v6471
    %v7176 = vpack.c.b16 %v6476, %v6472
    %v7177 = vpack.c.b16 %v6477, %v6473
    %v7178 = vpack.c.b16 %v6482, %v6478
    %v7179 = vpack.c.b16 %v6483, %v6479
    %v7180 = vpack.c.b16 %v6484, %v6480
    %v7181 = vpack.c.b16 %v6485, %v6481
    %v7182 = vpack.c.b16 %v6490, %v6486
    %v7183 = vpack.c.b16 %v6491, %v6487
    %v7184 = vpack.c.b16 %v6492, %v6488
    %v7185 = vpack.c.b16 %v6493, %v6489
    %v7186 = vpack.c.b16 %v6498, %v6494
    %v7187 = vpack.c.b16 %v6499, %v6495
    %v7188 = vpack.c.b16 %v6500, %v6496
    %v7189 = vpack.c.b16 %v6501, %v6497
    %v7190 = vpack.c.b16 %v6506, %v6502
    %v7191 = vpack.c.b16 %v6507, %v6503
    %v7192 = vpack.c.b16 %v6508, %v6504
    %v7193 = vpack.c.b16 %v6509, %v6505
    %v7194 = vpack.c.b16 %v6514, %v6510
    %v7195 = vpack.c.b16 %v6515, %v6511
    %v7196 = vpack.c.b16 %v6516, %v6512
    %v7197 = vpack.c.b16 %v6517, %v6513
    %v7198 = vpack.c.b16 %v6522, %v6518
    %v7199 = vpack.c.b16 %v6523, %v6519
    %v7200 = vpack.c.b16 %v6524, %v6520
    %v7201 = vpack.c.b16 %v6525, %v6521
    %v7202 = vpack.c.b16 %v6530, %v6526
    %v7203 = vpack.c.b16 %v6531, %v6527
    %v7204 = vpack.c.b16 %v6532, %v6528
    %v7205 = vpack.c.b16 %v6533, %v6529
    %v7206 = vpack.c.b16 %v6538, %v6534
    %v7207 = vpack.c.b16 %v6539, %v6535
    %v7208 = vpack.c.b16 %v6540, %v6536
    %v7209 = vpack.c.b16 %v6541, %v6537
    %v7210 = vpack.c.b16 %v6546, %v6542
    %v7211 = vpack.c.b16 %v6547, %v6543
    %v7212 = vpack.c.b16 %v6548, %v6544
    %v7213 = vpack.c.b16 %v6549, %v6545
    %v7214 = vpack.c.b16 %v6554, %v6550
    %v7215 = vpack.c.b16 %v6555, %v6551
    %v7216 = vpack.c.b16 %v6556, %v6552
    %v7217 = vpack.c.b16 %v6557, %v6553
    %v7218 = vpack.c.b16 %v6562, %v6558
    %v7219 = vpack.c.b16 %v6563, %v6559
    %v7220 = vpack.c.b16 %v6564, %v6560
    %v7221 = vpack.c.b16 %v6565, %v6561
    %v7222 = vpack.c.b16 %v6570, %v6566
    %v7223 = vpack.c.b16 %v6571, %v6567
    %v7224 = vpack.c.b16 %v6572, %v6568
    %v7225 = vpack.c.b16 %v6573, %v6569
    %v7226 = vpack.c.b16 %v6578, %v6574
    %v7227 = vpack.c.b16 %v6579, %v6575
    %v7228 = vpack.c.b16 %v6580, %v6576
    %v7229 = vpack.c.b16 %v6581, %v6577
    %v7230 = vpack.c.b16 %v6586, %v6582
    %v7231 = vpack.c.b16 %v6587, %v6583
    %v7232 = vpack.c.b16 %v6588, %v6584
    %v7233 = vpack.c.b16 %v6589, %v6585
    %v7234 = vpack.c.b16 %v6594, %v6590
    %v7235 = vpack.c.b16 %v6595, %v6591
    %v7236 = vpack.c.b16 %v6596, %v6592
    %v7237 = vpack.c.b16 %v6597, %v6593
    %v7238 = vpack.c.b16 %v6602, %v6598
    %v7239 = vpack.c.b16 %v6603, %v6599
    %v7240 = vpack.c.b16 %v6604, %v6600
    %v7241 = vpack.c.b16 %v6605, %v6601
    %v7242 = vpack.c.b16 %v6610, %v6606
    %v7243 = vpack.c.b16 %v6611, %v6607
    %v7244 = vpack.c.b16 %v6612, %v6608
    %v7245 = vpack.c.b16 %v6613, %v6609
    %v7246 = vpack.c.b16 %v6618, %v6614
    %v7247 = vpack.c.b16 %v6619, %v6615
    %v7248 = vpack.c.b16 %v6620, %v6616
    %v7249 = vpack.c.b16 %v6621, %v6617
    %v7250 = vpack.c.b16 %v6626, %v6622
    %v7251 = vpack.c.b16 %v6627, %v6623
    %v7252 = vpack.c.b16 %v6628, %v6624
    %v7253 = vpack.c.b16 %v6629, %v6625
    %v7254 = vpack.c.b16 %v6634, %v6630
    %v7255 = vpack.c.b16 %v6635, %v6631
    %v7256 = vpack.c.b16 %v6636, %v6632
    %v7257 = vpack.c.b16 %v6637, %v6633
    %v7258 = vpack.c.b16 %v6642, %v6638
    %v7259 = vpack.c.b16 %v6643, %v6639
    %v7260 = vpack.c.b16 %v6644, %v6640
    %v7261 = vpack.c.b16 %v6645, %v6641
    %v7262 = vpack.c.b16 %v6650, %v6646
    %v7263 = vpack.c.b16 %v6651, %v6647
    %v7264 = vpack.c.b16 %v6652, %v6648
    %v7265 = vpack.c.b16 %v6653, %v6649
    %v7266 = vpack.c.b16 %v6658, %v6654
    %v7267 = vpack.c.b16 %v6659, %v6655
    %v7268 = vpack.c.b16 %v6660, %v6656
    %v7269 = vpack.c.b16 %v6661, %v6657
    %v7270 = vpack.c.b16 %v6666, %v6662
    %v7271 = vpack.c.b16 %v6667, %v6663
    %v7272 = vpack.c.b16 %v6668, %v6664
    %v7273 = vpack.c.b16 %v6669, %v6665
    %v7274 = vpack.c.b16 %v6674, %v6670
    %v7275 = vpack.c.b16 %v6675, %v6671
    %v7276 = vpack.c.b16 %v6676, %v6672
    %v7277 = vpack.c.b16 %v6677, %v6673
    %v7278 = vpack.c.b16 %v6682, %v6678
    %v7279 = vpack.c.b16 %v6683, %v6679
    %v7280 = vpack.c.b16 %v6684, %v6680
    %v7281 = vpack.c.b16 %v6685, %v6681
    %v7282 = vpack.c.b16 %v6690, %v6686
    %v7283 = vpack.c.b16 %v6691, %v6687
    %v7284 = vpack.c.b16 %v6692, %v6688
    %v7285 = vpack.c.b16 %v6693, %v6689
    %v7286 = vpack.c.b16 %v6698, %v6694
    %v7287 = vpack.c.b16 %v6699, %v6695
    %v7288 = vpack.c.b16 %v6700, %v6696
    %v7289 = vpack.c.b16 %v6701, %v6697
    %v7290 = vpack.c.b16 %v6706, %v6702
    %v7291 = vpack.c.b16 %v6707, %v6703
    %v7292 = vpack.c.b16 %v6708, %v6704
    %v7293 = vpack.c.b16 %v6709, %v6705
    %v7294 = vpack.c.b16 %v6714, %v6710
    %v7295 = vpack.c.b16 %v6715, %v6711
    %v7296 = vpack.c.b16 %v6716, %v6712
    %v7297 = vpack.c.b16 %v6717, %v6713
    %v7298 = vpack.c.b16 %v6722, %v6718
    %v7299 = vpack.c.b16 %v6723, %v6719
    %v7300 = vpack.c.b16 %v6724, %v6720
    %v7301 = vpack.c.b16 %v6725, %v6721
    %7878 = vmatprep.subr.bf16.mxu0 %v6727
    %7879 = vmatpush1.bf16.msra.mxu0 %v6726
    %7880 = vmatprep.subr.bf16.mxu0 %v6731
    %7881 = vmatpush1.bf16.msra.mxu0 %v6730
    %7882 = vmatprep.subr.bf16.mxu0 %v6735
    %7883 = vmatpush1.bf16.msra.mxu0 %v6734
    %7884 = vmatprep.subr.bf16.mxu0 %v6739
    %7885 = vmatpush1.bf16.msra.mxu0 %v6738
    %7886 = vmatprep.subr.bf16.mxu0 %v6743
    %7887 = vmatpush1.bf16.msra.mxu0 %v6742
    %7888 = vmatprep.subr.bf16.mxu0 %v6747
    %7889 = vmatpush1.bf16.msra.mxu0 %v6746
    %7890 = vmatprep.subr.bf16.mxu0 %v6751
    %7891 = vmatpush1.bf16.msra.mxu0 %v6750
    %7892 = vmatprep.subr.bf16.mxu0 %v6755
    %7893 = vmatpush1.bf16.msra.mxu0 %v6754
    %7894 = vmatprep.subr.bf16.mxu0 %v6759
    %7895 = vmatpush1.bf16.msra.mxu0 %v6758
    %7896 = vmatprep.subr.bf16.mxu0 %v6763
    %7897 = vmatpush1.bf16.msra.mxu0 %v6762
    %7898 = vmatprep.subr.bf16.mxu0 %v6767
    %7899 = vmatpush1.bf16.msra.mxu0 %v6766
    %7900 = vmatprep.subr.bf16.mxu0 %v6771
    %7901 = vmatpush1.bf16.msra.mxu0 %v6770
    %7902 = vmatprep.subr.bf16.mxu0 %v6775
    %7903 = vmatpush1.bf16.msra.mxu0 %v6774
    %7904 = vmatprep.subr.bf16.mxu0 %v6779
    %7905 = vmatpush1.bf16.msra.mxu0 %v6778
    %7906 = vmatprep.subr.bf16.mxu0 %v6783
    %7907 = vmatpush1.bf16.msra.mxu0 %v6782
    %7908 = vmatprep.subr.bf16.mxu0 %v6787
    %7909 = vmatpush1.bf16.msra.mxu0 %v6786
    %7910 = vmatprep.mubr.bf16.mxu0 %v4279
    %7911 = vmatmul.mubr.bf16.gmra.mrb[0].mxu0 %v4278
    %v7912 = vpop.f32.mrb[0].mxu0
    %v7913 = vadd.f32 0.0, %v7912
    %v7914 = vpop.f32.mrb[0].mxu0
    %v7915 = vadd.f32 0.0, %v7914
    %v7916 = vpop.f32.mrb[0].mxu0
    %v7917 = vadd.f32 0.0, %v7916
    %v7918 = vpop.f32.mrb[0].mxu0
    %v7919 = vadd.f32 0.0, %v7918
    %7920 = vmatprep.mubr.bf16.mxu0 %v4297
    %7921 = vmatmul.mubr.bf16.gmra.mrb[0].mxu0 %v4296
    %v7922 = vpop.f32.mrb[0].mxu0
    %v7923 = vadd.f32 0.0, %v7922
    %v7924 = vpop.f32.mrb[0].mxu0
    %v7925 = vadd.f32 0.0, %v7924
    %v7926 = vpop.f32.mrb[0].mxu0
    %v7927 = vadd.f32 0.0, %v7926
    %v7928 = vpop.f32.mrb[0].mxu0
    %v7929 = vadd.f32 0.0, %v7928
    %7930 = vmatprep.mubr.bf16.mxu0 %v4315
    %7931 = vmatmul.mubr.bf16.gmra.mrb[0].mxu0 %v4314
    %v7932 = vpop.f32.mrb[0].mxu0
    %v7933 = vadd.f32 0.0, %v7932
    %v7934 = vpop.f32.mrb[0].mxu0
    %v7935 = vadd.f32 0.0, %v7934
    %v7936 = vpop.f32.mrb[0].mxu0
    %v7937 = vadd.f32 0.0, %v7936
    %v7938 = vpop.f32.mrb[0].mxu0
    %v7939 = vadd.f32 0.0, %v7938
    %7940 = vmatprep.mubr.bf16.mxu0 %v4333
    %7941 = vmatmul.mubr.bf16.gmra.mrb[0].mxu0 %v4332
    %v7942 = vpop.f32.mrb[0].mxu0
    %v7943 = vadd.f32 0.0, %v7942
    %v7944 = vpop.f32.mrb[0].mxu0
    %v7945 = vadd.f32 0.0, %v7944
    %v7946 = vpop.f32.mrb[0].mxu0
    %v7947 = vadd.f32 0.0, %v7946
    %v7948 = vpop.f32.mrb[0].mxu0
    %v7949 = vadd.f32 0.0, %v7948
    %7950 = vmatprep.mubr.bf16.mxu0 %v4351
    %7951 = vmatmul.mubr.bf16.gmra.mrb[0].mxu0 %v4350
    %v7952 = vpop.f32.mrb[0].mxu0
    %v7953 = vadd.f32 0.0, %v7952
    %v7954 = vpop.f32.mrb[0].mxu0
    %v7955 = vadd.f32 0.0, %v7954
    %v7956 = vpop.f32.mrb[0].mxu0
    %v7957 = vadd.f32 0.0, %v7956
    %v7958 = vpop.f32.mrb[0].mxu0
    %v7959 = vadd.f32 0.0, %v7958
    %7960 = vmatprep.mubr.bf16.mxu0 %v4369
    %7961 = vmatmul.mubr.bf16.gmra.mrb[0].mxu0 %v4368
    %v7962 = vpop.f32.mrb[0].mxu0
    %v7963 = vadd.f32 0.0, %v7962
    %v7964 = vpop.f32.mrb[0].mxu0
    %v7965 = vadd.f32 0.0, %v7964
    %v7966 = vpop.f32.mrb[0].mxu0
    %v7967 = vadd.f32 0.0, %v7966
    %v7968 = vpop.f32.mrb[0].mxu0
    %v7969 = vadd.f32 0.0, %v7968
    %7970 = vmatprep.mubr.bf16.mxu0 %v4387
    %7971 = vmatmul.mubr.bf16.gmra.mrb[0].mxu0 %v4386
    %v7972 = vpop.f32.mrb[0].mxu0
    %v7973 = vadd.f32 0.0, %v7972
    %v7974 = vpop.f32.mrb[0].mxu0
    %v7975 = vadd.f32 0.0, %v7974
    %v7976 = vpop.f32.mrb[0].mxu0
    %v7977 = vadd.f32 0.0, %v7976
    %v7978 = vpop.f32.mrb[0].mxu0
    %v7979 = vadd.f32 0.0, %v7978
    %7980 = vmatprep.mubr.bf16.mxu0 %v4405
    %7981 = vmatmul.mubr.bf16.gmra.mrb[0].mxu0 %v4404
    %v7982 = vpop.f32.mrb[0].mxu0
    %v7983 = vadd.f32 0.0, %v7982
    %v7984 = vpop.f32.mrb[0].mxu0
    %v7985 = vadd.f32 0.0, %v7984
    %v7986 = vpop.f32.mrb[0].mxu0
    %v7987 = vadd.f32 0.0, %v7986
    %v7988 = vpop.f32.mrb[0].mxu0
    %v7989 = vadd.f32 0.0, %v7988
    %7990 = vdwg.mxu0
    %7991 = vmatprep.subr.bf16.mxu0 %v6791
    %7992 = vmatpush1.bf16.msra.mxu0 %v6790
    %7993 = vmatprep.subr.bf16.mxu0 %v6795
    %7994 = vmatpush1.bf16.msra.mxu0 %v6794
    %7995 = vmatprep.subr.bf16.mxu0 %v6799
    %7996 = vmatpush1.bf16.msra.mxu0 %v6798
    %7997 = vmatprep.subr.bf16.mxu0 %v6803
    %7998 = vmatpush1.bf16.msra.mxu0 %v6802
    %7999 = vmatprep.subr.bf16.mxu0 %v6807
    %8000 = vmatpush1.bf16.msra.mxu0 %v6806
    %8001 = vmatprep.subr.bf16.mxu0 %v6811
    %8002 = vmatpush1.bf16.msra.mxu0 %v6810
    %8003 = vmatprep.subr.bf16.mxu0 %v6815
    %8004 = vmatpush1.bf16.msra.mxu0 %v6814
    %8005 = vmatprep.subr.bf16.mxu0 %v6819
    %8006 = vmatpush1.bf16.msra.mxu0 %v6818
    %8007 = vmatprep.subr.bf16.mxu0 %v6823
    %8008 = vmatpush1.bf16.msra.mxu0 %v6822
    %8009 = vmatprep.subr.bf16.mxu0 %v6827
    %8010 = vmatpush1.bf16.msra.mxu0 %v6826
    %8011 = vmatprep.subr.bf16.mxu0 %v6831
    %8012 = vmatpush1.bf16.msra.mxu0 %v6830
    %8013 = vmatprep.subr.bf16.mxu0 %v6835
    %8014 = vmatpush1.bf16.msra.mxu0 %v6834
    %8015 = vmatprep.subr.bf16.mxu0 %v6839
    %8016 = vmatpush1.bf16.msra.mxu0 %v6838
    %8017 = vmatprep.subr.bf16.mxu0 %v6843
    %8018 = vmatpush1.bf16.msra.mxu0 %v6842
    %8019 = vmatprep.subr.bf16.mxu0 %v6847
    %8020 = vmatpush1.bf16.msra.mxu0 %v6846
    %8021 = vmatprep.subr.bf16.mxu0 %v6851
    %8022 = vmatpush1.bf16.msra.mxu0 %v6850
    %8023 = vmatprep.mubr.bf16.mxu0 %v4281
    %8024 = vmatmul.mubr.bf16.gmra.mrb[0].mxu0 %v4280
    %v8025 = vpop.f32.mrb[0].mxu0
    %v8026 = vadd.f32 %v7913, %v8025
    %v8027 = vpop.f32.mrb[0].mxu0
    %v8028 = vadd.f32 %v7915, %v8027
    %v8029 = vpop.f32.mrb[0].mxu0
    %v8030 = vadd.f32 %v7917, %v8029
    %v8031 = vpop.f32.mrb[0].mxu0
    %v8032 = vadd.f32 %v7919, %v8031
    %8033 = vmatprep.mubr.bf16.mxu0 %v4299
    %8034 = vmatmul.mubr.bf16.gmra.mrb[0].mxu0 %v4298
    %v8035 = vpop.f32.mrb[0].mxu0
    %v8036 = vadd.f32 %v7923, %v8035
    %v8037 = vpop.f32.mrb[0].mxu0
    %v8038 = vadd.f32 %v7925, %v8037
    %v8039 = vpop.f32.mrb[0].mxu0
    %v8040 = vadd.f32 %v7927, %v8039
    %v8041 = vpop.f32.mrb[0].mxu0
    %v8042 = vadd.f32 %v7929, %v8041
    %8043 = vmatprep.mubr.bf16.mxu0 %v4317
    %8044 = vmatmul.mubr.bf16.gmra.mrb[0].mxu0 %v4316
    %v8045 = vpop.f32.mrb[0].mxu0
    %v8046 = vadd.f32 %v7933, %v8045
    %v8047 = vpop.f32.mrb[0].mxu0
    %v8048 = vadd.f32 %v7935, %v8047
    %v8049 = vpop.f32.mrb[0].mxu0
    %v8050 = vadd.f32 %v7937, %v8049
    %v8051 = vpop.f32.mrb[0].mxu0
    %v8052 = vadd.f32 %v7939, %v8051
    %8053 = vmatprep.mubr.bf16.mxu0 %v4335
    %8054 = vmatmul.mubr.bf16.gmra.mrb[0].mxu0 %v4334
    %v8055 = vpop.f32.mrb[0].mxu0
    %v8056 = vadd.f32 %v7943, %v8055
    %v8057 = vpop.f32.mrb[0].mxu0
    %v8058 = vadd.f32 %v7945, %v8057
    %v8059 = vpop.f32.mrb[0].mxu0
    %v8060 = vadd.f32 %v7947, %v8059
    %v8061 = vpop.f32.mrb[0].mxu0
    %v8062 = vadd.f32 %v7949, %v8061
    %8063 = vmatprep.mubr.bf16.mxu0 %v4353
    %8064 = vmatmul.mubr.bf16.gmra.mrb[0].mxu0 %v4352
    %v8065 = vpop.f32.mrb[0].mxu0
    %v8066 = vadd.f32 %v7953, %v8065
    %v8067 = vpop.f32.mrb[0].mxu0
    %v8068 = vadd.f32 %v7955, %v8067
    %v8069 = vpop.f32.mrb[0].mxu0
    %v8070 = vadd.f32 %v7957, %v8069
    %v8071 = vpop.f32.mrb[0].mxu0
    %v8072 = vadd.f32 %v7959, %v8071
    %8073 = vmatprep.mubr.bf16.mxu0 %v4371
    %8074 = vmatmul.mubr.bf16.gmra.mrb[0].mxu0 %v4370
    %v8075 = vpop.f32.mrb[0].mxu0
    %v8076 = vadd.f32 %v7963, %v8075
    %v8077 = vpop.f32.mrb[0].mxu0
    %v8078 = vadd.f32 %v7965, %v8077
    %v8079 = vpop.f32.mrb[0].mxu0
    %v8080 = vadd.f32 %v7967, %v8079
    %v8081 = vpop.f32.mrb[0].mxu0
    %v8082 = vadd.f32 %v7969, %v8081
    %8083 = vmatprep.mubr.bf16.mxu0 %v4389
    %8084 = vmatmul.mubr.bf16.gmra.mrb[0].mxu0 %v4388
    %v8085 = vpop.f32.mrb[0].mxu0
    %v8086 = vadd.f32 %v7973, %v8085
    %v8087 = vpop.f32.mrb[0].mxu0
    %v8088 = vadd.f32 %v7975, %v8087
    %v8089 = vpop.f32.mrb[0].mxu0
    %v8090 = vadd.f32 %v7977, %v8089
    %v8091 = vpop.f32.mrb[0].mxu0
    %v8092 = vadd.f32 %v7979, %v8091
    %8093 = vmatprep.mubr.bf16.mxu0 %v4407
    %8094 = vmatmul.mubr.bf16.gmra.mrb[0].mxu0 %v4406
    %v8095 = vpop.f32.mrb[0].mxu0
    %v8096 = vadd.f32 %v7983, %v8095
    %v8097 = vpop.f32.mrb[0].mxu0
    %v8098 = vadd.f32 %v7985, %v8097
    %v8099 = vpop.f32.mrb[0].mxu0
    %v8100 = vadd.f32 %v7987, %v8099
    %v8101 = vpop.f32.mrb[0].mxu0
    %v8102 = vadd.f32 %v7989, %v8101
    %8103 = vdwg.mxu0
    %8104 = vmatprep.subr.bf16.mxu0 %v6855
    %8105 = vmatpush1.bf16.msra.mxu0 %v6854
    %8106 = vmatprep.subr.bf16.mxu0 %v6859
    %8107 = vmatpush1.bf16.msra.mxu0 %v6858
    %8108 = vmatprep.subr.bf16.mxu0 %v6863
    %8109 = vmatpush1.bf16.msra.mxu0 %v6862
    %8110 = vmatprep.subr.bf16.mxu0 %v6867
    %8111 = vmatpush1.bf16.msra.mxu0 %v6866
    %8112 = vmatprep.subr.bf16.mxu0 %v6871
    %8113 = vmatpush1.bf16.msra.mxu0 %v6870
    %8114 = vmatprep.subr.bf16.mxu0 %v6875
    %8115 = vmatpush1.bf16.msra.mxu0 %v6874
    %8116 = vmatprep.subr.bf16.mxu0 %v6879
    %8117 = vmatpush1.bf16.msra.mxu0 %v6878
    %8118 = vmatprep.subr.bf16.mxu0 %v6883
    %8119 = vmatpush1.bf16.msra.mxu0 %v6882
    %8120 = vmatprep.subr.bf16.mxu0 %v6887
    %8121 = vmatpush1.bf16.msra.mxu0 %v6886
    %8122 = vmatprep.subr.bf16.mxu0 %v6891
    %8123 = vmatpush1.bf16.msra.mxu0 %v6890
    %8124 = vmatprep.subr.bf16.mxu0 %v6895
    %8125 = vmatpush1.bf16.msra.mxu0 %v6894
    %8126 = vmatprep.subr.bf16.mxu0 %v6899
    %8127 = vmatpush1.bf16.msra.mxu0 %v6898
    %8128 = vmatprep.subr.bf16.mxu0 %v6903
    %8129 = vmatpush1.bf16.msra.mxu0 %v6902
    %8130 = vmatprep.subr.bf16.mxu0 %v6907
    %8131 = vmatpush1.bf16.msra.mxu0 %v6906
    %8132 = vmatprep.subr.bf16.mxu0 %v6911
    %8133 = vmatpush1.bf16.msra.mxu0 %v6910
    %8134 = vmatprep.subr.bf16.mxu0 %v6915
    %8135 = vmatpush1.bf16.msra.mxu0 %v6914
    %8136 = vmatprep.mubr.bf16.mxu0 %v4283
    %8137 = vmatmul.mubr.bf16.gmra.mrb[0].mxu0 %v4282
    %v8138 = vpop.f32.mrb[0].mxu0
    %v8139 = vadd.f32 %v8026, %v8138
    %v8140 = vpop.f32.mrb[0].mxu0
    %v8141 = vadd.f32 %v8028, %v8140
    %v8142 = vpop.f32.mrb[0].mxu0
    %v8143 = vadd.f32 %v8030, %v8142
    %v8144 = vpop.f32.mrb[0].mxu0
    %v8145 = vadd.f32 %v8032, %v8144
    %8146 = vmatprep.mubr.bf16.mxu0 %v4301
    %8147 = vmatmul.mubr.bf16.gmra.mrb[0].mxu0 %v4300
    %v8148 = vpop.f32.mrb[0].mxu0
    %v8149 = vadd.f32 %v8036, %v8148
    %v8150 = vpop.f32.mrb[0].mxu0
    %v8151 = vadd.f32 %v8038, %v8150
    %v8152 = vpop.f32.mrb[0].mxu0
    %v8153 = vadd.f32 %v8040, %v8152
    %v8154 = vpop.f32.mrb[0].mxu0
    %v8155 = vadd.f32 %v8042, %v8154
    %8156 = vmatprep.mubr.bf16.mxu0 %v4319
    %8157 = vmatmul.mubr.bf16.gmra.mrb[0].mxu0 %v4318
    %v8158 = vpop.f32.mrb[0].mxu0
    %v8159 = vadd.f32 %v8046, %v8158
    %v8160 = vpop.f32.mrb[0].mxu0
    %v8161 = vadd.f32 %v8048, %v8160
    %v8162 = vpop.f32.mrb[0].mxu0
    %v8163 = vadd.f32 %v8050, %v8162
    %v8164 = vpop.f32.mrb[0].mxu0
    %v8165 = vadd.f32 %v8052, %v8164
    %8166 = vmatprep.mubr.bf16.mxu0 %v4337
    %8167 = vmatmul.mubr.bf16.gmra.mrb[0].mxu0 %v4336
    %v8168 = vpop.f32.mrb[0].mxu0
    %v8169 = vadd.f32 %v8056, %v8168
    %v8170 = vpop.f32.mrb[0].mxu0
    %v8171 = vadd.f32 %v8058, %v8170
    %v8172 = vpop.f32.mrb[0].mxu0
    %v8173 = vadd.f32 %v8060, %v8172
    %v8174 = vpop.f32.mrb[0].mxu0
    %v8175 = vadd.f32 %v8062, %v8174
    %8176 = vmatprep.mubr.bf16.mxu0 %v4355
    %8177 = vmatmul.mubr.bf16.gmra.mrb[0].mxu0 %v4354
    %v8178 = vpop.f32.mrb[0].mxu0
    %v8179 = vadd.f32 %v8066, %v8178
    %v8180 = vpop.f32.mrb[0].mxu0
    %v8181 = vadd.f32 %v8068, %v8180
    %v8182 = vpop.f32.mrb[0].mxu0
    %v8183 = vadd.f32 %v8070, %v8182
    %v8184 = vpop.f32.mrb[0].mxu0
    %v8185 = vadd.f32 %v8072, %v8184
    %8186 = vmatprep.mubr.bf16.mxu0 %v4373
    %8187 = vmatmul.mubr.bf16.gmra.mrb[0].mxu0 %v4372
    %v8188 = vpop.f32.mrb[0].mxu0
    %v8189 = vadd.f32 %v8076, %v8188
    %v8190 = vpop.f32.mrb[0].mxu0
    %v8191 = vadd.f32 %v8078, %v8190
    %v8192 = vpop.f32.mrb[0].mxu0
    %v8193 = vadd.f32 %v8080, %v8192
    %v8194 = vpop.f32.mrb[0].mxu0
    %v8195 = vadd.f32 %v8082, %v8194
    %8196 = vmatprep.mubr.bf16.mxu0 %v4391
    %8197 = vmatmul.mubr.bf16.gmra.mrb[0].mxu0 %v4390
    %v8198 = vpop.f32.mrb[0].mxu0
    %v8199 = vadd.f32 %v8086, %v8198
    %v8200 = vpop.f32.mrb[0].mxu0
    %v8201 = vadd.f32 %v8088, %v8200
    %v8202 = vpop.f32.mrb[0].mxu0
    %v8203 = vadd.f32 %v8090, %v8202
    %v8204 = vpop.f32.mrb[0].mxu0
    %v8205 = vadd.f32 %v8092, %v8204
    %8206 = vmatprep.mubr.bf16.mxu0 %v4409
    %8207 = vmatmul.mubr.bf16.gmra.mrb[0].mxu0 %v4408
    %v8208 = vpop.f32.mrb[0].mxu0
    %v8209 = vadd.f32 %v8096, %v8208
    %v8210 = vpop.f32.mrb[0].mxu0
    %v8211 = vadd.f32 %v8098, %v8210
    %v8212 = vpop.f32.mrb[0].mxu0
    %v8213 = vadd.f32 %v8100, %v8212
    %v8214 = vpop.f32.mrb[0].mxu0
    %v8215 = vadd.f32 %v8102, %v8214
    %8216 = vdwg.mxu0
    %8217 = vmatprep.subr.bf16.mxu0 %v6919
    %8218 = vmatpush1.bf16.msra.mxu0 %v6918
    %8219 = vmatprep.subr.bf16.mxu0 %v6923
    %8220 = vmatpush1.bf16.msra.mxu0 %v6922
    %8221 = vmatprep.subr.bf16.mxu0 %v6927
    %8222 = vmatpush1.bf16.msra.mxu0 %v6926
    %8223 = vmatprep.subr.bf16.mxu0 %v6931
    %8224 = vmatpush1.bf16.msra.mxu0 %v6930
    %8225 = vmatprep.subr.bf16.mxu0 %v6935
    %8226 = vmatpush1.bf16.msra.mxu0 %v6934
    %8227 = vmatprep.subr.bf16.mxu0 %v6939
    %8228 = vmatpush1.bf16.msra.mxu0 %v6938
    %8229 = vmatprep.subr.bf16.mxu0 %v6943
    %8230 = vmatpush1.bf16.msra.mxu0 %v6942
    %8231 = vmatprep.subr.bf16.mxu0 %v6947
    %8232 = vmatpush1.bf16.msra.mxu0 %v6946
    %8233 = vmatprep.subr.bf16.mxu0 %v6951
    %8234 = vmatpush1.bf16.msra.mxu0 %v6950
    %8235 = vmatprep.subr.bf16.mxu0 %v6955
    %8236 = vmatpush1.bf16.msra.mxu0 %v6954
    %8237 = vmatprep.subr.bf16.mxu0 %v6959
    %8238 = vmatpush1.bf16.msra.mxu0 %v6958
    %8239 = vmatprep.subr.bf16.mxu0 %v6963
    %8240 = vmatpush1.bf16.msra.mxu0 %v6962
    %8241 = vmatprep.subr.bf16.mxu0 %v6967
    %8242 = vmatpush1.bf16.msra.mxu0 %v6966
    %8243 = vmatprep.subr.bf16.mxu0 %v6971
    %8244 = vmatpush1.bf16.msra.mxu0 %v6970
    %8245 = vmatprep.subr.bf16.mxu0 %v6975
    %8246 = vmatpush1.bf16.msra.mxu0 %v6974
    %8247 = vmatprep.subr.bf16.mxu0 %v6979
    %8248 = vmatpush1.bf16.msra.mxu0 %v6978
    %8249 = vmatprep.mubr.bf16.mxu0 %v4285
    %8250 = vmatmul.mubr.bf16.gmra.mrb[0].mxu0 %v4284
    %v8251 = vpop.f32.mrb[0].mxu0
    %v8252 = vadd.f32 %v8139, %v8251
    %v8253 = vpop.f32.mrb[0].mxu0
    %v8254 = vadd.f32 %v8141, %v8253
    %v8255 = vpop.f32.mrb[0].mxu0
    %v8256 = vadd.f32 %v8143, %v8255
    %v8257 = vpop.f32.mrb[0].mxu0
    %v8258 = vadd.f32 %v8145, %v8257
    %8259 = vmatprep.mubr.bf16.mxu0 %v4303
    %8260 = vmatmul.mubr.bf16.gmra.mrb[0].mxu0 %v4302
    %v8261 = vpop.f32.mrb[0].mxu0
    %v8262 = vadd.f32 %v8149, %v8261
    %v8263 = vpop.f32.mrb[0].mxu0
    %v8264 = vadd.f32 %v8151, %v8263
    %v8265 = vpop.f32.mrb[0].mxu0
    %v8266 = vadd.f32 %v8153, %v8265
    %v8267 = vpop.f32.mrb[0].mxu0
    %v8268 = vadd.f32 %v8155, %v8267
    %8269 = vmatprep.mubr.bf16.mxu0 %v4321
    %8270 = vmatmul.mubr.bf16.gmra.mrb[0].mxu0 %v4320
    %v8271 = vpop.f32.mrb[0].mxu0
    %v8272 = vadd.f32 %v8159, %v8271
    %v8273 = vpop.f32.mrb[0].mxu0
    %v8274 = vadd.f32 %v8161, %v8273
    %v8275 = vpop.f32.mrb[0].mxu0
    %v8276 = vadd.f32 %v8163, %v8275
    %v8277 = vpop.f32.mrb[0].mxu0
    %v8278 = vadd.f32 %v8165, %v8277
    %8279 = vmatprep.mubr.bf16.mxu0 %v4339
    %8280 = vmatmul.mubr.bf16.gmra.mrb[0].mxu0 %v4338
    %v8281 = vpop.f32.mrb[0].mxu0
    %v8282 = vadd.f32 %v8169, %v8281
    %v8283 = vpop.f32.mrb[0].mxu0
    %v8284 = vadd.f32 %v8171, %v8283
    %v8285 = vpop.f32.mrb[0].mxu0
    %v8286 = vadd.f32 %v8173, %v8285
    %v8287 = vpop.f32.mrb[0].mxu0
    %v8288 = vadd.f32 %v8175, %v8287
    %8289 = vmatprep.mubr.bf16.mxu0 %v4357
    %8290 = vmatmul.mubr.bf16.gmra.mrb[0].mxu0 %v4356
    %v8291 = vpop.f32.mrb[0].mxu0
    %v8292 = vadd.f32 %v8179, %v8291
    %v8293 = vpop.f32.mrb[0].mxu0
    %v8294 = vadd.f32 %v8181, %v8293
    %v8295 = vpop.f32.mrb[0].mxu0
    %v8296 = vadd.f32 %v8183, %v8295
    %v8297 = vpop.f32.mrb[0].mxu0
    %v8298 = vadd.f32 %v8185, %v8297
    %8299 = vmatprep.mubr.bf16.mxu0 %v4375
    %8300 = vmatmul.mubr.bf16.gmra.mrb[0].mxu0 %v4374
    %v8301 = vpop.f32.mrb[0].mxu0
    %v8302 = vadd.f32 %v8189, %v8301
    %v8303 = vpop.f32.mrb[0].mxu0
    %v8304 = vadd.f32 %v8191, %v8303
    %v8305 = vpop.f32.mrb[0].mxu0
    %v8306 = vadd.f32 %v8193, %v8305
    %v8307 = vpop.f32.mrb[0].mxu0
    %v8308 = vadd.f32 %v8195, %v8307
    %8309 = vmatprep.mubr.bf16.mxu0 %v4393
    %8310 = vmatmul.mubr.bf16.gmra.mrb[0].mxu0 %v4392
    %v8311 = vpop.f32.mrb[0].mxu0
    %v8312 = vadd.f32 %v8199, %v8311
    %v8313 = vpop.f32.mrb[0].mxu0
    %v8314 = vadd.f32 %v8201, %v8313
    %v8315 = vpop.f32.mrb[0].mxu0
    %v8316 = vadd.f32 %v8203, %v8315
    %v8317 = vpop.f32.mrb[0].mxu0
    %v8318 = vadd.f32 %v8205, %v8317
    %8319 = vmatprep.mubr.bf16.mxu0 %v4411
    %8320 = vmatmul.mubr.bf16.gmra.mrb[0].mxu0 %v4410
    %v8321 = vpop.f32.mrb[0].mxu0
    %v8322 = vadd.f32 %v8209, %v8321
    %v8323 = vpop.f32.mrb[0].mxu0
    %v8324 = vadd.f32 %v8211, %v8323
    %v8325 = vpop.f32.mrb[0].mxu0
    %v8326 = vadd.f32 %v8213, %v8325
    %v8327 = vpop.f32.mrb[0].mxu0
    %v8328 = vadd.f32 %v8215, %v8327
    %8329 = vdwg.mxu0
    %8330 = vmatprep.subr.bf16.mxu0 %v6983
    %8331 = vmatpush1.bf16.msra.mxu0 %v6982
    %8332 = vmatprep.subr.bf16.mxu0 %v6987
    %8333 = vmatpush1.bf16.msra.mxu0 %v6986
    %8334 = vmatprep.subr.bf16.mxu0 %v6991
    %8335 = vmatpush1.bf16.msra.mxu0 %v6990
    %8336 = vmatprep.subr.bf16.mxu0 %v6995
    %8337 = vmatpush1.bf16.msra.mxu0 %v6994
    %8338 = vmatprep.subr.bf16.mxu0 %v6999
    %8339 = vmatpush1.bf16.msra.mxu0 %v6998
    %8340 = vmatprep.subr.bf16.mxu0 %v7003
    %8341 = vmatpush1.bf16.msra.mxu0 %v7002
    %8342 = vmatprep.subr.bf16.mxu0 %v7007
    %8343 = vmatpush1.bf16.msra.mxu0 %v7006
    %8344 = vmatprep.subr.bf16.mxu0 %v7011
    %8345 = vmatpush1.bf16.msra.mxu0 %v7010
    %8346 = vmatprep.subr.bf16.mxu0 %v7015
    %8347 = vmatpush1.bf16.msra.mxu0 %v7014
    %8348 = vmatprep.subr.bf16.mxu0 %v7019
    %8349 = vmatpush1.bf16.msra.mxu0 %v7018
    %8350 = vmatprep.subr.bf16.mxu0 %v7023
    %8351 = vmatpush1.bf16.msra.mxu0 %v7022
    %8352 = vmatprep.subr.bf16.mxu0 %v7027
    %8353 = vmatpush1.bf16.msra.mxu0 %v7026
    %8354 = vmatprep.subr.bf16.mxu0 %v7031
    %8355 = vmatpush1.bf16.msra.mxu0 %v7030
    %8356 = vmatprep.subr.bf16.mxu0 %v7035
    %8357 = vmatpush1.bf16.msra.mxu0 %v7034
    %8358 = vmatprep.subr.bf16.mxu0 %v7039
    %8359 = vmatpush1.bf16.msra.mxu0 %v7038
    %8360 = vmatprep.subr.bf16.mxu0 %v7043
    %8361 = vmatpush1.bf16.msra.mxu0 %v7042
    %8362 = vmatprep.mubr.bf16.mxu0 %v4287
    %8363 = vmatmul.mubr.bf16.gmra.mrb[0].mxu0 %v4286
    %v8364 = vpop.f32.mrb[0].mxu0
    %v8365 = vadd.f32 %v8252, %v8364
    %v8366 = vpop.f32.mrb[0].mxu0
    %v8367 = vadd.f32 %v8254, %v8366
    %v8368 = vpop.f32.mrb[0].mxu0
    %v8369 = vadd.f32 %v8256, %v8368
    %v8370 = vpop.f32.mrb[0].mxu0
    %v8371 = vadd.f32 %v8258, %v8370
    %8372 = vmatprep.mubr.bf16.mxu0 %v4305
    %8373 = vmatmul.mubr.bf16.gmra.mrb[0].mxu0 %v4304
    %v8374 = vpop.f32.mrb[0].mxu0
    %v8375 = vadd.f32 %v8262, %v8374
    %v8376 = vpop.f32.mrb[0].mxu0
    %v8377 = vadd.f32 %v8264, %v8376
    %v8378 = vpop.f32.mrb[0].mxu0
    %v8379 = vadd.f32 %v8266, %v8378
    %v8380 = vpop.f32.mrb[0].mxu0
    %v8381 = vadd.f32 %v8268, %v8380
    %8382 = vmatprep.mubr.bf16.mxu0 %v4323
    %8383 = vmatmul.mubr.bf16.gmra.mrb[0].mxu0 %v4322
    %v8384 = vpop.f32.mrb[0].mxu0
    %v8385 = vadd.f32 %v8272, %v8384
    %v8386 = vpop.f32.mrb[0].mxu0
    %v8387 = vadd.f32 %v8274, %v8386
    %v8388 = vpop.f32.mrb[0].mxu0
    %v8389 = vadd.f32 %v8276, %v8388
    %v8390 = vpop.f32.mrb[0].mxu0
    %v8391 = vadd.f32 %v8278, %v8390
    %8392 = vmatprep.mubr.bf16.mxu0 %v4341
    %8393 = vmatmul.mubr.bf16.gmra.mrb[0].mxu0 %v4340
    %v8394 = vpop.f32.mrb[0].mxu0
    %v8395 = vadd.f32 %v8282, %v8394
    %v8396 = vpop.f32.mrb[0].mxu0
    %v8397 = vadd.f32 %v8284, %v8396
    %v8398 = vpop.f32.mrb[0].mxu0
    %v8399 = vadd.f32 %v8286, %v8398
    %v8400 = vpop.f32.mrb[0].mxu0
    %v8401 = vadd.f32 %v8288, %v8400
    %8402 = vmatprep.mubr.bf16.mxu0 %v4359
    %8403 = vmatmul.mubr.bf16.gmra.mrb[0].mxu0 %v4358
    %v8404 = vpop.f32.mrb[0].mxu0
    %v8405 = vadd.f32 %v8292, %v8404
    %v8406 = vpop.f32.mrb[0].mxu0
    %v8407 = vadd.f32 %v8294, %v8406
    %v8408 = vpop.f32.mrb[0].mxu0
    %v8409 = vadd.f32 %v8296, %v8408
    %v8410 = vpop.f32.mrb[0].mxu0
    %v8411 = vadd.f32 %v8298, %v8410
    %8412 = vmatprep.mubr.bf16.mxu0 %v4377
    %8413 = vmatmul.mubr.bf16.gmra.mrb[0].mxu0 %v4376
    %v8414 = vpop.f32.mrb[0].mxu0
    %v8415 = vadd.f32 %v8302, %v8414
    %v8416 = vpop.f32.mrb[0].mxu0
    %v8417 = vadd.f32 %v8304, %v8416
    %v8418 = vpop.f32.mrb[0].mxu0
    %v8419 = vadd.f32 %v8306, %v8418
    %v8420 = vpop.f32.mrb[0].mxu0
    %v8421 = vadd.f32 %v8308, %v8420
    %8422 = vmatprep.mubr.bf16.mxu0 %v4395
    %8423 = vmatmul.mubr.bf16.gmra.mrb[0].mxu0 %v4394
    %v8424 = vpop.f32.mrb[0].mxu0
    %v8425 = vadd.f32 %v8312, %v8424
    %v8426 = vpop.f32.mrb[0].mxu0
    %v8427 = vadd.f32 %v8314, %v8426
    %v8428 = vpop.f32.mrb[0].mxu0
    %v8429 = vadd.f32 %v8316, %v8428
    %v8430 = vpop.f32.mrb[0].mxu0
    %v8431 = vadd.f32 %v8318, %v8430
    %8432 = vmatprep.mubr.bf16.mxu0 %v4413
    %8433 = vmatmul.mubr.bf16.gmra.mrb[0].mxu0 %v4412
    %v8434 = vpop.f32.mrb[0].mxu0
    %v8435 = vadd.f32 %v8322, %v8434
    %v8436 = vpop.f32.mrb[0].mxu0
    %v8437 = vadd.f32 %v8324, %v8436
    %v8438 = vpop.f32.mrb[0].mxu0
    %v8439 = vadd.f32 %v8326, %v8438
    %v8440 = vpop.f32.mrb[0].mxu0
    %v8441 = vadd.f32 %v8328, %v8440
    %8442 = vdwg.mxu0
    %8443 = vmatprep.subr.bf16.mxu0 %v7047
    %8444 = vmatpush1.bf16.msra.mxu0 %v7046
    %8445 = vmatprep.subr.bf16.mxu0 %v7051
    %8446 = vmatpush1.bf16.msra.mxu0 %v7050
    %8447 = vmatprep.subr.bf16.mxu0 %v7055
    %8448 = vmatpush1.bf16.msra.mxu0 %v7054
    %8449 = vmatprep.subr.bf16.mxu0 %v7059
    %8450 = vmatpush1.bf16.msra.mxu0 %v7058
    %8451 = vmatprep.subr.bf16.mxu0 %v7063
    %8452 = vmatpush1.bf16.msra.mxu0 %v7062
    %8453 = vmatprep.subr.bf16.mxu0 %v7067
    %8454 = vmatpush1.bf16.msra.mxu0 %v7066
    %8455 = vmatprep.subr.bf16.mxu0 %v7071
    %8456 = vmatpush1.bf16.msra.mxu0 %v7070
    %8457 = vmatprep.subr.bf16.mxu0 %v7075
    %8458 = vmatpush1.bf16.msra.mxu0 %v7074
    %8459 = vmatprep.subr.bf16.mxu0 %v7079
    %8460 = vmatpush1.bf16.msra.mxu0 %v7078
    %8461 = vmatprep.subr.bf16.mxu0 %v7083
    %8462 = vmatpush1.bf16.msra.mxu0 %v7082
    %8463 = vmatprep.subr.bf16.mxu0 %v7087
    %8464 = vmatpush1.bf16.msra.mxu0 %v7086
    %8465 = vmatprep.subr.bf16.mxu0 %v7091
    %8466 = vmatpush1.bf16.msra.mxu0 %v7090
    %8467 = vmatprep.subr.bf16.mxu0 %v7095
    %8468 = vmatpush1.bf16.msra.mxu0 %v7094
    %8469 = vmatprep.subr.bf16.mxu0 %v7099
    %8470 = vmatpush1.bf16.msra.mxu0 %v7098
    %8471 = vmatprep.subr.bf16.mxu0 %v7103
    %8472 = vmatpush1.bf16.msra.mxu0 %v7102
    %8473 = vmatprep.subr.bf16.mxu0 %v7107
    %8474 = vmatpush1.bf16.msra.mxu0 %v7106
    %8475 = vmatprep.mubr.bf16.mxu0 %v4289
    %8476 = vmatmul.mubr.bf16.gmra.mrb[0].mxu0 %v4288
    %v8477 = vpop.f32.mrb[0].mxu0
    %v8478 = vadd.f32 %v8365, %v8477
    %v8479 = vpop.f32.mrb[0].mxu0
    %v8480 = vadd.f32 %v8367, %v8479
    %v8481 = vpop.f32.mrb[0].mxu0
    %v8482 = vadd.f32 %v8369, %v8481
    %v8483 = vpop.f32.mrb[0].mxu0
    %v8484 = vadd.f32 %v8371, %v8483
    %8485 = vmatprep.mubr.bf16.mxu0 %v4307
    %8486 = vmatmul.mubr.bf16.gmra.mrb[0].mxu0 %v4306
    %v8487 = vpop.f32.mrb[0].mxu0
    %v8488 = vadd.f32 %v8375, %v8487
    %v8489 = vpop.f32.mrb[0].mxu0
    %v8490 = vadd.f32 %v8377, %v8489
    %v8491 = vpop.f32.mrb[0].mxu0
    %v8492 = vadd.f32 %v8379, %v8491
    %v8493 = vpop.f32.mrb[0].mxu0
    %v8494 = vadd.f32 %v8381, %v8493
    %8495 = vmatprep.mubr.bf16.mxu0 %v4325
    %8496 = vmatmul.mubr.bf16.gmra.mrb[0].mxu0 %v4324
    %v8497 = vpop.f32.mrb[0].mxu0
    %v8498 = vadd.f32 %v8385, %v8497
    %v8499 = vpop.f32.mrb[0].mxu0
    %v8500 = vadd.f32 %v8387, %v8499
    %v8501 = vpop.f32.mrb[0].mxu0
    %v8502 = vadd.f32 %v8389, %v8501
    %v8503 = vpop.f32.mrb[0].mxu0
    %v8504 = vadd.f32 %v8391, %v8503
    %8505 = vmatprep.mubr.bf16.mxu0 %v4343
    %8506 = vmatmul.mubr.bf16.gmra.mrb[0].mxu0 %v4342
    %v8507 = vpop.f32.mrb[0].mxu0
    %v8508 = vadd.f32 %v8395, %v8507
    %v8509 = vpop.f32.mrb[0].mxu0
    %v8510 = vadd.f32 %v8397, %v8509
    %v8511 = vpop.f32.mrb[0].mxu0
    %v8512 = vadd.f32 %v8399, %v8511
    %v8513 = vpop.f32.mrb[0].mxu0
    %v8514 = vadd.f32 %v8401, %v8513
    %8515 = vmatprep.mubr.bf16.mxu0 %v4361
    %8516 = vmatmul.mubr.bf16.gmra.mrb[0].mxu0 %v4360
    %v8517 = vpop.f32.mrb[0].mxu0
    %v8518 = vadd.f32 %v8405, %v8517
    %v8519 = vpop.f32.mrb[0].mxu0
    %v8520 = vadd.f32 %v8407, %v8519
    %v8521 = vpop.f32.mrb[0].mxu0
    %v8522 = vadd.f32 %v8409, %v8521
    %v8523 = vpop.f32.mrb[0].mxu0
    %v8524 = vadd.f32 %v8411, %v8523
    %8525 = vmatprep.mubr.bf16.mxu0 %v4379
    %8526 = vmatmul.mubr.bf16.gmra.mrb[0].mxu0 %v4378
    %v8527 = vpop.f32.mrb[0].mxu0
    %v8528 = vadd.f32 %v8415, %v8527
    %v8529 = vpop.f32.mrb[0].mxu0
    %v8530 = vadd.f32 %v8417, %v8529
    %v8531 = vpop.f32.mrb[0].mxu0
    %v8532 = vadd.f32 %v8419, %v8531
    %v8533 = vpop.f32.mrb[0].mxu0
    %v8534 = vadd.f32 %v8421, %v8533
    %8535 = vmatprep.mubr.bf16.mxu0 %v4397
    %8536 = vmatmul.mubr.bf16.gmra.mrb[0].mxu0 %v4396
    %v8537 = vpop.f32.mrb[0].mxu0
    %v8538 = vadd.f32 %v8425, %v8537
    %v8539 = vpop.f32.mrb[0].mxu0
    %v8540 = vadd.f32 %v8427, %v8539
    %v8541 = vpop.f32.mrb[0].mxu0
    %v8542 = vadd.f32 %v8429, %v8541
    %v8543 = vpop.f32.mrb[0].mxu0
    %v8544 = vadd.f32 %v8431, %v8543
    %8545 = vmatprep.mubr.bf16.mxu0 %v4415
    %8546 = vmatmul.mubr.bf16.gmra.mrb[0].mxu0 %v4414
    %v8547 = vpop.f32.mrb[0].mxu0
    %v8548 = vadd.f32 %v8435, %v8547
    %v8549 = vpop.f32.mrb[0].mxu0
    %v8550 = vadd.f32 %v8437, %v8549
    %v8551 = vpop.f32.mrb[0].mxu0
    %v8552 = vadd.f32 %v8439, %v8551
    %v8553 = vpop.f32.mrb[0].mxu0
    %v8554 = vadd.f32 %v8441, %v8553
    %8555 = vdwg.mxu0
    %8556 = vmatprep.subr.bf16.mxu0 %v7111
    %8557 = vmatpush1.bf16.msra.mxu0 %v7110
    %8558 = vmatprep.subr.bf16.mxu0 %v7115
    %8559 = vmatpush1.bf16.msra.mxu0 %v7114
    %8560 = vmatprep.subr.bf16.mxu0 %v7119
    %8561 = vmatpush1.bf16.msra.mxu0 %v7118
    %8562 = vmatprep.subr.bf16.mxu0 %v7123
    %8563 = vmatpush1.bf16.msra.mxu0 %v7122
    %8564 = vmatprep.subr.bf16.mxu0 %v7127
    %8565 = vmatpush1.bf16.msra.mxu0 %v7126
    %8566 = vmatprep.subr.bf16.mxu0 %v7131
    %8567 = vmatpush1.bf16.msra.mxu0 %v7130
    %8568 = vmatprep.subr.bf16.mxu0 %v7135
    %8569 = vmatpush1.bf16.msra.mxu0 %v7134
    %8570 = vmatprep.subr.bf16.mxu0 %v7139
    %8571 = vmatpush1.bf16.msra.mxu0 %v7138
    %8572 = vmatprep.subr.bf16.mxu0 %v7143
    %8573 = vmatpush1.bf16.msra.mxu0 %v7142
    %8574 = vmatprep.subr.bf16.mxu0 %v7147
    %8575 = vmatpush1.bf16.msra.mxu0 %v7146
    %8576 = vmatprep.subr.bf16.mxu0 %v7151
    %8577 = vmatpush1.bf16.msra.mxu0 %v7150
    %8578 = vmatprep.subr.bf16.mxu0 %v7155
    %8579 = vmatpush1.bf16.msra.mxu0 %v7154
    %8580 = vmatprep.subr.bf16.mxu0 %v7159
    %8581 = vmatpush1.bf16.msra.mxu0 %v7158
    %8582 = vmatprep.subr.bf16.mxu0 %v7163
    %8583 = vmatpush1.bf16.msra.mxu0 %v7162
    %8584 = vmatprep.subr.bf16.mxu0 %v7167
    %8585 = vmatpush1.bf16.msra.mxu0 %v7166
    %8586 = vmatprep.subr.bf16.mxu0 %v7171
    %8587 = vmatpush1.bf16.msra.mxu0 %v7170
    %8588 = vmatprep.mubr.bf16.mxu0 %v4291
    %8589 = vmatmul.mubr.bf16.gmra.mrb[0].mxu0 %v4290
    %v8590 = vpop.f32.mrb[0].mxu0
    %v8591 = vadd.f32 %v8478, %v8590
    %v8592 = vpop.f32.mrb[0].mxu0
    %v8593 = vadd.f32 %v8480, %v8592
    %v8594 = vpop.f32.mrb[0].mxu0
    %v8595 = vadd.f32 %v8482, %v8594
    %v8596 = vpop.f32.mrb[0].mxu0
    %v8597 = vadd.f32 %v8484, %v8596
    %8598 = vmatprep.mubr.bf16.mxu0 %v4309
    %8599 = vmatmul.mubr.bf16.gmra.mrb[0].mxu0 %v4308
    %v8600 = vpop.f32.mrb[0].mxu0
    %v8601 = vadd.f32 %v8488, %v8600
    %v8602 = vpop.f32.mrb[0].mxu0
    %v8603 = vadd.f32 %v8490, %v8602
    %v8604 = vpop.f32.mrb[0].mxu0
    %v8605 = vadd.f32 %v8492, %v8604
    %v8606 = vpop.f32.mrb[0].mxu0
    %v8607 = vadd.f32 %v8494, %v8606
    %8608 = vmatprep.mubr.bf16.mxu0 %v4327
    %8609 = vmatmul.mubr.bf16.gmra.mrb[0].mxu0 %v4326
    %v8610 = vpop.f32.mrb[0].mxu0
    %v8611 = vadd.f32 %v8498, %v8610
    %v8612 = vpop.f32.mrb[0].mxu0
    %v8613 = vadd.f32 %v8500, %v8612
    %v8614 = vpop.f32.mrb[0].mxu0
    %v8615 = vadd.f32 %v8502, %v8614
    %v8616 = vpop.f32.mrb[0].mxu0
    %v8617 = vadd.f32 %v8504, %v8616
    %8618 = vmatprep.mubr.bf16.mxu0 %v4345
    %8619 = vmatmul.mubr.bf16.gmra.mrb[0].mxu0 %v4344
    %v8620 = vpop.f32.mrb[0].mxu0
    %v8621 = vadd.f32 %v8508, %v8620
    %v8622 = vpop.f32.mrb[0].mxu0
    %v8623 = vadd.f32 %v8510, %v8622
    %v8624 = vpop.f32.mrb[0].mxu0
    %v8625 = vadd.f32 %v8512, %v8624
    %v8626 = vpop.f32.mrb[0].mxu0
    %v8627 = vadd.f32 %v8514, %v8626
    %8628 = vmatprep.mubr.bf16.mxu0 %v4363
    %8629 = vmatmul.mubr.bf16.gmra.mrb[0].mxu0 %v4362
    %v8630 = vpop.f32.mrb[0].mxu0
    %v8631 = vadd.f32 %v8518, %v8630
    %v8632 = vpop.f32.mrb[0].mxu0
    %v8633 = vadd.f32 %v8520, %v8632
    %v8634 = vpop.f32.mrb[0].mxu0
    %v8635 = vadd.f32 %v8522, %v8634
    %v8636 = vpop.f32.mrb[0].mxu0
    %v8637 = vadd.f32 %v8524, %v8636
    %8638 = vmatprep.mubr.bf16.mxu0 %v4381
    %8639 = vmatmul.mubr.bf16.gmra.mrb[0].mxu0 %v4380
    %v8640 = vpop.f32.mrb[0].mxu0
    %v8641 = vadd.f32 %v8528, %v8640
    %v8642 = vpop.f32.mrb[0].mxu0
    %v8643 = vadd.f32 %v8530, %v8642
    %v8644 = vpop.f32.mrb[0].mxu0
    %v8645 = vadd.f32 %v8532, %v8644
    %v8646 = vpop.f32.mrb[0].mxu0
    %v8647 = vadd.f32 %v8534, %v8646
    %8648 = vmatprep.mubr.bf16.mxu0 %v4399
    %8649 = vmatmul.mubr.bf16.gmra.mrb[0].mxu0 %v4398
    %v8650 = vpop.f32.mrb[0].mxu0
    %v8651 = vadd.f32 %v8538, %v8650
    %v8652 = vpop.f32.mrb[0].mxu0
    %v8653 = vadd.f32 %v8540, %v8652
    %v8654 = vpop.f32.mrb[0].mxu0
    %v8655 = vadd.f32 %v8542, %v8654
    %v8656 = vpop.f32.mrb[0].mxu0
    %v8657 = vadd.f32 %v8544, %v8656
    %8658 = vmatprep.mubr.bf16.mxu0 %v4417
    %8659 = vmatmul.mubr.bf16.gmra.mrb[0].mxu0 %v4416
    %v8660 = vpop.f32.mrb[0].mxu0
    %v8661 = vadd.f32 %v8548, %v8660
    %v8662 = vpop.f32.mrb[0].mxu0
    %v8663 = vadd.f32 %v8550, %v8662
    %v8664 = vpop.f32.mrb[0].mxu0
    %v8665 = vadd.f32 %v8552, %v8664
    %v8666 = vpop.f32.mrb[0].mxu0
    %v8667 = vadd.f32 %v8554, %v8666
    %8668 = vdwg.mxu0
    %8669 = vmatprep.subr.bf16.mxu0 %v7175
    %8670 = vmatpush1.bf16.msra.mxu0 %v7174
    %8671 = vmatprep.subr.bf16.mxu0 %v7179
    %8672 = vmatpush1.bf16.msra.mxu0 %v7178
    %8673 = vmatprep.subr.bf16.mxu0 %v7183
    %8674 = vmatpush1.bf16.msra.mxu0 %v7182
    %8675 = vmatprep.subr.bf16.mxu0 %v7187
    %8676 = vmatpush1.bf16.msra.mxu0 %v7186
    %8677 = vmatprep.subr.bf16.mxu0 %v7191
    %8678 = vmatpush1.bf16.msra.mxu0 %v7190
    %8679 = vmatprep.subr.bf16.mxu0 %v7195
    %8680 = vmatpush1.bf16.msra.mxu0 %v7194
    %8681 = vmatprep.subr.bf16.mxu0 %v7199
    %8682 = vmatpush1.bf16.msra.mxu0 %v7198
    %8683 = vmatprep.subr.bf16.mxu0 %v7203
    %8684 = vmatpush1.bf16.msra.mxu0 %v7202
    %8685 = vmatprep.subr.bf16.mxu0 %v7207
    %8686 = vmatpush1.bf16.msra.mxu0 %v7206
    %8687 = vmatprep.subr.bf16.mxu0 %v7211
    %8688 = vmatpush1.bf16.msra.mxu0 %v7210
    %8689 = vmatprep.subr.bf16.mxu0 %v7215
    %8690 = vmatpush1.bf16.msra.mxu0 %v7214
    %8691 = vmatprep.subr.bf16.mxu0 %v7219
    %8692 = vmatpush1.bf16.msra.mxu0 %v7218
    %8693 = vmatprep.subr.bf16.mxu0 %v7223
    %8694 = vmatpush1.bf16.msra.mxu0 %v7222
    %8695 = vmatprep.subr.bf16.mxu0 %v7227
    %8696 = vmatpush1.bf16.msra.mxu0 %v7226
    %8697 = vmatprep.subr.bf16.mxu0 %v7231
    %8698 = vmatpush1.bf16.msra.mxu0 %v7230
    %8699 = vmatprep.subr.bf16.mxu0 %v7235
    %8700 = vmatpush1.bf16.msra.mxu0 %v7234
    %8701 = vmatprep.mubr.bf16.mxu0 %v4293
    %8702 = vmatmul.mubr.bf16.gmra.mrb[0].mxu0 %v4292
    %v8703 = vpop.f32.mrb[0].mxu0
    %v8704 = vadd.f32 %v8591, %v8703
    %v8705 = vpop.f32.mrb[0].mxu0
    %v8706 = vadd.f32 %v8593, %v8705
    %v8707 = vpop.f32.mrb[0].mxu0
    %v8708 = vadd.f32 %v8595, %v8707
    %v8709 = vpop.f32.mrb[0].mxu0
    %v8710 = vadd.f32 %v8597, %v8709
    %8711 = vmatprep.mubr.bf16.mxu0 %v4311
    %8712 = vmatmul.mubr.bf16.gmra.mrb[0].mxu0 %v4310
    %v8713 = vpop.f32.mrb[0].mxu0
    %v8714 = vadd.f32 %v8601, %v8713
    %v8715 = vpop.f32.mrb[0].mxu0
    %v8716 = vadd.f32 %v8603, %v8715
    %v8717 = vpop.f32.mrb[0].mxu0
    %v8718 = vadd.f32 %v8605, %v8717
    %v8719 = vpop.f32.mrb[0].mxu0
    %v8720 = vadd.f32 %v8607, %v8719
    %8721 = vmatprep.mubr.bf16.mxu0 %v4329
    %8722 = vmatmul.mubr.bf16.gmra.mrb[0].mxu0 %v4328
    %v8723 = vpop.f32.mrb[0].mxu0
    %v8724 = vadd.f32 %v8611, %v8723
    %v8725 = vpop.f32.mrb[0].mxu0
    %v8726 = vadd.f32 %v8613, %v8725
    %v8727 = vpop.f32.mrb[0].mxu0
    %v8728 = vadd.f32 %v8615, %v8727
    %v8729 = vpop.f32.mrb[0].mxu0
    %v8730 = vadd.f32 %v8617, %v8729
    %8731 = vmatprep.mubr.bf16.mxu0 %v4347
    %8732 = vmatmul.mubr.bf16.gmra.mrb[0].mxu0 %v4346
    %v8733 = vpop.f32.mrb[0].mxu0
    %v8734 = vadd.f32 %v8621, %v8733
    %v8735 = vpop.f32.mrb[0].mxu0
    %v8736 = vadd.f32 %v8623, %v8735
    %v8737 = vpop.f32.mrb[0].mxu0
    %v8738 = vadd.f32 %v8625, %v8737
    %v8739 = vpop.f32.mrb[0].mxu0
    %v8740 = vadd.f32 %v8627, %v8739
    %8741 = vmatprep.mubr.bf16.mxu0 %v4365
    %8742 = vmatmul.mubr.bf16.gmra.mrb[0].mxu0 %v4364
    %v8743 = vpop.f32.mrb[0].mxu0
    %v8744 = vadd.f32 %v8631, %v8743
    %v8745 = vpop.f32.mrb[0].mxu0
    %v8746 = vadd.f32 %v8633, %v8745
    %v8747 = vpop.f32.mrb[0].mxu0
    %v8748 = vadd.f32 %v8635, %v8747
    %v8749 = vpop.f32.mrb[0].mxu0
    %v8750 = vadd.f32 %v8637, %v8749
    %8751 = vmatprep.mubr.bf16.mxu0 %v4383
    %8752 = vmatmul.mubr.bf16.gmra.mrb[0].mxu0 %v4382
    %v8753 = vpop.f32.mrb[0].mxu0
    %v8754 = vadd.f32 %v8641, %v8753
    %v8755 = vpop.f32.mrb[0].mxu0
    %v8756 = vadd.f32 %v8643, %v8755
    %v8757 = vpop.f32.mrb[0].mxu0
    %v8758 = vadd.f32 %v8645, %v8757
    %v8759 = vpop.f32.mrb[0].mxu0
    %v8760 = vadd.f32 %v8647, %v8759
    %8761 = vmatprep.mubr.bf16.mxu0 %v4401
    %8762 = vmatmul.mubr.bf16.gmra.mrb[0].mxu0 %v4400
    %v8763 = vpop.f32.mrb[0].mxu0
    %v8764 = vadd.f32 %v8651, %v8763
    %v8765 = vpop.f32.mrb[0].mxu0
    %v8766 = vadd.f32 %v8653, %v8765
    %v8767 = vpop.f32.mrb[0].mxu0
    %v8768 = vadd.f32 %v8655, %v8767
    %v8769 = vpop.f32.mrb[0].mxu0
    %v8770 = vadd.f32 %v8657, %v8769
    %8771 = vmatprep.mubr.bf16.mxu0 %v4419
    %8772 = vmatmul.mubr.bf16.gmra.mrb[0].mxu0 %v4418
    %v8773 = vpop.f32.mrb[0].mxu0
    %v8774 = vadd.f32 %v8661, %v8773
    %v8775 = vpop.f32.mrb[0].mxu0
    %v8776 = vadd.f32 %v8663, %v8775
    %v8777 = vpop.f32.mrb[0].mxu0
    %v8778 = vadd.f32 %v8665, %v8777
    %v8779 = vpop.f32.mrb[0].mxu0
    %v8780 = vadd.f32 %v8667, %v8779
    %8781 = vdwg.mxu0
    %8782 = vmatprep.subr.bf16.mxu0 %v7239
    %8783 = vmatpush1.bf16.msra.mxu0 %v7238
    %8784 = vmatprep.subr.bf16.mxu0 %v7243
    %8785 = vmatpush1.bf16.msra.mxu0 %v7242
    %8786 = vmatprep.subr.bf16.mxu0 %v7247
    %8787 = vmatpush1.bf16.msra.mxu0 %v7246
    %8788 = vmatprep.subr.bf16.mxu0 %v7251
    %8789 = vmatpush1.bf16.msra.mxu0 %v7250
    %8790 = vmatprep.subr.bf16.mxu0 %v7255
    %8791 = vmatpush1.bf16.msra.mxu0 %v7254
    %8792 = vmatprep.subr.bf16.mxu0 %v7259
    %8793 = vmatpush1.bf16.msra.mxu0 %v7258
    %8794 = vmatprep.subr.bf16.mxu0 %v7263
    %8795 = vmatpush1.bf16.msra.mxu0 %v7262
    %8796 = vmatprep.subr.bf16.mxu0 %v7267
    %8797 = vmatpush1.bf16.msra.mxu0 %v7266
    %8798 = vmatprep.subr.bf16.mxu0 %v7271
    %8799 = vmatpush1.bf16.msra.mxu0 %v7270
    %8800 = vmatprep.subr.bf16.mxu0 %v7275
    %8801 = vmatpush1.bf16.msra.mxu0 %v7274
    %8802 = vmatprep.subr.bf16.mxu0 %v7279
    %8803 = vmatpush1.bf16.msra.mxu0 %v7278
    %8804 = vmatprep.subr.bf16.mxu0 %v7283
    %8805 = vmatpush1.bf16.msra.mxu0 %v7282
    %8806 = vmatprep.subr.bf16.mxu0 %v7287
    %8807 = vmatpush1.bf16.msra.mxu0 %v7286
    %8808 = vmatprep.subr.bf16.mxu0 %v7291
    %8809 = vmatpush1.bf16.msra.mxu0 %v7290
    %8810 = vmatprep.subr.bf16.mxu0 %v7295
    %8811 = vmatpush1.bf16.msra.mxu0 %v7294
    %8812 = vmatprep.subr.bf16.mxu0 %v7299
    %8813 = vmatpush1.bf16.msra.mxu0 %v7298
    %8814 = vmatprep.mubr.bf16.mxu0 %v4295
    %8815 = vmatmul.mubr.bf16.gmra.mrb[0].mxu0 %v4294
    %v8816 = vpop.f32.mrb[0].mxu0
    %v8817 = vadd.f32 %v8704, %v8816
    %v8818 = vpop.f32.mrb[0].mxu0
    %v8819 = vadd.f32 %v8706, %v8818
    %v8820 = vpop.f32.mrb[0].mxu0
    %v8821 = vadd.f32 %v8708, %v8820
    %v8822 = vpop.f32.mrb[0].mxu0
    %v8823 = vadd.f32 %v8710, %v8822
    %8824 = vmatprep.mubr.bf16.mxu0 %v4313
    %8825 = vmatmul.mubr.bf16.gmra.mrb[0].mxu0 %v4312
    %v8826 = vpop.f32.mrb[0].mxu0
    %v8827 = vadd.f32 %v8714, %v8826
    %v8828 = vpop.f32.mrb[0].mxu0
    %v8829 = vadd.f32 %v8716, %v8828
    %v8830 = vpop.f32.mrb[0].mxu0
    %v8831 = vadd.f32 %v8718, %v8830
    %v8832 = vpop.f32.mrb[0].mxu0
    %v8833 = vadd.f32 %v8720, %v8832
    %8834 = vmatprep.mubr.bf16.mxu0 %v4331
    %8835 = vmatmul.mubr.bf16.gmra.mrb[0].mxu0 %v4330
    %v8836 = vpop.f32.mrb[0].mxu0
    %v8837 = vadd.f32 %v8724, %v8836
    %v8838 = vpop.f32.mrb[0].mxu0
    %v8839 = vadd.f32 %v8726, %v8838
    %v8840 = vpop.f32.mrb[0].mxu0
    %v8841 = vadd.f32 %v8728, %v8840
    %v8842 = vpop.f32.mrb[0].mxu0
    %v8843 = vadd.f32 %v8730, %v8842
    %8844 = vmatprep.mubr.bf16.mxu0 %v4349
    %8845 = vmatmul.mubr.bf16.gmra.mrb[0].mxu0 %v4348
    %v8846 = vpop.f32.mrb[0].mxu0
    %v8847 = vadd.f32 %v8734, %v8846
    %v8848 = vpop.f32.mrb[0].mxu0
    %v8849 = vadd.f32 %v8736, %v8848
    %v8850 = vpop.f32.mrb[0].mxu0
    %v8851 = vadd.f32 %v8738, %v8850
    %v8852 = vpop.f32.mrb[0].mxu0
    %v8853 = vadd.f32 %v8740, %v8852
    %8854 = vmatprep.mubr.bf16.mxu0 %v4367
    %8855 = vmatmul.mubr.bf16.gmra.mrb[0].mxu0 %v4366
    %v8856 = vpop.f32.mrb[0].mxu0
    %v8857 = vadd.f32 %v8744, %v8856
    %v8858 = vpop.f32.mrb[0].mxu0
    %v8859 = vadd.f32 %v8746, %v8858
    %v8860 = vpop.f32.mrb[0].mxu0
    %v8861 = vadd.f32 %v8748, %v8860
    %v8862 = vpop.f32.mrb[0].mxu0
    %v8863 = vadd.f32 %v8750, %v8862
    %8864 = vmatprep.mubr.bf16.mxu0 %v4385
    %8865 = vmatmul.mubr.bf16.gmra.mrb[0].mxu0 %v4384
    %v8866 = vpop.f32.mrb[0].mxu0
    %v8867 = vadd.f32 %v8754, %v8866
    %v8868 = vpop.f32.mrb[0].mxu0
    %v8869 = vadd.f32 %v8756, %v8868
    %v8870 = vpop.f32.mrb[0].mxu0
    %v8871 = vadd.f32 %v8758, %v8870
    %v8872 = vpop.f32.mrb[0].mxu0
    %v8873 = vadd.f32 %v8760, %v8872
    %8874 = vmatprep.mubr.bf16.mxu0 %v4403
    %8875 = vmatmul.mubr.bf16.gmra.mrb[0].mxu0 %v4402
    %v8876 = vpop.f32.mrb[0].mxu0
    %v8877 = vadd.f32 %v8764, %v8876
    %v8878 = vpop.f32.mrb[0].mxu0
    %v8879 = vadd.f32 %v8766, %v8878
    %v8880 = vpop.f32.mrb[0].mxu0
    %v8881 = vadd.f32 %v8768, %v8880
    %v8882 = vpop.f32.mrb[0].mxu0
    %v8883 = vadd.f32 %v8770, %v8882
    %8884 = vmatprep.mubr.bf16.mxu0 %v4421
    %8885 = vmatmul.mubr.bf16.gmra.mrb[0].mxu0 %v4420
    %v8886 = vpop.f32.mrb[0].mxu0
    %v8887 = vadd.f32 %v8774, %v8886
    %v8888 = vpop.f32.mrb[0].mxu0
    %v8889 = vadd.f32 %v8776, %v8888
    %v8890 = vpop.f32.mrb[0].mxu0
    %v8891 = vadd.f32 %v8778, %v8890
    %v8892 = vpop.f32.mrb[0].mxu0
    %v8893 = vadd.f32 %v8780, %v8892
    %8894 = vdwg.mxu0
    %8895 = vmatprep.subr.bf16.mxu0 %v6729
    %8896 = vmatpush1.bf16.msra.mxu0 %v6728
    %8897 = vmatprep.subr.bf16.mxu0 %v6733
    %8898 = vmatpush1.bf16.msra.mxu0 %v6732
    %8899 = vmatprep.subr.bf16.mxu0 %v6737
    %8900 = vmatpush1.bf16.msra.mxu0 %v6736
    %8901 = vmatprep.subr.bf16.mxu0 %v6741
    %8902 = vmatpush1.bf16.msra.mxu0 %v6740
    %8903 = vmatprep.subr.bf16.mxu0 %v6745
    %8904 = vmatpush1.bf16.msra.mxu0 %v6744
    %8905 = vmatprep.subr.bf16.mxu0 %v6749
    %8906 = vmatpush1.bf16.msra.mxu0 %v6748
    %8907 = vmatprep.subr.bf16.mxu0 %v6753
    %8908 = vmatpush1.bf16.msra.mxu0 %v6752
    %8909 = vmatprep.subr.bf16.mxu0 %v6757
    %8910 = vmatpush1.bf16.msra.mxu0 %v6756
    %8911 = vmatprep.subr.bf16.mxu0 %v6761
    %8912 = vmatpush1.bf16.msra.mxu0 %v6760
    %8913 = vmatprep.subr.bf16.mxu0 %v6765
    %8914 = vmatpush1.bf16.msra.mxu0 %v6764
    %8915 = vmatprep.subr.bf16.mxu0 %v6769
    %8916 = vmatpush1.bf16.msra.mxu0 %v6768
    %8917 = vmatprep.subr.bf16.mxu0 %v6773
    %8918 = vmatpush1.bf16.msra.mxu0 %v6772
    %8919 = vmatprep.subr.bf16.mxu0 %v6777
    %8920 = vmatpush1.bf16.msra.mxu0 %v6776
    %8921 = vmatprep.subr.bf16.mxu0 %v6781
    %8922 = vmatpush1.bf16.msra.mxu0 %v6780
    %8923 = vmatprep.subr.bf16.mxu0 %v6785
    %8924 = vmatpush1.bf16.msra.mxu0 %v6784
    %8925 = vmatprep.subr.bf16.mxu0 %v6789
    %8926 = vmatpush1.bf16.msra.mxu0 %v6788
    %8927 = vmatprep.mubr.bf16.mxu0 %v4279
    %8928 = vmatmul.mubr.bf16.gmra.mrb[0].mxu0 %v4278
    %v8929 = vpop.f32.mrb[0].mxu0
    %v8930 = vadd.f32 0.0, %v8929
    %v8931 = vpop.f32.mrb[0].mxu0
    %v8932 = vadd.f32 0.0, %v8931
    %v8933 = vpop.f32.mrb[0].mxu0
    %v8934 = vadd.f32 0.0, %v8933
    %v8935 = vpop.f32.mrb[0].mxu0
    %v8936 = vadd.f32 0.0, %v8935
    %8937 = vmatprep.mubr.bf16.mxu0 %v4297
    %8938 = vmatmul.mubr.bf16.gmra.mrb[0].mxu0 %v4296
    %v8939 = vpop.f32.mrb[0].mxu0
    %v8940 = vadd.f32 0.0, %v8939
    %v8941 = vpop.f32.mrb[0].mxu0
    %v8942 = vadd.f32 0.0, %v8941
    %v8943 = vpop.f32.mrb[0].mxu0
    %v8944 = vadd.f32 0.0, %v8943
    %v8945 = vpop.f32.mrb[0].mxu0
    %v8946 = vadd.f32 0.0, %v8945
    %8947 = vmatprep.mubr.bf16.mxu0 %v4315
    %8948 = vmatmul.mubr.bf16.gmra.mrb[0].mxu0 %v4314
    %v8949 = vpop.f32.mrb[0].mxu0
    %v8950 = vadd.f32 0.0, %v8949
    %v8951 = vpop.f32.mrb[0].mxu0
    %v8952 = vadd.f32 0.0, %v8951
    %v8953 = vpop.f32.mrb[0].mxu0
    %v8954 = vadd.f32 0.0, %v8953
    %v8955 = vpop.f32.mrb[0].mxu0
    %v8956 = vadd.f32 0.0, %v8955
    %8957 = vmatprep.mubr.bf16.mxu0 %v4333
    %8958 = vmatmul.mubr.bf16.gmra.mrb[0].mxu0 %v4332
    %v8959 = vpop.f32.mrb[0].mxu0
    %v8960 = vadd.f32 0.0, %v8959
    %v8961 = vpop.f32.mrb[0].mxu0
    %v8962 = vadd.f32 0.0, %v8961
    %v8963 = vpop.f32.mrb[0].mxu0
    %v8964 = vadd.f32 0.0, %v8963
    %v8965 = vpop.f32.mrb[0].mxu0
    %v8966 = vadd.f32 0.0, %v8965
    %8967 = vmatprep.mubr.bf16.mxu0 %v4351
    %8968 = vmatmul.mubr.bf16.gmra.mrb[0].mxu0 %v4350
    %v8969 = vpop.f32.mrb[0].mxu0
    %v8970 = vadd.f32 0.0, %v8969
    %v8971 = vpop.f32.mrb[0].mxu0
    %v8972 = vadd.f32 0.0, %v8971
    %v8973 = vpop.f32.mrb[0].mxu0
    %v8974 = vadd.f32 0.0, %v8973
    %v8975 = vpop.f32.mrb[0].mxu0
    %v8976 = vadd.f32 0.0, %v8975
    %8977 = vmatprep.mubr.bf16.mxu0 %v4369
    %8978 = vmatmul.mubr.bf16.gmra.mrb[0].mxu0 %v4368
    %v8979 = vpop.f32.mrb[0].mxu0
    %v8980 = vadd.f32 0.0, %v8979
    %v8981 = vpop.f32.mrb[0].mxu0
    %v8982 = vadd.f32 0.0, %v8981
    %v8983 = vpop.f32.mrb[0].mxu0
    %v8984 = vadd.f32 0.0, %v8983
    %v8985 = vpop.f32.mrb[0].mxu0
    %v8986 = vadd.f32 0.0, %v8985
    %8987 = vmatprep.mubr.bf16.mxu0 %v4387
    %8988 = vmatmul.mubr.bf16.gmra.mrb[0].mxu0 %v4386
    %v8989 = vpop.f32.mrb[0].mxu0
    %v8990 = vadd.f32 0.0, %v8989
    %v8991 = vpop.f32.mrb[0].mxu0
    %v8992 = vadd.f32 0.0, %v8991
    %v8993 = vpop.f32.mrb[0].mxu0
    %v8994 = vadd.f32 0.0, %v8993
    %v8995 = vpop.f32.mrb[0].mxu0
    %v8996 = vadd.f32 0.0, %v8995
    %8997 = vmatprep.mubr.bf16.mxu0 %v4405
    %8998 = vmatmul.mubr.bf16.gmra.mrb[0].mxu0 %v4404
    %v8999 = vpop.f32.mrb[0].mxu0
    %v9000 = vadd.f32 0.0, %v8999
    %v9001 = vpop.f32.mrb[0].mxu0
    %v9002 = vadd.f32 0.0, %v9001
    %v9003 = vpop.f32.mrb[0].mxu0
    %v9004 = vadd.f32 0.0, %v9003
    %v9005 = vpop.f32.mrb[0].mxu0
    %v9006 = vadd.f32 0.0, %v9005
    %9007 = vdwg.mxu0
    %9008 = vmatprep.subr.bf16.mxu0 %v6793
    %9009 = vmatpush1.bf16.msra.mxu0 %v6792
    %9010 = vmatprep.subr.bf16.mxu0 %v6797
    %9011 = vmatpush1.bf16.msra.mxu0 %v6796
    %9012 = vmatprep.subr.bf16.mxu0 %v6801
    %9013 = vmatpush1.bf16.msra.mxu0 %v6800
    %9014 = vmatprep.subr.bf16.mxu0 %v6805
    %9015 = vmatpush1.bf16.msra.mxu0 %v6804
    %9016 = vmatprep.subr.bf16.mxu0 %v6809
    %9017 = vmatpush1.bf16.msra.mxu0 %v6808
    %9018 = vmatprep.subr.bf16.mxu0 %v6813
    %9019 = vmatpush1.bf16.msra.mxu0 %v6812
    %9020 = vmatprep.subr.bf16.mxu0 %v6817
    %9021 = vmatpush1.bf16.msra.mxu0 %v6816
    %9022 = vmatprep.subr.bf16.mxu0 %v6821
    %9023 = vmatpush1.bf16.msra.mxu0 %v6820
    %9024 = vmatprep.subr.bf16.mxu0 %v6825
    %9025 = vmatpush1.bf16.msra.mxu0 %v6824
    %9026 = vmatprep.subr.bf16.mxu0 %v6829
    %9027 = vmatpush1.bf16.msra.mxu0 %v6828
    %9028 = vmatprep.subr.bf16.mxu0 %v6833
    %9029 = vmatpush1.bf16.msra.mxu0 %v6832
    %9030 = vmatprep.subr.bf16.mxu0 %v6837
    %9031 = vmatpush1.bf16.msra.mxu0 %v6836
    %9032 = vmatprep.subr.bf16.mxu0 %v6841
    %9033 = vmatpush1.bf16.msra.mxu0 %v6840
    %9034 = vmatprep.subr.bf16.mxu0 %v6845
    %9035 = vmatpush1.bf16.msra.mxu0 %v6844
    %9036 = vmatprep.subr.bf16.mxu0 %v6849
    %9037 = vmatpush1.bf16.msra.mxu0 %v6848
    %9038 = vmatprep.subr.bf16.mxu0 %v6853
    %9039 = vmatpush1.bf16.msra.mxu0 %v6852
    %9040 = vmatprep.mubr.bf16.mxu0 %v4281
    %9041 = vmatmul.mubr.bf16.gmra.mrb[0].mxu0 %v4280
    %v9042 = vpop.f32.mrb[0].mxu0
    %v9043 = vadd.f32 %v8930, %v9042
    %v9044 = vpop.f32.mrb[0].mxu0
    %v9045 = vadd.f32 %v8932, %v9044
    %v9046 = vpop.f32.mrb[0].mxu0
    %v9047 = vadd.f32 %v8934, %v9046
    %v9048 = vpop.f32.mrb[0].mxu0
    %v9049 = vadd.f32 %v8936, %v9048
    %9050 = vmatprep.mubr.bf16.mxu0 %v4299
    %9051 = vmatmul.mubr.bf16.gmra.mrb[0].mxu0 %v4298
    %v9052 = vpop.f32.mrb[0].mxu0
    %v9053 = vadd.f32 %v8940, %v9052
    %v9054 = vpop.f32.mrb[0].mxu0
    %v9055 = vadd.f32 %v8942, %v9054
    %v9056 = vpop.f32.mrb[0].mxu0
    %v9057 = vadd.f32 %v8944, %v9056
    %v9058 = vpop.f32.mrb[0].mxu0
    %v9059 = vadd.f32 %v8946, %v9058
    %9060 = vmatprep.mubr.bf16.mxu0 %v4317
    %9061 = vmatmul.mubr.bf16.gmra.mrb[0].mxu0 %v4316
    %v9062 = vpop.f32.mrb[0].mxu0
    %v9063 = vadd.f32 %v8950, %v9062
    %v9064 = vpop.f32.mrb[0].mxu0
    %v9065 = vadd.f32 %v8952, %v9064
    %v9066 = vpop.f32.mrb[0].mxu0
    %v9067 = vadd.f32 %v8954, %v9066
    %v9068 = vpop.f32.mrb[0].mxu0
    %v9069 = vadd.f32 %v8956, %v9068
    %9070 = vmatprep.mubr.bf16.mxu0 %v4335
    %9071 = vmatmul.mubr.bf16.gmra.mrb[0].mxu0 %v4334
    %v9072 = vpop.f32.mrb[0].mxu0
    %v9073 = vadd.f32 %v8960, %v9072
    %v9074 = vpop.f32.mrb[0].mxu0
    %v9075 = vadd.f32 %v8962, %v9074
    %v9076 = vpop.f32.mrb[0].mxu0
    %v9077 = vadd.f32 %v8964, %v9076
    %v9078 = vpop.f32.mrb[0].mxu0
    %v9079 = vadd.f32 %v8966, %v9078
    %9080 = vmatprep.mubr.bf16.mxu0 %v4353
    %9081 = vmatmul.mubr.bf16.gmra.mrb[0].mxu0 %v4352
    %v9082 = vpop.f32.mrb[0].mxu0
    %v9083 = vadd.f32 %v8970, %v9082
    %v9084 = vpop.f32.mrb[0].mxu0
    %v9085 = vadd.f32 %v8972, %v9084
    %v9086 = vpop.f32.mrb[0].mxu0
    %v9087 = vadd.f32 %v8974, %v9086
    %v9088 = vpop.f32.mrb[0].mxu0
    %v9089 = vadd.f32 %v8976, %v9088
    %9090 = vmatprep.mubr.bf16.mxu0 %v4371
    %9091 = vmatmul.mubr.bf16.gmra.mrb[0].mxu0 %v4370
    %v9092 = vpop.f32.mrb[0].mxu0
    %v9093 = vadd.f32 %v8980, %v9092
    %v9094 = vpop.f32.mrb[0].mxu0
    %v9095 = vadd.f32 %v8982, %v9094
    %v9096 = vpop.f32.mrb[0].mxu0
    %v9097 = vadd.f32 %v8984, %v9096
    %v9098 = vpop.f32.mrb[0].mxu0
    %v9099 = vadd.f32 %v8986, %v9098
    %9100 = vmatprep.mubr.bf16.mxu0 %v4389
    %9101 = vmatmul.mubr.bf16.gmra.mrb[0].mxu0 %v4388
    %v9102 = vpop.f32.mrb[0].mxu0
    %v9103 = vadd.f32 %v8990, %v9102
    %v9104 = vpop.f32.mrb[0].mxu0
    %v9105 = vadd.f32 %v8992, %v9104
    %v9106 = vpop.f32.mrb[0].mxu0
    %v9107 = vadd.f32 %v8994, %v9106
    %v9108 = vpop.f32.mrb[0].mxu0
    %v9109 = vadd.f32 %v8996, %v9108
    %9110 = vmatprep.mubr.bf16.mxu0 %v4407
    %9111 = vmatmul.mubr.bf16.gmra.mrb[0].mxu0 %v4406
    %v9112 = vpop.f32.mrb[0].mxu0
    %v9113 = vadd.f32 %v9000, %v9112
    %v9114 = vpop.f32.mrb[0].mxu0
    %v9115 = vadd.f32 %v9002, %v9114
    %v9116 = vpop.f32.mrb[0].mxu0
    %v9117 = vadd.f32 %v9004, %v9116
    %v9118 = vpop.f32.mrb[0].mxu0
    %v9119 = vadd.f32 %v9006, %v9118
    %9120 = vdwg.mxu0
    %9121 = vmatprep.subr.bf16.mxu0 %v6857
    %9122 = vmatpush1.bf16.msra.mxu0 %v6856
    %9123 = vmatprep.subr.bf16.mxu0 %v6861
    %9124 = vmatpush1.bf16.msra.mxu0 %v6860
    %9125 = vmatprep.subr.bf16.mxu0 %v6865
    %9126 = vmatpush1.bf16.msra.mxu0 %v6864
    %9127 = vmatprep.subr.bf16.mxu0 %v6869
    %9128 = vmatpush1.bf16.msra.mxu0 %v6868
    %9129 = vmatprep.subr.bf16.mxu0 %v6873
    %9130 = vmatpush1.bf16.msra.mxu0 %v6872
    %9131 = vmatprep.subr.bf16.mxu0 %v6877
    %9132 = vmatpush1.bf16.msra.mxu0 %v6876
    %9133 = vmatprep.subr.bf16.mxu0 %v6881
    %9134 = vmatpush1.bf16.msra.mxu0 %v6880
    %9135 = vmatprep.subr.bf16.mxu0 %v6885
    %9136 = vmatpush1.bf16.msra.mxu0 %v6884
    %9137 = vmatprep.subr.bf16.mxu0 %v6889
    %9138 = vmatpush1.bf16.msra.mxu0 %v6888
    %9139 = vmatprep.subr.bf16.mxu0 %v6893
    %9140 = vmatpush1.bf16.msra.mxu0 %v6892
    %9141 = vmatprep.subr.bf16.mxu0 %v6897
    %9142 = vmatpush1.bf16.msra.mxu0 %v6896
    %9143 = vmatprep.subr.bf16.mxu0 %v6901
    %9144 = vmatpush1.bf16.msra.mxu0 %v6900
    %9145 = vmatprep.subr.bf16.mxu0 %v6905
    %9146 = vmatpush1.bf16.msra.mxu0 %v6904
    %9147 = vmatprep.subr.bf16.mxu0 %v6909
    %9148 = vmatpush1.bf16.msra.mxu0 %v6908
    %9149 = vmatprep.subr.bf16.mxu0 %v6913
    %9150 = vmatpush1.bf16.msra.mxu0 %v6912
    %9151 = vmatprep.subr.bf16.mxu0 %v6917
    %9152 = vmatpush1.bf16.msra.mxu0 %v6916
    %9153 = vmatprep.mubr.bf16.mxu0 %v4283
    %9154 = vmatmul.mubr.bf16.gmra.mrb[0].mxu0 %v4282
    %v9155 = vpop.f32.mrb[0].mxu0
    %v9156 = vadd.f32 %v9043, %v9155
    %v9157 = vpop.f32.mrb[0].mxu0
    %v9158 = vadd.f32 %v9045, %v9157
    %v9159 = vpop.f32.mrb[0].mxu0
    %v9160 = vadd.f32 %v9047, %v9159
    %v9161 = vpop.f32.mrb[0].mxu0
    %v9162 = vadd.f32 %v9049, %v9161
    %9163 = vmatprep.mubr.bf16.mxu0 %v4301
    %9164 = vmatmul.mubr.bf16.gmra.mrb[0].mxu0 %v4300
    %v9165 = vpop.f32.mrb[0].mxu0
    %v9166 = vadd.f32 %v9053, %v9165
    %v9167 = vpop.f32.mrb[0].mxu0
    %v9168 = vadd.f32 %v9055, %v9167
    %v9169 = vpop.f32.mrb[0].mxu0
    %v9170 = vadd.f32 %v9057, %v9169
    %v9171 = vpop.f32.mrb[0].mxu0
    %v9172 = vadd.f32 %v9059, %v9171
    %9173 = vmatprep.mubr.bf16.mxu0 %v4319
    %9174 = vmatmul.mubr.bf16.gmra.mrb[0].mxu0 %v4318
    %v9175 = vpop.f32.mrb[0].mxu0
    %v9176 = vadd.f32 %v9063, %v9175
    %v9177 = vpop.f32.mrb[0].mxu0
    %v9178 = vadd.f32 %v9065, %v9177
    %v9179 = vpop.f32.mrb[0].mxu0
    %v9180 = vadd.f32 %v9067, %v9179
    %v9181 = vpop.f32.mrb[0].mxu0
    %v9182 = vadd.f32 %v9069, %v9181
    %9183 = vmatprep.mubr.bf16.mxu0 %v4337
    %9184 = vmatmul.mubr.bf16.gmra.mrb[0].mxu0 %v4336
    %v9185 = vpop.f32.mrb[0].mxu0
    %v9186 = vadd.f32 %v9073, %v9185
    %v9187 = vpop.f32.mrb[0].mxu0
    %v9188 = vadd.f32 %v9075, %v9187
    %v9189 = vpop.f32.mrb[0].mxu0
    %v9190 = vadd.f32 %v9077, %v9189
    %v9191 = vpop.f32.mrb[0].mxu0
    %v9192 = vadd.f32 %v9079, %v9191
    %9193 = vmatprep.mubr.bf16.mxu0 %v4355
    %9194 = vmatmul.mubr.bf16.gmra.mrb[0].mxu0 %v4354
    %v9195 = vpop.f32.mrb[0].mxu0
    %v9196 = vadd.f32 %v9083, %v9195
    %v9197 = vpop.f32.mrb[0].mxu0
    %v9198 = vadd.f32 %v9085, %v9197
    %v9199 = vpop.f32.mrb[0].mxu0
    %v9200 = vadd.f32 %v9087, %v9199
    %v9201 = vpop.f32.mrb[0].mxu0
    %v9202 = vadd.f32 %v9089, %v9201
    %9203 = vmatprep.mubr.bf16.mxu0 %v4373
    %9204 = vmatmul.mubr.bf16.gmra.mrb[0].mxu0 %v4372
    %v9205 = vpop.f32.mrb[0].mxu0
    %v9206 = vadd.f32 %v9093, %v9205
    %v9207 = vpop.f32.mrb[0].mxu0
    %v9208 = vadd.f32 %v9095, %v9207
    %v9209 = vpop.f32.mrb[0].mxu0
    %v9210 = vadd.f32 %v9097, %v9209
    %v9211 = vpop.f32.mrb[0].mxu0
    %v9212 = vadd.f32 %v9099, %v9211
    %9213 = vmatprep.mubr.bf16.mxu0 %v4391
    %9214 = vmatmul.mubr.bf16.gmra.mrb[0].mxu0 %v4390
    %v9215 = vpop.f32.mrb[0].mxu0
    %v9216 = vadd.f32 %v9103, %v9215
    %v9217 = vpop.f32.mrb[0].mxu0
    %v9218 = vadd.f32 %v9105, %v9217
    %v9219 = vpop.f32.mrb[0].mxu0
    %v9220 = vadd.f32 %v9107, %v9219
    %v9221 = vpop.f32.mrb[0].mxu0
    %v9222 = vadd.f32 %v9109, %v9221
    %9223 = vmatprep.mubr.bf16.mxu0 %v4409
    %9224 = vmatmul.mubr.bf16.gmra.mrb[0].mxu0 %v4408
    %v9225 = vpop.f32.mrb[0].mxu0
    %v9226 = vadd.f32 %v9113, %v9225
    %v9227 = vpop.f32.mrb[0].mxu0
    %v9228 = vadd.f32 %v9115, %v9227
    %v9229 = vpop.f32.mrb[0].mxu0
    %v9230 = vadd.f32 %v9117, %v9229
    %v9231 = vpop.f32.mrb[0].mxu0
    %v9232 = vadd.f32 %v9119, %v9231
    %9233 = vdwg.mxu0
    %9234 = vmatprep.subr.bf16.mxu0 %v6921
    %9235 = vmatpush1.bf16.msra.mxu0 %v6920
    %9236 = vmatprep.subr.bf16.mxu0 %v6925
    %9237 = vmatpush1.bf16.msra.mxu0 %v6924
    %9238 = vmatprep.subr.bf16.mxu0 %v6929
    %9239 = vmatpush1.bf16.msra.mxu0 %v6928
    %9240 = vmatprep.subr.bf16.mxu0 %v6933
    %9241 = vmatpush1.bf16.msra.mxu0 %v6932
    %9242 = vmatprep.subr.bf16.mxu0 %v6937
    %9243 = vmatpush1.bf16.msra.mxu0 %v6936
    %9244 = vmatprep.subr.bf16.mxu0 %v6941
    %9245 = vmatpush1.bf16.msra.mxu0 %v6940
    %9246 = vmatprep.subr.bf16.mxu0 %v6945
    %9247 = vmatpush1.bf16.msra.mxu0 %v6944
    %9248 = vmatprep.subr.bf16.mxu0 %v6949
    %9249 = vmatpush1.bf16.msra.mxu0 %v6948
    %9250 = vmatprep.subr.bf16.mxu0 %v6953
    %9251 = vmatpush1.bf16.msra.mxu0 %v6952
    %9252 = vmatprep.subr.bf16.mxu0 %v6957
    %9253 = vmatpush1.bf16.msra.mxu0 %v6956
    %9254 = vmatprep.subr.bf16.mxu0 %v6961
    %9255 = vmatpush1.bf16.msra.mxu0 %v6960
    %9256 = vmatprep.subr.bf16.mxu0 %v6965
    %9257 = vmatpush1.bf16.msra.mxu0 %v6964
    %9258 = vmatprep.subr.bf16.mxu0 %v6969
    %9259 = vmatpush1.bf16.msra.mxu0 %v6968
    %9260 = vmatprep.subr.bf16.mxu0 %v6973
    %9261 = vmatpush1.bf16.msra.mxu0 %v6972
    %9262 = vmatprep.subr.bf16.mxu0 %v6977
    %9263 = vmatpush1.bf16.msra.mxu0 %v6976
    %9264 = vmatprep.subr.bf16.mxu0 %v6981
    %9265 = vmatpush1.bf16.msra.mxu0 %v6980
    %9266 = vmatprep.mubr.bf16.mxu0 %v4285
    %9267 = vmatmul.mubr.bf16.gmra.mrb[0].mxu0 %v4284
    %v9268 = vpop.f32.mrb[0].mxu0
    %v9269 = vadd.f32 %v9156, %v9268
    %v9270 = vpop.f32.mrb[0].mxu0
    %v9271 = vadd.f32 %v9158, %v9270
    %v9272 = vpop.f32.mrb[0].mxu0
    %v9273 = vadd.f32 %v9160, %v9272
    %v9274 = vpop.f32.mrb[0].mxu0
    %v9275 = vadd.f32 %v9162, %v9274
    %9276 = vmatprep.mubr.bf16.mxu0 %v4303
    %9277 = vmatmul.mubr.bf16.gmra.mrb[0].mxu0 %v4302
    %v9278 = vpop.f32.mrb[0].mxu0
    %v9279 = vadd.f32 %v9166, %v9278
    %v9280 = vpop.f32.mrb[0].mxu0
    %v9281 = vadd.f32 %v9168, %v9280
    %v9282 = vpop.f32.mrb[0].mxu0
    %v9283 = vadd.f32 %v9170, %v9282
    %v9284 = vpop.f32.mrb[0].mxu0
    %v9285 = vadd.f32 %v9172, %v9284
    %9286 = vmatprep.mubr.bf16.mxu0 %v4321
    %9287 = vmatmul.mubr.bf16.gmra.mrb[0].mxu0 %v4320
    %v9288 = vpop.f32.mrb[0].mxu0
    %v9289 = vadd.f32 %v9176, %v9288
    %v9290 = vpop.f32.mrb[0].mxu0
    %v9291 = vadd.f32 %v9178, %v9290
    %v9292 = vpop.f32.mrb[0].mxu0
    %v9293 = vadd.f32 %v9180, %v9292
    %v9294 = vpop.f32.mrb[0].mxu0
    %v9295 = vadd.f32 %v9182, %v9294
    %9296 = vmatprep.mubr.bf16.mxu0 %v4339
    %9297 = vmatmul.mubr.bf16.gmra.mrb[0].mxu0 %v4338
    %v9298 = vpop.f32.mrb[0].mxu0
    %v9299 = vadd.f32 %v9186, %v9298
    %v9300 = vpop.f32.mrb[0].mxu0
    %v9301 = vadd.f32 %v9188, %v9300
    %v9302 = vpop.f32.mrb[0].mxu0
    %v9303 = vadd.f32 %v9190, %v9302
    %v9304 = vpop.f32.mrb[0].mxu0
    %v9305 = vadd.f32 %v9192, %v9304
    %9306 = vmatprep.mubr.bf16.mxu0 %v4357
    %9307 = vmatmul.mubr.bf16.gmra.mrb[0].mxu0 %v4356
    %v9308 = vpop.f32.mrb[0].mxu0
    %v9309 = vadd.f32 %v9196, %v9308
    %v9310 = vpop.f32.mrb[0].mxu0
    %v9311 = vadd.f32 %v9198, %v9310
    %v9312 = vpop.f32.mrb[0].mxu0
    %v9313 = vadd.f32 %v9200, %v9312
    %v9314 = vpop.f32.mrb[0].mxu0
    %v9315 = vadd.f32 %v9202, %v9314
    %9316 = vmatprep.mubr.bf16.mxu0 %v4375
    %9317 = vmatmul.mubr.bf16.gmra.mrb[0].mxu0 %v4374
    %v9318 = vpop.f32.mrb[0].mxu0
    %v9319 = vadd.f32 %v9206, %v9318
    %v9320 = vpop.f32.mrb[0].mxu0
    %v9321 = vadd.f32 %v9208, %v9320
    %v9322 = vpop.f32.mrb[0].mxu0
    %v9323 = vadd.f32 %v9210, %v9322
    %v9324 = vpop.f32.mrb[0].mxu0
    %v9325 = vadd.f32 %v9212, %v9324
    %9326 = vmatprep.mubr.bf16.mxu0 %v4393
    %9327 = vmatmul.mubr.bf16.gmra.mrb[0].mxu0 %v4392
    %v9328 = vpop.f32.mrb[0].mxu0
    %v9329 = vadd.f32 %v9216, %v9328
    %v9330 = vpop.f32.mrb[0].mxu0
    %v9331 = vadd.f32 %v9218, %v9330
    %v9332 = vpop.f32.mrb[0].mxu0
    %v9333 = vadd.f32 %v9220, %v9332
    %v9334 = vpop.f32.mrb[0].mxu0
    %v9335 = vadd.f32 %v9222, %v9334
    %9336 = vmatprep.mubr.bf16.mxu0 %v4411
    %9337 = vmatmul.mubr.bf16.gmra.mrb[0].mxu0 %v4410
    %v9338 = vpop.f32.mrb[0].mxu0
    %v9339 = vadd.f32 %v9226, %v9338
    %v9340 = vpop.f32.mrb[0].mxu0
    %v9341 = vadd.f32 %v9228, %v9340
    %v9342 = vpop.f32.mrb[0].mxu0
    %v9343 = vadd.f32 %v9230, %v9342
    %v9344 = vpop.f32.mrb[0].mxu0
    %v9345 = vadd.f32 %v9232, %v9344
    %9346 = vdwg.mxu0
    %9347 = vmatprep.subr.bf16.mxu0 %v6985
    %9348 = vmatpush1.bf16.msra.mxu0 %v6984
    %9349 = vmatprep.subr.bf16.mxu0 %v6989
    %9350 = vmatpush1.bf16.msra.mxu0 %v6988
    %9351 = vmatprep.subr.bf16.mxu0 %v6993
    %9352 = vmatpush1.bf16.msra.mxu0 %v6992
    %9353 = vmatprep.subr.bf16.mxu0 %v6997
    %9354 = vmatpush1.bf16.msra.mxu0 %v6996
    %9355 = vmatprep.subr.bf16.mxu0 %v7001
    %9356 = vmatpush1.bf16.msra.mxu0 %v7000
    %9357 = vmatprep.subr.bf16.mxu0 %v7005
    %9358 = vmatpush1.bf16.msra.mxu0 %v7004
    %9359 = vmatprep.subr.bf16.mxu0 %v7009
    %9360 = vmatpush1.bf16.msra.mxu0 %v7008
    %9361 = vmatprep.subr.bf16.mxu0 %v7013
    %9362 = vmatpush1.bf16.msra.mxu0 %v7012
    %9363 = vmatprep.subr.bf16.mxu0 %v7017
    %9364 = vmatpush1.bf16.msra.mxu0 %v7016
    %9365 = vmatprep.subr.bf16.mxu0 %v7021
    %9366 = vmatpush1.bf16.msra.mxu0 %v7020
    %9367 = vmatprep.subr.bf16.mxu0 %v7025
    %9368 = vmatpush1.bf16.msra.mxu0 %v7024
    %9369 = vmatprep.subr.bf16.mxu0 %v7029
    %9370 = vmatpush1.bf16.msra.mxu0 %v7028
    %9371 = vmatprep.subr.bf16.mxu0 %v7033
    %9372 = vmatpush1.bf16.msra.mxu0 %v7032
    %9373 = vmatprep.subr.bf16.mxu0 %v7037
    %9374 = vmatpush1.bf16.msra.mxu0 %v7036
    %9375 = vmatprep.subr.bf16.mxu0 %v7041
    %9376 = vmatpush1.bf16.msra.mxu0 %v7040
    %9377 = vmatprep.subr.bf16.mxu0 %v7045
    %9378 = vmatpush1.bf16.msra.mxu0 %v7044
    %9379 = vmatprep.mubr.bf16.mxu0 %v4287
    %9380 = vmatmul.mubr.bf16.gmra.mrb[0].mxu0 %v4286
    %v9381 = vpop.f32.mrb[0].mxu0
    %v9382 = vadd.f32 %v9269, %v9381
    %v9383 = vpop.f32.mrb[0].mxu0
    %v9384 = vadd.f32 %v9271, %v9383
    %v9385 = vpop.f32.mrb[0].mxu0
    %v9386 = vadd.f32 %v9273, %v9385
    %v9387 = vpop.f32.mrb[0].mxu0
    %v9388 = vadd.f32 %v9275, %v9387
    %9389 = vmatprep.mubr.bf16.mxu0 %v4305
    %9390 = vmatmul.mubr.bf16.gmra.mrb[0].mxu0 %v4304
    %v9391 = vpop.f32.mrb[0].mxu0
    %v9392 = vadd.f32 %v9279, %v9391
    %v9393 = vpop.f32.mrb[0].mxu0
    %v9394 = vadd.f32 %v9281, %v9393
    %v9395 = vpop.f32.mrb[0].mxu0
    %v9396 = vadd.f32 %v9283, %v9395
    %v9397 = vpop.f32.mrb[0].mxu0
    %v9398 = vadd.f32 %v9285, %v9397
    %9399 = vmatprep.mubr.bf16.mxu0 %v4323
    %9400 = vmatmul.mubr.bf16.gmra.mrb[0].mxu0 %v4322
    %v9401 = vpop.f32.mrb[0].mxu0
    %v9402 = vadd.f32 %v9289, %v9401
    %v9403 = vpop.f32.mrb[0].mxu0
    %v9404 = vadd.f32 %v9291, %v9403
    %v9405 = vpop.f32.mrb[0].mxu0
    %v9406 = vadd.f32 %v9293, %v9405
    %v9407 = vpop.f32.mrb[0].mxu0
    %v9408 = vadd.f32 %v9295, %v9407
    %9409 = vmatprep.mubr.bf16.mxu0 %v4341
    %9410 = vmatmul.mubr.bf16.gmra.mrb[0].mxu0 %v4340
    %v9411 = vpop.f32.mrb[0].mxu0
    %v9412 = vadd.f32 %v9299, %v9411
    %v9413 = vpop.f32.mrb[0].mxu0
    %v9414 = vadd.f32 %v9301, %v9413
    %v9415 = vpop.f32.mrb[0].mxu0
    %v9416 = vadd.f32 %v9303, %v9415
    %v9417 = vpop.f32.mrb[0].mxu0
    %v9418 = vadd.f32 %v9305, %v9417
    %9419 = vmatprep.mubr.bf16.mxu0 %v4359
    %9420 = vmatmul.mubr.bf16.gmra.mrb[0].mxu0 %v4358
    %v9421 = vpop.f32.mrb[0].mxu0
    %v9422 = vadd.f32 %v9309, %v9421
    %v9423 = vpop.f32.mrb[0].mxu0
    %v9424 = vadd.f32 %v9311, %v9423
    %v9425 = vpop.f32.mrb[0].mxu0
    %v9426 = vadd.f32 %v9313, %v9425
    %v9427 = vpop.f32.mrb[0].mxu0
    %v9428 = vadd.f32 %v9315, %v9427
    %9429 = vmatprep.mubr.bf16.mxu0 %v4377
    %9430 = vmatmul.mubr.bf16.gmra.mrb[0].mxu0 %v4376
    %v9431 = vpop.f32.mrb[0].mxu0
    %v9432 = vadd.f32 %v9319, %v9431
    %v9433 = vpop.f32.mrb[0].mxu0
    %v9434 = vadd.f32 %v9321, %v9433
    %v9435 = vpop.f32.mrb[0].mxu0
    %v9436 = vadd.f32 %v9323, %v9435
    %v9437 = vpop.f32.mrb[0].mxu0
    %v9438 = vadd.f32 %v9325, %v9437
    %9439 = vmatprep.mubr.bf16.mxu0 %v4395
    %9440 = vmatmul.mubr.bf16.gmra.mrb[0].mxu0 %v4394
    %v9441 = vpop.f32.mrb[0].mxu0
    %v9442 = vadd.f32 %v9329, %v9441
    %v9443 = vpop.f32.mrb[0].mxu0
    %v9444 = vadd.f32 %v9331, %v9443
    %v9445 = vpop.f32.mrb[0].mxu0
    %v9446 = vadd.f32 %v9333, %v9445
    %v9447 = vpop.f32.mrb[0].mxu0
    %v9448 = vadd.f32 %v9335, %v9447
    %9449 = vmatprep.mubr.bf16.mxu0 %v4413
    %9450 = vmatmul.mubr.bf16.gmra.mrb[0].mxu0 %v4412
    %v9451 = vpop.f32.mrb[0].mxu0
    %v9452 = vadd.f32 %v9339, %v9451
    %v9453 = vpop.f32.mrb[0].mxu0
    %v9454 = vadd.f32 %v9341, %v9453
    %v9455 = vpop.f32.mrb[0].mxu0
    %v9456 = vadd.f32 %v9343, %v9455
    %v9457 = vpop.f32.mrb[0].mxu0
    %v9458 = vadd.f32 %v9345, %v9457
    %9459 = vdwg.mxu0
    %9460 = vmatprep.subr.bf16.mxu0 %v7049
    %9461 = vmatpush1.bf16.msra.mxu0 %v7048
    %9462 = vmatprep.subr.bf16.mxu0 %v7053
    %9463 = vmatpush1.bf16.msra.mxu0 %v7052
    %9464 = vmatprep.subr.bf16.mxu0 %v7057
    %9465 = vmatpush1.bf16.msra.mxu0 %v7056
    %9466 = vmatprep.subr.bf16.mxu0 %v7061
    %9467 = vmatpush1.bf16.msra.mxu0 %v7060
    %9468 = vmatprep.subr.bf16.mxu0 %v7065
    %9469 = vmatpush1.bf16.msra.mxu0 %v7064
    %9470 = vmatprep.subr.bf16.mxu0 %v7069
    %9471 = vmatpush1.bf16.msra.mxu0 %v7068
    %9472 = vmatprep.subr.bf16.mxu0 %v7073
    %9473 = vmatpush1.bf16.msra.mxu0 %v7072
    %9474 = vmatprep.subr.bf16.mxu0 %v7077
    %9475 = vmatpush1.bf16.msra.mxu0 %v7076
    %9476 = vmatprep.subr.bf16.mxu0 %v7081
    %9477 = vmatpush1.bf16.msra.mxu0 %v7080
    %9478 = vmatprep.subr.bf16.mxu0 %v7085
    %9479 = vmatpush1.bf16.msra.mxu0 %v7084
    %9480 = vmatprep.subr.bf16.mxu0 %v7089
    %9481 = vmatpush1.bf16.msra.mxu0 %v7088
    %9482 = vmatprep.subr.bf16.mxu0 %v7093
    %9483 = vmatpush1.bf16.msra.mxu0 %v7092
    %9484 = vmatprep.subr.bf16.mxu0 %v7097
    %9485 = vmatpush1.bf16.msra.mxu0 %v7096
    %9486 = vmatprep.subr.bf16.mxu0 %v7101
    %9487 = vmatpush1.bf16.msra.mxu0 %v7100
    %9488 = vmatprep.subr.bf16.mxu0 %v7105
    %9489 = vmatpush1.bf16.msra.mxu0 %v7104
    %9490 = vmatprep.subr.bf16.mxu0 %v7109
    %9491 = vmatpush1.bf16.msra.mxu0 %v7108
    %9492 = vmatprep.mubr.bf16.mxu0 %v4289
    %9493 = vmatmul.mubr.bf16.gmra.mrb[0].mxu0 %v4288
    %v9494 = vpop.f32.mrb[0].mxu0
    %v9495 = vadd.f32 %v9382, %v9494
    %v9496 = vpop.f32.mrb[0].mxu0
    %v9497 = vadd.f32 %v9384, %v9496
    %v9498 = vpop.f32.mrb[0].mxu0
    %v9499 = vadd.f32 %v9386, %v9498
    %v9500 = vpop.f32.mrb[0].mxu0
    %v9501 = vadd.f32 %v9388, %v9500
    %9502 = vmatprep.mubr.bf16.mxu0 %v4307
    %9503 = vmatmul.mubr.bf16.gmra.mrb[0].mxu0 %v4306
    %v9504 = vpop.f32.mrb[0].mxu0
    %v9505 = vadd.f32 %v9392, %v9504
    %v9506 = vpop.f32.mrb[0].mxu0
    %v9507 = vadd.f32 %v9394, %v9506
    %v9508 = vpop.f32.mrb[0].mxu0
    %v9509 = vadd.f32 %v9396, %v9508
    %v9510 = vpop.f32.mrb[0].mxu0
    %v9511 = vadd.f32 %v9398, %v9510
    %9512 = vmatprep.mubr.bf16.mxu0 %v4325
    %9513 = vmatmul.mubr.bf16.gmra.mrb[0].mxu0 %v4324
    %v9514 = vpop.f32.mrb[0].mxu0
    %v9515 = vadd.f32 %v9402, %v9514
    %v9516 = vpop.f32.mrb[0].mxu0
    %v9517 = vadd.f32 %v9404, %v9516
    %v9518 = vpop.f32.mrb[0].mxu0
    %v9519 = vadd.f32 %v9406, %v9518
    %v9520 = vpop.f32.mrb[0].mxu0
    %v9521 = vadd.f32 %v9408, %v9520
    %9522 = vmatprep.mubr.bf16.mxu0 %v4343
    %9523 = vmatmul.mubr.bf16.gmra.mrb[0].mxu0 %v4342
    %v9524 = vpop.f32.mrb[0].mxu0
    %v9525 = vadd.f32 %v9412, %v9524
    %v9526 = vpop.f32.mrb[0].mxu0
    %v9527 = vadd.f32 %v9414, %v9526
    %v9528 = vpop.f32.mrb[0].mxu0
    %v9529 = vadd.f32 %v9416, %v9528
    %v9530 = vpop.f32.mrb[0].mxu0
    %v9531 = vadd.f32 %v9418, %v9530
    %9532 = vmatprep.mubr.bf16.mxu0 %v4361
    %9533 = vmatmul.mubr.bf16.gmra.mrb[0].mxu0 %v4360
    %v9534 = vpop.f32.mrb[0].mxu0
    %v9535 = vadd.f32 %v9422, %v9534
    %v9536 = vpop.f32.mrb[0].mxu0
    %v9537 = vadd.f32 %v9424, %v9536
    %v9538 = vpop.f32.mrb[0].mxu0
    %v9539 = vadd.f32 %v9426, %v9538
    %v9540 = vpop.f32.mrb[0].mxu0
    %v9541 = vadd.f32 %v9428, %v9540
    %9542 = vmatprep.mubr.bf16.mxu0 %v4379
    %9543 = vmatmul.mubr.bf16.gmra.mrb[0].mxu0 %v4378
    %v9544 = vpop.f32.mrb[0].mxu0
    %v9545 = vadd.f32 %v9432, %v9544
    %v9546 = vpop.f32.mrb[0].mxu0
    %v9547 = vadd.f32 %v9434, %v9546
    %v9548 = vpop.f32.mrb[0].mxu0
    %v9549 = vadd.f32 %v9436, %v9548
    %v9550 = vpop.f32.mrb[0].mxu0
    %v9551 = vadd.f32 %v9438, %v9550
    %9552 = vmatprep.mubr.bf16.mxu0 %v4397
    %9553 = vmatmul.mubr.bf16.gmra.mrb[0].mxu0 %v4396
    %v9554 = vpop.f32.mrb[0].mxu0
    %v9555 = vadd.f32 %v9442, %v9554
    %v9556 = vpop.f32.mrb[0].mxu0
    %v9557 = vadd.f32 %v9444, %v9556
    %v9558 = vpop.f32.mrb[0].mxu0
    %v9559 = vadd.f32 %v9446, %v9558
    %v9560 = vpop.f32.mrb[0].mxu0
    %v9561 = vadd.f32 %v9448, %v9560
    %9562 = vmatprep.mubr.bf16.mxu0 %v4415
    %9563 = vmatmul.mubr.bf16.gmra.mrb[0].mxu0 %v4414
    %v9564 = vpop.f32.mrb[0].mxu0
    %v9565 = vadd.f32 %v9452, %v9564
    %v9566 = vpop.f32.mrb[0].mxu0
    %v9567 = vadd.f32 %v9454, %v9566
    %v9568 = vpop.f32.mrb[0].mxu0
    %v9569 = vadd.f32 %v9456, %v9568
    %v9570 = vpop.f32.mrb[0].mxu0
    %v9571 = vadd.f32 %v9458, %v9570
    %9572 = vdwg.mxu0
    %9573 = vmatprep.subr.bf16.mxu0 %v7113
    %9574 = vmatpush1.bf16.msra.mxu0 %v7112
    %9575 = vmatprep.subr.bf16.mxu0 %v7117
    %9576 = vmatpush1.bf16.msra.mxu0 %v7116
    %9577 = vmatprep.subr.bf16.mxu0 %v7121
    %9578 = vmatpush1.bf16.msra.mxu0 %v7120
    %9579 = vmatprep.subr.bf16.mxu0 %v7125
    %9580 = vmatpush1.bf16.msra.mxu0 %v7124
    %9581 = vmatprep.subr.bf16.mxu0 %v7129
    %9582 = vmatpush1.bf16.msra.mxu0 %v7128
    %9583 = vmatprep.subr.bf16.mxu0 %v7133
    %9584 = vmatpush1.bf16.msra.mxu0 %v7132
    %9585 = vmatprep.subr.bf16.mxu0 %v7137
    %9586 = vmatpush1.bf16.msra.mxu0 %v7136
    %9587 = vmatprep.subr.bf16.mxu0 %v7141
    %9588 = vmatpush1.bf16.msra.mxu0 %v7140
    %9589 = vmatprep.subr.bf16.mxu0 %v7145
    %9590 = vmatpush1.bf16.msra.mxu0 %v7144
    %9591 = vmatprep.subr.bf16.mxu0 %v7149
    %9592 = vmatpush1.bf16.msra.mxu0 %v7148
    %9593 = vmatprep.subr.bf16.mxu0 %v7153
    %9594 = vmatpush1.bf16.msra.mxu0 %v7152
    %9595 = vmatprep.subr.bf16.mxu0 %v7157
    %9596 = vmatpush1.bf16.msra.mxu0 %v7156
    %9597 = vmatprep.subr.bf16.mxu0 %v7161
    %9598 = vmatpush1.bf16.msra.mxu0 %v7160
    %9599 = vmatprep.subr.bf16.mxu0 %v7165
    %9600 = vmatpush1.bf16.msra.mxu0 %v7164
    %9601 = vmatprep.subr.bf16.mxu0 %v7169
    %9602 = vmatpush1.bf16.msra.mxu0 %v7168
    %9603 = vmatprep.subr.bf16.mxu0 %v7173
    %9604 = vmatpush1.bf16.msra.mxu0 %v7172
    %9605 = vmatprep.mubr.bf16.mxu0 %v4291
    %9606 = vmatmul.mubr.bf16.gmra.mrb[0].mxu0 %v4290
    %v9607 = vpop.f32.mrb[0].mxu0
    %v9608 = vadd.f32 %v9495, %v9607
    %v9609 = vpop.f32.mrb[0].mxu0
    %v9610 = vadd.f32 %v9497, %v9609
    %v9611 = vpop.f32.mrb[0].mxu0
    %v9612 = vadd.f32 %v9499, %v9611
    %v9613 = vpop.f32.mrb[0].mxu0
    %v9614 = vadd.f32 %v9501, %v9613
    %9615 = vmatprep.mubr.bf16.mxu0 %v4309
    %9616 = vmatmul.mubr.bf16.gmra.mrb[0].mxu0 %v4308
    %v9617 = vpop.f32.mrb[0].mxu0
    %v9618 = vadd.f32 %v9505, %v9617
    %v9619 = vpop.f32.mrb[0].mxu0
    %v9620 = vadd.f32 %v9507, %v9619
    %v9621 = vpop.f32.mrb[0].mxu0
    %v9622 = vadd.f32 %v9509, %v9621
    %v9623 = vpop.f32.mrb[0].mxu0
    %v9624 = vadd.f32 %v9511, %v9623
    %9625 = vmatprep.mubr.bf16.mxu0 %v4327
    %9626 = vmatmul.mubr.bf16.gmra.mrb[0].mxu0 %v4326
    %v9627 = vpop.f32.mrb[0].mxu0
    %v9628 = vadd.f32 %v9515, %v9627
    %v9629 = vpop.f32.mrb[0].mxu0
    %v9630 = vadd.f32 %v9517, %v9629
    %v9631 = vpop.f32.mrb[0].mxu0
    %v9632 = vadd.f32 %v9519, %v9631
    %v9633 = vpop.f32.mrb[0].mxu0
    %v9634 = vadd.f32 %v9521, %v9633
    %9635 = vmatprep.mubr.bf16.mxu0 %v4345
    %9636 = vmatmul.mubr.bf16.gmra.mrb[0].mxu0 %v4344
    %v9637 = vpop.f32.mrb[0].mxu0
    %v9638 = vadd.f32 %v9525, %v9637
    %v9639 = vpop.f32.mrb[0].mxu0
    %v9640 = vadd.f32 %v9527, %v9639
    %v9641 = vpop.f32.mrb[0].mxu0
    %v9642 = vadd.f32 %v9529, %v9641
    %v9643 = vpop.f32.mrb[0].mxu0
    %v9644 = vadd.f32 %v9531, %v9643
    %9645 = vmatprep.mubr.bf16.mxu0 %v4363
    %9646 = vmatmul.mubr.bf16.gmra.mrb[0].mxu0 %v4362
    %v9647 = vpop.f32.mrb[0].mxu0
    %v9648 = vadd.f32 %v9535, %v9647
    %v9649 = vpop.f32.mrb[0].mxu0
    %v9650 = vadd.f32 %v9537, %v9649
    %v9651 = vpop.f32.mrb[0].mxu0
    %v9652 = vadd.f32 %v9539, %v9651
    %v9653 = vpop.f32.mrb[0].mxu0
    %v9654 = vadd.f32 %v9541, %v9653
    %9655 = vmatprep.mubr.bf16.mxu0 %v4381
    %9656 = vmatmul.mubr.bf16.gmra.mrb[0].mxu0 %v4380
    %v9657 = vpop.f32.mrb[0].mxu0
    %v9658 = vadd.f32 %v9545, %v9657
    %v9659 = vpop.f32.mrb[0].mxu0
    %v9660 = vadd.f32 %v9547, %v9659
    %v9661 = vpop.f32.mrb[0].mxu0
    %v9662 = vadd.f32 %v9549, %v9661
    %v9663 = vpop.f32.mrb[0].mxu0
    %v9664 = vadd.f32 %v9551, %v9663
    %9665 = vmatprep.mubr.bf16.mxu0 %v4399
    %9666 = vmatmul.mubr.bf16.gmra.mrb[0].mxu0 %v4398
    %v9667 = vpop.f32.mrb[0].mxu0
    %v9668 = vadd.f32 %v9555, %v9667
    %v9669 = vpop.f32.mrb[0].mxu0
    %v9670 = vadd.f32 %v9557, %v9669
    %v9671 = vpop.f32.mrb[0].mxu0
    %v9672 = vadd.f32 %v9559, %v9671
    %v9673 = vpop.f32.mrb[0].mxu0
    %v9674 = vadd.f32 %v9561, %v9673
    %9675 = vmatprep.mubr.bf16.mxu0 %v4417
    %9676 = vmatmul.mubr.bf16.gmra.mrb[0].mxu0 %v4416
    %v9677 = vpop.f32.mrb[0].mxu0
    %v9678 = vadd.f32 %v9565, %v9677
    %v9679 = vpop.f32.mrb[0].mxu0
    %v9680 = vadd.f32 %v9567, %v9679
    %v9681 = vpop.f32.mrb[0].mxu0
    %v9682 = vadd.f32 %v9569, %v9681
    %v9683 = vpop.f32.mrb[0].mxu0
    %v9684 = vadd.f32 %v9571, %v9683
    %9685 = vdwg.mxu0
    %9686 = vmatprep.subr.bf16.mxu0 %v7177
    %9687 = vmatpush1.bf16.msra.mxu0 %v7176
    %9688 = vmatprep.subr.bf16.mxu0 %v7181
    %9689 = vmatpush1.bf16.msra.mxu0 %v7180
    %9690 = vmatprep.subr.bf16.mxu0 %v7185
    %9691 = vmatpush1.bf16.msra.mxu0 %v7184
    %9692 = vmatprep.subr.bf16.mxu0 %v7189
    %9693 = vmatpush1.bf16.msra.mxu0 %v7188
    %9694 = vmatprep.subr.bf16.mxu0 %v7193
    %9695 = vmatpush1.bf16.msra.mxu0 %v7192
    %9696 = vmatprep.subr.bf16.mxu0 %v7197
    %9697 = vmatpush1.bf16.msra.mxu0 %v7196
    %9698 = vmatprep.subr.bf16.mxu0 %v7201
    %9699 = vmatpush1.bf16.msra.mxu0 %v7200
    %9700 = vmatprep.subr.bf16.mxu0 %v7205
    %9701 = vmatpush1.bf16.msra.mxu0 %v7204
    %9702 = vmatprep.subr.bf16.mxu0 %v7209
    %9703 = vmatpush1.bf16.msra.mxu0 %v7208
    %9704 = vmatprep.subr.bf16.mxu0 %v7213
    %9705 = vmatpush1.bf16.msra.mxu0 %v7212
    %9706 = vmatprep.subr.bf16.mxu0 %v7217
    %9707 = vmatpush1.bf16.msra.mxu0 %v7216
    %9708 = vmatprep.subr.bf16.mxu0 %v7221
    %9709 = vmatpush1.bf16.msra.mxu0 %v7220
    %9710 = vmatprep.subr.bf16.mxu0 %v7225
    %9711 = vmatpush1.bf16.msra.mxu0 %v7224
    %9712 = vmatprep.subr.bf16.mxu0 %v7229
    %9713 = vmatpush1.bf16.msra.mxu0 %v7228
    %9714 = vmatprep.subr.bf16.mxu0 %v7233
    %9715 = vmatpush1.bf16.msra.mxu0 %v7232
    %9716 = vmatprep.subr.bf16.mxu0 %v7237
    %9717 = vmatpush1.bf16.msra.mxu0 %v7236
    %9718 = vmatprep.mubr.bf16.mxu0 %v4293
    %9719 = vmatmul.mubr.bf16.gmra.mrb[0].mxu0 %v4292
    %v9720 = vpop.f32.mrb[0].mxu0
    %v9721 = vadd.f32 %v9608, %v9720
    %v9722 = vpop.f32.mrb[0].mxu0
    %v9723 = vadd.f32 %v9610, %v9722
    %v9724 = vpop.f32.mrb[0].mxu0
    %v9725 = vadd.f32 %v9612, %v9724
    %v9726 = vpop.f32.mrb[0].mxu0
    %v9727 = vadd.f32 %v9614, %v9726
    %9728 = vmatprep.mubr.bf16.mxu0 %v4311
    %9729 = vmatmul.mubr.bf16.gmra.mrb[0].mxu0 %v4310
    %v9730 = vpop.f32.mrb[0].mxu0
    %v9731 = vadd.f32 %v9618, %v9730
    %v9732 = vpop.f32.mrb[0].mxu0
    %v9733 = vadd.f32 %v9620, %v9732
    %v9734 = vpop.f32.mrb[0].mxu0
    %v9735 = vadd.f32 %v9622, %v9734
    %v9736 = vpop.f32.mrb[0].mxu0
    %v9737 = vadd.f32 %v9624, %v9736
    %9738 = vmatprep.mubr.bf16.mxu0 %v4329
    %9739 = vmatmul.mubr.bf16.gmra.mrb[0].mxu0 %v4328
    %v9740 = vpop.f32.mrb[0].mxu0
    %v9741 = vadd.f32 %v9628, %v9740
    %v9742 = vpop.f32.mrb[0].mxu0
    %v9743 = vadd.f32 %v9630, %v9742
    %v9744 = vpop.f32.mrb[0].mxu0
    %v9745 = vadd.f32 %v9632, %v9744
    %v9746 = vpop.f32.mrb[0].mxu0
    %v9747 = vadd.f32 %v9634, %v9746
    %9748 = vmatprep.mubr.bf16.mxu0 %v4347
    %9749 = vmatmul.mubr.bf16.gmra.mrb[0].mxu0 %v4346
    %v9750 = vpop.f32.mrb[0].mxu0
    %v9751 = vadd.f32 %v9638, %v9750
    %v9752 = vpop.f32.mrb[0].mxu0
    %v9753 = vadd.f32 %v9640, %v9752
    %v9754 = vpop.f32.mrb[0].mxu0
    %v9755 = vadd.f32 %v9642, %v9754
    %v9756 = vpop.f32.mrb[0].mxu0
    %v9757 = vadd.f32 %v9644, %v9756
    %9758 = vmatprep.mubr.bf16.mxu0 %v4365
    %9759 = vmatmul.mubr.bf16.gmra.mrb[0].mxu0 %v4364
    %v9760 = vpop.f32.mrb[0].mxu0
    %v9761 = vadd.f32 %v9648, %v9760
    %v9762 = vpop.f32.mrb[0].mxu0
    %v9763 = vadd.f32 %v9650, %v9762
    %v9764 = vpop.f32.mrb[0].mxu0
    %v9765 = vadd.f32 %v9652, %v9764
    %v9766 = vpop.f32.mrb[0].mxu0
    %v9767 = vadd.f32 %v9654, %v9766
    %9768 = vmatprep.mubr.bf16.mxu0 %v4383
    %9769 = vmatmul.mubr.bf16.gmra.mrb[0].mxu0 %v4382
    %v9770 = vpop.f32.mrb[0].mxu0
    %v9771 = vadd.f32 %v9658, %v9770
    %v9772 = vpop.f32.mrb[0].mxu0
    %v9773 = vadd.f32 %v9660, %v9772
    %v9774 = vpop.f32.mrb[0].mxu0
    %v9775 = vadd.f32 %v9662, %v9774
    %v9776 = vpop.f32.mrb[0].mxu0
    %v9777 = vadd.f32 %v9664, %v9776
    %9778 = vmatprep.mubr.bf16.mxu0 %v4401
    %9779 = vmatmul.mubr.bf16.gmra.mrb[0].mxu0 %v4400
    %v9780 = vpop.f32.mrb[0].mxu0
    %v9781 = vadd.f32 %v9668, %v9780
    %v9782 = vpop.f32.mrb[0].mxu0
    %v9783 = vadd.f32 %v9670, %v9782
    %v9784 = vpop.f32.mrb[0].mxu0
    %v9785 = vadd.f32 %v9672, %v9784
    %v9786 = vpop.f32.mrb[0].mxu0
    %v9787 = vadd.f32 %v9674, %v9786
    %9788 = vmatprep.mubr.bf16.mxu0 %v4419
    %9789 = vmatmul.mubr.bf16.gmra.mrb[0].mxu0 %v4418
    %v9790 = vpop.f32.mrb[0].mxu0
    %v9791 = vadd.f32 %v9678, %v9790
    %v9792 = vpop.f32.mrb[0].mxu0
    %v9793 = vadd.f32 %v9680, %v9792
    %v9794 = vpop.f32.mrb[0].mxu0
    %v9795 = vadd.f32 %v9682, %v9794
    %v9796 = vpop.f32.mrb[0].mxu0
    %v9797 = vadd.f32 %v9684, %v9796
    %9798 = vdwg.mxu0
    %9799 = vmatprep.subr.bf16.mxu0 %v7241
    %9800 = vmatpush1.bf16.msra.mxu0 %v7240
    %9801 = vmatprep.subr.bf16.mxu0 %v7245
    %9802 = vmatpush1.bf16.msra.mxu0 %v7244
    %9803 = vmatprep.subr.bf16.mxu0 %v7249
    %9804 = vmatpush1.bf16.msra.mxu0 %v7248
    %9805 = vmatprep.subr.bf16.mxu0 %v7253
    %9806 = vmatpush1.bf16.msra.mxu0 %v7252
    %9807 = vmatprep.subr.bf16.mxu0 %v7257
    %9808 = vmatpush1.bf16.msra.mxu0 %v7256
    %9809 = vmatprep.subr.bf16.mxu0 %v7261
    %9810 = vmatpush1.bf16.msra.mxu0 %v7260
    %9811 = vmatprep.subr.bf16.mxu0 %v7265
    %9812 = vmatpush1.bf16.msra.mxu0 %v7264
    %9813 = vmatprep.subr.bf16.mxu0 %v7269
    %9814 = vmatpush1.bf16.msra.mxu0 %v7268
    %9815 = vmatprep.subr.bf16.mxu0 %v7273
    %9816 = vmatpush1.bf16.msra.mxu0 %v7272
    %9817 = vmatprep.subr.bf16.mxu0 %v7277
    %9818 = vmatpush1.bf16.msra.mxu0 %v7276
    %9819 = vmatprep.subr.bf16.mxu0 %v7281
    %9820 = vmatpush1.bf16.msra.mxu0 %v7280
    %9821 = vmatprep.subr.bf16.mxu0 %v7285
    %9822 = vmatpush1.bf16.msra.mxu0 %v7284
    %9823 = vmatprep.subr.bf16.mxu0 %v7289
    %9824 = vmatpush1.bf16.msra.mxu0 %v7288
    %9825 = vmatprep.subr.bf16.mxu0 %v7293
    %9826 = vmatpush1.bf16.msra.mxu0 %v7292
    %9827 = vmatprep.subr.bf16.mxu0 %v7297
    %9828 = vmatpush1.bf16.msra.mxu0 %v7296
    %9829 = vmatprep.subr.bf16.mxu0 %v7301
    %9830 = vmatpush1.bf16.msra.mxu0 %v7300
    %9831 = vmatprep.mubr.bf16.mxu0 %v4295
    %9832 = vmatmul.mubr.bf16.gmra.mrb[0].mxu0 %v4294
    %v9833 = vpop.f32.mrb[0].mxu0
    %v9834 = vadd.f32 %v9721, %v9833
    %v9835 = vpop.f32.mrb[0].mxu0
    %v9836 = vadd.f32 %v9723, %v9835
    %v9837 = vpop.f32.mrb[0].mxu0
    %v9838 = vadd.f32 %v9725, %v9837
    %v9839 = vpop.f32.mrb[0].mxu0
    %v9840 = vadd.f32 %v9727, %v9839
    %9841 = vmatprep.mubr.bf16.mxu0 %v4313
    %9842 = vmatmul.mubr.bf16.gmra.mrb[0].mxu0 %v4312
    %v9843 = vpop.f32.mrb[0].mxu0
    %v9844 = vadd.f32 %v9731, %v9843
    %v9845 = vpop.f32.mrb[0].mxu0
    %v9846 = vadd.f32 %v9733, %v9845
    %v9847 = vpop.f32.mrb[0].mxu0
    %v9848 = vadd.f32 %v9735, %v9847
    %v9849 = vpop.f32.mrb[0].mxu0
    %v9850 = vadd.f32 %v9737, %v9849
    %9851 = vmatprep.mubr.bf16.mxu0 %v4331
    %9852 = vmatmul.mubr.bf16.gmra.mrb[0].mxu0 %v4330
    %v9853 = vpop.f32.mrb[0].mxu0
    %v9854 = vadd.f32 %v9741, %v9853
    %v9855 = vpop.f32.mrb[0].mxu0
    %v9856 = vadd.f32 %v9743, %v9855
    %v9857 = vpop.f32.mrb[0].mxu0
    %v9858 = vadd.f32 %v9745, %v9857
    %v9859 = vpop.f32.mrb[0].mxu0
    %v9860 = vadd.f32 %v9747, %v9859
    %9861 = vmatprep.mubr.bf16.mxu0 %v4349
    %9862 = vmatmul.mubr.bf16.gmra.mrb[0].mxu0 %v4348
    %v9863 = vpop.f32.mrb[0].mxu0
    %v9864 = vadd.f32 %v9751, %v9863
    %v9865 = vpop.f32.mrb[0].mxu0
    %v9866 = vadd.f32 %v9753, %v9865
    %v9867 = vpop.f32.mrb[0].mxu0
    %v9868 = vadd.f32 %v9755, %v9867
    %v9869 = vpop.f32.mrb[0].mxu0
    %v9870 = vadd.f32 %v9757, %v9869
    %9871 = vmatprep.mubr.bf16.mxu0 %v4367
    %9872 = vmatmul.mubr.bf16.gmra.mrb[0].mxu0 %v4366
    %v9873 = vpop.f32.mrb[0].mxu0
    %v9874 = vadd.f32 %v9761, %v9873
    %v9875 = vpop.f32.mrb[0].mxu0
    %v9876 = vadd.f32 %v9763, %v9875
    %v9877 = vpop.f32.mrb[0].mxu0
    %v9878 = vadd.f32 %v9765, %v9877
    %v9879 = vpop.f32.mrb[0].mxu0
    %v9880 = vadd.f32 %v9767, %v9879
    %9881 = vmatprep.mubr.bf16.mxu0 %v4385
    %9882 = vmatmul.mubr.bf16.gmra.mrb[0].mxu0 %v4384
    %v9883 = vpop.f32.mrb[0].mxu0
    %v9884 = vadd.f32 %v9771, %v9883
    %v9885 = vpop.f32.mrb[0].mxu0
    %v9886 = vadd.f32 %v9773, %v9885
    %v9887 = vpop.f32.mrb[0].mxu0
    %v9888 = vadd.f32 %v9775, %v9887
    %v9889 = vpop.f32.mrb[0].mxu0
    %v9890 = vadd.f32 %v9777, %v9889
    %9891 = vmatprep.mubr.bf16.mxu0 %v4403
    %9892 = vmatmul.mubr.bf16.gmra.mrb[0].mxu0 %v4402
    %v9893 = vpop.f32.mrb[0].mxu0
    %v9894 = vadd.f32 %v9781, %v9893
    %v9895 = vpop.f32.mrb[0].mxu0
    %v9896 = vadd.f32 %v9783, %v9895
    %v9897 = vpop.f32.mrb[0].mxu0
    %v9898 = vadd.f32 %v9785, %v9897
    %v9899 = vpop.f32.mrb[0].mxu0
    %v9900 = vadd.f32 %v9787, %v9899
    %9901 = vmatprep.mubr.bf16.mxu0 %v4421
    %9902 = vmatmul.mubr.bf16.gmra.mrb[0].mxu0 %v4420
    %v9903 = vpop.f32.mrb[0].mxu0
    %v9904 = vadd.f32 %v9791, %v9903
    %v9905 = vpop.f32.mrb[0].mxu0
    %v9906 = vadd.f32 %v9793, %v9905
    %v9907 = vpop.f32.mrb[0].mxu0
    %v9908 = vadd.f32 %v9795, %v9907
    %v9909 = vpop.f32.mrb[0].mxu0
    %v9910 = vadd.f32 %v9797, %v9909
    %9911 = vdwg.mxu0
    %v9912 = vadd.f32 %v8817, %v8821
    %v9913 = vadd.f32 %v9912, %v8827
    %v9914 = vadd.f32 %v9913, %v8831
    %v9915 = vadd.f32 %v9914, %v8837
    %v9916 = vadd.f32 %v9915, %v8841
    %v9917 = vadd.f32 %v9916, %v8847
    %v9918 = vadd.f32 %v9917, %v8851
    %v9919 = vadd.f32 %v9918, %v8857
    %v9920 = vadd.f32 %v9919, %v8861
    %v9921 = vadd.f32 %v9920, %v8867
    %v9922 = vadd.f32 %v9921, %v8871
    %v9923 = vadd.f32 %v9922, %v8877
    %v9924 = vadd.f32 %v9923, %v8881
    %v9925 = vadd.f32 %v9924, %v8887
    %v9926 = vadd.f32 %v9925, %v8891
    %v9927 = vrot.slane %v9926, 4
    %v9928 = vadd.f32 %v9926, %v9927
    %v9929 = vrot.slane %v9928, 2
    %v9930 = vadd.f32 %v9928, %v9929
    %v9931 = vrot.slane %v9930, 1
    %v9932 = vadd.f32 %v9930, %v9931
    %v9933 = vadd.f32 %v8819, %v8823
    %v9934 = vadd.f32 %v9933, %v8829
    %v9935 = vadd.f32 %v9934, %v8833
    %v9936 = vadd.f32 %v9935, %v8839
    %v9937 = vadd.f32 %v9936, %v8843
    %v9938 = vadd.f32 %v9937, %v8849
    %v9939 = vadd.f32 %v9938, %v8853
    %v9940 = vadd.f32 %v9939, %v8859
    %v9941 = vadd.f32 %v9940, %v8863
    %v9942 = vadd.f32 %v9941, %v8869
    %v9943 = vadd.f32 %v9942, %v8873
    %v9944 = vadd.f32 %v9943, %v8879
    %v9945 = vadd.f32 %v9944, %v8883
    %v9946 = vadd.f32 %v9945, %v8889
    %v9947 = vadd.f32 %v9946, %v8893
    %v9948 = vrot.slane %v9947, 4
    %v9949 = vadd.f32 %v9947, %v9948
    %v9950 = vrot.slane %v9949, 2
    %v9951 = vadd.f32 %v9949, %v9950
    %v9952 = vrot.slane %v9951, 1
    %v9953 = vadd.f32 %v9951, %v9952
    %v9954 = vadd.f32 %v9834, %v9838
    %v9955 = vadd.f32 %v9954, %v9844
    %v9956 = vadd.f32 %v9955, %v9848
    %v9957 = vadd.f32 %v9956, %v9854
    %v9958 = vadd.f32 %v9957, %v9858
    %v9959 = vadd.f32 %v9958, %v9864
    %v9960 = vadd.f32 %v9959, %v9868
    %v9961 = vadd.f32 %v9960, %v9874
    %v9962 = vadd.f32 %v9961, %v9878
    %v9963 = vadd.f32 %v9962, %v9884
    %v9964 = vadd.f32 %v9963, %v9888
    %v9965 = vadd.f32 %v9964, %v9894
    %v9966 = vadd.f32 %v9965, %v9898
    %v9967 = vadd.f32 %v9966, %v9904
    %v9968 = vadd.f32 %v9967, %v9908
    %v9969 = vrot.slane %v9968, 4
    %v9970 = vadd.f32 %v9968, %v9969
    %v9971 = vrot.slane %v9970, 2
    %v9972 = vadd.f32 %v9970, %v9971
    %v9973 = vrot.slane %v9972, 1
    %v9974 = vadd.f32 %v9972, %v9973
    %v9975 = vadd.f32 %v9836, %v9840
    %v9976 = vadd.f32 %v9975, %v9846
    %v9977 = vadd.f32 %v9976, %v9850
    %v9978 = vadd.f32 %v9977, %v9856
    %v9979 = vadd.f32 %v9978, %v9860
    %v9980 = vadd.f32 %v9979, %v9866
    %v9981 = vadd.f32 %v9980, %v9870
    %v9982 = vadd.f32 %v9981, %v9876
    %v9983 = vadd.f32 %v9982, %v9880
    %v9984 = vadd.f32 %v9983, %v9886
    %v9985 = vadd.f32 %v9984, %v9890
    %v9986 = vadd.f32 %v9985, %v9896
    %v9987 = vadd.f32 %v9986, %v9900
    %v9988 = vadd.f32 %v9987, %v9906
    %v9989 = vadd.f32 %v9988, %v9910
    %v9990 = vrot.slane %v9989, 4
    %v9991 = vadd.f32 %v9989, %v9990
    %v9992 = vrot.slane %v9991, 2
    %v9993 = vadd.f32 %v9991, %v9992
    %v9994 = vrot.slane %v9993, 1
    %v9995 = vadd.f32 %v9993, %v9994
    %v9996 = vmul.f32 %v9932, 0.0078125
    %v9997 = vmul.f32 %v9953, 0.0078125
    %v9998 = vmul.f32 %v9974, 0.0078125
    %v9999 = vmul.f32 %v9995, 0.0078125
    %v10000 = vmul.f32 %v8817, %v8817
    %v10001 = vmul.f32 %v8819, %v8819
    %v10002 = vmul.f32 %v9834, %v9834
    %v10003 = vmul.f32 %v9836, %v9836
    %v10004 = vmul.f32 %v8821, %v8821
    %v10005 = vmul.f32 %v8823, %v8823
    %v10006 = vmul.f32 %v9838, %v9838
    %v10007 = vmul.f32 %v9840, %v9840
    %v10008 = vmul.f32 %v8827, %v8827
    %v10009 = vmul.f32 %v8829, %v8829
    %v10010 = vmul.f32 %v9844, %v9844
    %v10011 = vmul.f32 %v9846, %v9846
    %v10012 = vmul.f32 %v8831, %v8831
    %v10013 = vmul.f32 %v8833, %v8833
    %v10014 = vmul.f32 %v9848, %v9848
    %v10015 = vmul.f32 %v9850, %v9850
    %v10016 = vmul.f32 %v8837, %v8837
    %v10017 = vmul.f32 %v8839, %v8839
    %v10018 = vmul.f32 %v9854, %v9854
    %v10019 = vmul.f32 %v9856, %v9856
    %v10020 = vmul.f32 %v8841, %v8841
    %v10021 = vmul.f32 %v8843, %v8843
    %v10022 = vmul.f32 %v9858, %v9858
    %v10023 = vmul.f32 %v9860, %v9860
    %v10024 = vmul.f32 %v8847, %v8847
    %v10025 = vmul.f32 %v8849, %v8849
    %v10026 = vmul.f32 %v9864, %v9864
    %v10027 = vmul.f32 %v9866, %v9866
    %v10028 = vmul.f32 %v8851, %v8851
    %v10029 = vmul.f32 %v8853, %v8853
    %v10030 = vmul.f32 %v9868, %v9868
    %v10031 = vmul.f32 %v9870, %v9870
    %v10032 = vmul.f32 %v8857, %v8857
    %v10033 = vmul.f32 %v8859, %v8859
    %v10034 = vmul.f32 %v9874, %v9874
    %v10035 = vmul.f32 %v9876, %v9876
    %v10036 = vmul.f32 %v8861, %v8861
    %v10037 = vmul.f32 %v8863, %v8863
    %v10038 = vmul.f32 %v9878, %v9878
    %v10039 = vmul.f32 %v9880, %v9880
    %v10040 = vmul.f32 %v8867, %v8867
    %v10041 = vmul.f32 %v8869, %v8869
    %v10042 = vmul.f32 %v9884, %v9884
    %v10043 = vmul.f32 %v9886, %v9886
    %v10044 = vmul.f32 %v8871, %v8871
    %v10045 = vmul.f32 %v8873, %v8873
    %v10046 = vmul.f32 %v9888, %v9888
    %v10047 = vmul.f32 %v9890, %v9890
    %v10048 = vmul.f32 %v8877, %v8877
    %v10049 = vmul.f32 %v8879, %v8879
    %v10050 = vmul.f32 %v9894, %v9894
    %v10051 = vmul.f32 %v9896, %v9896
    %v10052 = vmul.f32 %v8881, %v8881
    %v10053 = vmul.f32 %v8883, %v8883
    %v10054 = vmul.f32 %v9898, %v9898
    %v10055 = vmul.f32 %v9900, %v9900
    %v10056 = vmul.f32 %v8887, %v8887
    %v10057 = vmul.f32 %v8889, %v8889
    %v10058 = vmul.f32 %v9904, %v9904
    %v10059 = vmul.f32 %v9906, %v9906
    %v10060 = vmul.f32 %v8891, %v8891
    %v10061 = vmul.f32 %v8893, %v8893
    %v10062 = vmul.f32 %v9908, %v9908
    %v10063 = vmul.f32 %v9910, %v9910
    %v10064 = vadd.f32 %v10000, %v10004
    %v10065 = vadd.f32 %v10064, %v10008
    %v10066 = vadd.f32 %v10065, %v10012
    %v10067 = vadd.f32 %v10066, %v10016
    %v10068 = vadd.f32 %v10067, %v10020
    %v10069 = vadd.f32 %v10068, %v10024
    %v10070 = vadd.f32 %v10069, %v10028
    %v10071 = vadd.f32 %v10070, %v10032
    %v10072 = vadd.f32 %v10071, %v10036
    %v10073 = vadd.f32 %v10072, %v10040
    %v10074 = vadd.f32 %v10073, %v10044
    %v10075 = vadd.f32 %v10074, %v10048
    %v10076 = vadd.f32 %v10075, %v10052
    %v10077 = vadd.f32 %v10076, %v10056
    %v10078 = vadd.f32 %v10077, %v10060
    %v10079 = vrot.slane %v10078, 4
    %v10080 = vadd.f32 %v10078, %v10079
    %v10081 = vrot.slane %v10080, 2
    %v10082 = vadd.f32 %v10080, %v10081
    %v10083 = vrot.slane %v10082, 1
    %v10084 = vadd.f32 %v10082, %v10083
    %v10085 = vadd.f32 %v10001, %v10005
    %v10086 = vadd.f32 %v10085, %v10009
    %v10087 = vadd.f32 %v10086, %v10013
    %v10088 = vadd.f32 %v10087, %v10017
    %v10089 = vadd.f32 %v10088, %v10021
    %v10090 = vadd.f32 %v10089, %v10025
    %v10091 = vadd.f32 %v10090, %v10029
    %v10092 = vadd.f32 %v10091, %v10033
    %v10093 = vadd.f32 %v10092, %v10037
    %v10094 = vadd.f32 %v10093, %v10041
    %v10095 = vadd.f32 %v10094, %v10045
    %v10096 = vadd.f32 %v10095, %v10049
    %v10097 = vadd.f32 %v10096, %v10053
    %v10098 = vadd.f32 %v10097, %v10057
    %v10099 = vadd.f32 %v10098, %v10061
    %v10100 = vrot.slane %v10099, 4
    %v10101 = vadd.f32 %v10099, %v10100
    %v10102 = vrot.slane %v10101, 2
    %v10103 = vadd.f32 %v10101, %v10102
    %v10104 = vrot.slane %v10103, 1
    %v10105 = vadd.f32 %v10103, %v10104
    %v10106 = vadd.f32 %v10002, %v10006
    %v10107 = vadd.f32 %v10106, %v10010
    %v10108 = vadd.f32 %v10107, %v10014
    %v10109 = vadd.f32 %v10108, %v10018
    %v10110 = vadd.f32 %v10109, %v10022
    %v10111 = vadd.f32 %v10110, %v10026
    %v10112 = vadd.f32 %v10111, %v10030
    %v10113 = vadd.f32 %v10112, %v10034
    %v10114 = vadd.f32 %v10113, %v10038
    %v10115 = vadd.f32 %v10114, %v10042
    %v10116 = vadd.f32 %v10115, %v10046
    %v10117 = vadd.f32 %v10116, %v10050
    %v10118 = vadd.f32 %v10117, %v10054
    %v10119 = vadd.f32 %v10118, %v10058
    %v10120 = vadd.f32 %v10119, %v10062
    %v10121 = vrot.slane %v10120, 4
    %v10122 = vadd.f32 %v10120, %v10121
    %v10123 = vrot.slane %v10122, 2
    %v10124 = vadd.f32 %v10122, %v10123
    %v10125 = vrot.slane %v10124, 1
    %v10126 = vadd.f32 %v10124, %v10125
    %v10127 = vadd.f32 %v10003, %v10007
    %v10128 = vadd.f32 %v10127, %v10011
    %v10129 = vadd.f32 %v10128, %v10015
    %v10130 = vadd.f32 %v10129, %v10019
    %v10131 = vadd.f32 %v10130, %v10023
    %v10132 = vadd.f32 %v10131, %v10027
    %v10133 = vadd.f32 %v10132, %v10031
    %v10134 = vadd.f32 %v10133, %v10035
    %v10135 = vadd.f32 %v10134, %v10039
    %v10136 = vadd.f32 %v10135, %v10043
    %v10137 = vadd.f32 %v10136, %v10047
    %v10138 = vadd.f32 %v10137, %v10051
    %v10139 = vadd.f32 %v10138, %v10055
    %v10140 = vadd.f32 %v10139, %v10059
    %v10141 = vadd.f32 %v10140, %v10063
    %v10142 = vrot.slane %v10141, 4
    %v10143 = vadd.f32 %v10141, %v10142
    %v10144 = vrot.slane %v10143, 2
    %v10145 = vadd.f32 %v10143, %v10144
    %v10146 = vrot.slane %v10145, 1
    %v10147 = vadd.f32 %v10145, %v10146
    %v10148 = vmul.f32 %v10084, 0.0078125
    %v10149 = vmul.f32 %v10105, 0.0078125
    %v10150 = vmul.f32 %v10126, 0.0078125
    %v10151 = vmul.f32 %v10147, 0.0078125
    %v10152 = vmul.f32 %v9996, %v9996
    %v10153 = vmul.f32 %v9997, %v9997
    %v10154 = vmul.f32 %v9998, %v9998
    %v10155 = vmul.f32 %v9999, %v9999
    %v10156 = vsub.f32 %v10148, %v10152
    %v10157 = vsub.f32 %v10149, %v10153
    %v10158 = vsub.f32 %v10150, %v10154
    %v10159 = vsub.f32 %v10151, %v10155
    %v10160 = vmax.f32 %v10156, 0.0
    %v10161 = vmax.f32 %v10157, 0.0
    %v10162 = vmax.f32 %v10158, 0.0
    %v10163 = vmax.f32 %v10159, 0.0
    %v10164 = vsub.f32 %v8817, %v9996
    %v10165 = vsub.f32 %v8819, %v9997
    %v10166 = vsub.f32 %v9834, %v9998
    %v10167 = vsub.f32 %v9836, %v9999
    %v10168 = vsub.f32 %v8821, %v9996
    %v10169 = vsub.f32 %v8823, %v9997
    %v10170 = vsub.f32 %v9838, %v9998
    %v10171 = vsub.f32 %v9840, %v9999
    %v10172 = vsub.f32 %v8827, %v9996
    %v10173 = vsub.f32 %v8829, %v9997
    %v10174 = vsub.f32 %v9844, %v9998
    %v10175 = vsub.f32 %v9846, %v9999
    %v10176 = vsub.f32 %v8831, %v9996
    %v10177 = vsub.f32 %v8833, %v9997
    %v10178 = vsub.f32 %v9848, %v9998
    %v10179 = vsub.f32 %v9850, %v9999
    %v10180 = vsub.f32 %v8837, %v9996
    %v10181 = vsub.f32 %v8839, %v9997
    %v10182 = vsub.f32 %v9854, %v9998
    %v10183 = vsub.f32 %v9856, %v9999
    %v10184 = vsub.f32 %v8841, %v9996
    %v10185 = vsub.f32 %v8843, %v9997
    %v10186 = vsub.f32 %v9858, %v9998
    %v10187 = vsub.f32 %v9860, %v9999
    %v10188 = vsub.f32 %v8847, %v9996
    %v10189 = vsub.f32 %v8849, %v9997
    %v10190 = vsub.f32 %v9864, %v9998
    %v10191 = vsub.f32 %v9866, %v9999
    %v10192 = vsub.f32 %v8851, %v9996
    %v10193 = vsub.f32 %v8853, %v9997
    %v10194 = vsub.f32 %v9868, %v9998
    %v10195 = vsub.f32 %v9870, %v9999
    %v10196 = vsub.f32 %v8857, %v9996
    %v10197 = vsub.f32 %v8859, %v9997
    %v10198 = vsub.f32 %v9874, %v9998
    %v10199 = vsub.f32 %v9876, %v9999
    %v10200 = vsub.f32 %v8861, %v9996
    %v10201 = vsub.f32 %v8863, %v9997
    %v10202 = vsub.f32 %v9878, %v9998
    %v10203 = vsub.f32 %v9880, %v9999
    %v10204 = vsub.f32 %v8867, %v9996
    %v10205 = vsub.f32 %v8869, %v9997
    %v10206 = vsub.f32 %v9884, %v9998
    %v10207 = vsub.f32 %v9886, %v9999
    %v10208 = vsub.f32 %v8871, %v9996
    %v10209 = vsub.f32 %v8873, %v9997
    %v10210 = vsub.f32 %v9888, %v9998
    %v10211 = vsub.f32 %v9890, %v9999
    %v10212 = vsub.f32 %v8877, %v9996
    %v10213 = vsub.f32 %v8879, %v9997
    %v10214 = vsub.f32 %v9894, %v9998
    %v10215 = vsub.f32 %v9896, %v9999
    %v10216 = vsub.f32 %v8881, %v9996
    %v10217 = vsub.f32 %v8883, %v9997
    %v10218 = vsub.f32 %v9898, %v9998
    %v10219 = vsub.f32 %v9900, %v9999
    %v10220 = vsub.f32 %v8887, %v9996
    %v10221 = vsub.f32 %v8889, %v9997
    %v10222 = vsub.f32 %v9904, %v9998
    %v10223 = vsub.f32 %v9906, %v9999
    %v10224 = vsub.f32 %v8891, %v9996
    %v10225 = vsub.f32 %v8893, %v9997
    %v10226 = vsub.f32 %v9908, %v9998
    %v10227 = vsub.f32 %v9910, %v9999
    %v10228 = vadd.f32 %v10160, 1e-05
    %v10229 = vadd.f32 %v10161, 1e-05
    %v10230 = vadd.f32 %v10162, 1e-05
    %v10231 = vadd.f32 %v10163, 1e-05
    %v10232 = vrsqrt.pop %v10228
    %v10233 = vrsqrt.pop %v10229
    %v10234 = vrsqrt.pop %v10230
    %v10235 = vrsqrt.pop %v10231
    %v10236 = vmul.f32 %v10164, %v10232
    %v10237 = vmul.f32 %v10165, %v10233
    %v10238 = vmul.f32 %v10166, %v10234
    %v10239 = vmul.f32 %v10167, %v10235
    %v10240 = vmul.f32 %v10168, %v10232
    %v10241 = vmul.f32 %v10169, %v10233
    %v10242 = vmul.f32 %v10170, %v10234
    %v10243 = vmul.f32 %v10171, %v10235
    %v10244 = vmul.f32 %v10172, %v10232
    %v10245 = vmul.f32 %v10173, %v10233
    %v10246 = vmul.f32 %v10174, %v10234
    %v10247 = vmul.f32 %v10175, %v10235
    %v10248 = vmul.f32 %v10176, %v10232
    %v10249 = vmul.f32 %v10177, %v10233
    %v10250 = vmul.f32 %v10178, %v10234
    %v10251 = vmul.f32 %v10179, %v10235
    %v10252 = vmul.f32 %v10180, %v10232
    %v10253 = vmul.f32 %v10181, %v10233
    %v10254 = vmul.f32 %v10182, %v10234
    %v10255 = vmul.f32 %v10183, %v10235
    %v10256 = vmul.f32 %v10184, %v10232
    %v10257 = vmul.f32 %v10185, %v10233
    %v10258 = vmul.f32 %v10186, %v10234
    %v10259 = vmul.f32 %v10187, %v10235
    %v10260 = vmul.f32 %v10188, %v10232
    %v10261 = vmul.f32 %v10189, %v10233
    %v10262 = vmul.f32 %v10190, %v10234
    %v10263 = vmul.f32 %v10191, %v10235
    %v10264 = vmul.f32 %v10192, %v10232
    %v10265 = vmul.f32 %v10193, %v10233
    %v10266 = vmul.f32 %v10194, %v10234
    %v10267 = vmul.f32 %v10195, %v10235
    %v10268 = vmul.f32 %v10196, %v10232
    %v10269 = vmul.f32 %v10197, %v10233
    %v10270 = vmul.f32 %v10198, %v10234
    %v10271 = vmul.f32 %v10199, %v10235
    %v10272 = vmul.f32 %v10200, %v10232
    %v10273 = vmul.f32 %v10201, %v10233
    %v10274 = vmul.f32 %v10202, %v10234
    %v10275 = vmul.f32 %v10203, %v10235
    %v10276 = vmul.f32 %v10204, %v10232
    %v10277 = vmul.f32 %v10205, %v10233
    %v10278 = vmul.f32 %v10206, %v10234
    %v10279 = vmul.f32 %v10207, %v10235
    %v10280 = vmul.f32 %v10208, %v10232
    %v10281 = vmul.f32 %v10209, %v10233
    %v10282 = vmul.f32 %v10210, %v10234
    %v10283 = vmul.f32 %v10211, %v10235
    %v10284 = vmul.f32 %v10212, %v10232
    %v10285 = vmul.f32 %v10213, %v10233
    %v10286 = vmul.f32 %v10214, %v10234
    %v10287 = vmul.f32 %v10215, %v10235
    %v10288 = vmul.f32 %v10216, %v10232
    %v10289 = vmul.f32 %v10217, %v10233
    %v10290 = vmul.f32 %v10218, %v10234
    %v10291 = vmul.f32 %v10219, %v10235
    %v10292 = vmul.f32 %v10220, %v10232
    %v10293 = vmul.f32 %v10221, %v10233
    %v10294 = vmul.f32 %v10222, %v10234
    %v10295 = vmul.f32 %v10223, %v10235
    %v10296 = vmul.f32 %v10224, %v10232
    %v10297 = vmul.f32 %v10225, %v10233
    %v10298 = vmul.f32 %v10226, %v10234
    %v10299 = vmul.f32 %v10227, %v10235
    %v10300 = vld [vmem:[#allocation14] sm:$0xf]
    %v10302 = vlaneseq
    %v10303 = vshrl.u32 %v10302, 7
    %v10304 = vsub.s32 0, %v10303
    %v10305 = vrot.slane %v10300, %v10304
    %v10306 = vlaneseq
    %v10307 = vshrl.u32 %v10306, 7
    %v10308 = vsub.s32 1, %v10307
    %v10309 = vrot.slane %v10300, %v10308
    %v10310 = vlaneseq
    %v10311 = vshrl.u32 %v10310, 7
    %v10312 = vsub.s32 2, %v10311
    %v10313 = vrot.slane %v10300, %v10312
    %v10314 = vlaneseq
    %v10315 = vshrl.u32 %v10314, 7
    %v10316 = vsub.s32 3, %v10315
    %v10317 = vrot.slane %v10300, %v10316
    %v10322 = vmul.f32 %v10236, %v10305
    %v10323 = vmul.f32 %v10237, %v10309
    %v10324 = vmul.f32 %v10238, %v10313
    %v10325 = vmul.f32 %v10239, %v10317
    %v10326 = vmul.f32 %v10240, %v10305
    %v10327 = vmul.f32 %v10241, %v10309
    %v10328 = vmul.f32 %v10242, %v10313
    %v10329 = vmul.f32 %v10243, %v10317
    %v10330 = vmul.f32 %v10244, %v10305
    %v10331 = vmul.f32 %v10245, %v10309
    %v10332 = vmul.f32 %v10246, %v10313
    %v10333 = vmul.f32 %v10247, %v10317
    %v10334 = vmul.f32 %v10248, %v10305
    %v10335 = vmul.f32 %v10249, %v10309
    %v10336 = vmul.f32 %v10250, %v10313
    %v10337 = vmul.f32 %v10251, %v10317
    %v10338 = vmul.f32 %v10252, %v10305
    %v10339 = vmul.f32 %v10253, %v10309
    %v10340 = vmul.f32 %v10254, %v10313
    %v10341 = vmul.f32 %v10255, %v10317
    %v10342 = vmul.f32 %v10256, %v10305
    %v10343 = vmul.f32 %v10257, %v10309
    %v10344 = vmul.f32 %v10258, %v10313
    %v10345 = vmul.f32 %v10259, %v10317
    %v10346 = vmul.f32 %v10260, %v10305
    %v10347 = vmul.f32 %v10261, %v10309
    %v10348 = vmul.f32 %v10262, %v10313
    %v10349 = vmul.f32 %v10263, %v10317
    %v10350 = vmul.f32 %v10264, %v10305
    %v10351 = vmul.f32 %v10265, %v10309
    %v10352 = vmul.f32 %v10266, %v10313
    %v10353 = vmul.f32 %v10267, %v10317
    %v10354 = vmul.f32 %v10268, %v10305
    %v10355 = vmul.f32 %v10269, %v10309
    %v10356 = vmul.f32 %v10270, %v10313
    %v10357 = vmul.f32 %v10271, %v10317
    %v10358 = vmul.f32 %v10272, %v10305
    %v10359 = vmul.f32 %v10273, %v10309
    %v10360 = vmul.f32 %v10274, %v10313
    %v10361 = vmul.f32 %v10275, %v10317
    %v10362 = vmul.f32 %v10276, %v10305
    %v10363 = vmul.f32 %v10277, %v10309
    %v10364 = vmul.f32 %v10278, %v10313
    %v10365 = vmul.f32 %v10279, %v10317
    %v10366 = vmul.f32 %v10280, %v10305
    %v10367 = vmul.f32 %v10281, %v10309
    %v10368 = vmul.f32 %v10282, %v10313
    %v10369 = vmul.f32 %v10283, %v10317
    %v10370 = vmul.f32 %v10284, %v10305
    %v10371 = vmul.f32 %v10285, %v10309
    %v10372 = vmul.f32 %v10286, %v10313
    %v10373 = vmul.f32 %v10287, %v10317
    %v10374 = vmul.f32 %v10288, %v10305
    %v10375 = vmul.f32 %v10289, %v10309
    %v10376 = vmul.f32 %v10290, %v10313
    %v10377 = vmul.f32 %v10291, %v10317
    %v10378 = vmul.f32 %v10292, %v10305
    %v10379 = vmul.f32 %v10293, %v10309
    %v10380 = vmul.f32 %v10294, %v10313
    %v10381 = vmul.f32 %v10295, %v10317
    %v10382 = vmul.f32 %v10296, %v10305
    %v10383 = vmul.f32 %v10297, %v10309
    %v10384 = vmul.f32 %v10298, %v10313
    %v10385 = vmul.f32 %v10299, %v10317
    %v10386 = vld [vmem:[#allocation15] sm:$0xf]
    %v10388 = vlaneseq
    %v10389 = vshrl.u32 %v10388, 7
    %v10390 = vsub.s32 0, %v10389
    %v10391 = vrot.slane %v10386, %v10390
    %v10392 = vlaneseq
    %v10393 = vshrl.u32 %v10392, 7
    %v10394 = vsub.s32 1, %v10393
    %v10395 = vrot.slane %v10386, %v10394
    %v10396 = vlaneseq
    %v10397 = vshrl.u32 %v10396, 7
    %v10398 = vsub.s32 2, %v10397
    %v10399 = vrot.slane %v10386, %v10398
    %v10400 = vlaneseq
    %v10401 = vshrl.u32 %v10400, 7
    %v10402 = vsub.s32 3, %v10401
    %v10403 = vrot.slane %v10386, %v10402
    %v10408 = vadd.f32 %v10322, %v10391
    %v10409 = vadd.f32 %v10323, %v10395
    %v10410 = vadd.f32 %v10324, %v10399
    %v10411 = vadd.f32 %v10325, %v10403
    %v10412 = vadd.f32 %v10326, %v10391
    %v10413 = vadd.f32 %v10327, %v10395
    %v10414 = vadd.f32 %v10328, %v10399
    %v10415 = vadd.f32 %v10329, %v10403
    %v10416 = vadd.f32 %v10330, %v10391
    %v10417 = vadd.f32 %v10331, %v10395
    %v10418 = vadd.f32 %v10332, %v10399
    %v10419 = vadd.f32 %v10333, %v10403
    %v10420 = vadd.f32 %v10334, %v10391
    %v10421 = vadd.f32 %v10335, %v10395
    %v10422 = vadd.f32 %v10336, %v10399
    %v10423 = vadd.f32 %v10337, %v10403
    %v10424 = vadd.f32 %v10338, %v10391
    %v10425 = vadd.f32 %v10339, %v10395
    %v10426 = vadd.f32 %v10340, %v10399
    %v10427 = vadd.f32 %v10341, %v10403
    %v10428 = vadd.f32 %v10342, %v10391
    %v10429 = vadd.f32 %v10343, %v10395
    %v10430 = vadd.f32 %v10344, %v10399
    %v10431 = vadd.f32 %v10345, %v10403
    %v10432 = vadd.f32 %v10346, %v10391
    %v10433 = vadd.f32 %v10347, %v10395
    %v10434 = vadd.f32 %v10348, %v10399
    %v10435 = vadd.f32 %v10349, %v10403
    %v10436 = vadd.f32 %v10350, %v10391
    %v10437 = vadd.f32 %v10351, %v10395
    %v10438 = vadd.f32 %v10352, %v10399
    %v10439 = vadd.f32 %v10353, %v10403
    %v10440 = vadd.f32 %v10354, %v10391
    %v10441 = vadd.f32 %v10355, %v10395
    %v10442 = vadd.f32 %v10356, %v10399
    %v10443 = vadd.f32 %v10357, %v10403
    %v10444 = vadd.f32 %v10358, %v10391
    %v10445 = vadd.f32 %v10359, %v10395
    %v10446 = vadd.f32 %v10360, %v10399
    %v10447 = vadd.f32 %v10361, %v10403
    %v10448 = vadd.f32 %v10362, %v10391
    %v10449 = vadd.f32 %v10363, %v10395
    %v10450 = vadd.f32 %v10364, %v10399
    %v10451 = vadd.f32 %v10365, %v10403
    %v10452 = vadd.f32 %v10366, %v10391
    %v10453 = vadd.f32 %v10367, %v10395
    %v10454 = vadd.f32 %v10368, %v10399
    %v10455 = vadd.f32 %v10369, %v10403
    %v10456 = vadd.f32 %v10370, %v10391
    %v10457 = vadd.f32 %v10371, %v10395
    %v10458 = vadd.f32 %v10372, %v10399
    %v10459 = vadd.f32 %v10373, %v10403
    %v10460 = vadd.f32 %v10374, %v10391
    %v10461 = vadd.f32 %v10375, %v10395
    %v10462 = vadd.f32 %v10376, %v10399
    %v10463 = vadd.f32 %v10377, %v10403
    %v10464 = vadd.f32 %v10378, %v10391
    %v10465 = vadd.f32 %v10379, %v10395
    %v10466 = vadd.f32 %v10380, %v10399
    %v10467 = vadd.f32 %v10381, %v10403
    %v10468 = vadd.f32 %v10382, %v10391
    %v10469 = vadd.f32 %v10383, %v10395
    %v10470 = vadd.f32 %v10384, %v10399
    %v10471 = vadd.f32 %v10385, %v10403
    %v10472 = vmul.f32 %v10408, 0.1
    %v10473 = vmul.f32 %v10409, 0.1
    %v10474 = vmul.f32 %v10410, 0.1
    %v10475 = vmul.f32 %v10411, 0.1
    %v10476 = vmul.f32 %v10412, 0.1
    %v10477 = vmul.f32 %v10413, 0.1
    %v10478 = vmul.f32 %v10414, 0.1
    %v10479 = vmul.f32 %v10415, 0.1
    %v10480 = vmul.f32 %v10416, 0.1
    %v10481 = vmul.f32 %v10417, 0.1
    %v10482 = vmul.f32 %v10418, 0.1
    %v10483 = vmul.f32 %v10419, 0.1
    %v10484 = vmul.f32 %v10420, 0.1
    %v10485 = vmul.f32 %v10421, 0.1
    %v10486 = vmul.f32 %v10422, 0.1
    %v10487 = vmul.f32 %v10423, 0.1
    %v10488 = vmul.f32 %v10424, 0.1
    %v10489 = vmul.f32 %v10425, 0.1
    %v10490 = vmul.f32 %v10426, 0.1
    %v10491 = vmul.f32 %v10427, 0.1
    %v10492 = vmul.f32 %v10428, 0.1
    %v10493 = vmul.f32 %v10429, 0.1
    %v10494 = vmul.f32 %v10430, 0.1
    %v10495 = vmul.f32 %v10431, 0.1
    %v10496 = vmul.f32 %v10432, 0.1
    %v10497 = vmul.f32 %v10433, 0.1
    %v10498 = vmul.f32 %v10434, 0.1
    %v10499 = vmul.f32 %v10435, 0.1
    %v10500 = vmul.f32 %v10436, 0.1
    %v10501 = vmul.f32 %v10437, 0.1
    %v10502 = vmul.f32 %v10438, 0.1
    %v10503 = vmul.f32 %v10439, 0.1
    %v10504 = vmul.f32 %v10440, 0.1
    %v10505 = vmul.f32 %v10441, 0.1
    %v10506 = vmul.f32 %v10442, 0.1
    %v10507 = vmul.f32 %v10443, 0.1
    %v10508 = vmul.f32 %v10444, 0.1
    %v10509 = vmul.f32 %v10445, 0.1
    %v10510 = vmul.f32 %v10446, 0.1
    %v10511 = vmul.f32 %v10447, 0.1
    %v10512 = vmul.f32 %v10448, 0.1
    %v10513 = vmul.f32 %v10449, 0.1
    %v10514 = vmul.f32 %v10450, 0.1
    %v10515 = vmul.f32 %v10451, 0.1
    %v10516 = vmul.f32 %v10452, 0.1
    %v10517 = vmul.f32 %v10453, 0.1
    %v10518 = vmul.f32 %v10454, 0.1
    %v10519 = vmul.f32 %v10455, 0.1
    %v10520 = vmul.f32 %v10456, 0.1
    %v10521 = vmul.f32 %v10457, 0.1
    %v10522 = vmul.f32 %v10458, 0.1
    %v10523 = vmul.f32 %v10459, 0.1
    %v10524 = vmul.f32 %v10460, 0.1
    %v10525 = vmul.f32 %v10461, 0.1
    %v10526 = vmul.f32 %v10462, 0.1
    %v10527 = vmul.f32 %v10463, 0.1
    %v10528 = vmul.f32 %v10464, 0.1
    %v10529 = vmul.f32 %v10465, 0.1
    %v10530 = vmul.f32 %v10466, 0.1
    %v10531 = vmul.f32 %v10467, 0.1
    %v10532 = vmul.f32 %v10468, 0.1
    %v10533 = vmul.f32 %v10469, 0.1
    %v10534 = vmul.f32 %v10470, 0.1
    %v10535 = vmul.f32 %v10471, 0.1
    %v10536 = vmax.f32 %v10408, %v10472
    %v10537 = vmax.f32 %v10409, %v10473
    %v10538 = vmax.f32 %v10410, %v10474
    %v10539 = vmax.f32 %v10411, %v10475
    %v10540 = vmax.f32 %v10412, %v10476
    %v10541 = vmax.f32 %v10413, %v10477
    %v10542 = vmax.f32 %v10414, %v10478
    %v10543 = vmax.f32 %v10415, %v10479
    %v10544 = vmax.f32 %v10416, %v10480
    %v10545 = vmax.f32 %v10417, %v10481
    %v10546 = vmax.f32 %v10418, %v10482
    %v10547 = vmax.f32 %v10419, %v10483
    %v10548 = vmax.f32 %v10420, %v10484
    %v10549 = vmax.f32 %v10421, %v10485
    %v10550 = vmax.f32 %v10422, %v10486
    %v10551 = vmax.f32 %v10423, %v10487
    %v10552 = vmax.f32 %v10424, %v10488
    %v10553 = vmax.f32 %v10425, %v10489
    %v10554 = vmax.f32 %v10426, %v10490
    %v10555 = vmax.f32 %v10427, %v10491
    %v10556 = vmax.f32 %v10428, %v10492
    %v10557 = vmax.f32 %v10429, %v10493
    %v10558 = vmax.f32 %v10430, %v10494
    %v10559 = vmax.f32 %v10431, %v10495
    %v10560 = vmax.f32 %v10432, %v10496
    %v10561 = vmax.f32 %v10433, %v10497
    %v10562 = vmax.f32 %v10434, %v10498
    %v10563 = vmax.f32 %v10435, %v10499
    %v10564 = vmax.f32 %v10436, %v10500
    %v10565 = vmax.f32 %v10437, %v10501
    %v10566 = vmax.f32 %v10438, %v10502
    %v10567 = vmax.f32 %v10439, %v10503
    %v10568 = vmax.f32 %v10440, %v10504
    %v10569 = vmax.f32 %v10441, %v10505
    %v10570 = vmax.f32 %v10442, %v10506
    %v10571 = vmax.f32 %v10443, %v10507
    %v10572 = vmax.f32 %v10444, %v10508
    %v10573 = vmax.f32 %v10445, %v10509
    %v10574 = vmax.f32 %v10446, %v10510
    %v10575 = vmax.f32 %v10447, %v10511
    %v10576 = vmax.f32 %v10448, %v10512
    %v10577 = vmax.f32 %v10449, %v10513
    %v10578 = vmax.f32 %v10450, %v10514
    %v10579 = vmax.f32 %v10451, %v10515
    %v10580 = vmax.f32 %v10452, %v10516
    %v10581 = vmax.f32 %v10453, %v10517
    %v10582 = vmax.f32 %v10454, %v10518
    %v10583 = vmax.f32 %v10455, %v10519
    %v10584 = vmax.f32 %v10456, %v10520
    %v10585 = vmax.f32 %v10457, %v10521
    %v10586 = vmax.f32 %v10458, %v10522
    %v10587 = vmax.f32 %v10459, %v10523
    %v10588 = vmax.f32 %v10460, %v10524
    %v10589 = vmax.f32 %v10461, %v10525
    %v10590 = vmax.f32 %v10462, %v10526
    %v10591 = vmax.f32 %v10463, %v10527
    %v10592 = vmax.f32 %v10464, %v10528
    %v10593 = vmax.f32 %v10465, %v10529
    %v10594 = vmax.f32 %v10466, %v10530
    %v10595 = vmax.f32 %v10467, %v10531
    %v10596 = vmax.f32 %v10468, %v10532
    %v10597 = vmax.f32 %v10469, %v10533
    %v10598 = vmax.f32 %v10470, %v10534
    %v10599 = vmax.f32 %v10471, %v10535
    %v10600 = vld [vmem:[#allocation6] sm:$0xff]
    %v10601 = vld [vmem:[#allocation6 + $0x8] sm:$0xff]
    %v10602 = vld [vmem:[#allocation6 + $0x10] sm:$0xff]
    %v10603 = vld [vmem:[#allocation6 + $0x18] sm:$0xff]
    %v10604 = vld [vmem:[#allocation6 + $0x20] sm:$0xff]
    %v10605 = vld [vmem:[#allocation6 + $0x28] sm:$0xff]
    %v10606 = vld [vmem:[#allocation6 + $0x30] sm:$0xff]
    %v10607 = vld [vmem:[#allocation6 + $0x38] sm:$0xff]
    %v10608 = vld [vmem:[#allocation6 + $0x40] sm:$0xff]
    %v10609 = vld [vmem:[#allocation6 + $0x48] sm:$0xff]
    %v10610 = vld [vmem:[#allocation6 + $0x50] sm:$0xff]
    %v10611 = vld [vmem:[#allocation6 + $0x58] sm:$0xff]
    %v10612 = vld [vmem:[#allocation6 + $0x60] sm:$0xff]
    %v10613 = vld [vmem:[#allocation6 + $0x68] sm:$0xff]
    %v10614 = vld [vmem:[#allocation6 + $0x70] sm:$0xff]
    %v10615 = vld [vmem:[#allocation6 + $0x78] sm:$0xff]
    %v10616 = vld [vmem:[#allocation6 + $0x80] sm:$0xff]
    %v10617 = vld [vmem:[#allocation6 + $0x88] sm:$0xff]
    %v10618 = vld [vmem:[#allocation6 + $0x90] sm:$0xff]
    %v10619 = vld [vmem:[#allocation6 + $0x98] sm:$0xff]
    %v10620 = vld [vmem:[#allocation6 + $0xa0] sm:$0xff]
    %v10621 = vld [vmem:[#allocation6 + $0xa8] sm:$0xff]
    %v10622 = vld [vmem:[#allocation6 + $0xb0] sm:$0xff]
    %v10623 = vld [vmem:[#allocation6 + $0xb8] sm:$0xff]
    %v10624 = vld [vmem:[#allocation6 + $0xc0] sm:$0xff]
    %v10625 = vld [vmem:[#allocation6 + $0xc8] sm:$0xff]
    %v10626 = vld [vmem:[#allocation6 + $0xd0] sm:$0xff]
    %v10627 = vld [vmem:[#allocation6 + $0xd8] sm:$0xff]
    %v10628 = vld [vmem:[#allocation6 + $0xe0] sm:$0xff]
    %v10629 = vld [vmem:[#allocation6 + $0xe8] sm:$0xff]
    %v10630 = vld [vmem:[#allocation6 + $0xf0] sm:$0xff]
    %v10631 = vld [vmem:[#allocation6 + $0xf8] sm:$0xff]
    %v10632 = vld [vmem:[#allocation6 + $0x100] sm:$0xff]
    %v10633 = vld [vmem:[#allocation6 + $0x108] sm:$0xff]
    %v10634 = vld [vmem:[#allocation6 + $0x110] sm:$0xff]
    %v10635 = vld [vmem:[#allocation6 + $0x118] sm:$0xff]
    %v10636 = vld [vmem:[#allocation6 + $0x120] sm:$0xff]
    %v10637 = vld [vmem:[#allocation6 + $0x128] sm:$0xff]
    %v10638 = vld [vmem:[#allocation6 + $0x130] sm:$0xff]
    %v10639 = vld [vmem:[#allocation6 + $0x138] sm:$0xff]
    %v10640 = vld [vmem:[#allocation6 + $0x140] sm:$0xff]
    %v10641 = vld [vmem:[#allocation6 + $0x148] sm:$0xff]
    %v10642 = vld [vmem:[#allocation6 + $0x150] sm:$0xff]
    %v10643 = vld [vmem:[#allocation6 + $0x158] sm:$0xff]
    %v10644 = vld [vmem:[#allocation6 + $0x160] sm:$0xff]
    %v10645 = vld [vmem:[#allocation6 + $0x168] sm:$0xff]
    %v10646 = vld [vmem:[#allocation6 + $0x170] sm:$0xff]
    %v10647 = vld [vmem:[#allocation6 + $0x178] sm:$0xff]
    %v10648 = vld [vmem:[#allocation6 + $0x180] sm:$0xff]
    %v10649 = vld [vmem:[#allocation6 + $0x188] sm:$0xff]
    %v10650 = vld [vmem:[#allocation6 + $0x190] sm:$0xff]
    %v10651 = vld [vmem:[#allocation6 + $0x198] sm:$0xff]
    %v10652 = vld [vmem:[#allocation6 + $0x1a0] sm:$0xff]
    %v10653 = vld [vmem:[#allocation6 + $0x1a8] sm:$0xff]
    %v10654 = vld [vmem:[#allocation6 + $0x1b0] sm:$0xff]
    %v10655 = vld [vmem:[#allocation6 + $0x1b8] sm:$0xff]
    %v10656 = vld [vmem:[#allocation6 + $0x1c0] sm:$0xff]
    %v10657 = vld [vmem:[#allocation6 + $0x1c8] sm:$0xff]
    %v10658 = vld [vmem:[#allocation6 + $0x1d0] sm:$0xff]
    %v10659 = vld [vmem:[#allocation6 + $0x1d8] sm:$0xff]
    %v10660 = vld [vmem:[#allocation6 + $0x1e0] sm:$0xff]
    %v10661 = vld [vmem:[#allocation6 + $0x1e8] sm:$0xff]
    %v10662 = vld [vmem:[#allocation6 + $0x1f0] sm:$0xff]
    %v10663 = vld [vmem:[#allocation6 + $0x1f8] sm:$0xff]
    %v10664 = vadd.f32 %v10600, %v10536
    %v10665 = vadd.f32 %v10601, %v10537
    %v10666 = vadd.f32 %v10602, %v10538
    %v10667 = vadd.f32 %v10603, %v10539
    %v10668 = vadd.f32 %v10604, %v10540
    %v10669 = vadd.f32 %v10605, %v10541
    %v10670 = vadd.f32 %v10606, %v10542
    %v10671 = vadd.f32 %v10607, %v10543
    %v10672 = vadd.f32 %v10608, %v10544
    %v10673 = vadd.f32 %v10609, %v10545
    %v10674 = vadd.f32 %v10610, %v10546
    %v10675 = vadd.f32 %v10611, %v10547
    %v10676 = vadd.f32 %v10612, %v10548
    %v10677 = vadd.f32 %v10613, %v10549
    %v10678 = vadd.f32 %v10614, %v10550
    %v10679 = vadd.f32 %v10615, %v10551
    %v10680 = vadd.f32 %v10616, %v10552
    %v10681 = vadd.f32 %v10617, %v10553
    %v10682 = vadd.f32 %v10618, %v10554
    %v10683 = vadd.f32 %v10619, %v10555
    %v10684 = vadd.f32 %v10620, %v10556
    %v10685 = vadd.f32 %v10621, %v10557
    %v10686 = vadd.f32 %v10622, %v10558
    %v10687 = vadd.f32 %v10623, %v10559
    %v10688 = vadd.f32 %v10624, %v10560
    %v10689 = vadd.f32 %v10625, %v10561
    %v10690 = vadd.f32 %v10626, %v10562
    %v10691 = vadd.f32 %v10627, %v10563
    %v10692 = vadd.f32 %v10628, %v10564
    %v10693 = vadd.f32 %v10629, %v10565
    %v10694 = vadd.f32 %v10630, %v10566
    %v10695 = vadd.f32 %v10631, %v10567
    %v10696 = vadd.f32 %v10632, %v10568
    %v10697 = vadd.f32 %v10633, %v10569
    %v10698 = vadd.f32 %v10634, %v10570
    %v10699 = vadd.f32 %v10635, %v10571
    %v10700 = vadd.f32 %v10636, %v10572
    %v10701 = vadd.f32 %v10637, %v10573
    %v10702 = vadd.f32 %v10638, %v10574
    %v10703 = vadd.f32 %v10639, %v10575
    %v10704 = vadd.f32 %v10640, %v10576
    %v10705 = vadd.f32 %v10641, %v10577
    %v10706 = vadd.f32 %v10642, %v10578
    %v10707 = vadd.f32 %v10643, %v10579
    %v10708 = vadd.f32 %v10644, %v10580
    %v10709 = vadd.f32 %v10645, %v10581
    %v10710 = vadd.f32 %v10646, %v10582
    %v10711 = vadd.f32 %v10647, %v10583
    %v10712 = vadd.f32 %v10648, %v10584
    %v10713 = vadd.f32 %v10649, %v10585
    %v10714 = vadd.f32 %v10650, %v10586
    %v10715 = vadd.f32 %v10651, %v10587
    %v10716 = vadd.f32 %v10652, %v10588
    %v10717 = vadd.f32 %v10653, %v10589
    %v10718 = vadd.f32 %v10654, %v10590
    %v10719 = vadd.f32 %v10655, %v10591
    %v10720 = vadd.f32 %v10656, %v10592
    %v10721 = vadd.f32 %v10657, %v10593
    %v10722 = vadd.f32 %v10658, %v10594
    %v10723 = vadd.f32 %v10659, %v10595
    %v10724 = vadd.f32 %v10660, %v10596
    %v10725 = vadd.f32 %v10661, %v10597
    %v10726 = vadd.f32 %v10662, %v10598
    %v10727 = vadd.f32 %v10663, %v10599
    %10728 = vst [vmem:[#allocation17] sm:$0xff] %v10664
    %10729 = vst [vmem:[#allocation17 + $0x8] sm:$0xff] %v10665
    %10730 = vst [vmem:[#allocation17 + $0x10] sm:$0xff] %v10666
    %10731 = vst [vmem:[#allocation17 + $0x18] sm:$0xff] %v10667
    %10732 = vst [vmem:[#allocation17 + $0x20] sm:$0xff] %v10668
    %10733 = vst [vmem:[#allocation17 + $0x28] sm:$0xff] %v10669
    %10734 = vst [vmem:[#allocation17 + $0x30] sm:$0xff] %v10670
    %10735 = vst [vmem:[#allocation17 + $0x38] sm:$0xff] %v10671
    %10736 = vst [vmem:[#allocation17 + $0x40] sm:$0xff] %v10672
    %10737 = vst [vmem:[#allocation17 + $0x48] sm:$0xff] %v10673
    %10738 = vst [vmem:[#allocation17 + $0x50] sm:$0xff] %v10674
    %10739 = vst [vmem:[#allocation17 + $0x58] sm:$0xff] %v10675
    %10740 = vst [vmem:[#allocation17 + $0x60] sm:$0xff] %v10676
    %10741 = vst [vmem:[#allocation17 + $0x68] sm:$0xff] %v10677
    %10742 = vst [vmem:[#allocation17 + $0x70] sm:$0xff] %v10678
    %10743 = vst [vmem:[#allocation17 + $0x78] sm:$0xff] %v10679
    %10744 = vst [vmem:[#allocation17 + $0x80] sm:$0xff] %v10680
    %10745 = vst [vmem:[#allocation17 + $0x88] sm:$0xff] %v10681
    %10746 = vst [vmem:[#allocation17 + $0x90] sm:$0xff] %v10682
    %10747 = vst [vmem:[#allocation17 + $0x98] sm:$0xff] %v10683
    %10748 = vst [vmem:[#allocation17 + $0xa0] sm:$0xff] %v10684
    %10749 = vst [vmem:[#allocation17 + $0xa8] sm:$0xff] %v10685
    %10750 = vst [vmem:[#allocation17 + $0xb0] sm:$0xff] %v10686
    %10751 = vst [vmem:[#allocation17 + $0xb8] sm:$0xff] %v10687
    %10752 = vst [vmem:[#allocation17 + $0xc0] sm:$0xff] %v10688
    %10753 = vst [vmem:[#allocation17 + $0xc8] sm:$0xff] %v10689
    %10754 = vst [vmem:[#allocation17 + $0xd0] sm:$0xff] %v10690
    %10755 = vst [vmem:[#allocation17 + $0xd8] sm:$0xff] %v10691
    %10756 = vst [vmem:[#allocation17 + $0xe0] sm:$0xff] %v10692
    %10757 = vst [vmem:[#allocation17 + $0xe8] sm:$0xff] %v10693
    %10758 = vst [vmem:[#allocation17 + $0xf0] sm:$0xff] %v10694
    %10759 = vst [vmem:[#allocation17 + $0xf8] sm:$0xff] %v10695
    %10760 = vst [vmem:[#allocation17 + $0x100] sm:$0xff] %v10696
    %10761 = vst [vmem:[#allocation17 + $0x108] sm:$0xff] %v10697
    %10762 = vst [vmem:[#allocation17 + $0x110] sm:$0xff] %v10698
    %10763 = vst [vmem:[#allocation17 + $0x118] sm:$0xff] %v10699
    %10764 = vst [vmem:[#allocation17 + $0x120] sm:$0xff] %v10700
    %10765 = vst [vmem:[#allocation17 + $0x128] sm:$0xff] %v10701
    %10766 = vst [vmem:[#allocation17 + $0x130] sm:$0xff] %v10702
    %10767 = vst [vmem:[#allocation17 + $0x138] sm:$0xff] %v10703
    %10768 = vst [vmem:[#allocation17 + $0x140] sm:$0xff] %v10704
    %10769 = vst [vmem:[#allocation17 + $0x148] sm:$0xff] %v10705
    %10770 = vst [vmem:[#allocation17 + $0x150] sm:$0xff] %v10706
    %10771 = vst [vmem:[#allocation17 + $0x158] sm:$0xff] %v10707
    %10772 = vst [vmem:[#allocation17 + $0x160] sm:$0xff] %v10708
    %10773 = vst [vmem:[#allocation17 + $0x168] sm:$0xff] %v10709
    %10774 = vst [vmem:[#allocation17 + $0x170] sm:$0xff] %v10710
    %10775 = vst [vmem:[#allocation17 + $0x178] sm:$0xff] %v10711
    %10776 = vst [vmem:[#allocation17 + $0x180] sm:$0xff] %v10712
    %10777 = vst [vmem:[#allocation17 + $0x188] sm:$0xff] %v10713
    %10778 = vst [vmem:[#allocation17 + $0x190] sm:$0xff] %v10714
    %10779 = vst [vmem:[#allocation17 + $0x198] sm:$0xff] %v10715
    %10780 = vst [vmem:[#allocation17 + $0x1a0] sm:$0xff] %v10716
    %10781 = vst [vmem:[#allocation17 + $0x1a8] sm:$0xff] %v10717
    %10782 = vst [vmem:[#allocation17 + $0x1b0] sm:$0xff] %v10718
    %10783 = vst [vmem:[#allocation17 + $0x1b8] sm:$0xff] %v10719
    %10784 = vst [vmem:[#allocation17 + $0x1c0] sm:$0xff] %v10720
    %10785 = vst [vmem:[#allocation17 + $0x1c8] sm:$0xff] %v10721
    %10786 = vst [vmem:[#allocation17 + $0x1d0] sm:$0xff] %v10722
    %10787 = vst [vmem:[#allocation17 + $0x1d8] sm:$0xff] %v10723
    %10788 = vst [vmem:[#allocation17 + $0x1e0] sm:$0xff] %v10724
    %10789 = vst [vmem:[#allocation17 + $0x1e8] sm:$0xff] %v10725
    %10790 = vst [vmem:[#allocation17 + $0x1f0] sm:$0xff] %v10726
    %10791 = vst [vmem:[#allocation17 + $0x1f8] sm:$0xff] %v10727
    // Predicated region
    $region70: #{tpu_custom_call.1} parent=1 // pred_check
      _
    $region71: #{tpu_custom_call.1} parent=1 // pred_check_branch
      %10793 = sbr.rel (0) target = $region73
    $region72: #{tpu_custom_call.1} parent=1 // pred_region
      %s10795 = ssub.s32 8192, 8192
      %10796 = vsyncadd [#allocation5], %s10795
      %s10797 = sshll.u32 [#allocation17], 4
      %s10798 = int_to_ptr.vmem [resolvable:$true] %s10797
      %10803 = dma.vmem_to_hbm [thread:$0]  %s10798, 8192, %s9, [#allocation5], 512, 512, 32
    $region73: #{tpu_custom_call.1} parent=1 // pred_fallthru
      _
    // Predicated region
    $region74: #{tpu_custom_call.1} parent=1 // pred_check
      _
    $region75: #{tpu_custom_call.1} parent=1 // pred_check_branch
      %10805 = sbr.rel (0) target = $region77
    $region76: #{tpu_custom_call.1} parent=1 // pred_region
      %10806 = dma.done [#allocation5], 8192
    $region77: #{tpu_custom_call.1} parent=1 // pred_fallthru
      _
    %10807 = vsyncpa [#allocation4], 1
    %10808 = vsyncpa [#allocation7], 1
    %10809 = vsyncpa [#allocation10], 1
    %10810 = vsyncpa [#allocation13], 1
    %10811 = vsyncpa [#allocation16], 1
    %10812 = vsyncpa [#allocation5], 1

</llo_original>
